<compile_context>
chip_gen: v7x
topology: tpu7x:2x2x1
jax: 0.10.0
libtpu: 0.0.40
codegen_flags: <defaults>
</compile_context>

<pallas_src>
import jax
import jax.numpy as jnp
from jax.experimental import pallas as pl
from jax.experimental.pallas import tpu as pltpu

EPS = 1e-5
NEG_SLOPE = 0.1
LEFT_PAD = 8          # interior of the halo scratch starts at sublane 8 (aligned)


# ------------------------------ fused kernel --------------------------------

def _residual_block_kernel(x_ref, w1_ref, g1_ref, b1_ref,
                           w2_ref, g2_ref, b2_ref, o_ref, z1p_ref):
    """Whole ResidualBlock forward for the full (tiny) batch in one shot.

    x_ref  : (N, H, W, Cin)      input, NHWC
    w1_ref : (Cin, C1)           1x1 conv weight
    g1/b1  : (1, C1)             BN1 gamma / beta
    w2_ref : (3, 3, C1, C2)      3x3 conv weight, HWIO
    g2/b2  : (1, C2)             BN2 gamma / beta
    o_ref  : (N, H, W, C2)       output, NHWC
    z1p_ref: (N, H+2, W+2*LEFT_PAD, C1)  VMEM halo scratch for padded z1
    """
    N, H, W, Cin = x_ref.shape
    C1 = w1_ref.shape[1]
    C2 = w2_ref.shape[-1]
    M = N * H * W

    x2d = x_ref[...].reshape(M, Cin)                    # kept for the residual

    # ---- conv1 (1x1) : per-pixel matmul on the MXU ----
    y1 = jnp.dot(x2d, w1_ref[...], preferred_element_type=jnp.float32)  # (M, C1)

    # ---- BN1 (training-mode batch stats, biased var) + LeakyReLU(0.1) ----
    m1 = jnp.mean(y1, axis=0, keepdims=True)            # (1, C1)
    v1 = jnp.mean((y1 - m1) ** 2, axis=0, keepdims=True)
    sc1 = g1_ref[...] * jax.lax.rsqrt(v1 + EPS)
    sh1 = b1_ref[...] - m1 * sc1
    z1 = y1 * sc1 + sh1
    z1 = jnp.where(z1 > 0, z1, NEG_SLOPE * z1)          # (M, C1)

    # ---- zero-pad z1 into the VMEM halo scratch (no HBM round trip) ----
    # Interior lives at rows [1, H+1) (untiled dim) and sublanes
    # [LEFT_PAD, LEFT_PAD+W) (aligned offset, aligned size), so this is an
    # aligned sub-window store.
    z1p_ref[...] = jnp.zeros_like(z1p_ref)
    z1p_ref[:, 1:H + 1, LEFT_PAD:LEFT_PAD + W, :] = z1.reshape(N, H, W, C1)

    # ---- conv2 (3x3, stride 1, pad 1) : 9 accumulated K=C1 matmuls ----
    # Tap (dh, dw) needs padded pixel (h+dh, w+dw); padded col w_pad maps to
    # scratch sublane w_pad + LEFT_PAD - 1.
    acc = jnp.zeros((M, C2), jnp.float32)
    for dh in range(3):
        for dw in range(3):
            c0 = LEFT_PAD - 1 + dw
            tap = z1p_ref[:, dh:dh + H, c0:c0 + W, :].reshape(M, C1)
            acc += jnp.dot(tap, w2_ref[dh, dw],
                           preferred_element_type=jnp.float32)

    # ---- BN2 + LeakyReLU + residual add ----
    m2 = jnp.mean(acc, axis=0, keepdims=True)           # (1, C2)
    v2 = jnp.mean((acc - m2) ** 2, axis=0, keepdims=True)
    sc2 = g2_ref[...] * jax.lax.rsqrt(v2 + EPS)
    sh2 = b2_ref[...] - m2 * sc2
    z2 = acc * sc2 + sh2
    z2 = jnp.where(z2 > 0, z2, NEG_SLOPE * z2)

    o_ref[...] = (z2 + x2d).reshape(N, H, W, C2)


# -------------------------------- wrapper ------------------------------------

def residual_block(x_nchw, params):
    """conv1(1x1)+BN+LReLU -> conv2(3x3,pad=1)+BN+LReLU -> + x  (NCHW in/out)."""
    N, Cin, H, W = x_nchw.shape
    w1 = params["w1"]                                   # (Cin, C1)
    w2 = params["w2"]                                   # (3, 3, C1, C2) HWIO
    C1, C2 = w1.shape[1], w2.shape[-1]
    assert C2 == Cin, "residual add requires conv2_out_channels == in_channels"

    x = jnp.transpose(x_nchw, (0, 2, 3, 1))             # NCHW -> NHWC (tiny glue)

    g1 = params["gamma1"].reshape(1, C1).astype(jnp.float32)
    b1 = params["beta1"].reshape(1, C1).astype(jnp.float32)
    g2 = params["gamma2"].reshape(1, C2).astype(jnp.float32)
    b2 = params["beta2"].reshape(1, C2).astype(jnp.float32)

    vmem_spec = pl.BlockSpec(memory_space=pltpu.MemorySpace.VMEM)

    out_nhwc = pl.pallas_call(
        _residual_block_kernel,
        out_shape=jax.ShapeDtypeStruct((N, H, W, C2), jnp.float32),
        in_specs=[vmem_spec] * 7,
        out_specs=vmem_spec,
        scratch_shapes=[pltpu.VMEM((N, H + 2, W + 2 * LEFT_PAD, C1),
                                   jnp.float32)],
        compiler_params=pltpu.CompilerParams(
            vmem_limit_bytes=32 * 1024 * 1024),
    )(x, w1, g1, b1, w2, g2, b2)

    return jnp.transpose(out_nhwc, (0, 3, 1, 2))        # NHWC -> NCHW


# --------------------------- pure-JAX reference -----------------------------

def _reference(x_nchw, params):
    x = jnp.transpose(x_nchw, (0, 2, 3, 1))

    def conv_bn_lrelu(inp, w_hwio, gamma, beta, pad):
        y = jax.lax.conv_general_dilated(
            inp, w_hwio, window_strides=(1, 1),
            padding=[(pad, pad), (pad, pad)],
            dimension_numbers=("NHWC", "HWIO", "NHWC"))
        mean = jnp.mean(y, axis=(0, 1, 2))
        var = jnp.var(y, axis=(0, 1, 2))                # biased (training mode)
        yh = (y - mean) / jnp.sqrt(var + EPS) * gamma + beta
        return jnp.where(yh > 0, yh, NEG_SLOPE * yh)

    cin, c1 = params["w1"].shape
    z1 = conv_bn_lrelu(x, params["w1"].reshape(1, 1, cin, c1),
                       params["gamma1"], params["beta1"], 0)
    z2 = conv_bn_lrelu(z1, params["w2"], params["gamma2"], params["beta2"], 1)
    return jnp.transpose(z2 + x, (0, 3, 1, 2))


# --------------------------------- main --------------------------------------

if __name__ == "__main__":
    key = jax.random.PRNGKey(0)
    ks = jax.random.split(key, 7)

    # Darknet53 residual block: conv1 halves channels, conv2 restores them.
    N, Cin, H, W = 2, 32, 16, 16
    C1, C2 = 16, 32

    x = jax.random.normal(ks[0], (N, Cin, H, W), jnp.float32)
    params = dict(
        w1=0.1 * jax.random.normal(ks[1], (Cin, C1), jnp.float32),
        gamma1=1.0 + 0.1 * jax.random.normal(ks[2], (C1,), jnp.float32),
        beta1=0.1 * jax.random.normal(ks[3], (C1,), jnp.float32),
        w2=0.05 * jax.random.normal(ks[4], (3, 3, C1, C2), jnp.float32),
        gamma2=1.0 + 0.1 * jax.random.normal(ks[5], (C2,), jnp.float32),
        beta2=0.1 * jax.random.normal(ks[6], (C2,), jnp.float32),
    )

    fwd = jax.jit(residual_block)
    out = jax.block_until_ready(fwd(x, params))

    ref = _reference(x, params)
    assert out.shape == (N, C2, H, W)
    max_err = float(jnp.max(jnp.abs(out - ref)))
    assert max_err < 2e-2, f"max abs error {max_err}"
    print("KERNEL_OK")
</pallas_src>

<mosaic_0001>
module attributes {stable_mosaic.version = 11 : i64} {
  func.func @_residual_block_kernel(%arg0: memref<2x16x16x32xf32, #tpu.memory_space<vmem>>, %arg1: memref<32x16xf32, #tpu.memory_space<vmem>>, %arg2: memref<1x16xf32, #tpu.memory_space<vmem>>, %arg3: memref<1x16xf32, #tpu.memory_space<vmem>>, %arg4: memref<3x3x16x32xf32, #tpu.memory_space<vmem>>, %arg5: memref<1x32xf32, #tpu.memory_space<vmem>>, %arg6: memref<1x32xf32, #tpu.memory_space<vmem>>, %arg7: memref<2x16x16x32xf32, #tpu.memory_space<vmem>>, %arg8: memref<2x18x32x16xf32, #tpu.memory_space<vmem>>) attributes {dimension_semantics = [], scalar_prefetch = 0 : i64, scratch_operands = 1 : i64, tpu.core_type = #tpu.core_type<tc>} {
    %c0 = arith.constant 0 : index
    %c0_0 = arith.constant 0 : index
    %c0_1 = arith.constant 0 : index
    %c0_2 = arith.constant 0 : index
    %0 = vector.load %arg0[%c0, %c0_0, %c0_1, %c0_2] : memref<2x16x16x32xf32, #tpu.memory_space<vmem>>, vector<2x16x16x32xf32>
    %1 = vector.shape_cast %0 : vector<2x16x16x32xf32> to vector<512x32xf32>
    %c0_3 = arith.constant 0 : index
    %c0_4 = arith.constant 0 : index
    %2 = vector.load %arg1[%c0_3, %c0_4] : memref<32x16xf32, #tpu.memory_space<vmem>>, vector<32x16xf32>
    %cst = arith.constant dense<0.000000e+00> : vector<512x16xf32>
    %3 = tpu.matmul %1, %2, %cst {dimension_numbers = #tpu.dot_dimension_numbers<[1], [0], [0], [1], [0, 0, 1, 1], [], []>} : vector<512x32xf32>, vector<32x16xf32>, vector<512x16xf32> -> vector<512x16xf32>
    %cst_5 = arith.constant dense<0.000000e+00> : vector<16xf32>
    %4 = vector.multi_reduction <add>, %3, %cst_5 [0] : vector<512x16xf32> to vector<16xf32>
    %5 = vector.shape_cast %4 : vector<16xf32> to vector<1x16xf32>
    %cst_6 = arith.constant 5.120000e+02 : f32
    %6 = vector.broadcast %cst_6 : f32 to vector<1x16xf32>
    %7 = arith.divf %5, %6 : vector<1x16xf32>
    %8 = vector.broadcast %7 : vector<1x16xf32> to vector<512x16xf32>
    %9 = arith.subf %3, %8 : vector<512x16xf32>
    %10 = arith.mulf %9, %9 : vector<512x16xf32>
    %cst_7 = arith.constant dense<0.000000e+00> : vector<16xf32>
    %11 = vector.multi_reduction <add>, %10, %cst_7 [0] : vector<512x16xf32> to vector<16xf32>
    %12 = vector.shape_cast %11 : vector<16xf32> to vector<1x16xf32>
    %cst_8 = arith.constant 5.120000e+02 : f32
    %13 = vector.broadcast %cst_8 : f32 to vector<1x16xf32>
    %14 = arith.divf %12, %13 : vector<1x16xf32>
    %c0_9 = arith.constant 0 : index
    %c0_10 = arith.constant 0 : index
    %15 = vector.load %arg2[%c0_9, %c0_10] : memref<1x16xf32, #tpu.memory_space<vmem>>, vector<1x16xf32>
    %cst_11 = arith.constant 9.99999974E-6 : f32
    %16 = vector.broadcast %cst_11 : f32 to vector<1x16xf32>
    %17 = arith.addf %14, %16 : vector<1x16xf32>
    %18 = math.rsqrt %17 : vector<1x16xf32>
    %19 = arith.mulf %15, %18 : vector<1x16xf32>
    %c0_12 = arith.constant 0 : index
    %c0_13 = arith.constant 0 : index
    %20 = vector.load %arg3[%c0_12, %c0_13] : memref<1x16xf32, #tpu.memory_space<vmem>>, vector<1x16xf32>
    %21 = arith.mulf %7, %19 : vector<1x16xf32>
    %22 = arith.subf %20, %21 : vector<1x16xf32>
    %23 = vector.broadcast %19 : vector<1x16xf32> to vector<512x16xf32>
    %24 = arith.mulf %3, %23 : vector<512x16xf32>
    %25 = vector.broadcast %22 : vector<1x16xf32> to vector<512x16xf32>
    %26 = arith.addf %24, %25 : vector<512x16xf32>
    %cst_14 = arith.constant 0.000000e+00 : f32
    %27 = vector.broadcast %cst_14 : f32 to vector<512x16xf32>
    %28 = arith.cmpf ogt, %26, %27 : vector<512x16xf32>
    %cst_15 = arith.constant 1.000000e-01 : f32
    %29 = vector.broadcast %cst_15 : f32 to vector<512x16xf32>
    %30 = arith.mulf %29, %26 : vector<512x16xf32>
    %31 = arith.select %28, %26, %30 : vector<512x16xi1>, vector<512x16xf32>
    %cst_16 = arith.constant 0.000000e+00 : f32
    %32 = vector.broadcast %cst_16 : f32 to vector<2x18x32x16xf32>
    %c0_17 = arith.constant 0 : index
    %c0_18 = arith.constant 0 : index
    %c0_19 = arith.constant 0 : index
    %c0_20 = arith.constant 0 : index
    %33 = vector.load %arg8[%c0_17, %c0_18, %c0_19, %c0_20] : memref<2x18x32x16xf32, #tpu.memory_space<vmem>>, vector<2x18x32x16xf32>
    tpu.vector_store %arg8[%c0_17, %c0_18, %c0_19, %c0_20], %32 {strides = array<i32>} : memref<2x18x32x16xf32, #tpu.memory_space<vmem>>, vector<2x18x32x16xf32>,
    %34 = vector.shape_cast %31 : vector<512x16xf32> to vector<2x16x16x16xf32>
    %c0_21 = arith.constant 0 : index
    %c1 = arith.constant 1 : index
    %c8 = arith.constant 8 : index
    %c0_22 = arith.constant 0 : index
    %35 = vector.load %arg8[%c0_21, %c1, %c8, %c0_22] : memref<2x18x32x16xf32, #tpu.memory_space<vmem>>, vector<2x16x16x16xf32>
    tpu.vector_store %arg8[%c0_21, %c1, %c8, %c0_22], %34 {strides = array<i32>} : memref<2x18x32x16xf32, #tpu.memory_space<vmem>>, vector<2x16x16x16xf32>,
    %cst_23 = arith.constant 0.000000e+00 : f32
    %36 = vector.broadcast %cst_23 : f32 to vector<512x32xf32>
    %c0_24 = arith.constant 0 : index
    %c0_25 = arith.constant 0 : index
    %c7 = arith.constant 7 : index
    %c0_26 = arith.constant 0 : index
    %37 = vector.load %arg8[%c0_24, %c0_25, %c7, %c0_26] : memref<2x18x32x16xf32, #tpu.memory_space<vmem>>, vector<2x16x16x16xf32>
    %38 = vector.shape_cast %37 : vector<2x16x16x16xf32> to vector<512x16xf32>
    %c0_27 = arith.constant 0 : index
    %c0_28 = arith.constant 0 : index
    %c0_29 = arith.constant 0 : index
    %c0_30 = arith.constant 0 : index
    %39 = vector.load %arg4[%c0_27, %c0_28, %c0_29, %c0_30] : memref<3x3x16x32xf32, #tpu.memory_space<vmem>>, vector<1x1x16x32xf32>
    %40 = vector.shape_cast %39 : vector<1x1x16x32xf32> to vector<16x32xf32>
    %cst_31 = arith.constant dense<0.000000e+00> : vector<512x32xf32>
    %41 = tpu.matmul %38, %40, %cst_31 {dimension_numbers = #tpu.dot_dimension_numbers<[1], [0], [0], [1], [0, 0, 1, 1], [], []>} : vector<512x16xf32>, vector<16x32xf32>, vector<512x32xf32> -> vector<512x32xf32>
    %42 = arith.addf %36, %41 : vector<512x32xf32>
    %c0_32 = arith.constant 0 : index
    %c0_33 = arith.constant 0 : index
    %c8_34 = arith.constant 8 : index
    %c0_35 = arith.constant 0 : index
    %43 = vector.load %arg8[%c0_32, %c0_33, %c8_34, %c0_35] : memref<2x18x32x16xf32, #tpu.memory_space<vmem>>, vector<2x16x16x16xf32>
    %44 = vector.shape_cast %43 : vector<2x16x16x16xf32> to vector<512x16xf32>
    %c0_36 = arith.constant 0 : index
    %c1_37 = arith.constant 1 : index
    %c0_38 = arith.constant 0 : index
    %c0_39 = arith.constant 0 : index
    %45 = vector.load %arg4[%c0_36, %c1_37, %c0_38, %c0_39] : memref<3x3x16x32xf32, #tpu.memory_space<vmem>>, vector<1x1x16x32xf32>
    %46 = vector.shape_cast %45 : vector<1x1x16x32xf32> to vector<16x32xf32>
    %cst_40 = arith.constant dense<0.000000e+00> : vector<512x32xf32>
    %47 = tpu.matmul %44, %46, %cst_40 {dimension_numbers = #tpu.dot_dimension_numbers<[1], [0], [0], [1], [0, 0, 1, 1], [], []>} : vector<512x16xf32>, vector<16x32xf32>, vector<512x32xf32> -> vector<512x32xf32>
    %48 = arith.addf %42, %47 : vector<512x32xf32>
    %c0_41 = arith.constant 0 : index
    %c0_42 = arith.constant 0 : index
    %c9 = arith.constant 9 : index
    %c0_43 = arith.constant 0 : index
    %49 = vector.load %arg8[%c0_41, %c0_42, %c9, %c0_43] : memref<2x18x32x16xf32, #tpu.memory_space<vmem>>, vector<2x16x16x16xf32>
    %50 = vector.shape_cast %49 : vector<2x16x16x16xf32> to vector<512x16xf32>
    %c0_44 = arith.constant 0 : index
    %c2 = arith.constant 2 : index
    %c0_45 = arith.constant 0 : index
    %c0_46 = arith.constant 0 : index
    %51 = vector.load %arg4[%c0_44, %c2, %c0_45, %c0_46] : memref<3x3x16x32xf32, #tpu.memory_space<vmem>>, vector<1x1x16x32xf32>
    %52 = vector.shape_cast %51 : vector<1x1x16x32xf32> to vector<16x32xf32>
    %cst_47 = arith.constant dense<0.000000e+00> : vector<512x32xf32>
    %53 = tpu.matmul %50, %52, %cst_47 {dimension_numbers = #tpu.dot_dimension_numbers<[1], [0], [0], [1], [0, 0, 1, 1], [], []>} : vector<512x16xf32>, vector<16x32xf32>, vector<512x32xf32> -> vector<512x32xf32>
    %54 = arith.addf %48, %53 : vector<512x32xf32>
    %c0_48 = arith.constant 0 : index
    %c1_49 = arith.constant 1 : index
    %c7_50 = arith.constant 7 : index
    %c0_51 = arith.constant 0 : index
    %55 = vector.load %arg8[%c0_48, %c1_49, %c7_50, %c0_51] : memref<2x18x32x16xf32, #tpu.memory_space<vmem>>, vector<2x16x16x16xf32>
    %56 = vector.shape_cast %55 : vector<2x16x16x16xf32> to vector<512x16xf32>
    %c1_52 = arith.constant 1 : index
    %c0_53 = arith.constant 0 : index
    %c0_54 = arith.constant 0 : index
    %c0_55 = arith.constant 0 : index
    %57 = vector.load %arg4[%c1_52, %c0_53, %c0_54, %c0_55] : memref<3x3x16x32xf32, #tpu.memory_space<vmem>>, vector<1x1x16x32xf32>
    %58 = vector.shape_cast %57 : vector<1x1x16x32xf32> to vector<16x32xf32>
    %cst_56 = arith.constant dense<0.000000e+00> : vector<512x32xf32>
    %59 = tpu.matmul %56, %58, %cst_56 {dimension_numbers = #tpu.dot_dimension_numbers<[1], [0], [0], [1], [0, 0, 1, 1], [], []>} : vector<512x16xf32>, vector<16x32xf32>, vector<512x32xf32> -> vector<512x32xf32>
    %60 = arith.addf %54, %59 : vector<512x32xf32>
    %c0_57 = arith.constant 0 : index
    %c1_58 = arith.constant 1 : index
    %c8_59 = arith.constant 8 : index
    %c0_60 = arith.constant 0 : index
    %61 = vector.load %arg8[%c0_57, %c1_58, %c8_59, %c0_60] : memref<2x18x32x16xf32, #tpu.memory_space<vmem>>, vector<2x16x16x16xf32>
    %62 = vector.shape_cast %61 : vector<2x16x16x16xf32> to vector<512x16xf32>
    %c1_61 = arith.constant 1 : index
    %c1_62 = arith.constant 1 : index
    %c0_63 = arith.constant 0 : index
    %c0_64 = arith.constant 0 : index
    %63 = vector.load %arg4[%c1_61, %c1_62, %c0_63, %c0_64] : memref<3x3x16x32xf32, #tpu.memory_space<vmem>>, vector<1x1x16x32xf32>
    %64 = vector.shape_cast %63 : vector<1x1x16x32xf32> to vector<16x32xf32>
    %cst_65 = arith.constant dense<0.000000e+00> : vector<512x32xf32>
    %65 = tpu.matmul %62, %64, %cst_65 {dimension_numbers = #tpu.dot_dimension_numbers<[1], [0], [0], [1], [0, 0, 1, 1], [], []>} : vector<512x16xf32>, vector<16x32xf32>, vector<512x32xf32> -> vector<512x32xf32>
    %66 = arith.addf %60, %65 : vector<512x32xf32>
    %c0_66 = arith.constant 0 : index
    %c1_67 = arith.constant 1 : index
    %c9_68 = arith.constant 9 : index
    %c0_69 = arith.constant 0 : index
    %67 = vector.load %arg8[%c0_66, %c1_67, %c9_68, %c0_69] : memref<2x18x32x16xf32, #tpu.memory_space<vmem>>, vector<2x16x16x16xf32>
    %68 = vector.shape_cast %67 : vector<2x16x16x16xf32> to vector<512x16xf32>
    %c1_70 = arith.constant 1 : index
    %c2_71 = arith.constant 2 : index
    %c0_72 = arith.constant 0 : index
    %c0_73 = arith.constant 0 : index
    %69 = vector.load %arg4[%c1_70, %c2_71, %c0_72, %c0_73] : memref<3x3x16x32xf32, #tpu.memory_space<vmem>>, vector<1x1x16x32xf32>
    %70 = vector.shape_cast %69 : vector<1x1x16x32xf32> to vector<16x32xf32>
    %cst_74 = arith.constant dense<0.000000e+00> : vector<512x32xf32>
    %71 = tpu.matmul %68, %70, %cst_74 {dimension_numbers = #tpu.dot_dimension_numbers<[1], [0], [0], [1], [0, 0, 1, 1], [], []>} : vector<512x16xf32>, vector<16x32xf32>, vector<512x32xf32> -> vector<512x32xf32>
    %72 = arith.addf %66, %71 : vector<512x32xf32>
    %c0_75 = arith.constant 0 : index
    %c2_76 = arith.constant 2 : index
    %c7_77 = arith.constant 7 : index
    %c0_78 = arith.constant 0 : index
    %73 = vector.load %arg8[%c0_75, %c2_76, %c7_77, %c0_78] : memref<2x18x32x16xf32, #tpu.memory_space<vmem>>, vector<2x16x16x16xf32>
    %74 = vector.shape_cast %73 : vector<2x16x16x16xf32> to vector<512x16xf32>
    %c2_79 = arith.constant 2 : index
    %c0_80 = arith.constant 0 : index
    %c0_81 = arith.constant 0 : index
    %c0_82 = arith.constant 0 : index
    %75 = vector.load %arg4[%c2_79, %c0_80, %c0_81, %c0_82] : memref<3x3x16x32xf32, #tpu.memory_space<vmem>>, vector<1x1x16x32xf32>
    %76 = vector.shape_cast %75 : vector<1x1x16x32xf32> to vector<16x32xf32>
    %cst_83 = arith.constant dense<0.000000e+00> : vector<512x32xf32>
    %77 = tpu.matmul %74, %76, %cst_83 {dimension_numbers = #tpu.dot_dimension_numbers<[1], [0], [0], [1], [0, 0, 1, 1], [], []>} : vector<512x16xf32>, vector<16x32xf32>, vector<512x32xf32> -> vector<512x32xf32>
    %78 = arith.addf %72, %77 : vector<512x32xf32>
    %c0_84 = arith.constant 0 : index
    %c2_85 = arith.constant 2 : index
    %c8_86 = arith.constant 8 : index
    %c0_87 = arith.constant 0 : index
    %79 = vector.load %arg8[%c0_84, %c2_85, %c8_86, %c0_87] : memref<2x18x32x16xf32, #tpu.memory_space<vmem>>, vector<2x16x16x16xf32>
    %80 = vector.shape_cast %79 : vector<2x16x16x16xf32> to vector<512x16xf32>
    %c2_88 = arith.constant 2 : index
    %c1_89 = arith.constant 1 : index
    %c0_90 = arith.constant 0 : index
    %c0_91 = arith.constant 0 : index
    %81 = vector.load %arg4[%c2_88, %c1_89, %c0_90, %c0_91] : memref<3x3x16x32xf32, #tpu.memory_space<vmem>>, vector<1x1x16x32xf32>
    %82 = vector.shape_cast %81 : vector<1x1x16x32xf32> to vector<16x32xf32>
    %cst_92 = arith.constant dense<0.000000e+00> : vector<512x32xf32>
    %83 = tpu.matmul %80, %82, %cst_92 {dimension_numbers = #tpu.dot_dimension_numbers<[1], [0], [0], [1], [0, 0, 1, 1], [], []>} : vector<512x16xf32>, vector<16x32xf32>, vector<512x32xf32> -> vector<512x32xf32>
    %84 = arith.addf %78, %83 : vector<512x32xf32>
    %c0_93 = arith.constant 0 : index
    %c2_94 = arith.constant 2 : index
    %c9_95 = arith.constant 9 : index
    %c0_96 = arith.constant 0 : index
    %85 = vector.load %arg8[%c0_93, %c2_94, %c9_95, %c0_96] : memref<2x18x32x16xf32, #tpu.memory_space<vmem>>, vector<2x16x16x16xf32>
    %86 = vector.shape_cast %85 : vector<2x16x16x16xf32> to vector<512x16xf32>
    %c2_97 = arith.constant 2 : index
    %c2_98 = arith.constant 2 : index
    %c0_99 = arith.constant 0 : index
    %c0_100 = arith.constant 0 : index
    %87 = vector.load %arg4[%c2_97, %c2_98, %c0_99, %c0_100] : memref<3x3x16x32xf32, #tpu.memory_space<vmem>>, vector<1x1x16x32xf32>
    %88 = vector.shape_cast %87 : vector<1x1x16x32xf32> to vector<16x32xf32>
    %cst_101 = arith.constant dense<0.000000e+00> : vector<512x32xf32>
    %89 = tpu.matmul %86, %88, %cst_101 {dimension_numbers = #tpu.dot_dimension_numbers<[1], [0], [0], [1], [0, 0, 1, 1], [], []>} : vector<512x16xf32>, vector<16x32xf32>, vector<512x32xf32> -> vector<512x32xf32>
    %90 = arith.addf %84, %89 : vector<512x32xf32>
    %cst_102 = arith.constant dense<0.000000e+00> : vector<32xf32>
    %91 = vector.multi_reduction <add>, %90, %cst_102 [0] : vector<512x32xf32> to vector<32xf32>
    %92 = vector.shape_cast %91 : vector<32xf32> to vector<1x32xf32>
    %cst_103 = arith.constant 5.120000e+02 : f32
    %93 = vector.broadcast %cst_103 : f32 to vector<1x32xf32>
    %94 = arith.divf %92, %93 : vector<1x32xf32>
    %95 = vector.broadcast %94 : vector<1x32xf32> to vector<512x32xf32>
    %96 = arith.subf %90, %95 : vector<512x32xf32>
    %97 = arith.mulf %96, %96 : vector<512x32xf32>
    %cst_104 = arith.constant dense<0.000000e+00> : vector<32xf32>
    %98 = vector.multi_reduction <add>, %97, %cst_104 [0] : vector<512x32xf32> to vector<32xf32>
    %99 = vector.shape_cast %98 : vector<32xf32> to vector<1x32xf32>
    %cst_105 = arith.constant 5.120000e+02 : f32
    %100 = vector.broadcast %cst_105 : f32 to vector<1x32xf32>
    %101 = arith.divf %99, %100 : vector<1x32xf32>
    %c0_106 = arith.constant 0 : index
    %c0_107 = arith.constant 0 : index
    %102 = vector.load %arg5[%c0_106, %c0_107] : memref<1x32xf32, #tpu.memory_space<vmem>>, vector<1x32xf32>
    %cst_108 = arith.constant 9.99999974E-6 : f32
    %103 = vector.broadcast %cst_108 : f32 to vector<1x32xf32>
    %104 = arith.addf %101, %103 : vector<1x32xf32>
    %105 = math.rsqrt %104 : vector<1x32xf32>
    %106 = arith.mulf %102, %105 : vector<1x32xf32>
    %c0_109 = arith.constant 0 : index
    %c0_110 = arith.constant 0 : index
    %107 = vector.load %arg6[%c0_109, %c0_110] : memref<1x32xf32, #tpu.memory_space<vmem>>, vector<1x32xf32>
    %108 = arith.mulf %94, %106 : vector<1x32xf32>
    %109 = arith.subf %107, %108 : vector<1x32xf32>
    %110 = vector.broadcast %106 : vector<1x32xf32> to vector<512x32xf32>
    %111 = arith.mulf %90, %110 : vector<512x32xf32>
    %112 = vector.broadcast %109 : vector<1x32xf32> to vector<512x32xf32>
    %113 = arith.addf %111, %112 : vector<512x32xf32>
    %cst_111 = arith.constant 0.000000e+00 : f32
    %114 = vector.broadcast %cst_111 : f32 to vector<512x32xf32>
    %115 = arith.cmpf ogt, %113, %114 : vector<512x32xf32>
    %cst_112 = arith.constant 1.000000e-01 : f32
    %116 = vector.broadcast %cst_112 : f32 to vector<512x32xf32>
    %117 = arith.mulf %116, %113 : vector<512x32xf32>
    %118 = arith.select %115, %113, %117 : vector<512x32xi1>, vector<512x32xf32>
    %119 = arith.addf %118, %1 : vector<512x32xf32>
    %120 = vector.shape_cast %119 : vector<512x32xf32> to vector<2x16x16x32xf32>
    %c0_113 = arith.constant 0 : index
    %c0_114 = arith.constant 0 : index
    %c0_115 = arith.constant 0 : index
    %c0_116 = arith.constant 0 : index
    %121 = vector.load %arg7[%c0_113, %c0_114, %c0_115, %c0_116] : memref<2x16x16x32xf32, #tpu.memory_space<vmem>>, vector<2x16x16x32xf32>
    tpu.vector_store %arg7[%c0_113, %c0_114, %c0_115, %c0_116], %120 {strides = array<i32>} : memref<2x16x16x32xf32, #tpu.memory_space<vmem>>, vector<2x16x16x32xf32>,
    return
  }
}

</mosaic_0001>

<llo_original>
// kernel: residual_block.1
$region0: #{residual_block.1}
  #allocation0 [shape = 'u32[]', space=smem, size = 0x4, offset = 0x4, fixed_abs, tag = 'smem constant byte address 0x4 - core index']
  #allocation1 [shape = 'u32[144,128]{1,0:T(1,128)}', space=vmem, size = 0x12000, scoped, tag = 'internal scratch']
  #allocation2 [shape = 'f32[2,18,32,16]{3,2,1,0:T(8,128)}', space=vmem, size = 0x90000, scoped, tag = 'scratch operand']
  %s0 = inlined_call_operand.hbm [shape: f32[2,16,16,32], index: 0, kind: input, shape index: {}]
  %s1 = inlined_call_operand.vmem [shape: f32[32,16], index: 1, kind: input, shape index: {}]
  %s2 = inlined_call_operand.vmem [shape: f32[1,16], index: 2, kind: input, shape index: {}]
  %s3 = inlined_call_operand.vmem [shape: f32[1,16], index: 3, kind: input, shape index: {}]
  %s4 = inlined_call_operand.hbm [shape: f32[3,3,16,32], index: 4, kind: input, shape index: {}]
  %s5 = inlined_call_operand.vmem [shape: f32[1,32], index: 5, kind: input, shape index: {}]
  %s6 = inlined_call_operand.vmem [shape: f32[1,32], index: 6, kind: input, shape index: {}]
  %s7 = inlined_call_operand.hbm [shape: f32[2,16,16,32], index: 7, kind: output, shape index: {}]
  %s8 = sld [smem:[#allocation0]]
  $region46: #{residual_block.1} parent=0
    _
  %s10 = ssub.s32 1, %s8
  %s11 = scalar_select 0, %s10, %s8
  $region1: #{residual_block.1} parent=0
    #allocation3 [shape = 'u8[262144]{0}', space=vmem, size = 0x40000, scoped, tag = 'input window, operand 0, single buffered']
    #allocation4 [shape = 's32[1]{0}', space=sflag, size = 0x4, scoped, tag = 'scoped memory for residual_block.1']
    #allocation5 [shape = 's32[1]{0}', space=sflag, size = 0x4, scoped, tag = 'scoped memory for residual_block.1']
    #allocation6 [shape = 'u8[73728]{0}', space=vmem, size = 0x12000, scoped, tag = 'input window, operand 4, single buffered']
    #allocation7 [shape = 's32[1]{0}', space=sflag, size = 0x4, scoped, tag = 'scoped memory for residual_block.1']
    #allocation8 [shape = 'u8[262144]{0}', space=vmem, size = 0x40000, scoped, tag = 'output window, operand 0, single buffered']
    %12 = vsyncpa [#allocation4], 0
    %13 = vsyncpa [#allocation7], 0
    %14 = vsyncpa [#allocation5], 0
    // Predicated region
    $region2: #{residual_block.1} parent=1 // pred_check
      _
    $region3: #{residual_block.1} parent=1 // pred_check_branch
      %16 = sbr.rel (0) target = $region5
    $region4: #{residual_block.1} parent=1 // pred_region
      %s18 = ssub.s32 8192, 8192
      %19 = vsyncadd [#allocation4], %s18
      %s20 = sshll.u32 [#allocation3], 4
      %s21 = int_to_ptr.vmem [resolvable:$true] %s20
      %26 = dma.hbm_to_vmem [thread:$0]  %s0, 8192, %s21, [#allocation4], 128, 128, 8
    $region5: #{residual_block.1} parent=1 // pred_fallthru
      _
    // Predicated region
    $region6: #{residual_block.1} parent=1 // pred_check
      _
    $region7: #{residual_block.1} parent=1 // pred_check_branch
      %28 = sbr.rel (0) target = $region9
    $region8: #{residual_block.1} parent=1 // pred_region
      _
    $region9: #{residual_block.1} parent=1 // pred_fallthru
      _
    // Predicated region
    $region10: #{residual_block.1} parent=1 // pred_check
      _
    $region11: #{residual_block.1} parent=1 // pred_check_branch
      %30 = sbr.rel (0) target = $region13
    $region12: #{residual_block.1} parent=1 // pred_region
      _
    $region13: #{residual_block.1} parent=1 // pred_fallthru
      _
    // Predicated region
    $region14: #{residual_block.1} parent=1 // pred_check
      _
    $region15: #{residual_block.1} parent=1 // pred_check_branch
      %32 = sbr.rel (0) target = $region17
    $region16: #{residual_block.1} parent=1 // pred_region
      _
    $region17: #{residual_block.1} parent=1 // pred_fallthru
      _
    // Predicated region
    $region18: #{residual_block.1} parent=1 // pred_check
      _
    $region19: #{residual_block.1} parent=1 // pred_check_branch
      %34 = sbr.rel (0) target = $region21
    $region20: #{residual_block.1} parent=1 // pred_region
      %s36 = ssub.s32 2304, 2304
      %37 = vsyncadd [#allocation7], %s36
      %s38 = sshll.u32 [#allocation6], 4
      %s39 = int_to_ptr.vmem [resolvable:$true] %s38
      %44 = dma.hbm_to_vmem [thread:$0]  %s4, 2304, %s39, [#allocation7], 128, 128, 8
    $region21: #{residual_block.1} parent=1 // pred_fallthru
      _
    // Predicated region
    $region22: #{residual_block.1} parent=1 // pred_check
      _
    $region23: #{residual_block.1} parent=1 // pred_check_branch
      %46 = sbr.rel (0) target = $region25
    $region24: #{residual_block.1} parent=1 // pred_region
      _
    $region25: #{residual_block.1} parent=1 // pred_fallthru
      _
    // Predicated region
    $region26: #{residual_block.1} parent=1 // pred_check
      _
    $region27: #{residual_block.1} parent=1 // pred_check_branch
      %48 = sbr.rel (0) target = $region29
    $region28: #{residual_block.1} parent=1 // pred_region
      _
    $region29: #{residual_block.1} parent=1 // pred_fallthru
      _
    // Predicated region
    $region30: #{residual_block.1} parent=1 // pred_check
      _
    $region31: #{residual_block.1} parent=1 // pred_check_branch
      %50 = sbr.rel (0) target = $region33
    $region32: #{residual_block.1} parent=1 // pred_region
      %51 = dma.done [#allocation4], 8192
    $region33: #{residual_block.1} parent=1 // pred_fallthru
      _
    // Predicated region
    $region34: #{residual_block.1} parent=1 // pred_check
      _
    $region35: #{residual_block.1} parent=1 // pred_check_branch
      %53 = sbr.rel (0) target = $region37
    $region36: #{residual_block.1} parent=1 // pred_region
      %54 = dma.done [#allocation7], 2304
    $region37: #{residual_block.1} parent=1 // pred_fallthru
      _
    %v55 = vld [vmem:[#allocation3] sm:$0xff]
    %v56 = vld [vmem:[#allocation3 + $0x8] sm:$0xff]
    %v57 = vld [vmem:[#allocation3 + $0x10] sm:$0xff]
    %v58 = vld [vmem:[#allocation3 + $0x18] sm:$0xff]
    %v59 = vld [vmem:[#allocation3 + $0x20] sm:$0xff]
    %v60 = vld [vmem:[#allocation3 + $0x28] sm:$0xff]
    %v61 = vld [vmem:[#allocation3 + $0x30] sm:$0xff]
    %v62 = vld [vmem:[#allocation3 + $0x38] sm:$0xff]
    %v63 = vld [vmem:[#allocation3 + $0x40] sm:$0xff]
    %v64 = vld [vmem:[#allocation3 + $0x48] sm:$0xff]
    %v65 = vld [vmem:[#allocation3 + $0x50] sm:$0xff]
    %v66 = vld [vmem:[#allocation3 + $0x58] sm:$0xff]
    %v67 = vld [vmem:[#allocation3 + $0x60] sm:$0xff]
    %v68 = vld [vmem:[#allocation3 + $0x68] sm:$0xff]
    %v69 = vld [vmem:[#allocation3 + $0x70] sm:$0xff]
    %v70 = vld [vmem:[#allocation3 + $0x78] sm:$0xff]
    %v71 = vld [vmem:[#allocation3 + $0x80] sm:$0xff]
    %v72 = vld [vmem:[#allocation3 + $0x88] sm:$0xff]
    %v73 = vld [vmem:[#allocation3 + $0x90] sm:$0xff]
    %v74 = vld [vmem:[#allocation3 + $0x98] sm:$0xff]
    %v75 = vld [vmem:[#allocation3 + $0xa0] sm:$0xff]
    %v76 = vld [vmem:[#allocation3 + $0xa8] sm:$0xff]
    %v77 = vld [vmem:[#allocation3 + $0xb0] sm:$0xff]
    %v78 = vld [vmem:[#allocation3 + $0xb8] sm:$0xff]
    %v79 = vld [vmem:[#allocation3 + $0xc0] sm:$0xff]
    %v80 = vld [vmem:[#allocation3 + $0xc8] sm:$0xff]
    %v81 = vld [vmem:[#allocation3 + $0xd0] sm:$0xff]
    %v82 = vld [vmem:[#allocation3 + $0xd8] sm:$0xff]
    %v83 = vld [vmem:[#allocation3 + $0xe0] sm:$0xff]
    %v84 = vld [vmem:[#allocation3 + $0xe8] sm:$0xff]
    %v85 = vld [vmem:[#allocation3 + $0xf0] sm:$0xff]
    %v86 = vld [vmem:[#allocation3 + $0xf8] sm:$0xff]
    %v87 = vld [vmem:[#allocation3 + $0x100] sm:$0xff]
    %v88 = vld [vmem:[#allocation3 + $0x108] sm:$0xff]
    %v89 = vld [vmem:[#allocation3 + $0x110] sm:$0xff]
    %v90 = vld [vmem:[#allocation3 + $0x118] sm:$0xff]
    %v91 = vld [vmem:[#allocation3 + $0x120] sm:$0xff]
    %v92 = vld [vmem:[#allocation3 + $0x128] sm:$0xff]
    %v93 = vld [vmem:[#allocation3 + $0x130] sm:$0xff]
    %v94 = vld [vmem:[#allocation3 + $0x138] sm:$0xff]
    %v95 = vld [vmem:[#allocation3 + $0x140] sm:$0xff]
    %v96 = vld [vmem:[#allocation3 + $0x148] sm:$0xff]
    %v97 = vld [vmem:[#allocation3 + $0x150] sm:$0xff]
    %v98 = vld [vmem:[#allocation3 + $0x158] sm:$0xff]
    %v99 = vld [vmem:[#allocation3 + $0x160] sm:$0xff]
    %v100 = vld [vmem:[#allocation3 + $0x168] sm:$0xff]
    %v101 = vld [vmem:[#allocation3 + $0x170] sm:$0xff]
    %v102 = vld [vmem:[#allocation3 + $0x178] sm:$0xff]
    %v103 = vld [vmem:[#allocation3 + $0x180] sm:$0xff]
    %v104 = vld [vmem:[#allocation3 + $0x188] sm:$0xff]
    %v105 = vld [vmem:[#allocation3 + $0x190] sm:$0xff]
    %v106 = vld [vmem:[#allocation3 + $0x198] sm:$0xff]
    %v107 = vld [vmem:[#allocation3 + $0x1a0] sm:$0xff]
    %v108 = vld [vmem:[#allocation3 + $0x1a8] sm:$0xff]
    %v109 = vld [vmem:[#allocation3 + $0x1b0] sm:$0xff]
    %v110 = vld [vmem:[#allocation3 + $0x1b8] sm:$0xff]
    %v111 = vld [vmem:[#allocation3 + $0x1c0] sm:$0xff]
    %v112 = vld [vmem:[#allocation3 + $0x1c8] sm:$0xff]
    %v113 = vld [vmem:[#allocation3 + $0x1d0] sm:$0xff]
    %v114 = vld [vmem:[#allocation3 + $0x1d8] sm:$0xff]
    %v115 = vld [vmem:[#allocation3 + $0x1e0] sm:$0xff]
    %v116 = vld [vmem:[#allocation3 + $0x1e8] sm:$0xff]
    %v117 = vld [vmem:[#allocation3 + $0x1f0] sm:$0xff]
    %v118 = vld [vmem:[#allocation3 + $0x1f8] sm:$0xff]
    %v119 = vld [vmem:[%s1] sm:$0xff]
    %v120 = vld [vmem:[%s1 + $0x8] sm:$0xff]
    %v121 = vld [vmem:[%s1 + $0x10] sm:$0xff]
    %v122 = vld [vmem:[%s1 + $0x18] sm:$0xff]
    %vm123 = vcmask 261120
    %v125 = vsel %vm123, %v55, 0
    %v128 = vsel %vm123, %v56, 0
    %v131 = vsel %vm123, %v57, 0
    %v134 = vsel %vm123, %v58, 0
    %v137 = vsel %vm123, %v59, 0
    %v140 = vsel %vm123, %v60, 0
    %v143 = vsel %vm123, %v61, 0
    %v146 = vsel %vm123, %v62, 0
    %v149 = vsel %vm123, %v63, 0
    %v152 = vsel %vm123, %v64, 0
    %v155 = vsel %vm123, %v65, 0
    %v158 = vsel %vm123, %v66, 0
    %v161 = vsel %vm123, %v67, 0
    %v164 = vsel %vm123, %v68, 0
    %v167 = vsel %vm123, %v69, 0
    %v170 = vsel %vm123, %v70, 0
    %v173 = vsel %vm123, %v71, 0
    %v176 = vsel %vm123, %v72, 0
    %v179 = vsel %vm123, %v73, 0
    %v182 = vsel %vm123, %v74, 0
    %v185 = vsel %vm123, %v75, 0
    %v188 = vsel %vm123, %v76, 0
    %v191 = vsel %vm123, %v77, 0
    %v194 = vsel %vm123, %v78, 0
    %v197 = vsel %vm123, %v79, 0
    %v200 = vsel %vm123, %v80, 0
    %v203 = vsel %vm123, %v81, 0
    %v206 = vsel %vm123, %v82, 0
    %v209 = vsel %vm123, %v83, 0
    %v212 = vsel %vm123, %v84, 0
    %v215 = vsel %vm123, %v85, 0
    %v218 = vsel %vm123, %v86, 0
    %v221 = vsel %vm123, %v87, 0
    %v224 = vsel %vm123, %v88, 0
    %v227 = vsel %vm123, %v89, 0
    %v230 = vsel %vm123, %v90, 0
    %v233 = vsel %vm123, %v91, 0
    %v236 = vsel %vm123, %v92, 0
    %v239 = vsel %vm123, %v93, 0
    %v242 = vsel %vm123, %v94, 0
    %v245 = vsel %vm123, %v95, 0
    %v248 = vsel %vm123, %v96, 0
    %v251 = vsel %vm123, %v97, 0
    %v254 = vsel %vm123, %v98, 0
    %v257 = vsel %vm123, %v99, 0
    %v260 = vsel %vm123, %v100, 0
    %v263 = vsel %vm123, %v101, 0
    %v266 = vsel %vm123, %v102, 0
    %v269 = vsel %vm123, %v103, 0
    %v272 = vsel %vm123, %v104, 0
    %v275 = vsel %vm123, %v105, 0
    %v278 = vsel %vm123, %v106, 0
    %v281 = vsel %vm123, %v107, 0
    %v284 = vsel %vm123, %v108, 0
    %v287 = vsel %vm123, %v109, 0
    %v290 = vsel %vm123, %v110, 0
    %v293 = vsel %vm123, %v111, 0
    %v296 = vsel %vm123, %v112, 0
    %v299 = vsel %vm123, %v113, 0
    %v302 = vsel %vm123, %v114, 0
    %v305 = vsel %vm123, %v115, 0
    %v308 = vsel %vm123, %v116, 0
    %v311 = vsel %vm123, %v117, 0
    %v314 = vsel %vm123, %v118, 0
    %316 = vmatprep.subr.mxu0 0.0
    %317 = vmatpush1.msra.mxu0 %v119
    %318 = vmatprep.subr.mxu0 0.0
    %319 = vmatpush1.msra.mxu0 %v120
    %320 = vmatprep.subr.mxu0 0.0
    %321 = vmatpush1.msra.mxu0 %v121
    %322 = vmatprep.subr.mxu0 0.0
    %323 = vmatpush1.msra.mxu0 %v122
    %324 = vmatprep.subr.mxu0 0.0
    %325 = vmatpush1.msra.mxu0 0.0
    %326 = vmatprep.subr.mxu0 0.0
    %327 = vmatpush1.msra.mxu0 0.0
    %328 = vmatprep.subr.mxu0 0.0
    %329 = vmatpush1.msra.mxu0 0.0
    %330 = vmatprep.subr.mxu0 0.0
    %331 = vmatpush1.msra.mxu0 0.0
    %332 = vmatprep.subr.mxu0 0.0
    %333 = vmatpush1.msra.mxu0 0.0
    %334 = vmatprep.subr.mxu0 0.0
    %335 = vmatpush1.msra.mxu0 0.0
    %336 = vmatprep.subr.mxu0 0.0
    %337 = vmatpush1.msra.mxu0 0.0
    %338 = vmatprep.subr.mxu0 0.0
    %339 = vmatpush1.msra.mxu0 0.0
    %340 = vmatprep.subr.mxu0 0.0
    %341 = vmatpush1.msra.mxu0 0.0
    %342 = vmatprep.subr.mxu0 0.0
    %343 = vmatpush1.msra.mxu0 0.0
    %344 = vmatprep.subr.mxu0 0.0
    %345 = vmatpush1.msra.mxu0 0.0
    %346 = vmatprep.subr.mxu0 0.0
    %347 = vmatpush1.msra.mxu0 0.0
    %348 = vmatprep.subr.mxu0 0.0
    %349 = vmatpush1.msra.mxu0 0.0
    %350 = vmatprep.subr.mxu0 0.0
    %351 = vmatpush1.msra.mxu0 0.0
    %352 = vmatprep.subr.mxu0 0.0
    %353 = vmatpush1.msra.mxu0 0.0
    %354 = vmatprep.subr.mxu0 0.0
    %355 = vmatpush1.msra.mxu0 0.0
    %356 = vmatprep.subr.mxu0 0.0
    %357 = vmatpush1.msra.mxu0 0.0
    %358 = vmatprep.subr.mxu0 0.0
    %359 = vmatpush1.msra.mxu0 0.0
    %360 = vmatprep.subr.mxu0 0.0
    %361 = vmatpush1.msra.mxu0 0.0
    %362 = vmatprep.subr.mxu0 0.0
    %363 = vmatpush1.msra.mxu0 0.0
    %364 = vmatprep.subr.mxu0 0.0
    %365 = vmatpush1.msra.mxu0 0.0
    %366 = vmatprep.subr.mxu0 0.0
    %367 = vmatpush1.msra.mxu0 0.0
    %368 = vmatprep.subr.mxu0 0.0
    %369 = vmatpush1.msra.mxu0 0.0
    %370 = vmatprep.subr.mxu0 0.0
    %371 = vmatpush1.msra.mxu0 0.0
    %372 = vmatprep.subr.mxu0 0.0
    %373 = vmatpush1.msra.mxu0 0.0
    %374 = vmatprep.subr.mxu0 0.0
    %375 = vmatpush1.msra.mxu0 0.0
    %376 = vmatprep.subr.mxu0 0.0
    %377 = vmatpush1.msra.mxu0 0.0
    %378 = vmatprep.subr.mxu0 0.0
    %379 = vmatpush1.msra.mxu0 0.0
    %380 = vmatprep.mubr.f32.mxu0 0.0
    %381 = vmatmul.mubr.f32.gmra.mrb[0].mxu0 %v125
    %v382 = vpop.f32.mrb[0].mxu0
    %v383 = vadd.f32 0.0, %v382
    %v384 = vpop.f32.mrb[0].mxu0
    %385 = vmatprep.mubr.f32.mxu0 0.0
    %386 = vmatmul.mubr.f32.gmra.mrb[0].mxu0 %v128
    %v387 = vpop.f32.mrb[0].mxu0
    %v388 = vadd.f32 0.0, %v387
    %v389 = vpop.f32.mrb[0].mxu0
    %390 = vmatprep.mubr.f32.mxu0 0.0
    %391 = vmatmul.mubr.f32.gmra.mrb[0].mxu0 %v131
    %v392 = vpop.f32.mrb[0].mxu0
    %v393 = vadd.f32 0.0, %v392
    %v394 = vpop.f32.mrb[0].mxu0
    %395 = vmatprep.mubr.f32.mxu0 0.0
    %396 = vmatmul.mubr.f32.gmra.mrb[0].mxu0 %v134
    %v397 = vpop.f32.mrb[0].mxu0
    %v398 = vadd.f32 0.0, %v397
    %v399 = vpop.f32.mrb[0].mxu0
    %400 = vmatprep.mubr.f32.mxu0 0.0
    %401 = vmatmul.mubr.f32.gmra.mrb[0].mxu0 %v137
    %v402 = vpop.f32.mrb[0].mxu0
    %v403 = vadd.f32 0.0, %v402
    %v404 = vpop.f32.mrb[0].mxu0
    %405 = vmatprep.mubr.f32.mxu0 0.0
    %406 = vmatmul.mubr.f32.gmra.mrb[0].mxu0 %v140
    %v407 = vpop.f32.mrb[0].mxu0
    %v408 = vadd.f32 0.0, %v407
    %v409 = vpop.f32.mrb[0].mxu0
    %410 = vmatprep.mubr.f32.mxu0 0.0
    %411 = vmatmul.mubr.f32.gmra.mrb[0].mxu0 %v143
    %v412 = vpop.f32.mrb[0].mxu0
    %v413 = vadd.f32 0.0, %v412
    %v414 = vpop.f32.mrb[0].mxu0
    %415 = vmatprep.mubr.f32.mxu0 0.0
    %416 = vmatmul.mubr.f32.gmra.mrb[0].mxu0 %v146
    %v417 = vpop.f32.mrb[0].mxu0
    %v418 = vadd.f32 0.0, %v417
    %v419 = vpop.f32.mrb[0].mxu0
    %420 = vmatprep.mubr.f32.mxu0 0.0
    %421 = vmatmul.mubr.f32.gmra.mrb[0].mxu0 %v149
    %v422 = vpop.f32.mrb[0].mxu0
    %v423 = vadd.f32 0.0, %v422
    %v424 = vpop.f32.mrb[0].mxu0
    %425 = vmatprep.mubr.f32.mxu0 0.0
    %426 = vmatmul.mubr.f32.gmra.mrb[0].mxu0 %v152
    %v427 = vpop.f32.mrb[0].mxu0
    %v428 = vadd.f32 0.0, %v427
    %v429 = vpop.f32.mrb[0].mxu0
    %430 = vmatprep.mubr.f32.mxu0 0.0
    %431 = vmatmul.mubr.f32.gmra.mrb[0].mxu0 %v155
    %v432 = vpop.f32.mrb[0].mxu0
    %v433 = vadd.f32 0.0, %v432
    %v434 = vpop.f32.mrb[0].mxu0
    %435 = vmatprep.mubr.f32.mxu0 0.0
    %436 = vmatmul.mubr.f32.gmra.mrb[0].mxu0 %v158
    %v437 = vpop.f32.mrb[0].mxu0
    %v438 = vadd.f32 0.0, %v437
    %v439 = vpop.f32.mrb[0].mxu0
    %440 = vmatprep.mubr.f32.mxu0 0.0
    %441 = vmatmul.mubr.f32.gmra.mrb[0].mxu0 %v161
    %v442 = vpop.f32.mrb[0].mxu0
    %v443 = vadd.f32 0.0, %v442
    %v444 = vpop.f32.mrb[0].mxu0
    %445 = vmatprep.mubr.f32.mxu0 0.0
    %446 = vmatmul.mubr.f32.gmra.mrb[0].mxu0 %v164
    %v447 = vpop.f32.mrb[0].mxu0
    %v448 = vadd.f32 0.0, %v447
    %v449 = vpop.f32.mrb[0].mxu0
    %450 = vmatprep.mubr.f32.mxu0 0.0
    %451 = vmatmul.mubr.f32.gmra.mrb[0].mxu0 %v167
    %v452 = vpop.f32.mrb[0].mxu0
    %v453 = vadd.f32 0.0, %v452
    %v454 = vpop.f32.mrb[0].mxu0
    %455 = vmatprep.mubr.f32.mxu0 0.0
    %456 = vmatmul.mubr.f32.gmra.mrb[0].mxu0 %v170
    %v457 = vpop.f32.mrb[0].mxu0
    %v458 = vadd.f32 0.0, %v457
    %v459 = vpop.f32.mrb[0].mxu0
    %460 = vmatprep.mubr.f32.mxu0 0.0
    %461 = vmatmul.mubr.f32.gmra.mrb[0].mxu0 %v173
    %v462 = vpop.f32.mrb[0].mxu0
    %v463 = vadd.f32 0.0, %v462
    %v464 = vpop.f32.mrb[0].mxu0
    %465 = vmatprep.mubr.f32.mxu0 0.0
    %466 = vmatmul.mubr.f32.gmra.mrb[0].mxu0 %v176
    %v467 = vpop.f32.mrb[0].mxu0
    %v468 = vadd.f32 0.0, %v467
    %v469 = vpop.f32.mrb[0].mxu0
    %470 = vmatprep.mubr.f32.mxu0 0.0
    %471 = vmatmul.mubr.f32.gmra.mrb[0].mxu0 %v179
    %v472 = vpop.f32.mrb[0].mxu0
    %v473 = vadd.f32 0.0, %v472
    %v474 = vpop.f32.mrb[0].mxu0
    %475 = vmatprep.mubr.f32.mxu0 0.0
    %476 = vmatmul.mubr.f32.gmra.mrb[0].mxu0 %v182
    %v477 = vpop.f32.mrb[0].mxu0
    %v478 = vadd.f32 0.0, %v477
    %v479 = vpop.f32.mrb[0].mxu0
    %480 = vmatprep.mubr.f32.mxu0 0.0
    %481 = vmatmul.mubr.f32.gmra.mrb[0].mxu0 %v185
    %v482 = vpop.f32.mrb[0].mxu0
    %v483 = vadd.f32 0.0, %v482
    %v484 = vpop.f32.mrb[0].mxu0
    %485 = vmatprep.mubr.f32.mxu0 0.0
    %486 = vmatmul.mubr.f32.gmra.mrb[0].mxu0 %v188
    %v487 = vpop.f32.mrb[0].mxu0
    %v488 = vadd.f32 0.0, %v487
    %v489 = vpop.f32.mrb[0].mxu0
    %490 = vmatprep.mubr.f32.mxu0 0.0
    %491 = vmatmul.mubr.f32.gmra.mrb[0].mxu0 %v191
    %v492 = vpop.f32.mrb[0].mxu0
    %v493 = vadd.f32 0.0, %v492
    %v494 = vpop.f32.mrb[0].mxu0
    %495 = vmatprep.mubr.f32.mxu0 0.0
    %496 = vmatmul.mubr.f32.gmra.mrb[0].mxu0 %v194
    %v497 = vpop.f32.mrb[0].mxu0
    %v498 = vadd.f32 0.0, %v497
    %v499 = vpop.f32.mrb[0].mxu0
    %500 = vmatprep.mubr.f32.mxu0 0.0
    %501 = vmatmul.mubr.f32.gmra.mrb[0].mxu0 %v197
    %v502 = vpop.f32.mrb[0].mxu0
    %v503 = vadd.f32 0.0, %v502
    %v504 = vpop.f32.mrb[0].mxu0
    %505 = vmatprep.mubr.f32.mxu0 0.0
    %506 = vmatmul.mubr.f32.gmra.mrb[0].mxu0 %v200
    %v507 = vpop.f32.mrb[0].mxu0
    %v508 = vadd.f32 0.0, %v507
    %v509 = vpop.f32.mrb[0].mxu0
    %510 = vmatprep.mubr.f32.mxu0 0.0
    %511 = vmatmul.mubr.f32.gmra.mrb[0].mxu0 %v203
    %v512 = vpop.f32.mrb[0].mxu0
    %v513 = vadd.f32 0.0, %v512
    %v514 = vpop.f32.mrb[0].mxu0
    %515 = vmatprep.mubr.f32.mxu0 0.0
    %516 = vmatmul.mubr.f32.gmra.mrb[0].mxu0 %v206
    %v517 = vpop.f32.mrb[0].mxu0
    %v518 = vadd.f32 0.0, %v517
    %v519 = vpop.f32.mrb[0].mxu0
    %520 = vmatprep.mubr.f32.mxu0 0.0
    %521 = vmatmul.mubr.f32.gmra.mrb[0].mxu0 %v209
    %v522 = vpop.f32.mrb[0].mxu0
    %v523 = vadd.f32 0.0, %v522
    %v524 = vpop.f32.mrb[0].mxu0
    %525 = vmatprep.mubr.f32.mxu0 0.0
    %526 = vmatmul.mubr.f32.gmra.mrb[0].mxu0 %v212
    %v527 = vpop.f32.mrb[0].mxu0
    %v528 = vadd.f32 0.0, %v527
    %v529 = vpop.f32.mrb[0].mxu0
    %530 = vmatprep.mubr.f32.mxu0 0.0
    %531 = vmatmul.mubr.f32.gmra.mrb[0].mxu0 %v215
    %v532 = vpop.f32.mrb[0].mxu0
    %v533 = vadd.f32 0.0, %v532
    %v534 = vpop.f32.mrb[0].mxu0
    %535 = vmatprep.mubr.f32.mxu0 0.0
    %536 = vmatmul.mubr.f32.gmra.mrb[0].mxu0 %v218
    %v537 = vpop.f32.mrb[0].mxu0
    %v538 = vadd.f32 0.0, %v537
    %v539 = vpop.f32.mrb[0].mxu0
    %540 = vmatprep.mubr.f32.mxu0 0.0
    %541 = vmatmul.mubr.f32.gmra.mrb[0].mxu0 %v221
    %v542 = vpop.f32.mrb[0].mxu0
    %v543 = vadd.f32 0.0, %v542
    %v544 = vpop.f32.mrb[0].mxu0
    %545 = vmatprep.mubr.f32.mxu0 0.0
    %546 = vmatmul.mubr.f32.gmra.mrb[0].mxu0 %v224
    %v547 = vpop.f32.mrb[0].mxu0
    %v548 = vadd.f32 0.0, %v547
    %v549 = vpop.f32.mrb[0].mxu0
    %550 = vmatprep.mubr.f32.mxu0 0.0
    %551 = vmatmul.mubr.f32.gmra.mrb[0].mxu0 %v227
    %v552 = vpop.f32.mrb[0].mxu0
    %v553 = vadd.f32 0.0, %v552
    %v554 = vpop.f32.mrb[0].mxu0
    %555 = vmatprep.mubr.f32.mxu0 0.0
    %556 = vmatmul.mubr.f32.gmra.mrb[0].mxu0 %v230
    %v557 = vpop.f32.mrb[0].mxu0
    %v558 = vadd.f32 0.0, %v557
    %v559 = vpop.f32.mrb[0].mxu0
    %560 = vmatprep.mubr.f32.mxu0 0.0
    %561 = vmatmul.mubr.f32.gmra.mrb[0].mxu0 %v233
    %v562 = vpop.f32.mrb[0].mxu0
    %v563 = vadd.f32 0.0, %v562
    %v564 = vpop.f32.mrb[0].mxu0
    %565 = vmatprep.mubr.f32.mxu0 0.0
    %566 = vmatmul.mubr.f32.gmra.mrb[0].mxu0 %v236
    %v567 = vpop.f32.mrb[0].mxu0
    %v568 = vadd.f32 0.0, %v567
    %v569 = vpop.f32.mrb[0].mxu0
    %570 = vmatprep.mubr.f32.mxu0 0.0
    %571 = vmatmul.mubr.f32.gmra.mrb[0].mxu0 %v239
    %v572 = vpop.f32.mrb[0].mxu0
    %v573 = vadd.f32 0.0, %v572
    %v574 = vpop.f32.mrb[0].mxu0
    %575 = vmatprep.mubr.f32.mxu0 0.0
    %576 = vmatmul.mubr.f32.gmra.mrb[0].mxu0 %v242
    %v577 = vpop.f32.mrb[0].mxu0
    %v578 = vadd.f32 0.0, %v577
    %v579 = vpop.f32.mrb[0].mxu0
    %580 = vmatprep.mubr.f32.mxu0 0.0
    %581 = vmatmul.mubr.f32.gmra.mrb[0].mxu0 %v245
    %v582 = vpop.f32.mrb[0].mxu0
    %v583 = vadd.f32 0.0, %v582
    %v584 = vpop.f32.mrb[0].mxu0
    %585 = vmatprep.mubr.f32.mxu0 0.0
    %586 = vmatmul.mubr.f32.gmra.mrb[0].mxu0 %v248
    %v587 = vpop.f32.mrb[0].mxu0
    %v588 = vadd.f32 0.0, %v587
    %v589 = vpop.f32.mrb[0].mxu0
    %590 = vmatprep.mubr.f32.mxu0 0.0
    %591 = vmatmul.mubr.f32.gmra.mrb[0].mxu0 %v251
    %v592 = vpop.f32.mrb[0].mxu0
    %v593 = vadd.f32 0.0, %v592
    %v594 = vpop.f32.mrb[0].mxu0
    %595 = vmatprep.mubr.f32.mxu0 0.0
    %596 = vmatmul.mubr.f32.gmra.mrb[0].mxu0 %v254
    %v597 = vpop.f32.mrb[0].mxu0
    %v598 = vadd.f32 0.0, %v597
    %v599 = vpop.f32.mrb[0].mxu0
    %600 = vmatprep.mubr.f32.mxu0 0.0
    %601 = vmatmul.mubr.f32.gmra.mrb[0].mxu0 %v257
    %v602 = vpop.f32.mrb[0].mxu0
    %v603 = vadd.f32 0.0, %v602
    %v604 = vpop.f32.mrb[0].mxu0
    %605 = vmatprep.mubr.f32.mxu0 0.0
    %606 = vmatmul.mubr.f32.gmra.mrb[0].mxu0 %v260
    %v607 = vpop.f32.mrb[0].mxu0
    %v608 = vadd.f32 0.0, %v607
    %v609 = vpop.f32.mrb[0].mxu0
    %610 = vmatprep.mubr.f32.mxu0 0.0
    %611 = vmatmul.mubr.f32.gmra.mrb[0].mxu0 %v263
    %v612 = vpop.f32.mrb[0].mxu0
    %v613 = vadd.f32 0.0, %v612
    %v614 = vpop.f32.mrb[0].mxu0
    %615 = vmatprep.mubr.f32.mxu0 0.0
    %616 = vmatmul.mubr.f32.gmra.mrb[0].mxu0 %v266
    %v617 = vpop.f32.mrb[0].mxu0
    %v618 = vadd.f32 0.0, %v617
    %v619 = vpop.f32.mrb[0].mxu0
    %620 = vmatprep.mubr.f32.mxu0 0.0
    %621 = vmatmul.mubr.f32.gmra.mrb[0].mxu0 %v269
    %v622 = vpop.f32.mrb[0].mxu0
    %v623 = vadd.f32 0.0, %v622
    %v624 = vpop.f32.mrb[0].mxu0
    %625 = vmatprep.mubr.f32.mxu0 0.0
    %626 = vmatmul.mubr.f32.gmra.mrb[0].mxu0 %v272
    %v627 = vpop.f32.mrb[0].mxu0
    %v628 = vadd.f32 0.0, %v627
    %v629 = vpop.f32.mrb[0].mxu0
    %630 = vmatprep.mubr.f32.mxu0 0.0
    %631 = vmatmul.mubr.f32.gmra.mrb[0].mxu0 %v275
    %v632 = vpop.f32.mrb[0].mxu0
    %v633 = vadd.f32 0.0, %v632
    %v634 = vpop.f32.mrb[0].mxu0
    %635 = vmatprep.mubr.f32.mxu0 0.0
    %636 = vmatmul.mubr.f32.gmra.mrb[0].mxu0 %v278
    %v637 = vpop.f32.mrb[0].mxu0
    %v638 = vadd.f32 0.0, %v637
    %v639 = vpop.f32.mrb[0].mxu0
    %640 = vmatprep.mubr.f32.mxu0 0.0
    %641 = vmatmul.mubr.f32.gmra.mrb[0].mxu0 %v281
    %v642 = vpop.f32.mrb[0].mxu0
    %v643 = vadd.f32 0.0, %v642
    %v644 = vpop.f32.mrb[0].mxu0
    %645 = vmatprep.mubr.f32.mxu0 0.0
    %646 = vmatmul.mubr.f32.gmra.mrb[0].mxu0 %v284
    %v647 = vpop.f32.mrb[0].mxu0
    %v648 = vadd.f32 0.0, %v647
    %v649 = vpop.f32.mrb[0].mxu0
    %650 = vmatprep.mubr.f32.mxu0 0.0
    %651 = vmatmul.mubr.f32.gmra.mrb[0].mxu0 %v287
    %v652 = vpop.f32.mrb[0].mxu0
    %v653 = vadd.f32 0.0, %v652
    %v654 = vpop.f32.mrb[0].mxu0
    %655 = vmatprep.mubr.f32.mxu0 0.0
    %656 = vmatmul.mubr.f32.gmra.mrb[0].mxu0 %v290
    %v657 = vpop.f32.mrb[0].mxu0
    %v658 = vadd.f32 0.0, %v657
    %v659 = vpop.f32.mrb[0].mxu0
    %660 = vmatprep.mubr.f32.mxu0 0.0
    %661 = vmatmul.mubr.f32.gmra.mrb[0].mxu0 %v293
    %v662 = vpop.f32.mrb[0].mxu0
    %v663 = vadd.f32 0.0, %v662
    %v664 = vpop.f32.mrb[0].mxu0
    %665 = vmatprep.mubr.f32.mxu0 0.0
    %666 = vmatmul.mubr.f32.gmra.mrb[0].mxu0 %v296
    %v667 = vpop.f32.mrb[0].mxu0
    %v668 = vadd.f32 0.0, %v667
    %v669 = vpop.f32.mrb[0].mxu0
    %670 = vmatprep.mubr.f32.mxu0 0.0
    %671 = vmatmul.mubr.f32.gmra.mrb[0].mxu0 %v299
    %v672 = vpop.f32.mrb[0].mxu0
    %v673 = vadd.f32 0.0, %v672
    %v674 = vpop.f32.mrb[0].mxu0
    %675 = vmatprep.mubr.f32.mxu0 0.0
    %676 = vmatmul.mubr.f32.gmra.mrb[0].mxu0 %v302
    %v677 = vpop.f32.mrb[0].mxu0
    %v678 = vadd.f32 0.0, %v677
    %v679 = vpop.f32.mrb[0].mxu0
    %680 = vmatprep.mubr.f32.mxu0 0.0
    %681 = vmatmul.mubr.f32.gmra.mrb[0].mxu0 %v305
    %v682 = vpop.f32.mrb[0].mxu0
    %v683 = vadd.f32 0.0, %v682
    %v684 = vpop.f32.mrb[0].mxu0
    %685 = vmatprep.mubr.f32.mxu0 0.0
    %686 = vmatmul.mubr.f32.gmra.mrb[0].mxu0 %v308
    %v687 = vpop.f32.mrb[0].mxu0
    %v688 = vadd.f32 0.0, %v687
    %v689 = vpop.f32.mrb[0].mxu0
    %690 = vmatprep.mubr.f32.mxu0 0.0
    %691 = vmatmul.mubr.f32.gmra.mrb[0].mxu0 %v311
    %v692 = vpop.f32.mrb[0].mxu0
    %v693 = vadd.f32 0.0, %v692
    %v694 = vpop.f32.mrb[0].mxu0
    %695 = vmatprep.mubr.f32.mxu0 0.0
    %696 = vmatmul.mubr.f32.gmra.mrb[0].mxu0 %v314
    %v697 = vpop.f32.mrb[0].mxu0
    %v698 = vadd.f32 0.0, %v697
    %v699 = vpop.f32.mrb[0].mxu0
    %700 = vdwg.mxu0
    %vm701 = vcmask 130048
    %v702 = vsel %vm701, %v383, 0.0
    %v703 = vsel %vm701, %v388, 0.0
    %v704 = vadd.f32 %v702, %v703
    %v705 = vsel %vm701, %v393, 0.0
    %v706 = vadd.f32 %v704, %v705
    %v707 = vsel %vm701, %v398, 0.0
    %v708 = vadd.f32 %v706, %v707
    %v709 = vsel %vm701, %v403, 0.0
    %v710 = vadd.f32 %v708, %v709
    %v711 = vsel %vm701, %v408, 0.0
    %v712 = vadd.f32 %v710, %v711
    %v713 = vsel %vm701, %v413, 0.0
    %v714 = vadd.f32 %v712, %v713
    %v715 = vsel %vm701, %v418, 0.0
    %v716 = vadd.f32 %v714, %v715
    %v717 = vsel %vm701, %v423, 0.0
    %v718 = vadd.f32 %v716, %v717
    %v719 = vsel %vm701, %v428, 0.0
    %v720 = vadd.f32 %v718, %v719
    %v721 = vsel %vm701, %v433, 0.0
    %v722 = vadd.f32 %v720, %v721
    %v723 = vsel %vm701, %v438, 0.0
    %v724 = vadd.f32 %v722, %v723
    %v725 = vsel %vm701, %v443, 0.0
    %v726 = vadd.f32 %v724, %v725
    %v727 = vsel %vm701, %v448, 0.0
    %v728 = vadd.f32 %v726, %v727
    %v729 = vsel %vm701, %v453, 0.0
    %v730 = vadd.f32 %v728, %v729
    %v731 = vsel %vm701, %v458, 0.0
    %v732 = vadd.f32 %v730, %v731
    %v733 = vsel %vm701, %v463, 0.0
    %v734 = vadd.f32 %v732, %v733
    %v735 = vsel %vm701, %v468, 0.0
    %v736 = vadd.f32 %v734, %v735
    %v737 = vsel %vm701, %v473, 0.0
    %v738 = vadd.f32 %v736, %v737
    %v739 = vsel %vm701, %v478, 0.0
    %v740 = vadd.f32 %v738, %v739
    %v741 = vsel %vm701, %v483, 0.0
    %v742 = vadd.f32 %v740, %v741
    %v743 = vsel %vm701, %v488, 0.0
    %v744 = vadd.f32 %v742, %v743
    %v745 = vsel %vm701, %v493, 0.0
    %v746 = vadd.f32 %v744, %v745
    %v747 = vsel %vm701, %v498, 0.0
    %v748 = vadd.f32 %v746, %v747
    %v749 = vsel %vm701, %v503, 0.0
    %v750 = vadd.f32 %v748, %v749
    %v751 = vsel %vm701, %v508, 0.0
    %v752 = vadd.f32 %v750, %v751
    %v753 = vsel %vm701, %v513, 0.0
    %v754 = vadd.f32 %v752, %v753
    %v755 = vsel %vm701, %v518, 0.0
    %v756 = vadd.f32 %v754, %v755
    %v757 = vsel %vm701, %v523, 0.0
    %v758 = vadd.f32 %v756, %v757
    %v759 = vsel %vm701, %v528, 0.0
    %v760 = vadd.f32 %v758, %v759
    %v761 = vsel %vm701, %v533, 0.0
    %v762 = vadd.f32 %v760, %v761
    %v763 = vsel %vm701, %v538, 0.0
    %v764 = vadd.f32 %v762, %v763
    %v765 = vsel %vm701, %v543, 0.0
    %v766 = vadd.f32 %v764, %v765
    %v767 = vsel %vm701, %v548, 0.0
    %v768 = vadd.f32 %v766, %v767
    %v769 = vsel %vm701, %v553, 0.0
    %v770 = vadd.f32 %v768, %v769
    %v771 = vsel %vm701, %v558, 0.0
    %v772 = vadd.f32 %v770, %v771
    %v773 = vsel %vm701, %v563, 0.0
    %v774 = vadd.f32 %v772, %v773
    %v775 = vsel %vm701, %v568, 0.0
    %v776 = vadd.f32 %v774, %v775
    %v777 = vsel %vm701, %v573, 0.0
    %v778 = vadd.f32 %v776, %v777
    %v779 = vsel %vm701, %v578, 0.0
    %v780 = vadd.f32 %v778, %v779
    %v781 = vsel %vm701, %v583, 0.0
    %v782 = vadd.f32 %v780, %v781
    %v783 = vsel %vm701, %v588, 0.0
    %v784 = vadd.f32 %v782, %v783
    %v785 = vsel %vm701, %v593, 0.0
    %v786 = vadd.f32 %v784, %v785
    %v787 = vsel %vm701, %v598, 0.0
    %v788 = vadd.f32 %v786, %v787
    %v789 = vsel %vm701, %v603, 0.0
    %v790 = vadd.f32 %v788, %v789
    %v791 = vsel %vm701, %v608, 0.0
    %v792 = vadd.f32 %v790, %v791
    %v793 = vsel %vm701, %v613, 0.0
    %v794 = vadd.f32 %v792, %v793
    %v795 = vsel %vm701, %v618, 0.0
    %v796 = vadd.f32 %v794, %v795
    %v797 = vsel %vm701, %v623, 0.0
    %v798 = vadd.f32 %v796, %v797
    %v799 = vsel %vm701, %v628, 0.0
    %v800 = vadd.f32 %v798, %v799
    %v801 = vsel %vm701, %v633, 0.0
    %v802 = vadd.f32 %v800, %v801
    %v803 = vsel %vm701, %v638, 0.0
    %v804 = vadd.f32 %v802, %v803
    %v805 = vsel %vm701, %v643, 0.0
    %v806 = vadd.f32 %v804, %v805
    %v807 = vsel %vm701, %v648, 0.0
    %v808 = vadd.f32 %v806, %v807
    %v809 = vsel %vm701, %v653, 0.0
    %v810 = vadd.f32 %v808, %v809
    %v811 = vsel %vm701, %v658, 0.0
    %v812 = vadd.f32 %v810, %v811
    %v813 = vsel %vm701, %v663, 0.0
    %v814 = vadd.f32 %v812, %v813
    %v815 = vsel %vm701, %v668, 0.0
    %v816 = vadd.f32 %v814, %v815
    %v817 = vsel %vm701, %v673, 0.0
    %v818 = vadd.f32 %v816, %v817
    %v819 = vsel %vm701, %v678, 0.0
    %v820 = vadd.f32 %v818, %v819
    %v821 = vsel %vm701, %v683, 0.0
    %v822 = vadd.f32 %v820, %v821
    %v823 = vsel %vm701, %v688, 0.0
    %v824 = vadd.f32 %v822, %v823
    %v825 = vsel %vm701, %v693, 0.0
    %v826 = vadd.f32 %v824, %v825
    %v827 = vsel %vm701, %v698, 0.0
    %v828 = vadd.f32 %v826, %v827
    %v829 = vrot.slane %v828, 4
    %v830 = vadd.f32 %v828, %v829
    %v831 = vrot.slane %v830, 2
    %v832 = vadd.f32 %v830, %v831
    %v833 = vrot.slane %v832, 1
    %v834 = vadd.f32 %v832, %v833
    %v835 = vrcp.pop 512.0
    %v836 = vmul.f32 %v834, %v835
    %v837 = vsub.f32 %v383, %v836
    %v838 = vsub.f32 %v388, %v836
    %v839 = vsub.f32 %v393, %v836
    %v840 = vsub.f32 %v398, %v836
    %v841 = vsub.f32 %v403, %v836
    %v842 = vsub.f32 %v408, %v836
    %v843 = vsub.f32 %v413, %v836
    %v844 = vsub.f32 %v418, %v836
    %v845 = vsub.f32 %v423, %v836
    %v846 = vsub.f32 %v428, %v836
    %v847 = vsub.f32 %v433, %v836
    %v848 = vsub.f32 %v438, %v836
    %v849 = vsub.f32 %v443, %v836
    %v850 = vsub.f32 %v448, %v836
    %v851 = vsub.f32 %v453, %v836
    %v852 = vsub.f32 %v458, %v836
    %v853 = vsub.f32 %v463, %v836
    %v854 = vsub.f32 %v468, %v836
    %v855 = vsub.f32 %v473, %v836
    %v856 = vsub.f32 %v478, %v836
    %v857 = vsub.f32 %v483, %v836
    %v858 = vsub.f32 %v488, %v836
    %v859 = vsub.f32 %v493, %v836
    %v860 = vsub.f32 %v498, %v836
    %v861 = vsub.f32 %v503, %v836
    %v862 = vsub.f32 %v508, %v836
    %v863 = vsub.f32 %v513, %v836
    %v864 = vsub.f32 %v518, %v836
    %v865 = vsub.f32 %v523, %v836
    %v866 = vsub.f32 %v528, %v836
    %v867 = vsub.f32 %v533, %v836
    %v868 = vsub.f32 %v538, %v836
    %v869 = vsub.f32 %v543, %v836
    %v870 = vsub.f32 %v548, %v836
    %v871 = vsub.f32 %v553, %v836
    %v872 = vsub.f32 %v558, %v836
    %v873 = vsub.f32 %v563, %v836
    %v874 = vsub.f32 %v568, %v836
    %v875 = vsub.f32 %v573, %v836
    %v876 = vsub.f32 %v578, %v836
    %v877 = vsub.f32 %v583, %v836
    %v878 = vsub.f32 %v588, %v836
    %v879 = vsub.f32 %v593, %v836
    %v880 = vsub.f32 %v598, %v836
    %v881 = vsub.f32 %v603, %v836
    %v882 = vsub.f32 %v608, %v836
    %v883 = vsub.f32 %v613, %v836
    %v884 = vsub.f32 %v618, %v836
    %v885 = vsub.f32 %v623, %v836
    %v886 = vsub.f32 %v628, %v836
    %v887 = vsub.f32 %v633, %v836
    %v888 = vsub.f32 %v638, %v836
    %v889 = vsub.f32 %v643, %v836
    %v890 = vsub.f32 %v648, %v836
    %v891 = vsub.f32 %v653, %v836
    %v892 = vsub.f32 %v658, %v836
    %v893 = vsub.f32 %v663, %v836
    %v894 = vsub.f32 %v668, %v836
    %v895 = vsub.f32 %v673, %v836
    %v896 = vsub.f32 %v678, %v836
    %v897 = vsub.f32 %v683, %v836
    %v898 = vsub.f32 %v688, %v836
    %v899 = vsub.f32 %v693, %v836
    %v900 = vsub.f32 %v698, %v836
    %v901 = vmul.f32 %v837, %v837
    %v902 = vmul.f32 %v838, %v838
    %v903 = vmul.f32 %v839, %v839
    %v904 = vmul.f32 %v840, %v840
    %v905 = vmul.f32 %v841, %v841
    %v906 = vmul.f32 %v842, %v842
    %v907 = vmul.f32 %v843, %v843
    %v908 = vmul.f32 %v844, %v844
    %v909 = vmul.f32 %v845, %v845
    %v910 = vmul.f32 %v846, %v846
    %v911 = vmul.f32 %v847, %v847
    %v912 = vmul.f32 %v848, %v848
    %v913 = vmul.f32 %v849, %v849
    %v914 = vmul.f32 %v850, %v850
    %v915 = vmul.f32 %v851, %v851
    %v916 = vmul.f32 %v852, %v852
    %v917 = vmul.f32 %v853, %v853
    %v918 = vmul.f32 %v854, %v854
    %v919 = vmul.f32 %v855, %v855
    %v920 = vmul.f32 %v856, %v856
    %v921 = vmul.f32 %v857, %v857
    %v922 = vmul.f32 %v858, %v858
    %v923 = vmul.f32 %v859, %v859
    %v924 = vmul.f32 %v860, %v860
    %v925 = vmul.f32 %v861, %v861
    %v926 = vmul.f32 %v862, %v862
    %v927 = vmul.f32 %v863, %v863
    %v928 = vmul.f32 %v864, %v864
    %v929 = vmul.f32 %v865, %v865
    %v930 = vmul.f32 %v866, %v866
    %v931 = vmul.f32 %v867, %v867
    %v932 = vmul.f32 %v868, %v868
    %v933 = vmul.f32 %v869, %v869
    %v934 = vmul.f32 %v870, %v870
    %v935 = vmul.f32 %v871, %v871
    %v936 = vmul.f32 %v872, %v872
    %v937 = vmul.f32 %v873, %v873
    %v938 = vmul.f32 %v874, %v874
    %v939 = vmul.f32 %v875, %v875
    %v940 = vmul.f32 %v876, %v876
    %v941 = vmul.f32 %v877, %v877
    %v942 = vmul.f32 %v878, %v878
    %v943 = vmul.f32 %v879, %v879
    %v944 = vmul.f32 %v880, %v880
    %v945 = vmul.f32 %v881, %v881
    %v946 = vmul.f32 %v882, %v882
    %v947 = vmul.f32 %v883, %v883
    %v948 = vmul.f32 %v884, %v884
    %v949 = vmul.f32 %v885, %v885
    %v950 = vmul.f32 %v886, %v886
    %v951 = vmul.f32 %v887, %v887
    %v952 = vmul.f32 %v888, %v888
    %v953 = vmul.f32 %v889, %v889
    %v954 = vmul.f32 %v890, %v890
    %v955 = vmul.f32 %v891, %v891
    %v956 = vmul.f32 %v892, %v892
    %v957 = vmul.f32 %v893, %v893
    %v958 = vmul.f32 %v894, %v894
    %v959 = vmul.f32 %v895, %v895
    %v960 = vmul.f32 %v896, %v896
    %v961 = vmul.f32 %v897, %v897
    %v962 = vmul.f32 %v898, %v898
    %v963 = vmul.f32 %v899, %v899
    %v964 = vmul.f32 %v900, %v900
    %v965 = vsel %vm701, %v901, 0.0
    %v966 = vsel %vm701, %v902, 0.0
    %v967 = vadd.f32 %v965, %v966
    %v968 = vsel %vm701, %v903, 0.0
    %v969 = vadd.f32 %v967, %v968
    %v970 = vsel %vm701, %v904, 0.0
    %v971 = vadd.f32 %v969, %v970
    %v972 = vsel %vm701, %v905, 0.0
    %v973 = vadd.f32 %v971, %v972
    %v974 = vsel %vm701, %v906, 0.0
    %v975 = vadd.f32 %v973, %v974
    %v976 = vsel %vm701, %v907, 0.0
    %v977 = vadd.f32 %v975, %v976
    %v978 = vsel %vm701, %v908, 0.0
    %v979 = vadd.f32 %v977, %v978
    %v980 = vsel %vm701, %v909, 0.0
    %v981 = vadd.f32 %v979, %v980
    %v982 = vsel %vm701, %v910, 0.0
    %v983 = vadd.f32 %v981, %v982
    %v984 = vsel %vm701, %v911, 0.0
    %v985 = vadd.f32 %v983, %v984
    %v986 = vsel %vm701, %v912, 0.0
    %v987 = vadd.f32 %v985, %v986
    %v988 = vsel %vm701, %v913, 0.0
    %v989 = vadd.f32 %v987, %v988
    %v990 = vsel %vm701, %v914, 0.0
    %v991 = vadd.f32 %v989, %v990
    %v992 = vsel %vm701, %v915, 0.0
    %v993 = vadd.f32 %v991, %v992
    %v994 = vsel %vm701, %v916, 0.0
    %v995 = vadd.f32 %v993, %v994
    %v996 = vsel %vm701, %v917, 0.0
    %v997 = vadd.f32 %v995, %v996
    %v998 = vsel %vm701, %v918, 0.0
    %v999 = vadd.f32 %v997, %v998
    %v1000 = vsel %vm701, %v919, 0.0
    %v1001 = vadd.f32 %v999, %v1000
    %v1002 = vsel %vm701, %v920, 0.0
    %v1003 = vadd.f32 %v1001, %v1002
    %v1004 = vsel %vm701, %v921, 0.0
    %v1005 = vadd.f32 %v1003, %v1004
    %v1006 = vsel %vm701, %v922, 0.0
    %v1007 = vadd.f32 %v1005, %v1006
    %v1008 = vsel %vm701, %v923, 0.0
    %v1009 = vadd.f32 %v1007, %v1008
    %v1010 = vsel %vm701, %v924, 0.0
    %v1011 = vadd.f32 %v1009, %v1010
    %v1012 = vsel %vm701, %v925, 0.0
    %v1013 = vadd.f32 %v1011, %v1012
    %v1014 = vsel %vm701, %v926, 0.0
    %v1015 = vadd.f32 %v1013, %v1014
    %v1016 = vsel %vm701, %v927, 0.0
    %v1017 = vadd.f32 %v1015, %v1016
    %v1018 = vsel %vm701, %v928, 0.0
    %v1019 = vadd.f32 %v1017, %v1018
    %v1020 = vsel %vm701, %v929, 0.0
    %v1021 = vadd.f32 %v1019, %v1020
    %v1022 = vsel %vm701, %v930, 0.0
    %v1023 = vadd.f32 %v1021, %v1022
    %v1024 = vsel %vm701, %v931, 0.0
    %v1025 = vadd.f32 %v1023, %v1024
    %v1026 = vsel %vm701, %v932, 0.0
    %v1027 = vadd.f32 %v1025, %v1026
    %v1028 = vsel %vm701, %v933, 0.0
    %v1029 = vadd.f32 %v1027, %v1028
    %v1030 = vsel %vm701, %v934, 0.0
    %v1031 = vadd.f32 %v1029, %v1030
    %v1032 = vsel %vm701, %v935, 0.0
    %v1033 = vadd.f32 %v1031, %v1032
    %v1034 = vsel %vm701, %v936, 0.0
    %v1035 = vadd.f32 %v1033, %v1034
    %v1036 = vsel %vm701, %v937, 0.0
    %v1037 = vadd.f32 %v1035, %v1036
    %v1038 = vsel %vm701, %v938, 0.0
    %v1039 = vadd.f32 %v1037, %v1038
    %v1040 = vsel %vm701, %v939, 0.0
    %v1041 = vadd.f32 %v1039, %v1040
    %v1042 = vsel %vm701, %v940, 0.0
    %v1043 = vadd.f32 %v1041, %v1042
    %v1044 = vsel %vm701, %v941, 0.0
    %v1045 = vadd.f32 %v1043, %v1044
    %v1046 = vsel %vm701, %v942, 0.0
    %v1047 = vadd.f32 %v1045, %v1046
    %v1048 = vsel %vm701, %v943, 0.0
    %v1049 = vadd.f32 %v1047, %v1048
    %v1050 = vsel %vm701, %v944, 0.0
    %v1051 = vadd.f32 %v1049, %v1050
    %v1052 = vsel %vm701, %v945, 0.0
    %v1053 = vadd.f32 %v1051, %v1052
    %v1054 = vsel %vm701, %v946, 0.0
    %v1055 = vadd.f32 %v1053, %v1054
    %v1056 = vsel %vm701, %v947, 0.0
    %v1057 = vadd.f32 %v1055, %v1056
    %v1058 = vsel %vm701, %v948, 0.0
    %v1059 = vadd.f32 %v1057, %v1058
    %v1060 = vsel %vm701, %v949, 0.0
    %v1061 = vadd.f32 %v1059, %v1060
    %v1062 = vsel %vm701, %v950, 0.0
    %v1063 = vadd.f32 %v1061, %v1062
    %v1064 = vsel %vm701, %v951, 0.0
    %v1065 = vadd.f32 %v1063, %v1064
    %v1066 = vsel %vm701, %v952, 0.0
    %v1067 = vadd.f32 %v1065, %v1066
    %v1068 = vsel %vm701, %v953, 0.0
    %v1069 = vadd.f32 %v1067, %v1068
    %v1070 = vsel %vm701, %v954, 0.0
    %v1071 = vadd.f32 %v1069, %v1070
    %v1072 = vsel %vm701, %v955, 0.0
    %v1073 = vadd.f32 %v1071, %v1072
    %v1074 = vsel %vm701, %v956, 0.0
    %v1075 = vadd.f32 %v1073, %v1074
    %v1076 = vsel %vm701, %v957, 0.0
    %v1077 = vadd.f32 %v1075, %v1076
    %v1078 = vsel %vm701, %v958, 0.0
    %v1079 = vadd.f32 %v1077, %v1078
    %v1080 = vsel %vm701, %v959, 0.0
    %v1081 = vadd.f32 %v1079, %v1080
    %v1082 = vsel %vm701, %v960, 0.0
    %v1083 = vadd.f32 %v1081, %v1082
    %v1084 = vsel %vm701, %v961, 0.0
    %v1085 = vadd.f32 %v1083, %v1084
    %v1086 = vsel %vm701, %v962, 0.0
    %v1087 = vadd.f32 %v1085, %v1086
    %v1088 = vsel %vm701, %v963, 0.0
    %v1089 = vadd.f32 %v1087, %v1088
    %v1090 = vsel %vm701, %v964, 0.0
    %v1091 = vadd.f32 %v1089, %v1090
    %v1092 = vrot.slane %v1091, 4
    %v1093 = vadd.f32 %v1091, %v1092
    %v1094 = vrot.slane %v1093, 2
    %v1095 = vadd.f32 %v1093, %v1094
    %v1096 = vrot.slane %v1095, 1
    %v1097 = vadd.f32 %v1095, %v1096
    %v1098 = vmul.f32 %v1097, %v835
    %v1099 = vld [vmem:[%s2] sm:$0x1]
    %v1100 = vadd.f32 %v1098, 1e-05
    %v1101 = vrsqrt.pop %v1100
    %v1102 = vmul.f32 %v1099, %v1101
    %v1103 = vld [vmem:[%s3] sm:$0x1]
    %v1104 = vmul.f32 %v836, %v1102
    %v1105 = vsub.f32 %v1103, %v1104
    %v1107 = vlaneseq
    %v1108 = vshrl.u32 %v1107, 7
    %v1109 = vsub.s32 0, %v1108
    %v1110 = vrot.slane %v1102, %v1109
    %v1112 = vmul.f32 %v383, %v1110
    %v1113 = vmul.f32 %v388, %v1110
    %v1114 = vmul.f32 %v393, %v1110
    %v1115 = vmul.f32 %v398, %v1110
    %v1116 = vmul.f32 %v403, %v1110
    %v1117 = vmul.f32 %v408, %v1110
    %v1118 = vmul.f32 %v413, %v1110
    %v1119 = vmul.f32 %v418, %v1110
    %v1120 = vmul.f32 %v423, %v1110
    %v1121 = vmul.f32 %v428, %v1110
    %v1122 = vmul.f32 %v433, %v1110
    %v1123 = vmul.f32 %v438, %v1110
    %v1124 = vmul.f32 %v443, %v1110
    %v1125 = vmul.f32 %v448, %v1110
    %v1126 = vmul.f32 %v453, %v1110
    %v1127 = vmul.f32 %v458, %v1110
    %v1128 = vmul.f32 %v463, %v1110
    %v1129 = vmul.f32 %v468, %v1110
    %v1130 = vmul.f32 %v473, %v1110
    %v1131 = vmul.f32 %v478, %v1110
    %v1132 = vmul.f32 %v483, %v1110
    %v1133 = vmul.f32 %v488, %v1110
    %v1134 = vmul.f32 %v493, %v1110
    %v1135 = vmul.f32 %v498, %v1110
    %v1136 = vmul.f32 %v503, %v1110
    %v1137 = vmul.f32 %v508, %v1110
    %v1138 = vmul.f32 %v513, %v1110
    %v1139 = vmul.f32 %v518, %v1110
    %v1140 = vmul.f32 %v523, %v1110
    %v1141 = vmul.f32 %v528, %v1110
    %v1142 = vmul.f32 %v533, %v1110
    %v1143 = vmul.f32 %v538, %v1110
    %v1144 = vmul.f32 %v543, %v1110
    %v1145 = vmul.f32 %v548, %v1110
    %v1146 = vmul.f32 %v553, %v1110
    %v1147 = vmul.f32 %v558, %v1110
    %v1148 = vmul.f32 %v563, %v1110
    %v1149 = vmul.f32 %v568, %v1110
    %v1150 = vmul.f32 %v573, %v1110
    %v1151 = vmul.f32 %v578, %v1110
    %v1152 = vmul.f32 %v583, %v1110
    %v1153 = vmul.f32 %v588, %v1110
    %v1154 = vmul.f32 %v593, %v1110
    %v1155 = vmul.f32 %v598, %v1110
    %v1156 = vmul.f32 %v603, %v1110
    %v1157 = vmul.f32 %v608, %v1110
    %v1158 = vmul.f32 %v613, %v1110
    %v1159 = vmul.f32 %v618, %v1110
    %v1160 = vmul.f32 %v623, %v1110
    %v1161 = vmul.f32 %v628, %v1110
    %v1162 = vmul.f32 %v633, %v1110
    %v1163 = vmul.f32 %v638, %v1110
    %v1164 = vmul.f32 %v643, %v1110
    %v1165 = vmul.f32 %v648, %v1110
    %v1166 = vmul.f32 %v653, %v1110
    %v1167 = vmul.f32 %v658, %v1110
    %v1168 = vmul.f32 %v663, %v1110
    %v1169 = vmul.f32 %v668, %v1110
    %v1170 = vmul.f32 %v673, %v1110
    %v1171 = vmul.f32 %v678, %v1110
    %v1172 = vmul.f32 %v683, %v1110
    %v1173 = vmul.f32 %v688, %v1110
    %v1174 = vmul.f32 %v693, %v1110
    %v1175 = vmul.f32 %v698, %v1110
    %v1177 = vlaneseq
    %v1178 = vshrl.u32 %v1177, 7
    %v1179 = vsub.s32 0, %v1178
    %v1180 = vrot.slane %v1105, %v1179
    %v1182 = vadd.f32 %v1112, %v1180
    %v1183 = vadd.f32 %v1113, %v1180
    %v1184 = vadd.f32 %v1114, %v1180
    %v1185 = vadd.f32 %v1115, %v1180
    %v1186 = vadd.f32 %v1116, %v1180
    %v1187 = vadd.f32 %v1117, %v1180
    %v1188 = vadd.f32 %v1118, %v1180
    %v1189 = vadd.f32 %v1119, %v1180
    %v1190 = vadd.f32 %v1120, %v1180
    %v1191 = vadd.f32 %v1121, %v1180
    %v1192 = vadd.f32 %v1122, %v1180
    %v1193 = vadd.f32 %v1123, %v1180
    %v1194 = vadd.f32 %v1124, %v1180
    %v1195 = vadd.f32 %v1125, %v1180
    %v1196 = vadd.f32 %v1126, %v1180
    %v1197 = vadd.f32 %v1127, %v1180
    %v1198 = vadd.f32 %v1128, %v1180
    %v1199 = vadd.f32 %v1129, %v1180
    %v1200 = vadd.f32 %v1130, %v1180
    %v1201 = vadd.f32 %v1131, %v1180
    %v1202 = vadd.f32 %v1132, %v1180
    %v1203 = vadd.f32 %v1133, %v1180
    %v1204 = vadd.f32 %v1134, %v1180
    %v1205 = vadd.f32 %v1135, %v1180
    %v1206 = vadd.f32 %v1136, %v1180
    %v1207 = vadd.f32 %v1137, %v1180
    %v1208 = vadd.f32 %v1138, %v1180
    %v1209 = vadd.f32 %v1139, %v1180
    %v1210 = vadd.f32 %v1140, %v1180
    %v1211 = vadd.f32 %v1141, %v1180
    %v1212 = vadd.f32 %v1142, %v1180
    %v1213 = vadd.f32 %v1143, %v1180
    %v1214 = vadd.f32 %v1144, %v1180
    %v1215 = vadd.f32 %v1145, %v1180
    %v1216 = vadd.f32 %v1146, %v1180
    %v1217 = vadd.f32 %v1147, %v1180
    %v1218 = vadd.f32 %v1148, %v1180
    %v1219 = vadd.f32 %v1149, %v1180
    %v1220 = vadd.f32 %v1150, %v1180
    %v1221 = vadd.f32 %v1151, %v1180
    %v1222 = vadd.f32 %v1152, %v1180
    %v1223 = vadd.f32 %v1153, %v1180
    %v1224 = vadd.f32 %v1154, %v1180
    %v1225 = vadd.f32 %v1155, %v1180
    %v1226 = vadd.f32 %v1156, %v1180
    %v1227 = vadd.f32 %v1157, %v1180
    %v1228 = vadd.f32 %v1158, %v1180
    %v1229 = vadd.f32 %v1159, %v1180
    %v1230 = vadd.f32 %v1160, %v1180
    %v1231 = vadd.f32 %v1161, %v1180
    %v1232 = vadd.f32 %v1162, %v1180
    %v1233 = vadd.f32 %v1163, %v1180
    %v1234 = vadd.f32 %v1164, %v1180
    %v1235 = vadd.f32 %v1165, %v1180
    %v1236 = vadd.f32 %v1166, %v1180
    %v1237 = vadd.f32 %v1167, %v1180
    %v1238 = vadd.f32 %v1168, %v1180
    %v1239 = vadd.f32 %v1169, %v1180
    %v1240 = vadd.f32 %v1170, %v1180
    %v1241 = vadd.f32 %v1171, %v1180
    %v1242 = vadd.f32 %v1172, %v1180
    %v1243 = vadd.f32 %v1173, %v1180
    %v1244 = vadd.f32 %v1174, %v1180
    %v1245 = vadd.f32 %v1175, %v1180
    %vm1246 = vcmp.gt.f32.partialorder %v1182, 0.0
    %vm1247 = vcmp.gt.f32.partialorder %v1183, 0.0
    %vm1248 = vcmp.gt.f32.partialorder %v1184, 0.0
    %vm1249 = vcmp.gt.f32.partialorder %v1185, 0.0
    %vm1250 = vcmp.gt.f32.partialorder %v1186, 0.0
    %vm1251 = vcmp.gt.f32.partialorder %v1187, 0.0
    %vm1252 = vcmp.gt.f32.partialorder %v1188, 0.0
    %vm1253 = vcmp.gt.f32.partialorder %v1189, 0.0
    %vm1254 = vcmp.gt.f32.partialorder %v1190, 0.0
    %vm1255 = vcmp.gt.f32.partialorder %v1191, 0.0
    %vm1256 = vcmp.gt.f32.partialorder %v1192, 0.0
    %vm1257 = vcmp.gt.f32.partialorder %v1193, 0.0
    %vm1258 = vcmp.gt.f32.partialorder %v1194, 0.0
    %vm1259 = vcmp.gt.f32.partialorder %v1195, 0.0
    %vm1260 = vcmp.gt.f32.partialorder %v1196, 0.0
    %vm1261 = vcmp.gt.f32.partialorder %v1197, 0.0
    %vm1262 = vcmp.gt.f32.partialorder %v1198, 0.0
    %vm1263 = vcmp.gt.f32.partialorder %v1199, 0.0
    %vm1264 = vcmp.gt.f32.partialorder %v1200, 0.0
    %vm1265 = vcmp.gt.f32.partialorder %v1201, 0.0
    %vm1266 = vcmp.gt.f32.partialorder %v1202, 0.0
    %vm1267 = vcmp.gt.f32.partialorder %v1203, 0.0
    %vm1268 = vcmp.gt.f32.partialorder %v1204, 0.0
    %vm1269 = vcmp.gt.f32.partialorder %v1205, 0.0
    %vm1270 = vcmp.gt.f32.partialorder %v1206, 0.0
    %vm1271 = vcmp.gt.f32.partialorder %v1207, 0.0
    %vm1272 = vcmp.gt.f32.partialorder %v1208, 0.0
    %vm1273 = vcmp.gt.f32.partialorder %v1209, 0.0
    %vm1274 = vcmp.gt.f32.partialorder %v1210, 0.0
    %vm1275 = vcmp.gt.f32.partialorder %v1211, 0.0
    %vm1276 = vcmp.gt.f32.partialorder %v1212, 0.0
    %vm1277 = vcmp.gt.f32.partialorder %v1213, 0.0
    %vm1278 = vcmp.gt.f32.partialorder %v1214, 0.0
    %vm1279 = vcmp.gt.f32.partialorder %v1215, 0.0
    %vm1280 = vcmp.gt.f32.partialorder %v1216, 0.0
    %vm1281 = vcmp.gt.f32.partialorder %v1217, 0.0
    %vm1282 = vcmp.gt.f32.partialorder %v1218, 0.0
    %vm1283 = vcmp.gt.f32.partialorder %v1219, 0.0
    %vm1284 = vcmp.gt.f32.partialorder %v1220, 0.0
    %vm1285 = vcmp.gt.f32.partialorder %v1221, 0.0
    %vm1286 = vcmp.gt.f32.partialorder %v1222, 0.0
    %vm1287 = vcmp.gt.f32.partialorder %v1223, 0.0
    %vm1288 = vcmp.gt.f32.partialorder %v1224, 0.0
    %vm1289 = vcmp.gt.f32.partialorder %v1225, 0.0
    %vm1290 = vcmp.gt.f32.partialorder %v1226, 0.0
    %vm1291 = vcmp.gt.f32.partialorder %v1227, 0.0
    %vm1292 = vcmp.gt.f32.partialorder %v1228, 0.0
    %vm1293 = vcmp.gt.f32.partialorder %v1229, 0.0
    %vm1294 = vcmp.gt.f32.partialorder %v1230, 0.0
    %vm1295 = vcmp.gt.f32.partialorder %v1231, 0.0
    %vm1296 = vcmp.gt.f32.partialorder %v1232, 0.0
    %vm1297 = vcmp.gt.f32.partialorder %v1233, 0.0
    %vm1298 = vcmp.gt.f32.partialorder %v1234, 0.0
    %vm1299 = vcmp.gt.f32.partialorder %v1235, 0.0
    %vm1300 = vcmp.gt.f32.partialorder %v1236, 0.0
    %vm1301 = vcmp.gt.f32.partialorder %v1237, 0.0
    %vm1302 = vcmp.gt.f32.partialorder %v1238, 0.0
    %vm1303 = vcmp.gt.f32.partialorder %v1239, 0.0
    %vm1304 = vcmp.gt.f32.partialorder %v1240, 0.0
    %vm1305 = vcmp.gt.f32.partialorder %v1241, 0.0
    %vm1306 = vcmp.gt.f32.partialorder %v1242, 0.0
    %vm1307 = vcmp.gt.f32.partialorder %v1243, 0.0
    %vm1308 = vcmp.gt.f32.partialorder %v1244, 0.0
    %vm1309 = vcmp.gt.f32.partialorder %v1245, 0.0
    %v1310 = vmul.f32 %v1182, 0.1
    %v1311 = vmul.f32 %v1183, 0.1
    %v1312 = vmul.f32 %v1184, 0.1
    %v1313 = vmul.f32 %v1185, 0.1
    %v1314 = vmul.f32 %v1186, 0.1
    %v1315 = vmul.f32 %v1187, 0.1
    %v1316 = vmul.f32 %v1188, 0.1
    %v1317 = vmul.f32 %v1189, 0.1
    %v1318 = vmul.f32 %v1190, 0.1
    %v1319 = vmul.f32 %v1191, 0.1
    %v1320 = vmul.f32 %v1192, 0.1
    %v1321 = vmul.f32 %v1193, 0.1
    %v1322 = vmul.f32 %v1194, 0.1
    %v1323 = vmul.f32 %v1195, 0.1
    %v1324 = vmul.f32 %v1196, 0.1
    %v1325 = vmul.f32 %v1197, 0.1
    %v1326 = vmul.f32 %v1198, 0.1
    %v1327 = vmul.f32 %v1199, 0.1
    %v1328 = vmul.f32 %v1200, 0.1
    %v1329 = vmul.f32 %v1201, 0.1
    %v1330 = vmul.f32 %v1202, 0.1
    %v1331 = vmul.f32 %v1203, 0.1
    %v1332 = vmul.f32 %v1204, 0.1
    %v1333 = vmul.f32 %v1205, 0.1
    %v1334 = vmul.f32 %v1206, 0.1
    %v1335 = vmul.f32 %v1207, 0.1
    %v1336 = vmul.f32 %v1208, 0.1
    %v1337 = vmul.f32 %v1209, 0.1
    %v1338 = vmul.f32 %v1210, 0.1
    %v1339 = vmul.f32 %v1211, 0.1
    %v1340 = vmul.f32 %v1212, 0.1
    %v1341 = vmul.f32 %v1213, 0.1
    %v1342 = vmul.f32 %v1214, 0.1
    %v1343 = vmul.f32 %v1215, 0.1
    %v1344 = vmul.f32 %v1216, 0.1
    %v1345 = vmul.f32 %v1217, 0.1
    %v1346 = vmul.f32 %v1218, 0.1
    %v1347 = vmul.f32 %v1219, 0.1
    %v1348 = vmul.f32 %v1220, 0.1
    %v1349 = vmul.f32 %v1221, 0.1
    %v1350 = vmul.f32 %v1222, 0.1
    %v1351 = vmul.f32 %v1223, 0.1
    %v1352 = vmul.f32 %v1224, 0.1
    %v1353 = vmul.f32 %v1225, 0.1
    %v1354 = vmul.f32 %v1226, 0.1
    %v1355 = vmul.f32 %v1227, 0.1
    %v1356 = vmul.f32 %v1228, 0.1
    %v1357 = vmul.f32 %v1229, 0.1
    %v1358 = vmul.f32 %v1230, 0.1
    %v1359 = vmul.f32 %v1231, 0.1
    %v1360 = vmul.f32 %v1232, 0.1
    %v1361 = vmul.f32 %v1233, 0.1
    %v1362 = vmul.f32 %v1234, 0.1
    %v1363 = vmul.f32 %v1235, 0.1
    %v1364 = vmul.f32 %v1236, 0.1
    %v1365 = vmul.f32 %v1237, 0.1
    %v1366 = vmul.f32 %v1238, 0.1
    %v1367 = vmul.f32 %v1239, 0.1
    %v1368 = vmul.f32 %v1240, 0.1
    %v1369 = vmul.f32 %v1241, 0.1
    %v1370 = vmul.f32 %v1242, 0.1
    %v1371 = vmul.f32 %v1243, 0.1
    %v1372 = vmul.f32 %v1244, 0.1
    %v1373 = vmul.f32 %v1245, 0.1
    %v1374 = vsel %vm1246, %v1182, %v1310
    %v1375 = vsel %vm1247, %v1183, %v1311
    %v1376 = vsel %vm1248, %v1184, %v1312
    %v1377 = vsel %vm1249, %v1185, %v1313
    %v1378 = vsel %vm1250, %v1186, %v1314
    %v1379 = vsel %vm1251, %v1187, %v1315
    %v1380 = vsel %vm1252, %v1188, %v1316
    %v1381 = vsel %vm1253, %v1189, %v1317
    %v1382 = vsel %vm1254, %v1190, %v1318
    %v1383 = vsel %vm1255, %v1191, %v1319
    %v1384 = vsel %vm1256, %v1192, %v1320
    %v1385 = vsel %vm1257, %v1193, %v1321
    %v1386 = vsel %vm1258, %v1194, %v1322
    %v1387 = vsel %vm1259, %v1195, %v1323
    %v1388 = vsel %vm1260, %v1196, %v1324
    %v1389 = vsel %vm1261, %v1197, %v1325
    %v1390 = vsel %vm1262, %v1198, %v1326
    %v1391 = vsel %vm1263, %v1199, %v1327
    %v1392 = vsel %vm1264, %v1200, %v1328
    %v1393 = vsel %vm1265, %v1201, %v1329
    %v1394 = vsel %vm1266, %v1202, %v1330
    %v1395 = vsel %vm1267, %v1203, %v1331
    %v1396 = vsel %vm1268, %v1204, %v1332
    %v1397 = vsel %vm1269, %v1205, %v1333
    %v1398 = vsel %vm1270, %v1206, %v1334
    %v1399 = vsel %vm1271, %v1207, %v1335
    %v1400 = vsel %vm1272, %v1208, %v1336
    %v1401 = vsel %vm1273, %v1209, %v1337
    %v1402 = vsel %vm1274, %v1210, %v1338
    %v1403 = vsel %vm1275, %v1211, %v1339
    %v1404 = vsel %vm1276, %v1212, %v1340
    %v1405 = vsel %vm1277, %v1213, %v1341
    %v1406 = vsel %vm1278, %v1214, %v1342
    %v1407 = vsel %vm1279, %v1215, %v1343
    %v1408 = vsel %vm1280, %v1216, %v1344
    %v1409 = vsel %vm1281, %v1217, %v1345
    %v1410 = vsel %vm1282, %v1218, %v1346
    %v1411 = vsel %vm1283, %v1219, %v1347
    %v1412 = vsel %vm1284, %v1220, %v1348
    %v1413 = vsel %vm1285, %v1221, %v1349
    %v1414 = vsel %vm1286, %v1222, %v1350
    %v1415 = vsel %vm1287, %v1223, %v1351
    %v1416 = vsel %vm1288, %v1224, %v1352
    %v1417 = vsel %vm1289, %v1225, %v1353
    %v1418 = vsel %vm1290, %v1226, %v1354
    %v1419 = vsel %vm1291, %v1227, %v1355
    %v1420 = vsel %vm1292, %v1228, %v1356
    %v1421 = vsel %vm1293, %v1229, %v1357
    %v1422 = vsel %vm1294, %v1230, %v1358
    %v1423 = vsel %vm1295, %v1231, %v1359
    %v1424 = vsel %vm1296, %v1232, %v1360
    %v1425 = vsel %vm1297, %v1233, %v1361
    %v1426 = vsel %vm1298, %v1234, %v1362
    %v1427 = vsel %vm1299, %v1235, %v1363
    %v1428 = vsel %vm1300, %v1236, %v1364
    %v1429 = vsel %vm1301, %v1237, %v1365
    %v1430 = vsel %vm1302, %v1238, %v1366
    %v1431 = vsel %vm1303, %v1239, %v1367
    %v1432 = vsel %vm1304, %v1240, %v1368
    %v1433 = vsel %vm1305, %v1241, %v1369
    %v1434 = vsel %vm1306, %v1242, %v1370
    %v1435 = vsel %vm1307, %v1243, %v1371
    %v1436 = vsel %vm1308, %v1244, %v1372
    %v1437 = vsel %vm1309, %v1245, %v1373
    %1438 = vst.msk [vmem:[#allocation2] sm:$0xff] %vm701, 0.0
    %1439 = vst.msk [vmem:[#allocation2 + $0x8] sm:$0xff] %vm701, 0.0
    %1440 = vst.msk [vmem:[#allocation2 + $0x10] sm:$0xff] %vm701, 0.0
    %1441 = vst.msk [vmem:[#allocation2 + $0x18] sm:$0xff] %vm701, 0.0
    %1442 = vst.msk [vmem:[#allocation2 + $0x20] sm:$0xff] %vm701, 0.0
    %1443 = vst.msk [vmem:[#allocation2 + $0x28] sm:$0xff] %vm701, 0.0
    %1444 = vst.msk [vmem:[#allocation2 + $0x30] sm:$0xff] %vm701, 0.0
    %1445 = vst.msk [vmem:[#allocation2 + $0x38] sm:$0xff] %vm701, 0.0
    %1446 = vst.msk [vmem:[#allocation2 + $0x40] sm:$0xff] %vm701, 0.0
    %1447 = vst.msk [vmem:[#allocation2 + $0x48] sm:$0xff] %vm701, 0.0
    %1448 = vst.msk [vmem:[#allocation2 + $0x50] sm:$0xff] %vm701, 0.0
    %1449 = vst.msk [vmem:[#allocation2 + $0x58] sm:$0xff] %vm701, 0.0
    %1450 = vst.msk [vmem:[#allocation2 + $0x60] sm:$0xff] %vm701, 0.0
    %1451 = vst.msk [vmem:[#allocation2 + $0x68] sm:$0xff] %vm701, 0.0
    %1452 = vst.msk [vmem:[#allocation2 + $0x70] sm:$0xff] %vm701, 0.0
    %1453 = vst.msk [vmem:[#allocation2 + $0x78] sm:$0xff] %vm701, 0.0
    %1454 = vst.msk [vmem:[#allocation2 + $0x80] sm:$0xff] %vm701, 0.0
    %1455 = vst.msk [vmem:[#allocation2 + $0x88] sm:$0xff] %vm701, 0.0
    %1456 = vst.msk [vmem:[#allocation2 + $0x90] sm:$0xff] %vm701, 0.0
    %1457 = vst.msk [vmem:[#allocation2 + $0x98] sm:$0xff] %vm701, 0.0
    %1458 = vst.msk [vmem:[#allocation2 + $0xa0] sm:$0xff] %vm701, 0.0
    %1459 = vst.msk [vmem:[#allocation2 + $0xa8] sm:$0xff] %vm701, 0.0
    %1460 = vst.msk [vmem:[#allocation2 + $0xb0] sm:$0xff] %vm701, 0.0
    %1461 = vst.msk [vmem:[#allocation2 + $0xb8] sm:$0xff] %vm701, 0.0
    %1462 = vst.msk [vmem:[#allocation2 + $0xc0] sm:$0xff] %vm701, 0.0
    %1463 = vst.msk [vmem:[#allocation2 + $0xc8] sm:$0xff] %vm701, 0.0
    %1464 = vst.msk [vmem:[#allocation2 + $0xd0] sm:$0xff] %vm701, 0.0
    %1465 = vst.msk [vmem:[#allocation2 + $0xd8] sm:$0xff] %vm701, 0.0
    %1466 = vst.msk [vmem:[#allocation2 + $0xe0] sm:$0xff] %vm701, 0.0
    %1467 = vst.msk [vmem:[#allocation2 + $0xe8] sm:$0xff] %vm701, 0.0
    %1468 = vst.msk [vmem:[#allocation2 + $0xf0] sm:$0xff] %vm701, 0.0
    %1469 = vst.msk [vmem:[#allocation2 + $0xf8] sm:$0xff] %vm701, 0.0
    %1470 = vst.msk [vmem:[#allocation2 + $0x100] sm:$0xff] %vm701, 0.0
    %1471 = vst.msk [vmem:[#allocation2 + $0x108] sm:$0xff] %vm701, 0.0
    %1472 = vst.msk [vmem:[#allocation2 + $0x110] sm:$0xff] %vm701, 0.0
    %1473 = vst.msk [vmem:[#allocation2 + $0x118] sm:$0xff] %vm701, 0.0
    %1474 = vst.msk [vmem:[#allocation2 + $0x120] sm:$0xff] %vm701, 0.0
    %1475 = vst.msk [vmem:[#allocation2 + $0x128] sm:$0xff] %vm701, 0.0
    %1476 = vst.msk [vmem:[#allocation2 + $0x130] sm:$0xff] %vm701, 0.0
    %1477 = vst.msk [vmem:[#allocation2 + $0x138] sm:$0xff] %vm701, 0.0
    %1478 = vst.msk [vmem:[#allocation2 + $0x140] sm:$0xff] %vm701, 0.0
    %1479 = vst.msk [vmem:[#allocation2 + $0x148] sm:$0xff] %vm701, 0.0
    %1480 = vst.msk [vmem:[#allocation2 + $0x150] sm:$0xff] %vm701, 0.0
    %1481 = vst.msk [vmem:[#allocation2 + $0x158] sm:$0xff] %vm701, 0.0
    %1482 = vst.msk [vmem:[#allocation2 + $0x160] sm:$0xff] %vm701, 0.0
    %1483 = vst.msk [vmem:[#allocation2 + $0x168] sm:$0xff] %vm701, 0.0
    %1484 = vst.msk [vmem:[#allocation2 + $0x170] sm:$0xff] %vm701, 0.0
    %1485 = vst.msk [vmem:[#allocation2 + $0x178] sm:$0xff] %vm701, 0.0
    %1486 = vst.msk [vmem:[#allocation2 + $0x180] sm:$0xff] %vm701, 0.0
    %1487 = vst.msk [vmem:[#allocation2 + $0x188] sm:$0xff] %vm701, 0.0
    %1488 = vst.msk [vmem:[#allocation2 + $0x190] sm:$0xff] %vm701, 0.0
    %1489 = vst.msk [vmem:[#allocation2 + $0x198] sm:$0xff] %vm701, 0.0
    %1490 = vst.msk [vmem:[#allocation2 + $0x1a0] sm:$0xff] %vm701, 0.0
    %1491 = vst.msk [vmem:[#allocation2 + $0x1a8] sm:$0xff] %vm701, 0.0
    %1492 = vst.msk [vmem:[#allocation2 + $0x1b0] sm:$0xff] %vm701, 0.0
    %1493 = vst.msk [vmem:[#allocation2 + $0x1b8] sm:$0xff] %vm701, 0.0
    %1494 = vst.msk [vmem:[#allocation2 + $0x1c0] sm:$0xff] %vm701, 0.0
    %1495 = vst.msk [vmem:[#allocation2 + $0x1c8] sm:$0xff] %vm701, 0.0
    %1496 = vst.msk [vmem:[#allocation2 + $0x1d0] sm:$0xff] %vm701, 0.0
    %1497 = vst.msk [vmem:[#allocation2 + $0x1d8] sm:$0xff] %vm701, 0.0
    %1498 = vst.msk [vmem:[#allocation2 + $0x1e0] sm:$0xff] %vm701, 0.0
    %1499 = vst.msk [vmem:[#allocation2 + $0x1e8] sm:$0xff] %vm701, 0.0
    %1500 = vst.msk [vmem:[#allocation2 + $0x1f0] sm:$0xff] %vm701, 0.0
    %1501 = vst.msk [vmem:[#allocation2 + $0x1f8] sm:$0xff] %vm701, 0.0
    %1502 = vst.msk [vmem:[#allocation2 + $0x200] sm:$0xff] %vm701, 0.0
    %1503 = vst.msk [vmem:[#allocation2 + $0x208] sm:$0xff] %vm701, 0.0
    %1504 = vst.msk [vmem:[#allocation2 + $0x210] sm:$0xff] %vm701, 0.0
    %1505 = vst.msk [vmem:[#allocation2 + $0x218] sm:$0xff] %vm701, 0.0
    %1506 = vst.msk [vmem:[#allocation2 + $0x220] sm:$0xff] %vm701, 0.0
    %1507 = vst.msk [vmem:[#allocation2 + $0x228] sm:$0xff] %vm701, 0.0
    %1508 = vst.msk [vmem:[#allocation2 + $0x230] sm:$0xff] %vm701, 0.0
    %1509 = vst.msk [vmem:[#allocation2 + $0x238] sm:$0xff] %vm701, 0.0
    %1510 = vst.msk [vmem:[#allocation2 + $0x240] sm:$0xff] %vm701, 0.0
    %1511 = vst.msk [vmem:[#allocation2 + $0x248] sm:$0xff] %vm701, 0.0
    %1512 = vst.msk [vmem:[#allocation2 + $0x250] sm:$0xff] %vm701, 0.0
    %1513 = vst.msk [vmem:[#allocation2 + $0x258] sm:$0xff] %vm701, 0.0
    %1514 = vst.msk [vmem:[#allocation2 + $0x260] sm:$0xff] %vm701, 0.0
    %1515 = vst.msk [vmem:[#allocation2 + $0x268] sm:$0xff] %vm701, 0.0
    %1516 = vst.msk [vmem:[#allocation2 + $0x270] sm:$0xff] %vm701, 0.0
    %1517 = vst.msk [vmem:[#allocation2 + $0x278] sm:$0xff] %vm701, 0.0
    %1518 = vst.msk [vmem:[#allocation2 + $0x280] sm:$0xff] %vm701, 0.0
    %1519 = vst.msk [vmem:[#allocation2 + $0x288] sm:$0xff] %vm701, 0.0
    %1520 = vst.msk [vmem:[#allocation2 + $0x290] sm:$0xff] %vm701, 0.0
    %1521 = vst.msk [vmem:[#allocation2 + $0x298] sm:$0xff] %vm701, 0.0
    %1522 = vst.msk [vmem:[#allocation2 + $0x2a0] sm:$0xff] %vm701, 0.0
    %1523 = vst.msk [vmem:[#allocation2 + $0x2a8] sm:$0xff] %vm701, 0.0
    %1524 = vst.msk [vmem:[#allocation2 + $0x2b0] sm:$0xff] %vm701, 0.0
    %1525 = vst.msk [vmem:[#allocation2 + $0x2b8] sm:$0xff] %vm701, 0.0
    %1526 = vst.msk [vmem:[#allocation2 + $0x2c0] sm:$0xff] %vm701, 0.0
    %1527 = vst.msk [vmem:[#allocation2 + $0x2c8] sm:$0xff] %vm701, 0.0
    %1528 = vst.msk [vmem:[#allocation2 + $0x2d0] sm:$0xff] %vm701, 0.0
    %1529 = vst.msk [vmem:[#allocation2 + $0x2d8] sm:$0xff] %vm701, 0.0
    %1530 = vst.msk [vmem:[#allocation2 + $0x2e0] sm:$0xff] %vm701, 0.0
    %1531 = vst.msk [vmem:[#allocation2 + $0x2e8] sm:$0xff] %vm701, 0.0
    %1532 = vst.msk [vmem:[#allocation2 + $0x2f0] sm:$0xff] %vm701, 0.0
    %1533 = vst.msk [vmem:[#allocation2 + $0x2f8] sm:$0xff] %vm701, 0.0
    %1534 = vst.msk [vmem:[#allocation2 + $0x300] sm:$0xff] %vm701, 0.0
    %1535 = vst.msk [vmem:[#allocation2 + $0x308] sm:$0xff] %vm701, 0.0
    %1536 = vst.msk [vmem:[#allocation2 + $0x310] sm:$0xff] %vm701, 0.0
    %1537 = vst.msk [vmem:[#allocation2 + $0x318] sm:$0xff] %vm701, 0.0
    %1538 = vst.msk [vmem:[#allocation2 + $0x320] sm:$0xff] %vm701, 0.0
    %1539 = vst.msk [vmem:[#allocation2 + $0x328] sm:$0xff] %vm701, 0.0
    %1540 = vst.msk [vmem:[#allocation2 + $0x330] sm:$0xff] %vm701, 0.0
    %1541 = vst.msk [vmem:[#allocation2 + $0x338] sm:$0xff] %vm701, 0.0
    %1542 = vst.msk [vmem:[#allocation2 + $0x340] sm:$0xff] %vm701, 0.0
    %1543 = vst.msk [vmem:[#allocation2 + $0x348] sm:$0xff] %vm701, 0.0
    %1544 = vst.msk [vmem:[#allocation2 + $0x350] sm:$0xff] %vm701, 0.0
    %1545 = vst.msk [vmem:[#allocation2 + $0x358] sm:$0xff] %vm701, 0.0
    %1546 = vst.msk [vmem:[#allocation2 + $0x360] sm:$0xff] %vm701, 0.0
    %1547 = vst.msk [vmem:[#allocation2 + $0x368] sm:$0xff] %vm701, 0.0
    %1548 = vst.msk [vmem:[#allocation2 + $0x370] sm:$0xff] %vm701, 0.0
    %1549 = vst.msk [vmem:[#allocation2 + $0x378] sm:$0xff] %vm701, 0.0
    %1550 = vst.msk [vmem:[#allocation2 + $0x380] sm:$0xff] %vm701, 0.0
    %1551 = vst.msk [vmem:[#allocation2 + $0x388] sm:$0xff] %vm701, 0.0
    %1552 = vst.msk [vmem:[#allocation2 + $0x390] sm:$0xff] %vm701, 0.0
    %1553 = vst.msk [vmem:[#allocation2 + $0x398] sm:$0xff] %vm701, 0.0
    %1554 = vst.msk [vmem:[#allocation2 + $0x3a0] sm:$0xff] %vm701, 0.0
    %1555 = vst.msk [vmem:[#allocation2 + $0x3a8] sm:$0xff] %vm701, 0.0
    %1556 = vst.msk [vmem:[#allocation2 + $0x3b0] sm:$0xff] %vm701, 0.0
    %1557 = vst.msk [vmem:[#allocation2 + $0x3b8] sm:$0xff] %vm701, 0.0
    %1558 = vst.msk [vmem:[#allocation2 + $0x3c0] sm:$0xff] %vm701, 0.0
    %1559 = vst.msk [vmem:[#allocation2 + $0x3c8] sm:$0xff] %vm701, 0.0
    %1560 = vst.msk [vmem:[#allocation2 + $0x3d0] sm:$0xff] %vm701, 0.0
    %1561 = vst.msk [vmem:[#allocation2 + $0x3d8] sm:$0xff] %vm701, 0.0
    %1562 = vst.msk [vmem:[#allocation2 + $0x3e0] sm:$0xff] %vm701, 0.0
    %1563 = vst.msk [vmem:[#allocation2 + $0x3e8] sm:$0xff] %vm701, 0.0
    %1564 = vst.msk [vmem:[#allocation2 + $0x3f0] sm:$0xff] %vm701, 0.0
    %1565 = vst.msk [vmem:[#allocation2 + $0x3f8] sm:$0xff] %vm701, 0.0
    %1566 = vst.msk [vmem:[#allocation2 + $0x400] sm:$0xff] %vm701, 0.0
    %1567 = vst.msk [vmem:[#allocation2 + $0x408] sm:$0xff] %vm701, 0.0
    %1568 = vst.msk [vmem:[#allocation2 + $0x410] sm:$0xff] %vm701, 0.0
    %1569 = vst.msk [vmem:[#allocation2 + $0x418] sm:$0xff] %vm701, 0.0
    %1570 = vst.msk [vmem:[#allocation2 + $0x420] sm:$0xff] %vm701, 0.0
    %1571 = vst.msk [vmem:[#allocation2 + $0x428] sm:$0xff] %vm701, 0.0
    %1572 = vst.msk [vmem:[#allocation2 + $0x430] sm:$0xff] %vm701, 0.0
    %1573 = vst.msk [vmem:[#allocation2 + $0x438] sm:$0xff] %vm701, 0.0
    %1574 = vst.msk [vmem:[#allocation2 + $0x440] sm:$0xff] %vm701, 0.0
    %1575 = vst.msk [vmem:[#allocation2 + $0x448] sm:$0xff] %vm701, 0.0
    %1576 = vst.msk [vmem:[#allocation2 + $0x450] sm:$0xff] %vm701, 0.0
    %1577 = vst.msk [vmem:[#allocation2 + $0x458] sm:$0xff] %vm701, 0.0
    %1578 = vst.msk [vmem:[#allocation2 + $0x460] sm:$0xff] %vm701, 0.0
    %1579 = vst.msk [vmem:[#allocation2 + $0x468] sm:$0xff] %vm701, 0.0
    %1580 = vst.msk [vmem:[#allocation2 + $0x470] sm:$0xff] %vm701, 0.0
    %1581 = vst.msk [vmem:[#allocation2 + $0x478] sm:$0xff] %vm701, 0.0
    %s1582 = scalar_lea.vmem [#allocation2], 32
    %1583 = vst.msk [vmem:[%s1582 + $0x8] sm:$0xff] %vm701, %v1374
    %1584 = vst.msk [vmem:[%s1582 + $0x10] sm:$0xff] %vm701, %v1375
    %1585 = vst.msk [vmem:[%s1582 + $0x28] sm:$0xff] %vm701, %v1376
    %1586 = vst.msk [vmem:[%s1582 + $0x30] sm:$0xff] %vm701, %v1377
    %1587 = vst.msk [vmem:[%s1582 + $0x48] sm:$0xff] %vm701, %v1378
    %1588 = vst.msk [vmem:[%s1582 + $0x50] sm:$0xff] %vm701, %v1379
    %1589 = vst.msk [vmem:[%s1582 + $0x68] sm:$0xff] %vm701, %v1380
    %1590 = vst.msk [vmem:[%s1582 + $0x70] sm:$0xff] %vm701, %v1381
    %1591 = vst.msk [vmem:[%s1582 + $0x88] sm:$0xff] %vm701, %v1382
    %1592 = vst.msk [vmem:[%s1582 + $0x90] sm:$0xff] %vm701, %v1383
    %1593 = vst.msk [vmem:[%s1582 + $0xa8] sm:$0xff] %vm701, %v1384
    %1594 = vst.msk [vmem:[%s1582 + $0xb0] sm:$0xff] %vm701, %v1385
    %1595 = vst.msk [vmem:[%s1582 + $0xc8] sm:$0xff] %vm701, %v1386
    %1596 = vst.msk [vmem:[%s1582 + $0xd0] sm:$0xff] %vm701, %v1387
    %1597 = vst.msk [vmem:[%s1582 + $0xe8] sm:$0xff] %vm701, %v1388
    %1598 = vst.msk [vmem:[%s1582 + $0xf0] sm:$0xff] %vm701, %v1389
    %1599 = vst.msk [vmem:[%s1582 + $0x108] sm:$0xff] %vm701, %v1390
    %1600 = vst.msk [vmem:[%s1582 + $0x110] sm:$0xff] %vm701, %v1391
    %1601 = vst.msk [vmem:[%s1582 + $0x128] sm:$0xff] %vm701, %v1392
    %1602 = vst.msk [vmem:[%s1582 + $0x130] sm:$0xff] %vm701, %v1393
    %1603 = vst.msk [vmem:[%s1582 + $0x148] sm:$0xff] %vm701, %v1394
    %1604 = vst.msk [vmem:[%s1582 + $0x150] sm:$0xff] %vm701, %v1395
    %1605 = vst.msk [vmem:[%s1582 + $0x168] sm:$0xff] %vm701, %v1396
    %1606 = vst.msk [vmem:[%s1582 + $0x170] sm:$0xff] %vm701, %v1397
    %1607 = vst.msk [vmem:[%s1582 + $0x188] sm:$0xff] %vm701, %v1398
    %1608 = vst.msk [vmem:[%s1582 + $0x190] sm:$0xff] %vm701, %v1399
    %1609 = vst.msk [vmem:[%s1582 + $0x1a8] sm:$0xff] %vm701, %v1400
    %1610 = vst.msk [vmem:[%s1582 + $0x1b0] sm:$0xff] %vm701, %v1401
    %1611 = vst.msk [vmem:[%s1582 + $0x1c8] sm:$0xff] %vm701, %v1402
    %1612 = vst.msk [vmem:[%s1582 + $0x1d0] sm:$0xff] %vm701, %v1403
    %1613 = vst.msk [vmem:[%s1582 + $0x1e8] sm:$0xff] %vm701, %v1404
    %1614 = vst.msk [vmem:[%s1582 + $0x1f0] sm:$0xff] %vm701, %v1405
    %1615 = vst.msk [vmem:[%s1582 + $0x248] sm:$0xff] %vm701, %v1406
    %1616 = vst.msk [vmem:[%s1582 + $0x250] sm:$0xff] %vm701, %v1407
    %1617 = vst.msk [vmem:[%s1582 + $0x268] sm:$0xff] %vm701, %v1408
    %1618 = vst.msk [vmem:[%s1582 + $0x270] sm:$0xff] %vm701, %v1409
    %1619 = vst.msk [vmem:[%s1582 + $0x288] sm:$0xff] %vm701, %v1410
    %1620 = vst.msk [vmem:[%s1582 + $0x290] sm:$0xff] %vm701, %v1411
    %1621 = vst.msk [vmem:[%s1582 + $0x2a8] sm:$0xff] %vm701, %v1412
    %1622 = vst.msk [vmem:[%s1582 + $0x2b0] sm:$0xff] %vm701, %v1413
    %1623 = vst.msk [vmem:[%s1582 + $0x2c8] sm:$0xff] %vm701, %v1414
    %1624 = vst.msk [vmem:[%s1582 + $0x2d0] sm:$0xff] %vm701, %v1415
    %1625 = vst.msk [vmem:[%s1582 + $0x2e8] sm:$0xff] %vm701, %v1416
    %1626 = vst.msk [vmem:[%s1582 + $0x2f0] sm:$0xff] %vm701, %v1417
    %1627 = vst.msk [vmem:[%s1582 + $0x308] sm:$0xff] %vm701, %v1418
    %1628 = vst.msk [vmem:[%s1582 + $0x310] sm:$0xff] %vm701, %v1419
    %1629 = vst.msk [vmem:[%s1582 + $0x328] sm:$0xff] %vm701, %v1420
    %1630 = vst.msk [vmem:[%s1582 + $0x330] sm:$0xff] %vm701, %v1421
    %1631 = vst.msk [vmem:[%s1582 + $0x348] sm:$0xff] %vm701, %v1422
    %1632 = vst.msk [vmem:[%s1582 + $0x350] sm:$0xff] %vm701, %v1423
    %1633 = vst.msk [vmem:[%s1582 + $0x368] sm:$0xff] %vm701, %v1424
    %1634 = vst.msk [vmem:[%s1582 + $0x370] sm:$0xff] %vm701, %v1425
    %1635 = vst.msk [vmem:[%s1582 + $0x388] sm:$0xff] %vm701, %v1426
    %1636 = vst.msk [vmem:[%s1582 + $0x390] sm:$0xff] %vm701, %v1427
    %1637 = vst.msk [vmem:[%s1582 + $0x3a8] sm:$0xff] %vm701, %v1428
    %1638 = vst.msk [vmem:[%s1582 + $0x3b0] sm:$0xff] %vm701, %v1429
    %1639 = vst.msk [vmem:[%s1582 + $0x3c8] sm:$0xff] %vm701, %v1430
    %1640 = vst.msk [vmem:[%s1582 + $0x3d0] sm:$0xff] %vm701, %v1431
    %1641 = vst.msk [vmem:[%s1582 + $0x3e8] sm:$0xff] %vm701, %v1432
    %1642 = vst.msk [vmem:[%s1582 + $0x3f0] sm:$0xff] %vm701, %v1433
    %1643 = vst.msk [vmem:[%s1582 + $0x408] sm:$0xff] %vm701, %v1434
    %1644 = vst.msk [vmem:[%s1582 + $0x410] sm:$0xff] %vm701, %v1435
    %1645 = vst.msk [vmem:[%s1582 + $0x428] sm:$0xff] %vm701, %v1436
    %1646 = vst.msk [vmem:[%s1582 + $0x430] sm:$0xff] %vm701, %v1437
    %v1647 = vld [vmem:[#allocation2 + $0x7] sm:$0xff]
    %v1648 = vld [vmem:[#allocation2 + $0xf] sm:$0xff]
    %v1649 = vld [vmem:[#allocation2 + $0x27] sm:$0xff]
    %v1650 = vld [vmem:[#allocation2 + $0x2f] sm:$0xff]
    %v1651 = vld [vmem:[#allocation2 + $0x47] sm:$0xff]
    %v1652 = vld [vmem:[#allocation2 + $0x4f] sm:$0xff]
    %v1653 = vld [vmem:[#allocation2 + $0x67] sm:$0xff]
    %v1654 = vld [vmem:[#allocation2 + $0x6f] sm:$0xff]
    %v1655 = vld [vmem:[#allocation2 + $0x87] sm:$0xff]
    %v1656 = vld [vmem:[#allocation2 + $0x8f] sm:$0xff]
    %v1657 = vld [vmem:[#allocation2 + $0xa7] sm:$0xff]
    %v1658 = vld [vmem:[#allocation2 + $0xaf] sm:$0xff]
    %v1659 = vld [vmem:[#allocation2 + $0xc7] sm:$0xff]
    %v1660 = vld [vmem:[#allocation2 + $0xcf] sm:$0xff]
    %v1661 = vld [vmem:[#allocation2 + $0xe7] sm:$0xff]
    %v1662 = vld [vmem:[#allocation2 + $0xef] sm:$0xff]
    %v1663 = vld [vmem:[#allocation2 + $0x107] sm:$0xff]
    %v1664 = vld [vmem:[#allocation2 + $0x10f] sm:$0xff]
    %v1665 = vld [vmem:[#allocation2 + $0x127] sm:$0xff]
    %v1666 = vld [vmem:[#allocation2 + $0x12f] sm:$0xff]
    %v1667 = vld [vmem:[#allocation2 + $0x147] sm:$0xff]
    %v1668 = vld [vmem:[#allocation2 + $0x14f] sm:$0xff]
    %v1669 = vld [vmem:[#allocation2 + $0x167] sm:$0xff]
    %v1670 = vld [vmem:[#allocation2 + $0x16f] sm:$0xff]
    %v1671 = vld [vmem:[#allocation2 + $0x187] sm:$0xff]
    %v1672 = vld [vmem:[#allocation2 + $0x18f] sm:$0xff]
    %v1673 = vld [vmem:[#allocation2 + $0x1a7] sm:$0xff]
    %v1674 = vld [vmem:[#allocation2 + $0x1af] sm:$0xff]
    %v1675 = vld [vmem:[#allocation2 + $0x1c7] sm:$0xff]
    %v1676 = vld [vmem:[#allocation2 + $0x1cf] sm:$0xff]
    %v1677 = vld [vmem:[#allocation2 + $0x1e7] sm:$0xff]
    %v1678 = vld [vmem:[#allocation2 + $0x1ef] sm:$0xff]
    %v1679 = vld [vmem:[#allocation2 + $0x247] sm:$0xff]
    %v1680 = vld [vmem:[#allocation2 + $0x24f] sm:$0xff]
    %v1681 = vld [vmem:[#allocation2 + $0x267] sm:$0xff]
    %v1682 = vld [vmem:[#allocation2 + $0x26f] sm:$0xff]
    %v1683 = vld [vmem:[#allocation2 + $0x287] sm:$0xff]
    %v1684 = vld [vmem:[#allocation2 + $0x28f] sm:$0xff]
    %v1685 = vld [vmem:[#allocation2 + $0x2a7] sm:$0xff]
    %v1686 = vld [vmem:[#allocation2 + $0x2af] sm:$0xff]
    %v1687 = vld [vmem:[#allocation2 + $0x2c7] sm:$0xff]
    %v1688 = vld [vmem:[#allocation2 + $0x2cf] sm:$0xff]
    %v1689 = vld [vmem:[#allocation2 + $0x2e7] sm:$0xff]
    %v1690 = vld [vmem:[#allocation2 + $0x2ef] sm:$0xff]
    %v1691 = vld [vmem:[#allocation2 + $0x307] sm:$0xff]
    %v1692 = vld [vmem:[#allocation2 + $0x30f] sm:$0xff]
    %v1693 = vld [vmem:[#allocation2 + $0x327] sm:$0xff]
    %v1694 = vld [vmem:[#allocation2 + $0x32f] sm:$0xff]
    %v1695 = vld [vmem:[#allocation2 + $0x347] sm:$0xff]
    %v1696 = vld [vmem:[#allocation2 + $0x34f] sm:$0xff]
    %v1697 = vld [vmem:[#allocation2 + $0x367] sm:$0xff]
    %v1698 = vld [vmem:[#allocation2 + $0x36f] sm:$0xff]
    %v1699 = vld [vmem:[#allocation2 + $0x387] sm:$0xff]
    %v1700 = vld [vmem:[#allocation2 + $0x38f] sm:$0xff]
    %v1701 = vld [vmem:[#allocation2 + $0x3a7] sm:$0xff]
    %v1702 = vld [vmem:[#allocation2 + $0x3af] sm:$0xff]
    %v1703 = vld [vmem:[#allocation2 + $0x3c7] sm:$0xff]
    %v1704 = vld [vmem:[#allocation2 + $0x3cf] sm:$0xff]
    %v1705 = vld [vmem:[#allocation2 + $0x3e7] sm:$0xff]
    %v1706 = vld [vmem:[#allocation2 + $0x3ef] sm:$0xff]
    %v1707 = vld [vmem:[#allocation2 + $0x407] sm:$0xff]
    %v1708 = vld [vmem:[#allocation2 + $0x40f] sm:$0xff]
    %v1709 = vld [vmem:[#allocation2 + $0x427] sm:$0xff]
    %v1710 = vld [vmem:[#allocation2 + $0x42f] sm:$0xff]
    %v1711 = vld [vmem:[#allocation6] sm:$0xff]
    %v1712 = vld [vmem:[#allocation6 + $0x8] sm:$0xff]
    %v1713 = vld [vmem:[#allocation2 + $0x8] sm:$0xff]
    %v1714 = vld [vmem:[#allocation2 + $0x10] sm:$0xff]
    %v1715 = vld [vmem:[#allocation2 + $0x28] sm:$0xff]
    %v1716 = vld [vmem:[#allocation2 + $0x30] sm:$0xff]
    %v1717 = vld [vmem:[#allocation2 + $0x48] sm:$0xff]
    %v1718 = vld [vmem:[#allocation2 + $0x50] sm:$0xff]
    %v1719 = vld [vmem:[#allocation2 + $0x68] sm:$0xff]
    %v1720 = vld [vmem:[#allocation2 + $0x70] sm:$0xff]
    %v1721 = vld [vmem:[#allocation2 + $0x88] sm:$0xff]
    %v1722 = vld [vmem:[#allocation2 + $0x90] sm:$0xff]
    %v1723 = vld [vmem:[#allocation2 + $0xa8] sm:$0xff]
    %v1724 = vld [vmem:[#allocation2 + $0xb0] sm:$0xff]
    %v1725 = vld [vmem:[#allocation2 + $0xc8] sm:$0xff]
    %v1726 = vld [vmem:[#allocation2 + $0xd0] sm:$0xff]
    %v1727 = vld [vmem:[#allocation2 + $0xe8] sm:$0xff]
    %v1728 = vld [vmem:[#allocation2 + $0xf0] sm:$0xff]
    %v1729 = vld [vmem:[#allocation2 + $0x108] sm:$0xff]
    %v1730 = vld [vmem:[#allocation2 + $0x110] sm:$0xff]
    %v1731 = vld [vmem:[#allocation2 + $0x128] sm:$0xff]
    %v1732 = vld [vmem:[#allocation2 + $0x130] sm:$0xff]
    %v1733 = vld [vmem:[#allocation2 + $0x148] sm:$0xff]
    %v1734 = vld [vmem:[#allocation2 + $0x150] sm:$0xff]
    %v1735 = vld [vmem:[#allocation2 + $0x168] sm:$0xff]
    %v1736 = vld [vmem:[#allocation2 + $0x170] sm:$0xff]
    %v1737 = vld [vmem:[#allocation2 + $0x188] sm:$0xff]
    %v1738 = vld [vmem:[#allocation2 + $0x190] sm:$0xff]
    %v1739 = vld [vmem:[#allocation2 + $0x1a8] sm:$0xff]
    %v1740 = vld [vmem:[#allocation2 + $0x1b0] sm:$0xff]
    %v1741 = vld [vmem:[#allocation2 + $0x1c8] sm:$0xff]
    %v1742 = vld [vmem:[#allocation2 + $0x1d0] sm:$0xff]
    %v1743 = vld [vmem:[#allocation2 + $0x1e8] sm:$0xff]
    %v1744 = vld [vmem:[#allocation2 + $0x1f0] sm:$0xff]
    %v1745 = vld [vmem:[#allocation2 + $0x248] sm:$0xff]
    %v1746 = vld [vmem:[#allocation2 + $0x250] sm:$0xff]
    %v1747 = vld [vmem:[#allocation2 + $0x268] sm:$0xff]
    %v1748 = vld [vmem:[#allocation2 + $0x270] sm:$0xff]
    %v1749 = vld [vmem:[#allocation2 + $0x288] sm:$0xff]
    %v1750 = vld [vmem:[#allocation2 + $0x290] sm:$0xff]
    %v1751 = vld [vmem:[#allocation2 + $0x2a8] sm:$0xff]
    %v1752 = vld [vmem:[#allocation2 + $0x2b0] sm:$0xff]
    %v1753 = vld [vmem:[#allocation2 + $0x2c8] sm:$0xff]
    %v1754 = vld [vmem:[#allocation2 + $0x2d0] sm:$0xff]
    %v1755 = vld [vmem:[#allocation2 + $0x2e8] sm:$0xff]
    %v1756 = vld [vmem:[#allocation2 + $0x2f0] sm:$0xff]
    %v1757 = vld [vmem:[#allocation2 + $0x308] sm:$0xff]
    %v1758 = vld [vmem:[#allocation2 + $0x310] sm:$0xff]
    %v1759 = vld [vmem:[#allocation2 + $0x328] sm:$0xff]
    %v1760 = vld [vmem:[#allocation2 + $0x330] sm:$0xff]
    %v1761 = vld [vmem:[#allocation2 + $0x348] sm:$0xff]
    %v1762 = vld [vmem:[#allocation2 + $0x350] sm:$0xff]
    %v1763 = vld [vmem:[#allocation2 + $0x368] sm:$0xff]
    %v1764 = vld [vmem:[#allocation2 + $0x370] sm:$0xff]
    %v1765 = vld [vmem:[#allocation2 + $0x388] sm:$0xff]
    %v1766 = vld [vmem:[#allocation2 + $0x390] sm:$0xff]
    %v1767 = vld [vmem:[#allocation2 + $0x3a8] sm:$0xff]
    %v1768 = vld [vmem:[#allocation2 + $0x3b0] sm:$0xff]
    %v1769 = vld [vmem:[#allocation2 + $0x3c8] sm:$0xff]
    %v1770 = vld [vmem:[#allocation2 + $0x3d0] sm:$0xff]
    %v1771 = vld [vmem:[#allocation2 + $0x3e8] sm:$0xff]
    %v1772 = vld [vmem:[#allocation2 + $0x3f0] sm:$0xff]
    %v1773 = vld [vmem:[#allocation2 + $0x408] sm:$0xff]
    %v1774 = vld [vmem:[#allocation2 + $0x410] sm:$0xff]
    %v1775 = vld [vmem:[#allocation2 + $0x428] sm:$0xff]
    %v1776 = vld [vmem:[#allocation2 + $0x430] sm:$0xff]
    %s1777 = scalar_lea.vmem [#allocation6], 16
    %v1778 = vld [vmem:[%s1777] sm:$0xff]
    %v1779 = vld [vmem:[%s1777 + $0x8] sm:$0xff]
    %v1781 = vsel %vm701, %v1713, 0
    %v1784 = vsel %vm701, %v1714, 0
    %v1787 = vsel %vm701, %v1715, 0
    %v1790 = vsel %vm701, %v1716, 0
    %v1793 = vsel %vm701, %v1717, 0
    %v1796 = vsel %vm701, %v1718, 0
    %v1799 = vsel %vm701, %v1719, 0
    %v1802 = vsel %vm701, %v1720, 0
    %v1805 = vsel %vm701, %v1721, 0
    %v1808 = vsel %vm701, %v1722, 0
    %v1811 = vsel %vm701, %v1723, 0
    %v1814 = vsel %vm701, %v1724, 0
    %v1817 = vsel %vm701, %v1725, 0
    %v1820 = vsel %vm701, %v1726, 0
    %v1823 = vsel %vm701, %v1727, 0
    %v1826 = vsel %vm701, %v1728, 0
    %v1829 = vsel %vm701, %v1729, 0
    %v1832 = vsel %vm701, %v1730, 0
    %v1835 = vsel %vm701, %v1731, 0
    %v1838 = vsel %vm701, %v1732, 0
    %v1841 = vsel %vm701, %v1733, 0
    %v1844 = vsel %vm701, %v1734, 0
    %v1847 = vsel %vm701, %v1735, 0
    %v1850 = vsel %vm701, %v1736, 0
    %v1853 = vsel %vm701, %v1737, 0
    %v1856 = vsel %vm701, %v1738, 0
    %v1859 = vsel %vm701, %v1739, 0
    %v1862 = vsel %vm701, %v1740, 0
    %v1865 = vsel %vm701, %v1741, 0
    %v1868 = vsel %vm701, %v1742, 0
    %v1871 = vsel %vm701, %v1743, 0
    %v1874 = vsel %vm701, %v1744, 0
    %v1877 = vsel %vm701, %v1745, 0
    %v1880 = vsel %vm701, %v1746, 0
    %v1883 = vsel %vm701, %v1747, 0
    %v1886 = vsel %vm701, %v1748, 0
    %v1889 = vsel %vm701, %v1749, 0
    %v1892 = vsel %vm701, %v1750, 0
    %v1895 = vsel %vm701, %v1751, 0
    %v1898 = vsel %vm701, %v1752, 0
    %v1901 = vsel %vm701, %v1753, 0
    %v1904 = vsel %vm701, %v1754, 0
    %v1907 = vsel %vm701, %v1755, 0
    %v1910 = vsel %vm701, %v1756, 0
    %v1913 = vsel %vm701, %v1757, 0
    %v1916 = vsel %vm701, %v1758, 0
    %v1919 = vsel %vm701, %v1759, 0
    %v1922 = vsel %vm701, %v1760, 0
    %v1925 = vsel %vm701, %v1761, 0
    %v1928 = vsel %vm701, %v1762, 0
    %v1931 = vsel %vm701, %v1763, 0
    %v1934 = vsel %vm701, %v1764, 0
    %v1937 = vsel %vm701, %v1765, 0
    %v1940 = vsel %vm701, %v1766, 0
    %v1943 = vsel %vm701, %v1767, 0
    %v1946 = vsel %vm701, %v1768, 0
    %v1949 = vsel %vm701, %v1769, 0
    %v1952 = vsel %vm701, %v1770, 0
    %v1955 = vsel %vm701, %v1771, 0
    %v1958 = vsel %vm701, %v1772, 0
    %v1961 = vsel %vm701, %v1773, 0
    %v1964 = vsel %vm701, %v1774, 0
    %v1967 = vsel %vm701, %v1775, 0
    %v1970 = vsel %vm701, %v1776, 0
    %1972 = vmatprep.subr.mxu0 0.0
    %1973 = vmatpush1.msra.mxu0 %v1778
    %1974 = vmatprep.subr.mxu0 0.0
    %1975 = vmatpush1.msra.mxu0 %v1779
    %1976 = vmatprep.subr.mxu0 0.0
    %1977 = vmatpush1.msra.mxu0 0.0
    %1978 = vmatprep.subr.mxu0 0.0
    %1979 = vmatpush1.msra.mxu0 0.0
    %1980 = vmatprep.subr.mxu0 0.0
    %1981 = vmatpush1.msra.mxu0 0.0
    %1982 = vmatprep.subr.mxu0 0.0
    %1983 = vmatpush1.msra.mxu0 0.0
    %1984 = vmatprep.subr.mxu0 0.0
    %1985 = vmatpush1.msra.mxu0 0.0
    %1986 = vmatprep.subr.mxu0 0.0
    %1987 = vmatpush1.msra.mxu0 0.0
    %1988 = vmatprep.subr.mxu0 0.0
    %1989 = vmatpush1.msra.mxu0 0.0
    %1990 = vmatprep.subr.mxu0 0.0
    %1991 = vmatpush1.msra.mxu0 0.0
    %1992 = vmatprep.subr.mxu0 0.0
    %1993 = vmatpush1.msra.mxu0 0.0
    %1994 = vmatprep.subr.mxu0 0.0
    %1995 = vmatpush1.msra.mxu0 0.0
    %1996 = vmatprep.subr.mxu0 0.0
    %1997 = vmatpush1.msra.mxu0 0.0
    %1998 = vmatprep.subr.mxu0 0.0
    %1999 = vmatpush1.msra.mxu0 0.0
    %2000 = vmatprep.subr.mxu0 0.0
    %2001 = vmatpush1.msra.mxu0 0.0
    %2002 = vmatprep.subr.mxu0 0.0
    %2003 = vmatpush1.msra.mxu0 0.0
    %2004 = vmatprep.subr.mxu0 0.0
    %2005 = vmatpush1.msra.mxu0 0.0
    %2006 = vmatprep.subr.mxu0 0.0
    %2007 = vmatpush1.msra.mxu0 0.0
    %2008 = vmatprep.subr.mxu0 0.0
    %2009 = vmatpush1.msra.mxu0 0.0
    %2010 = vmatprep.subr.mxu0 0.0
    %2011 = vmatpush1.msra.mxu0 0.0
    %2012 = vmatprep.subr.mxu0 0.0
    %2013 = vmatpush1.msra.mxu0 0.0
    %2014 = vmatprep.subr.mxu0 0.0
    %2015 = vmatpush1.msra.mxu0 0.0
    %2016 = vmatprep.subr.mxu0 0.0
    %2017 = vmatpush1.msra.mxu0 0.0
    %2018 = vmatprep.subr.mxu0 0.0
    %2019 = vmatpush1.msra.mxu0 0.0
    %2020 = vmatprep.subr.mxu0 0.0
    %2021 = vmatpush1.msra.mxu0 0.0
    %2022 = vmatprep.subr.mxu0 0.0
    %2023 = vmatpush1.msra.mxu0 0.0
    %2024 = vmatprep.subr.mxu0 0.0
    %2025 = vmatpush1.msra.mxu0 0.0
    %2026 = vmatprep.subr.mxu0 0.0
    %2027 = vmatpush1.msra.mxu0 0.0
    %2028 = vmatprep.subr.mxu0 0.0
    %2029 = vmatpush1.msra.mxu0 0.0
    %2030 = vmatprep.subr.mxu0 0.0
    %2031 = vmatpush1.msra.mxu0 0.0
    %2032 = vmatprep.subr.mxu0 0.0
    %2033 = vmatpush1.msra.mxu0 0.0
    %2034 = vmatprep.subr.mxu0 0.0
    %2035 = vmatpush1.msra.mxu0 0.0
    %2036 = vmatprep.mubr.f32.mxu0 0.0
    %2037 = vmatmul.mubr.f32.gmra.mrb[0].mxu0 %v1781
    %v2038 = vpop.f32.mrb[0].mxu0
    %v2039 = vadd.f32 0.0, %v2038
    %v2040 = vpop.f32.mrb[0].mxu0
    %2041 = vmatprep.mubr.f32.mxu0 0.0
    %2042 = vmatmul.mubr.f32.gmra.mrb[0].mxu0 %v1784
    %v2043 = vpop.f32.mrb[0].mxu0
    %v2044 = vadd.f32 0.0, %v2043
    %v2045 = vpop.f32.mrb[0].mxu0
    %2046 = vmatprep.mubr.f32.mxu0 0.0
    %2047 = vmatmul.mubr.f32.gmra.mrb[0].mxu0 %v1787
    %v2048 = vpop.f32.mrb[0].mxu0
    %v2049 = vadd.f32 0.0, %v2048
    %v2050 = vpop.f32.mrb[0].mxu0
    %2051 = vmatprep.mubr.f32.mxu0 0.0
    %2052 = vmatmul.mubr.f32.gmra.mrb[0].mxu0 %v1790
    %v2053 = vpop.f32.mrb[0].mxu0
    %v2054 = vadd.f32 0.0, %v2053
    %v2055 = vpop.f32.mrb[0].mxu0
    %2056 = vmatprep.mubr.f32.mxu0 0.0
    %2057 = vmatmul.mubr.f32.gmra.mrb[0].mxu0 %v1793
    %v2058 = vpop.f32.mrb[0].mxu0
    %v2059 = vadd.f32 0.0, %v2058
    %v2060 = vpop.f32.mrb[0].mxu0
    %2061 = vmatprep.mubr.f32.mxu0 0.0
    %2062 = vmatmul.mubr.f32.gmra.mrb[0].mxu0 %v1796
    %v2063 = vpop.f32.mrb[0].mxu0
    %v2064 = vadd.f32 0.0, %v2063
    %v2065 = vpop.f32.mrb[0].mxu0
    %2066 = vmatprep.mubr.f32.mxu0 0.0
    %2067 = vmatmul.mubr.f32.gmra.mrb[0].mxu0 %v1799
    %v2068 = vpop.f32.mrb[0].mxu0
    %v2069 = vadd.f32 0.0, %v2068
    %v2070 = vpop.f32.mrb[0].mxu0
    %2071 = vmatprep.mubr.f32.mxu0 0.0
    %2072 = vmatmul.mubr.f32.gmra.mrb[0].mxu0 %v1802
    %v2073 = vpop.f32.mrb[0].mxu0
    %v2074 = vadd.f32 0.0, %v2073
    %v2075 = vpop.f32.mrb[0].mxu0
    %2076 = vmatprep.mubr.f32.mxu0 0.0
    %2077 = vmatmul.mubr.f32.gmra.mrb[0].mxu0 %v1805
    %v2078 = vpop.f32.mrb[0].mxu0
    %v2079 = vadd.f32 0.0, %v2078
    %v2080 = vpop.f32.mrb[0].mxu0
    %2081 = vmatprep.mubr.f32.mxu0 0.0
    %2082 = vmatmul.mubr.f32.gmra.mrb[0].mxu0 %v1808
    %v2083 = vpop.f32.mrb[0].mxu0
    %v2084 = vadd.f32 0.0, %v2083
    %v2085 = vpop.f32.mrb[0].mxu0
    %2086 = vmatprep.mubr.f32.mxu0 0.0
    %2087 = vmatmul.mubr.f32.gmra.mrb[0].mxu0 %v1811
    %v2088 = vpop.f32.mrb[0].mxu0
    %v2089 = vadd.f32 0.0, %v2088
    %v2090 = vpop.f32.mrb[0].mxu0
    %2091 = vmatprep.mubr.f32.mxu0 0.0
    %2092 = vmatmul.mubr.f32.gmra.mrb[0].mxu0 %v1814
    %v2093 = vpop.f32.mrb[0].mxu0
    %v2094 = vadd.f32 0.0, %v2093
    %v2095 = vpop.f32.mrb[0].mxu0
    %2096 = vmatprep.mubr.f32.mxu0 0.0
    %2097 = vmatmul.mubr.f32.gmra.mrb[0].mxu0 %v1817
    %v2098 = vpop.f32.mrb[0].mxu0
    %v2099 = vadd.f32 0.0, %v2098
    %v2100 = vpop.f32.mrb[0].mxu0
    %2101 = vmatprep.mubr.f32.mxu0 0.0
    %2102 = vmatmul.mubr.f32.gmra.mrb[0].mxu0 %v1820
    %v2103 = vpop.f32.mrb[0].mxu0
    %v2104 = vadd.f32 0.0, %v2103
    %v2105 = vpop.f32.mrb[0].mxu0
    %2106 = vmatprep.mubr.f32.mxu0 0.0
    %2107 = vmatmul.mubr.f32.gmra.mrb[0].mxu0 %v1823
    %v2108 = vpop.f32.mrb[0].mxu0
    %v2109 = vadd.f32 0.0, %v2108
    %v2110 = vpop.f32.mrb[0].mxu0
    %2111 = vmatprep.mubr.f32.mxu0 0.0
    %2112 = vmatmul.mubr.f32.gmra.mrb[0].mxu0 %v1826
    %v2113 = vpop.f32.mrb[0].mxu0
    %v2114 = vadd.f32 0.0, %v2113
    %v2115 = vpop.f32.mrb[0].mxu0
    %2116 = vmatprep.mubr.f32.mxu0 0.0
    %2117 = vmatmul.mubr.f32.gmra.mrb[0].mxu0 %v1829
    %v2118 = vpop.f32.mrb[0].mxu0
    %v2119 = vadd.f32 0.0, %v2118
    %v2120 = vpop.f32.mrb[0].mxu0
    %2121 = vmatprep.mubr.f32.mxu0 0.0
    %2122 = vmatmul.mubr.f32.gmra.mrb[0].mxu0 %v1832
    %v2123 = vpop.f32.mrb[0].mxu0
    %v2124 = vadd.f32 0.0, %v2123
    %v2125 = vpop.f32.mrb[0].mxu0
    %2126 = vmatprep.mubr.f32.mxu0 0.0
    %2127 = vmatmul.mubr.f32.gmra.mrb[0].mxu0 %v1835
    %v2128 = vpop.f32.mrb[0].mxu0
    %v2129 = vadd.f32 0.0, %v2128
    %v2130 = vpop.f32.mrb[0].mxu0
    %2131 = vmatprep.mubr.f32.mxu0 0.0
    %2132 = vmatmul.mubr.f32.gmra.mrb[0].mxu0 %v1838
    %v2133 = vpop.f32.mrb[0].mxu0
    %v2134 = vadd.f32 0.0, %v2133
    %v2135 = vpop.f32.mrb[0].mxu0
    %2136 = vmatprep.mubr.f32.mxu0 0.0
    %2137 = vmatmul.mubr.f32.gmra.mrb[0].mxu0 %v1841
    %v2138 = vpop.f32.mrb[0].mxu0
    %v2139 = vadd.f32 0.0, %v2138
    %v2140 = vpop.f32.mrb[0].mxu0
    %2141 = vmatprep.mubr.f32.mxu0 0.0
    %2142 = vmatmul.mubr.f32.gmra.mrb[0].mxu0 %v1844
    %v2143 = vpop.f32.mrb[0].mxu0
    %v2144 = vadd.f32 0.0, %v2143
    %v2145 = vpop.f32.mrb[0].mxu0
    %2146 = vmatprep.mubr.f32.mxu0 0.0
    %2147 = vmatmul.mubr.f32.gmra.mrb[0].mxu0 %v1847
    %v2148 = vpop.f32.mrb[0].mxu0
    %v2149 = vadd.f32 0.0, %v2148
    %v2150 = vpop.f32.mrb[0].mxu0
    %2151 = vmatprep.mubr.f32.mxu0 0.0
    %2152 = vmatmul.mubr.f32.gmra.mrb[0].mxu0 %v1850
    %v2153 = vpop.f32.mrb[0].mxu0
    %v2154 = vadd.f32 0.0, %v2153
    %v2155 = vpop.f32.mrb[0].mxu0
    %2156 = vmatprep.mubr.f32.mxu0 0.0
    %2157 = vmatmul.mubr.f32.gmra.mrb[0].mxu0 %v1853
    %v2158 = vpop.f32.mrb[0].mxu0
    %v2159 = vadd.f32 0.0, %v2158
    %v2160 = vpop.f32.mrb[0].mxu0
    %2161 = vmatprep.mubr.f32.mxu0 0.0
    %2162 = vmatmul.mubr.f32.gmra.mrb[0].mxu0 %v1856
    %v2163 = vpop.f32.mrb[0].mxu0
    %v2164 = vadd.f32 0.0, %v2163
    %v2165 = vpop.f32.mrb[0].mxu0
    %2166 = vmatprep.mubr.f32.mxu0 0.0
    %2167 = vmatmul.mubr.f32.gmra.mrb[0].mxu0 %v1859
    %v2168 = vpop.f32.mrb[0].mxu0
    %v2169 = vadd.f32 0.0, %v2168
    %v2170 = vpop.f32.mrb[0].mxu0
    %2171 = vmatprep.mubr.f32.mxu0 0.0
    %2172 = vmatmul.mubr.f32.gmra.mrb[0].mxu0 %v1862
    %v2173 = vpop.f32.mrb[0].mxu0
    %v2174 = vadd.f32 0.0, %v2173
    %v2175 = vpop.f32.mrb[0].mxu0
    %2176 = vmatprep.mubr.f32.mxu0 0.0
    %2177 = vmatmul.mubr.f32.gmra.mrb[0].mxu0 %v1865
    %v2178 = vpop.f32.mrb[0].mxu0
    %v2179 = vadd.f32 0.0, %v2178
    %v2180 = vpop.f32.mrb[0].mxu0
    %2181 = vmatprep.mubr.f32.mxu0 0.0
    %2182 = vmatmul.mubr.f32.gmra.mrb[0].mxu0 %v1868
    %v2183 = vpop.f32.mrb[0].mxu0
    %v2184 = vadd.f32 0.0, %v2183
    %v2185 = vpop.f32.mrb[0].mxu0
    %2186 = vmatprep.mubr.f32.mxu0 0.0
    %2187 = vmatmul.mubr.f32.gmra.mrb[0].mxu0 %v1871
    %v2188 = vpop.f32.mrb[0].mxu0
    %v2189 = vadd.f32 0.0, %v2188
    %v2190 = vpop.f32.mrb[0].mxu0
    %2191 = vmatprep.mubr.f32.mxu0 0.0
    %2192 = vmatmul.mubr.f32.gmra.mrb[0].mxu0 %v1874
    %v2193 = vpop.f32.mrb[0].mxu0
    %v2194 = vadd.f32 0.0, %v2193
    %v2195 = vpop.f32.mrb[0].mxu0
    %2196 = vmatprep.mubr.f32.mxu0 0.0
    %2197 = vmatmul.mubr.f32.gmra.mrb[0].mxu0 %v1877
    %v2198 = vpop.f32.mrb[0].mxu0
    %v2199 = vadd.f32 0.0, %v2198
    %v2200 = vpop.f32.mrb[0].mxu0
    %2201 = vmatprep.mubr.f32.mxu0 0.0
    %2202 = vmatmul.mubr.f32.gmra.mrb[0].mxu0 %v1880
    %v2203 = vpop.f32.mrb[0].mxu0
    %v2204 = vadd.f32 0.0, %v2203
    %v2205 = vpop.f32.mrb[0].mxu0
    %2206 = vmatprep.mubr.f32.mxu0 0.0
    %2207 = vmatmul.mubr.f32.gmra.mrb[0].mxu0 %v1883
    %v2208 = vpop.f32.mrb[0].mxu0
    %v2209 = vadd.f32 0.0, %v2208
    %v2210 = vpop.f32.mrb[0].mxu0
    %2211 = vmatprep.mubr.f32.mxu0 0.0
    %2212 = vmatmul.mubr.f32.gmra.mrb[0].mxu0 %v1886
    %v2213 = vpop.f32.mrb[0].mxu0
    %v2214 = vadd.f32 0.0, %v2213
    %v2215 = vpop.f32.mrb[0].mxu0
    %2216 = vmatprep.mubr.f32.mxu0 0.0
    %2217 = vmatmul.mubr.f32.gmra.mrb[0].mxu0 %v1889
    %v2218 = vpop.f32.mrb[0].mxu0
    %v2219 = vadd.f32 0.0, %v2218
    %v2220 = vpop.f32.mrb[0].mxu0
    %2221 = vmatprep.mubr.f32.mxu0 0.0
    %2222 = vmatmul.mubr.f32.gmra.mrb[0].mxu0 %v1892
    %v2223 = vpop.f32.mrb[0].mxu0
    %v2224 = vadd.f32 0.0, %v2223
    %v2225 = vpop.f32.mrb[0].mxu0
    %2226 = vmatprep.mubr.f32.mxu0 0.0
    %2227 = vmatmul.mubr.f32.gmra.mrb[0].mxu0 %v1895
    %v2228 = vpop.f32.mrb[0].mxu0
    %v2229 = vadd.f32 0.0, %v2228
    %v2230 = vpop.f32.mrb[0].mxu0
    %2231 = vmatprep.mubr.f32.mxu0 0.0
    %2232 = vmatmul.mubr.f32.gmra.mrb[0].mxu0 %v1898
    %v2233 = vpop.f32.mrb[0].mxu0
    %v2234 = vadd.f32 0.0, %v2233
    %v2235 = vpop.f32.mrb[0].mxu0
    %2236 = vmatprep.mubr.f32.mxu0 0.0
    %2237 = vmatmul.mubr.f32.gmra.mrb[0].mxu0 %v1901
    %v2238 = vpop.f32.mrb[0].mxu0
    %v2239 = vadd.f32 0.0, %v2238
    %v2240 = vpop.f32.mrb[0].mxu0
    %2241 = vmatprep.mubr.f32.mxu0 0.0
    %2242 = vmatmul.mubr.f32.gmra.mrb[0].mxu0 %v1904
    %v2243 = vpop.f32.mrb[0].mxu0
    %v2244 = vadd.f32 0.0, %v2243
    %v2245 = vpop.f32.mrb[0].mxu0
    %2246 = vmatprep.mubr.f32.mxu0 0.0
    %2247 = vmatmul.mubr.f32.gmra.mrb[0].mxu0 %v1907
    %v2248 = vpop.f32.mrb[0].mxu0
    %v2249 = vadd.f32 0.0, %v2248
    %v2250 = vpop.f32.mrb[0].mxu0
    %2251 = vmatprep.mubr.f32.mxu0 0.0
    %2252 = vmatmul.mubr.f32.gmra.mrb[0].mxu0 %v1910
    %v2253 = vpop.f32.mrb[0].mxu0
    %v2254 = vadd.f32 0.0, %v2253
    %v2255 = vpop.f32.mrb[0].mxu0
    %2256 = vmatprep.mubr.f32.mxu0 0.0
    %2257 = vmatmul.mubr.f32.gmra.mrb[0].mxu0 %v1913
    %v2258 = vpop.f32.mrb[0].mxu0
    %v2259 = vadd.f32 0.0, %v2258
    %v2260 = vpop.f32.mrb[0].mxu0
    %2261 = vmatprep.mubr.f32.mxu0 0.0
    %2262 = vmatmul.mubr.f32.gmra.mrb[0].mxu0 %v1916
    %v2263 = vpop.f32.mrb[0].mxu0
    %v2264 = vadd.f32 0.0, %v2263
    %v2265 = vpop.f32.mrb[0].mxu0
    %2266 = vmatprep.mubr.f32.mxu0 0.0
    %2267 = vmatmul.mubr.f32.gmra.mrb[0].mxu0 %v1919
    %v2268 = vpop.f32.mrb[0].mxu0
    %v2269 = vadd.f32 0.0, %v2268
    %v2270 = vpop.f32.mrb[0].mxu0
    %2271 = vmatprep.mubr.f32.mxu0 0.0
    %2272 = vmatmul.mubr.f32.gmra.mrb[0].mxu0 %v1922
    %v2273 = vpop.f32.mrb[0].mxu0
    %v2274 = vadd.f32 0.0, %v2273
    %v2275 = vpop.f32.mrb[0].mxu0
    %2276 = vmatprep.mubr.f32.mxu0 0.0
    %2277 = vmatmul.mubr.f32.gmra.mrb[0].mxu0 %v1925
    %v2278 = vpop.f32.mrb[0].mxu0
    %v2279 = vadd.f32 0.0, %v2278
    %v2280 = vpop.f32.mrb[0].mxu0
    %2281 = vmatprep.mubr.f32.mxu0 0.0
    %2282 = vmatmul.mubr.f32.gmra.mrb[0].mxu0 %v1928
    %v2283 = vpop.f32.mrb[0].mxu0
    %v2284 = vadd.f32 0.0, %v2283
    %v2285 = vpop.f32.mrb[0].mxu0
    %2286 = vmatprep.mubr.f32.mxu0 0.0
    %2287 = vmatmul.mubr.f32.gmra.mrb[0].mxu0 %v1931
    %v2288 = vpop.f32.mrb[0].mxu0
    %v2289 = vadd.f32 0.0, %v2288
    %v2290 = vpop.f32.mrb[0].mxu0
    %2291 = vmatprep.mubr.f32.mxu0 0.0
    %2292 = vmatmul.mubr.f32.gmra.mrb[0].mxu0 %v1934
    %v2293 = vpop.f32.mrb[0].mxu0
    %v2294 = vadd.f32 0.0, %v2293
    %v2295 = vpop.f32.mrb[0].mxu0
    %2296 = vmatprep.mubr.f32.mxu0 0.0
    %2297 = vmatmul.mubr.f32.gmra.mrb[0].mxu0 %v1937
    %v2298 = vpop.f32.mrb[0].mxu0
    %v2299 = vadd.f32 0.0, %v2298
    %v2300 = vpop.f32.mrb[0].mxu0
    %2301 = vmatprep.mubr.f32.mxu0 0.0
    %2302 = vmatmul.mubr.f32.gmra.mrb[0].mxu0 %v1940
    %v2303 = vpop.f32.mrb[0].mxu0
    %v2304 = vadd.f32 0.0, %v2303
    %v2305 = vpop.f32.mrb[0].mxu0
    %2306 = vmatprep.mubr.f32.mxu0 0.0
    %2307 = vmatmul.mubr.f32.gmra.mrb[0].mxu0 %v1943
    %v2308 = vpop.f32.mrb[0].mxu0
    %v2309 = vadd.f32 0.0, %v2308
    %v2310 = vpop.f32.mrb[0].mxu0
    %2311 = vmatprep.mubr.f32.mxu0 0.0
    %2312 = vmatmul.mubr.f32.gmra.mrb[0].mxu0 %v1946
    %v2313 = vpop.f32.mrb[0].mxu0
    %v2314 = vadd.f32 0.0, %v2313
    %v2315 = vpop.f32.mrb[0].mxu0
    %2316 = vmatprep.mubr.f32.mxu0 0.0
    %2317 = vmatmul.mubr.f32.gmra.mrb[0].mxu0 %v1949
    %v2318 = vpop.f32.mrb[0].mxu0
    %v2319 = vadd.f32 0.0, %v2318
    %v2320 = vpop.f32.mrb[0].mxu0
    %2321 = vmatprep.mubr.f32.mxu0 0.0
    %2322 = vmatmul.mubr.f32.gmra.mrb[0].mxu0 %v1952
    %v2323 = vpop.f32.mrb[0].mxu0
    %v2324 = vadd.f32 0.0, %v2323
    %v2325 = vpop.f32.mrb[0].mxu0
    %2326 = vmatprep.mubr.f32.mxu0 0.0
    %2327 = vmatmul.mubr.f32.gmra.mrb[0].mxu0 %v1955
    %v2328 = vpop.f32.mrb[0].mxu0
    %v2329 = vadd.f32 0.0, %v2328
    %v2330 = vpop.f32.mrb[0].mxu0
    %2331 = vmatprep.mubr.f32.mxu0 0.0
    %2332 = vmatmul.mubr.f32.gmra.mrb[0].mxu0 %v1958
    %v2333 = vpop.f32.mrb[0].mxu0
    %v2334 = vadd.f32 0.0, %v2333
    %v2335 = vpop.f32.mrb[0].mxu0
    %2336 = vmatprep.mubr.f32.mxu0 0.0
    %2337 = vmatmul.mubr.f32.gmra.mrb[0].mxu0 %v1961
    %v2338 = vpop.f32.mrb[0].mxu0
    %v2339 = vadd.f32 0.0, %v2338
    %v2340 = vpop.f32.mrb[0].mxu0
    %2341 = vmatprep.mubr.f32.mxu0 0.0
    %2342 = vmatmul.mubr.f32.gmra.mrb[0].mxu0 %v1964
    %v2343 = vpop.f32.mrb[0].mxu0
    %v2344 = vadd.f32 0.0, %v2343
    %v2345 = vpop.f32.mrb[0].mxu0
    %2346 = vmatprep.mubr.f32.mxu0 0.0
    %2347 = vmatmul.mubr.f32.gmra.mrb[0].mxu0 %v1967
    %v2348 = vpop.f32.mrb[0].mxu0
    %v2349 = vadd.f32 0.0, %v2348
    %v2350 = vpop.f32.mrb[0].mxu0
    %2351 = vmatprep.mubr.f32.mxu0 0.0
    %2352 = vmatmul.mubr.f32.gmra.mrb[0].mxu0 %v1970
    %v2353 = vpop.f32.mrb[0].mxu0
    %v2354 = vadd.f32 0.0, %v2353
    %v2355 = vpop.f32.mrb[0].mxu0
    %2356 = vdwg.mxu0
    %v2358 = vsel %vm701, %v1647, 0
    %v2361 = vsel %vm701, %v1648, 0
    %v2364 = vsel %vm701, %v1649, 0
    %v2367 = vsel %vm701, %v1650, 0
    %v2370 = vsel %vm701, %v1651, 0
    %v2373 = vsel %vm701, %v1652, 0
    %v2376 = vsel %vm701, %v1653, 0
    %v2379 = vsel %vm701, %v1654, 0
    %v2382 = vsel %vm701, %v1655, 0
    %v2385 = vsel %vm701, %v1656, 0
    %v2388 = vsel %vm701, %v1657, 0
    %v2391 = vsel %vm701, %v1658, 0
    %v2394 = vsel %vm701, %v1659, 0
    %v2397 = vsel %vm701, %v1660, 0
    %v2400 = vsel %vm701, %v1661, 0
    %v2403 = vsel %vm701, %v1662, 0
    %v2406 = vsel %vm701, %v1663, 0
    %v2409 = vsel %vm701, %v1664, 0
    %v2412 = vsel %vm701, %v1665, 0
    %v2415 = vsel %vm701, %v1666, 0
    %v2418 = vsel %vm701, %v1667, 0
    %v2421 = vsel %vm701, %v1668, 0
    %v2424 = vsel %vm701, %v1669, 0
    %v2427 = vsel %vm701, %v1670, 0
    %v2430 = vsel %vm701, %v1671, 0
    %v2433 = vsel %vm701, %v1672, 0
    %v2436 = vsel %vm701, %v1673, 0
    %v2439 = vsel %vm701, %v1674, 0
    %v2442 = vsel %vm701, %v1675, 0
    %v2445 = vsel %vm701, %v1676, 0
    %v2448 = vsel %vm701, %v1677, 0
    %v2451 = vsel %vm701, %v1678, 0
    %v2454 = vsel %vm701, %v1679, 0
    %v2457 = vsel %vm701, %v1680, 0
    %v2460 = vsel %vm701, %v1681, 0
    %v2463 = vsel %vm701, %v1682, 0
    %v2466 = vsel %vm701, %v1683, 0
    %v2469 = vsel %vm701, %v1684, 0
    %v2472 = vsel %vm701, %v1685, 0
    %v2475 = vsel %vm701, %v1686, 0
    %v2478 = vsel %vm701, %v1687, 0
    %v2481 = vsel %vm701, %v1688, 0
    %v2484 = vsel %vm701, %v1689, 0
    %v2487 = vsel %vm701, %v1690, 0
    %v2490 = vsel %vm701, %v1691, 0
    %v2493 = vsel %vm701, %v1692, 0
    %v2496 = vsel %vm701, %v1693, 0
    %v2499 = vsel %vm701, %v1694, 0
    %v2502 = vsel %vm701, %v1695, 0
    %v2505 = vsel %vm701, %v1696, 0
    %v2508 = vsel %vm701, %v1697, 0
    %v2511 = vsel %vm701, %v1698, 0
    %v2514 = vsel %vm701, %v1699, 0
    %v2517 = vsel %vm701, %v1700, 0
    %v2520 = vsel %vm701, %v1701, 0
    %v2523 = vsel %vm701, %v1702, 0
    %v2526 = vsel %vm701, %v1703, 0
    %v2529 = vsel %vm701, %v1704, 0
    %v2532 = vsel %vm701, %v1705, 0
    %v2535 = vsel %vm701, %v1706, 0
    %v2538 = vsel %vm701, %v1707, 0
    %v2541 = vsel %vm701, %v1708, 0
    %v2544 = vsel %vm701, %v1709, 0
    %v2547 = vsel %vm701, %v1710, 0
    %2549 = vmatprep.subr.mxu0 0.0
    %2550 = vmatpush1.msra.mxu0 %v1711
    %2551 = vmatprep.subr.mxu0 0.0
    %2552 = vmatpush1.msra.mxu0 %v1712
    %2553 = vmatprep.subr.mxu0 0.0
    %2554 = vmatpush1.msra.mxu0 0.0
    %2555 = vmatprep.subr.mxu0 0.0
    %2556 = vmatpush1.msra.mxu0 0.0
    %2557 = vmatprep.subr.mxu0 0.0
    %2558 = vmatpush1.msra.mxu0 0.0
    %2559 = vmatprep.subr.mxu0 0.0
    %2560 = vmatpush1.msra.mxu0 0.0
    %2561 = vmatprep.subr.mxu0 0.0
    %2562 = vmatpush1.msra.mxu0 0.0
    %2563 = vmatprep.subr.mxu0 0.0
    %2564 = vmatpush1.msra.mxu0 0.0
    %2565 = vmatprep.subr.mxu0 0.0
    %2566 = vmatpush1.msra.mxu0 0.0
    %2567 = vmatprep.subr.mxu0 0.0
    %2568 = vmatpush1.msra.mxu0 0.0
    %2569 = vmatprep.subr.mxu0 0.0
    %2570 = vmatpush1.msra.mxu0 0.0
    %2571 = vmatprep.subr.mxu0 0.0
    %2572 = vmatpush1.msra.mxu0 0.0
    %2573 = vmatprep.subr.mxu0 0.0
    %2574 = vmatpush1.msra.mxu0 0.0
    %2575 = vmatprep.subr.mxu0 0.0
    %2576 = vmatpush1.msra.mxu0 0.0
    %2577 = vmatprep.subr.mxu0 0.0
    %2578 = vmatpush1.msra.mxu0 0.0
    %2579 = vmatprep.subr.mxu0 0.0
    %2580 = vmatpush1.msra.mxu0 0.0
    %2581 = vmatprep.subr.mxu0 0.0
    %2582 = vmatpush1.msra.mxu0 0.0
    %2583 = vmatprep.subr.mxu0 0.0
    %2584 = vmatpush1.msra.mxu0 0.0
    %2585 = vmatprep.subr.mxu0 0.0
    %2586 = vmatpush1.msra.mxu0 0.0
    %2587 = vmatprep.subr.mxu0 0.0
    %2588 = vmatpush1.msra.mxu0 0.0
    %2589 = vmatprep.subr.mxu0 0.0
    %2590 = vmatpush1.msra.mxu0 0.0
    %2591 = vmatprep.subr.mxu0 0.0
    %2592 = vmatpush1.msra.mxu0 0.0
    %2593 = vmatprep.subr.mxu0 0.0
    %2594 = vmatpush1.msra.mxu0 0.0
    %2595 = vmatprep.subr.mxu0 0.0
    %2596 = vmatpush1.msra.mxu0 0.0
    %2597 = vmatprep.subr.mxu0 0.0
    %2598 = vmatpush1.msra.mxu0 0.0
    %2599 = vmatprep.subr.mxu0 0.0
    %2600 = vmatpush1.msra.mxu0 0.0
    %2601 = vmatprep.subr.mxu0 0.0
    %2602 = vmatpush1.msra.mxu0 0.0
    %2603 = vmatprep.subr.mxu0 0.0
    %2604 = vmatpush1.msra.mxu0 0.0
    %2605 = vmatprep.subr.mxu0 0.0
    %2606 = vmatpush1.msra.mxu0 0.0
    %2607 = vmatprep.subr.mxu0 0.0
    %2608 = vmatpush1.msra.mxu0 0.0
    %2609 = vmatprep.subr.mxu0 0.0
    %2610 = vmatpush1.msra.mxu0 0.0
    %2611 = vmatprep.subr.mxu0 0.0
    %2612 = vmatpush1.msra.mxu0 0.0
    %2613 = vmatprep.mubr.f32.mxu0 0.0
    %2614 = vmatmul.mubr.f32.gmra.mrb[0].mxu0 %v2358
    %v2615 = vpop.f32.mrb[0].mxu0
    %v2616 = vadd.f32 %v2039, %v2615
    %v2617 = vpop.f32.mrb[0].mxu0
    %2618 = vmatprep.mubr.f32.mxu0 0.0
    %2619 = vmatmul.mubr.f32.gmra.mrb[0].mxu0 %v2361
    %v2620 = vpop.f32.mrb[0].mxu0
    %v2621 = vadd.f32 %v2044, %v2620
    %v2622 = vpop.f32.mrb[0].mxu0
    %2623 = vmatprep.mubr.f32.mxu0 0.0
    %2624 = vmatmul.mubr.f32.gmra.mrb[0].mxu0 %v2364
    %v2625 = vpop.f32.mrb[0].mxu0
    %v2626 = vadd.f32 %v2049, %v2625
    %v2627 = vpop.f32.mrb[0].mxu0
    %2628 = vmatprep.mubr.f32.mxu0 0.0
    %2629 = vmatmul.mubr.f32.gmra.mrb[0].mxu0 %v2367
    %v2630 = vpop.f32.mrb[0].mxu0
    %v2631 = vadd.f32 %v2054, %v2630
    %v2632 = vpop.f32.mrb[0].mxu0
    %2633 = vmatprep.mubr.f32.mxu0 0.0
    %2634 = vmatmul.mubr.f32.gmra.mrb[0].mxu0 %v2370
    %v2635 = vpop.f32.mrb[0].mxu0
    %v2636 = vadd.f32 %v2059, %v2635
    %v2637 = vpop.f32.mrb[0].mxu0
    %2638 = vmatprep.mubr.f32.mxu0 0.0
    %2639 = vmatmul.mubr.f32.gmra.mrb[0].mxu0 %v2373
    %v2640 = vpop.f32.mrb[0].mxu0
    %v2641 = vadd.f32 %v2064, %v2640
    %v2642 = vpop.f32.mrb[0].mxu0
    %2643 = vmatprep.mubr.f32.mxu0 0.0
    %2644 = vmatmul.mubr.f32.gmra.mrb[0].mxu0 %v2376
    %v2645 = vpop.f32.mrb[0].mxu0
    %v2646 = vadd.f32 %v2069, %v2645
    %v2647 = vpop.f32.mrb[0].mxu0
    %2648 = vmatprep.mubr.f32.mxu0 0.0
    %2649 = vmatmul.mubr.f32.gmra.mrb[0].mxu0 %v2379
    %v2650 = vpop.f32.mrb[0].mxu0
    %v2651 = vadd.f32 %v2074, %v2650
    %v2652 = vpop.f32.mrb[0].mxu0
    %2653 = vmatprep.mubr.f32.mxu0 0.0
    %2654 = vmatmul.mubr.f32.gmra.mrb[0].mxu0 %v2382
    %v2655 = vpop.f32.mrb[0].mxu0
    %v2656 = vadd.f32 %v2079, %v2655
    %v2657 = vpop.f32.mrb[0].mxu0
    %2658 = vmatprep.mubr.f32.mxu0 0.0
    %2659 = vmatmul.mubr.f32.gmra.mrb[0].mxu0 %v2385
    %v2660 = vpop.f32.mrb[0].mxu0
    %v2661 = vadd.f32 %v2084, %v2660
    %v2662 = vpop.f32.mrb[0].mxu0
    %2663 = vmatprep.mubr.f32.mxu0 0.0
    %2664 = vmatmul.mubr.f32.gmra.mrb[0].mxu0 %v2388
    %v2665 = vpop.f32.mrb[0].mxu0
    %v2666 = vadd.f32 %v2089, %v2665
    %v2667 = vpop.f32.mrb[0].mxu0
    %2668 = vmatprep.mubr.f32.mxu0 0.0
    %2669 = vmatmul.mubr.f32.gmra.mrb[0].mxu0 %v2391
    %v2670 = vpop.f32.mrb[0].mxu0
    %v2671 = vadd.f32 %v2094, %v2670
    %v2672 = vpop.f32.mrb[0].mxu0
    %2673 = vmatprep.mubr.f32.mxu0 0.0
    %2674 = vmatmul.mubr.f32.gmra.mrb[0].mxu0 %v2394
    %v2675 = vpop.f32.mrb[0].mxu0
    %v2676 = vadd.f32 %v2099, %v2675
    %v2677 = vpop.f32.mrb[0].mxu0
    %2678 = vmatprep.mubr.f32.mxu0 0.0
    %2679 = vmatmul.mubr.f32.gmra.mrb[0].mxu0 %v2397
    %v2680 = vpop.f32.mrb[0].mxu0
    %v2681 = vadd.f32 %v2104, %v2680
    %v2682 = vpop.f32.mrb[0].mxu0
    %2683 = vmatprep.mubr.f32.mxu0 0.0
    %2684 = vmatmul.mubr.f32.gmra.mrb[0].mxu0 %v2400
    %v2685 = vpop.f32.mrb[0].mxu0
    %v2686 = vadd.f32 %v2109, %v2685
    %v2687 = vpop.f32.mrb[0].mxu0
    %2688 = vmatprep.mubr.f32.mxu0 0.0
    %2689 = vmatmul.mubr.f32.gmra.mrb[0].mxu0 %v2403
    %v2690 = vpop.f32.mrb[0].mxu0
    %v2691 = vadd.f32 %v2114, %v2690
    %v2692 = vpop.f32.mrb[0].mxu0
    %2693 = vmatprep.mubr.f32.mxu0 0.0
    %2694 = vmatmul.mubr.f32.gmra.mrb[0].mxu0 %v2406
    %v2695 = vpop.f32.mrb[0].mxu0
    %v2696 = vadd.f32 %v2119, %v2695
    %v2697 = vpop.f32.mrb[0].mxu0
    %2698 = vmatprep.mubr.f32.mxu0 0.0
    %2699 = vmatmul.mubr.f32.gmra.mrb[0].mxu0 %v2409
    %v2700 = vpop.f32.mrb[0].mxu0
    %v2701 = vadd.f32 %v2124, %v2700
    %v2702 = vpop.f32.mrb[0].mxu0
    %2703 = vmatprep.mubr.f32.mxu0 0.0
    %2704 = vmatmul.mubr.f32.gmra.mrb[0].mxu0 %v2412
    %v2705 = vpop.f32.mrb[0].mxu0
    %v2706 = vadd.f32 %v2129, %v2705
    %v2707 = vpop.f32.mrb[0].mxu0
    %2708 = vmatprep.mubr.f32.mxu0 0.0
    %2709 = vmatmul.mubr.f32.gmra.mrb[0].mxu0 %v2415
    %v2710 = vpop.f32.mrb[0].mxu0
    %v2711 = vadd.f32 %v2134, %v2710
    %v2712 = vpop.f32.mrb[0].mxu0
    %2713 = vmatprep.mubr.f32.mxu0 0.0
    %2714 = vmatmul.mubr.f32.gmra.mrb[0].mxu0 %v2418
    %v2715 = vpop.f32.mrb[0].mxu0
    %v2716 = vadd.f32 %v2139, %v2715
    %v2717 = vpop.f32.mrb[0].mxu0
    %2718 = vmatprep.mubr.f32.mxu0 0.0
    %2719 = vmatmul.mubr.f32.gmra.mrb[0].mxu0 %v2421
    %v2720 = vpop.f32.mrb[0].mxu0
    %v2721 = vadd.f32 %v2144, %v2720
    %v2722 = vpop.f32.mrb[0].mxu0
    %2723 = vmatprep.mubr.f32.mxu0 0.0
    %2724 = vmatmul.mubr.f32.gmra.mrb[0].mxu0 %v2424
    %v2725 = vpop.f32.mrb[0].mxu0
    %v2726 = vadd.f32 %v2149, %v2725
    %v2727 = vpop.f32.mrb[0].mxu0
    %2728 = vmatprep.mubr.f32.mxu0 0.0
    %2729 = vmatmul.mubr.f32.gmra.mrb[0].mxu0 %v2427
    %v2730 = vpop.f32.mrb[0].mxu0
    %v2731 = vadd.f32 %v2154, %v2730
    %v2732 = vpop.f32.mrb[0].mxu0
    %2733 = vmatprep.mubr.f32.mxu0 0.0
    %2734 = vmatmul.mubr.f32.gmra.mrb[0].mxu0 %v2430
    %v2735 = vpop.f32.mrb[0].mxu0
    %v2736 = vadd.f32 %v2159, %v2735
    %v2737 = vpop.f32.mrb[0].mxu0
    %2738 = vmatprep.mubr.f32.mxu0 0.0
    %2739 = vmatmul.mubr.f32.gmra.mrb[0].mxu0 %v2433
    %v2740 = vpop.f32.mrb[0].mxu0
    %v2741 = vadd.f32 %v2164, %v2740
    %v2742 = vpop.f32.mrb[0].mxu0
    %2743 = vmatprep.mubr.f32.mxu0 0.0
    %2744 = vmatmul.mubr.f32.gmra.mrb[0].mxu0 %v2436
    %v2745 = vpop.f32.mrb[0].mxu0
    %v2746 = vadd.f32 %v2169, %v2745
    %v2747 = vpop.f32.mrb[0].mxu0
    %2748 = vmatprep.mubr.f32.mxu0 0.0
    %2749 = vmatmul.mubr.f32.gmra.mrb[0].mxu0 %v2439
    %v2750 = vpop.f32.mrb[0].mxu0
    %v2751 = vadd.f32 %v2174, %v2750
    %v2752 = vpop.f32.mrb[0].mxu0
    %2753 = vmatprep.mubr.f32.mxu0 0.0
    %2754 = vmatmul.mubr.f32.gmra.mrb[0].mxu0 %v2442
    %v2755 = vpop.f32.mrb[0].mxu0
    %v2756 = vadd.f32 %v2179, %v2755
    %v2757 = vpop.f32.mrb[0].mxu0
    %2758 = vmatprep.mubr.f32.mxu0 0.0
    %2759 = vmatmul.mubr.f32.gmra.mrb[0].mxu0 %v2445
    %v2760 = vpop.f32.mrb[0].mxu0
    %v2761 = vadd.f32 %v2184, %v2760
    %v2762 = vpop.f32.mrb[0].mxu0
    %2763 = vmatprep.mubr.f32.mxu0 0.0
    %2764 = vmatmul.mubr.f32.gmra.mrb[0].mxu0 %v2448
    %v2765 = vpop.f32.mrb[0].mxu0
    %v2766 = vadd.f32 %v2189, %v2765
    %v2767 = vpop.f32.mrb[0].mxu0
    %2768 = vmatprep.mubr.f32.mxu0 0.0
    %2769 = vmatmul.mubr.f32.gmra.mrb[0].mxu0 %v2451
    %v2770 = vpop.f32.mrb[0].mxu0
    %v2771 = vadd.f32 %v2194, %v2770
    %v2772 = vpop.f32.mrb[0].mxu0
    %2773 = vmatprep.mubr.f32.mxu0 0.0
    %2774 = vmatmul.mubr.f32.gmra.mrb[0].mxu0 %v2454
    %v2775 = vpop.f32.mrb[0].mxu0
    %v2776 = vadd.f32 %v2199, %v2775
    %v2777 = vpop.f32.mrb[0].mxu0
    %2778 = vmatprep.mubr.f32.mxu0 0.0
    %2779 = vmatmul.mubr.f32.gmra.mrb[0].mxu0 %v2457
    %v2780 = vpop.f32.mrb[0].mxu0
    %v2781 = vadd.f32 %v2204, %v2780
    %v2782 = vpop.f32.mrb[0].mxu0
    %2783 = vmatprep.mubr.f32.mxu0 0.0
    %2784 = vmatmul.mubr.f32.gmra.mrb[0].mxu0 %v2460
    %v2785 = vpop.f32.mrb[0].mxu0
    %v2786 = vadd.f32 %v2209, %v2785
    %v2787 = vpop.f32.mrb[0].mxu0
    %2788 = vmatprep.mubr.f32.mxu0 0.0
    %2789 = vmatmul.mubr.f32.gmra.mrb[0].mxu0 %v2463
    %v2790 = vpop.f32.mrb[0].mxu0
    %v2791 = vadd.f32 %v2214, %v2790
    %v2792 = vpop.f32.mrb[0].mxu0
    %2793 = vmatprep.mubr.f32.mxu0 0.0
    %2794 = vmatmul.mubr.f32.gmra.mrb[0].mxu0 %v2466
    %v2795 = vpop.f32.mrb[0].mxu0
    %v2796 = vadd.f32 %v2219, %v2795
    %v2797 = vpop.f32.mrb[0].mxu0
    %2798 = vmatprep.mubr.f32.mxu0 0.0
    %2799 = vmatmul.mubr.f32.gmra.mrb[0].mxu0 %v2469
    %v2800 = vpop.f32.mrb[0].mxu0
    %v2801 = vadd.f32 %v2224, %v2800
    %v2802 = vpop.f32.mrb[0].mxu0
    %2803 = vmatprep.mubr.f32.mxu0 0.0
    %2804 = vmatmul.mubr.f32.gmra.mrb[0].mxu0 %v2472
    %v2805 = vpop.f32.mrb[0].mxu0
    %v2806 = vadd.f32 %v2229, %v2805
    %v2807 = vpop.f32.mrb[0].mxu0
    %2808 = vmatprep.mubr.f32.mxu0 0.0
    %2809 = vmatmul.mubr.f32.gmra.mrb[0].mxu0 %v2475
    %v2810 = vpop.f32.mrb[0].mxu0
    %v2811 = vadd.f32 %v2234, %v2810
    %v2812 = vpop.f32.mrb[0].mxu0
    %2813 = vmatprep.mubr.f32.mxu0 0.0
    %2814 = vmatmul.mubr.f32.gmra.mrb[0].mxu0 %v2478
    %v2815 = vpop.f32.mrb[0].mxu0
    %v2816 = vadd.f32 %v2239, %v2815
    %v2817 = vpop.f32.mrb[0].mxu0
    %2818 = vmatprep.mubr.f32.mxu0 0.0
    %2819 = vmatmul.mubr.f32.gmra.mrb[0].mxu0 %v2481
    %v2820 = vpop.f32.mrb[0].mxu0
    %v2821 = vadd.f32 %v2244, %v2820
    %v2822 = vpop.f32.mrb[0].mxu0
    %2823 = vmatprep.mubr.f32.mxu0 0.0
    %2824 = vmatmul.mubr.f32.gmra.mrb[0].mxu0 %v2484
    %v2825 = vpop.f32.mrb[0].mxu0
    %v2826 = vadd.f32 %v2249, %v2825
    %v2827 = vpop.f32.mrb[0].mxu0
    %2828 = vmatprep.mubr.f32.mxu0 0.0
    %2829 = vmatmul.mubr.f32.gmra.mrb[0].mxu0 %v2487
    %v2830 = vpop.f32.mrb[0].mxu0
    %v2831 = vadd.f32 %v2254, %v2830
    %v2832 = vpop.f32.mrb[0].mxu0
    %2833 = vmatprep.mubr.f32.mxu0 0.0
    %2834 = vmatmul.mubr.f32.gmra.mrb[0].mxu0 %v2490
    %v2835 = vpop.f32.mrb[0].mxu0
    %v2836 = vadd.f32 %v2259, %v2835
    %v2837 = vpop.f32.mrb[0].mxu0
    %2838 = vmatprep.mubr.f32.mxu0 0.0
    %2839 = vmatmul.mubr.f32.gmra.mrb[0].mxu0 %v2493
    %v2840 = vpop.f32.mrb[0].mxu0
    %v2841 = vadd.f32 %v2264, %v2840
    %v2842 = vpop.f32.mrb[0].mxu0
    %2843 = vmatprep.mubr.f32.mxu0 0.0
    %2844 = vmatmul.mubr.f32.gmra.mrb[0].mxu0 %v2496
    %v2845 = vpop.f32.mrb[0].mxu0
    %v2846 = vadd.f32 %v2269, %v2845
    %v2847 = vpop.f32.mrb[0].mxu0
    %2848 = vmatprep.mubr.f32.mxu0 0.0
    %2849 = vmatmul.mubr.f32.gmra.mrb[0].mxu0 %v2499
    %v2850 = vpop.f32.mrb[0].mxu0
    %v2851 = vadd.f32 %v2274, %v2850
    %v2852 = vpop.f32.mrb[0].mxu0
    %2853 = vmatprep.mubr.f32.mxu0 0.0
    %2854 = vmatmul.mubr.f32.gmra.mrb[0].mxu0 %v2502
    %v2855 = vpop.f32.mrb[0].mxu0
    %v2856 = vadd.f32 %v2279, %v2855
    %v2857 = vpop.f32.mrb[0].mxu0
    %2858 = vmatprep.mubr.f32.mxu0 0.0
    %2859 = vmatmul.mubr.f32.gmra.mrb[0].mxu0 %v2505
    %v2860 = vpop.f32.mrb[0].mxu0
    %v2861 = vadd.f32 %v2284, %v2860
    %v2862 = vpop.f32.mrb[0].mxu0
    %2863 = vmatprep.mubr.f32.mxu0 0.0
    %2864 = vmatmul.mubr.f32.gmra.mrb[0].mxu0 %v2508
    %v2865 = vpop.f32.mrb[0].mxu0
    %v2866 = vadd.f32 %v2289, %v2865
    %v2867 = vpop.f32.mrb[0].mxu0
    %2868 = vmatprep.mubr.f32.mxu0 0.0
    %2869 = vmatmul.mubr.f32.gmra.mrb[0].mxu0 %v2511
    %v2870 = vpop.f32.mrb[0].mxu0
    %v2871 = vadd.f32 %v2294, %v2870
    %v2872 = vpop.f32.mrb[0].mxu0
    %2873 = vmatprep.mubr.f32.mxu0 0.0
    %2874 = vmatmul.mubr.f32.gmra.mrb[0].mxu0 %v2514
    %v2875 = vpop.f32.mrb[0].mxu0
    %v2876 = vadd.f32 %v2299, %v2875
    %v2877 = vpop.f32.mrb[0].mxu0
    %2878 = vmatprep.mubr.f32.mxu0 0.0
    %2879 = vmatmul.mubr.f32.gmra.mrb[0].mxu0 %v2517
    %v2880 = vpop.f32.mrb[0].mxu0
    %v2881 = vadd.f32 %v2304, %v2880
    %v2882 = vpop.f32.mrb[0].mxu0
    %2883 = vmatprep.mubr.f32.mxu0 0.0
    %2884 = vmatmul.mubr.f32.gmra.mrb[0].mxu0 %v2520
    %v2885 = vpop.f32.mrb[0].mxu0
    %v2886 = vadd.f32 %v2309, %v2885
    %v2887 = vpop.f32.mrb[0].mxu0
    %2888 = vmatprep.mubr.f32.mxu0 0.0
    %2889 = vmatmul.mubr.f32.gmra.mrb[0].mxu0 %v2523
    %v2890 = vpop.f32.mrb[0].mxu0
    %v2891 = vadd.f32 %v2314, %v2890
    %v2892 = vpop.f32.mrb[0].mxu0
    %2893 = vmatprep.mubr.f32.mxu0 0.0
    %2894 = vmatmul.mubr.f32.gmra.mrb[0].mxu0 %v2526
    %v2895 = vpop.f32.mrb[0].mxu0
    %v2896 = vadd.f32 %v2319, %v2895
    %v2897 = vpop.f32.mrb[0].mxu0
    %2898 = vmatprep.mubr.f32.mxu0 0.0
    %2899 = vmatmul.mubr.f32.gmra.mrb[0].mxu0 %v2529
    %v2900 = vpop.f32.mrb[0].mxu0
    %v2901 = vadd.f32 %v2324, %v2900
    %v2902 = vpop.f32.mrb[0].mxu0
    %2903 = vmatprep.mubr.f32.mxu0 0.0
    %2904 = vmatmul.mubr.f32.gmra.mrb[0].mxu0 %v2532
    %v2905 = vpop.f32.mrb[0].mxu0
    %v2906 = vadd.f32 %v2329, %v2905
    %v2907 = vpop.f32.mrb[0].mxu0
    %2908 = vmatprep.mubr.f32.mxu0 0.0
    %2909 = vmatmul.mubr.f32.gmra.mrb[0].mxu0 %v2535
    %v2910 = vpop.f32.mrb[0].mxu0
    %v2911 = vadd.f32 %v2334, %v2910
    %v2912 = vpop.f32.mrb[0].mxu0
    %2913 = vmatprep.mubr.f32.mxu0 0.0
    %2914 = vmatmul.mubr.f32.gmra.mrb[0].mxu0 %v2538
    %v2915 = vpop.f32.mrb[0].mxu0
    %v2916 = vadd.f32 %v2339, %v2915
    %v2917 = vpop.f32.mrb[0].mxu0
    %2918 = vmatprep.mubr.f32.mxu0 0.0
    %2919 = vmatmul.mubr.f32.gmra.mrb[0].mxu0 %v2541
    %v2920 = vpop.f32.mrb[0].mxu0
    %v2921 = vadd.f32 %v2344, %v2920
    %v2922 = vpop.f32.mrb[0].mxu0
    %2923 = vmatprep.mubr.f32.mxu0 0.0
    %2924 = vmatmul.mubr.f32.gmra.mrb[0].mxu0 %v2544
    %v2925 = vpop.f32.mrb[0].mxu0
    %v2926 = vadd.f32 %v2349, %v2925
    %v2927 = vpop.f32.mrb[0].mxu0
    %2928 = vmatprep.mubr.f32.mxu0 0.0
    %2929 = vmatmul.mubr.f32.gmra.mrb[0].mxu0 %v2547
    %v2930 = vpop.f32.mrb[0].mxu0
    %v2931 = vadd.f32 %v2354, %v2930
    %v2932 = vpop.f32.mrb[0].mxu0
    %2933 = vdwg.mxu0
    %v2934 = vld [vmem:[#allocation2 + $0x9] sm:$0xff]
    %v2935 = vld [vmem:[#allocation2 + $0x11] sm:$0xff]
    %v2936 = vld [vmem:[#allocation2 + $0x29] sm:$0xff]
    %v2937 = vld [vmem:[#allocation2 + $0x31] sm:$0xff]
    %v2938 = vld [vmem:[#allocation2 + $0x49] sm:$0xff]
    %v2939 = vld [vmem:[#allocation2 + $0x51] sm:$0xff]
    %v2940 = vld [vmem:[#allocation2 + $0x69] sm:$0xff]
    %v2941 = vld [vmem:[#allocation2 + $0x71] sm:$0xff]
    %v2942 = vld [vmem:[#allocation2 + $0x89] sm:$0xff]
    %v2943 = vld [vmem:[#allocation2 + $0x91] sm:$0xff]
    %v2944 = vld [vmem:[#allocation2 + $0xa9] sm:$0xff]
    %v2945 = vld [vmem:[#allocation2 + $0xb1] sm:$0xff]
    %v2946 = vld [vmem:[#allocation2 + $0xc9] sm:$0xff]
    %v2947 = vld [vmem:[#allocation2 + $0xd1] sm:$0xff]
    %v2948 = vld [vmem:[#allocation2 + $0xe9] sm:$0xff]
    %v2949 = vld [vmem:[#allocation2 + $0xf1] sm:$0xff]
    %v2950 = vld [vmem:[#allocation2 + $0x109] sm:$0xff]
    %v2951 = vld [vmem:[#allocation2 + $0x111] sm:$0xff]
    %v2952 = vld [vmem:[#allocation2 + $0x129] sm:$0xff]
    %v2953 = vld [vmem:[#allocation2 + $0x131] sm:$0xff]
    %v2954 = vld [vmem:[#allocation2 + $0x149] sm:$0xff]
    %v2955 = vld [vmem:[#allocation2 + $0x151] sm:$0xff]
    %v2956 = vld [vmem:[#allocation2 + $0x169] sm:$0xff]
    %v2957 = vld [vmem:[#allocation2 + $0x171] sm:$0xff]
    %v2958 = vld [vmem:[#allocation2 + $0x189] sm:$0xff]
    %v2959 = vld [vmem:[#allocation2 + $0x191] sm:$0xff]
    %v2960 = vld [vmem:[#allocation2 + $0x1a9] sm:$0xff]
    %v2961 = vld [vmem:[#allocation2 + $0x1b1] sm:$0xff]
    %v2962 = vld [vmem:[#allocation2 + $0x1c9] sm:$0xff]
    %v2963 = vld [vmem:[#allocation2 + $0x1d1] sm:$0xff]
    %v2964 = vld [vmem:[#allocation2 + $0x1e9] sm:$0xff]
    %v2965 = vld [vmem:[#allocation2 + $0x1f1] sm:$0xff]
    %v2966 = vld [vmem:[#allocation2 + $0x249] sm:$0xff]
    %v2967 = vld [vmem:[#allocation2 + $0x251] sm:$0xff]
    %v2968 = vld [vmem:[#allocation2 + $0x269] sm:$0xff]
    %v2969 = vld [vmem:[#allocation2 + $0x271] sm:$0xff]
    %v2970 = vld [vmem:[#allocation2 + $0x289] sm:$0xff]
    %v2971 = vld [vmem:[#allocation2 + $0x291] sm:$0xff]
    %v2972 = vld [vmem:[#allocation2 + $0x2a9] sm:$0xff]
    %v2973 = vld [vmem:[#allocation2 + $0x2b1] sm:$0xff]
    %v2974 = vld [vmem:[#allocation2 + $0x2c9] sm:$0xff]
    %v2975 = vld [vmem:[#allocation2 + $0x2d1] sm:$0xff]
    %v2976 = vld [vmem:[#allocation2 + $0x2e9] sm:$0xff]
    %v2977 = vld [vmem:[#allocation2 + $0x2f1] sm:$0xff]
    %v2978 = vld [vmem:[#allocation2 + $0x309] sm:$0xff]
    %v2979 = vld [vmem:[#allocation2 + $0x311] sm:$0xff]
    %v2980 = vld [vmem:[#allocation2 + $0x329] sm:$0xff]
    %v2981 = vld [vmem:[#allocation2 + $0x331] sm:$0xff]
    %v2982 = vld [vmem:[#allocation2 + $0x349] sm:$0xff]
    %v2983 = vld [vmem:[#allocation2 + $0x351] sm:$0xff]
    %v2984 = vld [vmem:[#allocation2 + $0x369] sm:$0xff]
    %v2985 = vld [vmem:[#allocation2 + $0x371] sm:$0xff]
    %v2986 = vld [vmem:[#allocation2 + $0x389] sm:$0xff]
    %v2987 = vld [vmem:[#allocation2 + $0x391] sm:$0xff]
    %v2988 = vld [vmem:[#allocation2 + $0x3a9] sm:$0xff]
    %v2989 = vld [vmem:[#allocation2 + $0x3b1] sm:$0xff]
    %v2990 = vld [vmem:[#allocation2 + $0x3c9] sm:$0xff]
    %v2991 = vld [vmem:[#allocation2 + $0x3d1] sm:$0xff]
    %v2992 = vld [vmem:[#allocation2 + $0x3e9] sm:$0xff]
    %v2993 = vld [vmem:[#allocation2 + $0x3f1] sm:$0xff]
    %v2994 = vld [vmem:[#allocation2 + $0x409] sm:$0xff]
    %v2995 = vld [vmem:[#allocation2 + $0x411] sm:$0xff]
    %v2996 = vld [vmem:[#allocation2 + $0x429] sm:$0xff]
    %v2997 = vld [vmem:[#allocation2 + $0x431] sm:$0xff]
    %s2998 = scalar_lea.vmem [#allocation6], 32
    %v2999 = vld [vmem:[%s2998] sm:$0xff]
    %v3000 = vld [vmem:[%s2998 + $0x8] sm:$0xff]
    %v3002 = vsel %vm701, %v2934, 0
    %v3005 = vsel %vm701, %v2935, 0
    %v3008 = vsel %vm701, %v2936, 0
    %v3011 = vsel %vm701, %v2937, 0
    %v3014 = vsel %vm701, %v2938, 0
    %v3017 = vsel %vm701, %v2939, 0
    %v3020 = vsel %vm701, %v2940, 0
    %v3023 = vsel %vm701, %v2941, 0
    %v3026 = vsel %vm701, %v2942, 0
    %v3029 = vsel %vm701, %v2943, 0
    %v3032 = vsel %vm701, %v2944, 0
    %v3035 = vsel %vm701, %v2945, 0
    %v3038 = vsel %vm701, %v2946, 0
    %v3041 = vsel %vm701, %v2947, 0
    %v3044 = vsel %vm701, %v2948, 0
    %v3047 = vsel %vm701, %v2949, 0
    %v3050 = vsel %vm701, %v2950, 0
    %v3053 = vsel %vm701, %v2951, 0
    %v3056 = vsel %vm701, %v2952, 0
    %v3059 = vsel %vm701, %v2953, 0
    %v3062 = vsel %vm701, %v2954, 0
    %v3065 = vsel %vm701, %v2955, 0
    %v3068 = vsel %vm701, %v2956, 0
    %v3071 = vsel %vm701, %v2957, 0
    %v3074 = vsel %vm701, %v2958, 0
    %v3077 = vsel %vm701, %v2959, 0
    %v3080 = vsel %vm701, %v2960, 0
    %v3083 = vsel %vm701, %v2961, 0
    %v3086 = vsel %vm701, %v2962, 0
    %v3089 = vsel %vm701, %v2963, 0
    %v3092 = vsel %vm701, %v2964, 0
    %v3095 = vsel %vm701, %v2965, 0
    %v3098 = vsel %vm701, %v2966, 0
    %v3101 = vsel %vm701, %v2967, 0
    %v3104 = vsel %vm701, %v2968, 0
    %v3107 = vsel %vm701, %v2969, 0
    %v3110 = vsel %vm701, %v2970, 0
    %v3113 = vsel %vm701, %v2971, 0
    %v3116 = vsel %vm701, %v2972, 0
    %v3119 = vsel %vm701, %v2973, 0
    %v3122 = vsel %vm701, %v2974, 0
    %v3125 = vsel %vm701, %v2975, 0
    %v3128 = vsel %vm701, %v2976, 0
    %v3131 = vsel %vm701, %v2977, 0
    %v3134 = vsel %vm701, %v2978, 0
    %v3137 = vsel %vm701, %v2979, 0
    %v3140 = vsel %vm701, %v2980, 0
    %v3143 = vsel %vm701, %v2981, 0
    %v3146 = vsel %vm701, %v2982, 0
    %v3149 = vsel %vm701, %v2983, 0
    %v3152 = vsel %vm701, %v2984, 0
    %v3155 = vsel %vm701, %v2985, 0
    %v3158 = vsel %vm701, %v2986, 0
    %v3161 = vsel %vm701, %v2987, 0
    %v3164 = vsel %vm701, %v2988, 0
    %v3167 = vsel %vm701, %v2989, 0
    %v3170 = vsel %vm701, %v2990, 0
    %v3173 = vsel %vm701, %v2991, 0
    %v3176 = vsel %vm701, %v2992, 0
    %v3179 = vsel %vm701, %v2993, 0
    %v3182 = vsel %vm701, %v2994, 0
    %v3185 = vsel %vm701, %v2995, 0
    %v3188 = vsel %vm701, %v2996, 0
    %v3191 = vsel %vm701, %v2997, 0
    %3193 = vmatprep.subr.mxu0 0.0
    %3194 = vmatpush1.msra.mxu0 %v2999
    %3195 = vmatprep.subr.mxu0 0.0
    %3196 = vmatpush1.msra.mxu0 %v3000
    %3197 = vmatprep.subr.mxu0 0.0
    %3198 = vmatpush1.msra.mxu0 0.0
    %3199 = vmatprep.subr.mxu0 0.0
    %3200 = vmatpush1.msra.mxu0 0.0
    %3201 = vmatprep.subr.mxu0 0.0
    %3202 = vmatpush1.msra.mxu0 0.0
    %3203 = vmatprep.subr.mxu0 0.0
    %3204 = vmatpush1.msra.mxu0 0.0
    %3205 = vmatprep.subr.mxu0 0.0
    %3206 = vmatpush1.msra.mxu0 0.0
    %3207 = vmatprep.subr.mxu0 0.0
    %3208 = vmatpush1.msra.mxu0 0.0
    %3209 = vmatprep.subr.mxu0 0.0
    %3210 = vmatpush1.msra.mxu0 0.0
    %3211 = vmatprep.subr.mxu0 0.0
    %3212 = vmatpush1.msra.mxu0 0.0
    %3213 = vmatprep.subr.mxu0 0.0
    %3214 = vmatpush1.msra.mxu0 0.0
    %3215 = vmatprep.subr.mxu0 0.0
    %3216 = vmatpush1.msra.mxu0 0.0
    %3217 = vmatprep.subr.mxu0 0.0
    %3218 = vmatpush1.msra.mxu0 0.0
    %3219 = vmatprep.subr.mxu0 0.0
    %3220 = vmatpush1.msra.mxu0 0.0
    %3221 = vmatprep.subr.mxu0 0.0
    %3222 = vmatpush1.msra.mxu0 0.0
    %3223 = vmatprep.subr.mxu0 0.0
    %3224 = vmatpush1.msra.mxu0 0.0
    %3225 = vmatprep.subr.mxu0 0.0
    %3226 = vmatpush1.msra.mxu0 0.0
    %3227 = vmatprep.subr.mxu0 0.0
    %3228 = vmatpush1.msra.mxu0 0.0
    %3229 = vmatprep.subr.mxu0 0.0
    %3230 = vmatpush1.msra.mxu0 0.0
    %3231 = vmatprep.subr.mxu0 0.0
    %3232 = vmatpush1.msra.mxu0 0.0
    %3233 = vmatprep.subr.mxu0 0.0
    %3234 = vmatpush1.msra.mxu0 0.0
    %3235 = vmatprep.subr.mxu0 0.0
    %3236 = vmatpush1.msra.mxu0 0.0
    %3237 = vmatprep.subr.mxu0 0.0
    %3238 = vmatpush1.msra.mxu0 0.0
    %3239 = vmatprep.subr.mxu0 0.0
    %3240 = vmatpush1.msra.mxu0 0.0
    %3241 = vmatprep.subr.mxu0 0.0
    %3242 = vmatpush1.msra.mxu0 0.0
    %3243 = vmatprep.subr.mxu0 0.0
    %3244 = vmatpush1.msra.mxu0 0.0
    %3245 = vmatprep.subr.mxu0 0.0
    %3246 = vmatpush1.msra.mxu0 0.0
    %3247 = vmatprep.subr.mxu0 0.0
    %3248 = vmatpush1.msra.mxu0 0.0
    %3249 = vmatprep.subr.mxu0 0.0
    %3250 = vmatpush1.msra.mxu0 0.0
    %3251 = vmatprep.subr.mxu0 0.0
    %3252 = vmatpush1.msra.mxu0 0.0
    %3253 = vmatprep.subr.mxu0 0.0
    %3254 = vmatpush1.msra.mxu0 0.0
    %3255 = vmatprep.subr.mxu0 0.0
    %3256 = vmatpush1.msra.mxu0 0.0
    %3257 = vmatprep.mubr.f32.mxu0 0.0
    %3258 = vmatmul.mubr.f32.gmra.mrb[0].mxu0 %v3002
    %v3259 = vpop.f32.mrb[0].mxu0
    %v3260 = vadd.f32 0.0, %v3259
    %v3261 = vpop.f32.mrb[0].mxu0
    %3262 = vmatprep.mubr.f32.mxu0 0.0
    %3263 = vmatmul.mubr.f32.gmra.mrb[0].mxu0 %v3005
    %v3264 = vpop.f32.mrb[0].mxu0
    %v3265 = vadd.f32 0.0, %v3264
    %v3266 = vpop.f32.mrb[0].mxu0
    %3267 = vmatprep.mubr.f32.mxu0 0.0
    %3268 = vmatmul.mubr.f32.gmra.mrb[0].mxu0 %v3008
    %v3269 = vpop.f32.mrb[0].mxu0
    %v3270 = vadd.f32 0.0, %v3269
    %v3271 = vpop.f32.mrb[0].mxu0
    %3272 = vmatprep.mubr.f32.mxu0 0.0
    %3273 = vmatmul.mubr.f32.gmra.mrb[0].mxu0 %v3011
    %v3274 = vpop.f32.mrb[0].mxu0
    %v3275 = vadd.f32 0.0, %v3274
    %v3276 = vpop.f32.mrb[0].mxu0
    %3277 = vmatprep.mubr.f32.mxu0 0.0
    %3278 = vmatmul.mubr.f32.gmra.mrb[0].mxu0 %v3014
    %v3279 = vpop.f32.mrb[0].mxu0
    %v3280 = vadd.f32 0.0, %v3279
    %v3281 = vpop.f32.mrb[0].mxu0
    %3282 = vmatprep.mubr.f32.mxu0 0.0
    %3283 = vmatmul.mubr.f32.gmra.mrb[0].mxu0 %v3017
    %v3284 = vpop.f32.mrb[0].mxu0
    %v3285 = vadd.f32 0.0, %v3284
    %v3286 = vpop.f32.mrb[0].mxu0
    %3287 = vmatprep.mubr.f32.mxu0 0.0
    %3288 = vmatmul.mubr.f32.gmra.mrb[0].mxu0 %v3020
    %v3289 = vpop.f32.mrb[0].mxu0
    %v3290 = vadd.f32 0.0, %v3289
    %v3291 = vpop.f32.mrb[0].mxu0
    %3292 = vmatprep.mubr.f32.mxu0 0.0
    %3293 = vmatmul.mubr.f32.gmra.mrb[0].mxu0 %v3023
    %v3294 = vpop.f32.mrb[0].mxu0
    %v3295 = vadd.f32 0.0, %v3294
    %v3296 = vpop.f32.mrb[0].mxu0
    %3297 = vmatprep.mubr.f32.mxu0 0.0
    %3298 = vmatmul.mubr.f32.gmra.mrb[0].mxu0 %v3026
    %v3299 = vpop.f32.mrb[0].mxu0
    %v3300 = vadd.f32 0.0, %v3299
    %v3301 = vpop.f32.mrb[0].mxu0
    %3302 = vmatprep.mubr.f32.mxu0 0.0
    %3303 = vmatmul.mubr.f32.gmra.mrb[0].mxu0 %v3029
    %v3304 = vpop.f32.mrb[0].mxu0
    %v3305 = vadd.f32 0.0, %v3304
    %v3306 = vpop.f32.mrb[0].mxu0
    %3307 = vmatprep.mubr.f32.mxu0 0.0
    %3308 = vmatmul.mubr.f32.gmra.mrb[0].mxu0 %v3032
    %v3309 = vpop.f32.mrb[0].mxu0
    %v3310 = vadd.f32 0.0, %v3309
    %v3311 = vpop.f32.mrb[0].mxu0
    %3312 = vmatprep.mubr.f32.mxu0 0.0
    %3313 = vmatmul.mubr.f32.gmra.mrb[0].mxu0 %v3035
    %v3314 = vpop.f32.mrb[0].mxu0
    %v3315 = vadd.f32 0.0, %v3314
    %v3316 = vpop.f32.mrb[0].mxu0
    %3317 = vmatprep.mubr.f32.mxu0 0.0
    %3318 = vmatmul.mubr.f32.gmra.mrb[0].mxu0 %v3038
    %v3319 = vpop.f32.mrb[0].mxu0
    %v3320 = vadd.f32 0.0, %v3319
    %v3321 = vpop.f32.mrb[0].mxu0
    %3322 = vmatprep.mubr.f32.mxu0 0.0
    %3323 = vmatmul.mubr.f32.gmra.mrb[0].mxu0 %v3041
    %v3324 = vpop.f32.mrb[0].mxu0
    %v3325 = vadd.f32 0.0, %v3324
    %v3326 = vpop.f32.mrb[0].mxu0
    %3327 = vmatprep.mubr.f32.mxu0 0.0
    %3328 = vmatmul.mubr.f32.gmra.mrb[0].mxu0 %v3044
    %v3329 = vpop.f32.mrb[0].mxu0
    %v3330 = vadd.f32 0.0, %v3329
    %v3331 = vpop.f32.mrb[0].mxu0
    %3332 = vmatprep.mubr.f32.mxu0 0.0
    %3333 = vmatmul.mubr.f32.gmra.mrb[0].mxu0 %v3047
    %v3334 = vpop.f32.mrb[0].mxu0
    %v3335 = vadd.f32 0.0, %v3334
    %v3336 = vpop.f32.mrb[0].mxu0
    %3337 = vmatprep.mubr.f32.mxu0 0.0
    %3338 = vmatmul.mubr.f32.gmra.mrb[0].mxu0 %v3050
    %v3339 = vpop.f32.mrb[0].mxu0
    %v3340 = vadd.f32 0.0, %v3339
    %v3341 = vpop.f32.mrb[0].mxu0
    %3342 = vmatprep.mubr.f32.mxu0 0.0
    %3343 = vmatmul.mubr.f32.gmra.mrb[0].mxu0 %v3053
    %v3344 = vpop.f32.mrb[0].mxu0
    %v3345 = vadd.f32 0.0, %v3344
    %v3346 = vpop.f32.mrb[0].mxu0
    %3347 = vmatprep.mubr.f32.mxu0 0.0
    %3348 = vmatmul.mubr.f32.gmra.mrb[0].mxu0 %v3056
    %v3349 = vpop.f32.mrb[0].mxu0
    %v3350 = vadd.f32 0.0, %v3349
    %v3351 = vpop.f32.mrb[0].mxu0
    %3352 = vmatprep.mubr.f32.mxu0 0.0
    %3353 = vmatmul.mubr.f32.gmra.mrb[0].mxu0 %v3059
    %v3354 = vpop.f32.mrb[0].mxu0
    %v3355 = vadd.f32 0.0, %v3354
    %v3356 = vpop.f32.mrb[0].mxu0
    %3357 = vmatprep.mubr.f32.mxu0 0.0
    %3358 = vmatmul.mubr.f32.gmra.mrb[0].mxu0 %v3062
    %v3359 = vpop.f32.mrb[0].mxu0
    %v3360 = vadd.f32 0.0, %v3359
    %v3361 = vpop.f32.mrb[0].mxu0
    %3362 = vmatprep.mubr.f32.mxu0 0.0
    %3363 = vmatmul.mubr.f32.gmra.mrb[0].mxu0 %v3065
    %v3364 = vpop.f32.mrb[0].mxu0
    %v3365 = vadd.f32 0.0, %v3364
    %v3366 = vpop.f32.mrb[0].mxu0
    %3367 = vmatprep.mubr.f32.mxu0 0.0
    %3368 = vmatmul.mubr.f32.gmra.mrb[0].mxu0 %v3068
    %v3369 = vpop.f32.mrb[0].mxu0
    %v3370 = vadd.f32 0.0, %v3369
    %v3371 = vpop.f32.mrb[0].mxu0
    %3372 = vmatprep.mubr.f32.mxu0 0.0
    %3373 = vmatmul.mubr.f32.gmra.mrb[0].mxu0 %v3071
    %v3374 = vpop.f32.mrb[0].mxu0
    %v3375 = vadd.f32 0.0, %v3374
    %v3376 = vpop.f32.mrb[0].mxu0
    %3377 = vmatprep.mubr.f32.mxu0 0.0
    %3378 = vmatmul.mubr.f32.gmra.mrb[0].mxu0 %v3074
    %v3379 = vpop.f32.mrb[0].mxu0
    %v3380 = vadd.f32 0.0, %v3379
    %v3381 = vpop.f32.mrb[0].mxu0
    %3382 = vmatprep.mubr.f32.mxu0 0.0
    %3383 = vmatmul.mubr.f32.gmra.mrb[0].mxu0 %v3077
    %v3384 = vpop.f32.mrb[0].mxu0
    %v3385 = vadd.f32 0.0, %v3384
    %v3386 = vpop.f32.mrb[0].mxu0
    %3387 = vmatprep.mubr.f32.mxu0 0.0
    %3388 = vmatmul.mubr.f32.gmra.mrb[0].mxu0 %v3080
    %v3389 = vpop.f32.mrb[0].mxu0
    %v3390 = vadd.f32 0.0, %v3389
    %v3391 = vpop.f32.mrb[0].mxu0
    %3392 = vmatprep.mubr.f32.mxu0 0.0
    %3393 = vmatmul.mubr.f32.gmra.mrb[0].mxu0 %v3083
    %v3394 = vpop.f32.mrb[0].mxu0
    %v3395 = vadd.f32 0.0, %v3394
    %v3396 = vpop.f32.mrb[0].mxu0
    %3397 = vmatprep.mubr.f32.mxu0 0.0
    %3398 = vmatmul.mubr.f32.gmra.mrb[0].mxu0 %v3086
    %v3399 = vpop.f32.mrb[0].mxu0
    %v3400 = vadd.f32 0.0, %v3399
    %v3401 = vpop.f32.mrb[0].mxu0
    %3402 = vmatprep.mubr.f32.mxu0 0.0
    %3403 = vmatmul.mubr.f32.gmra.mrb[0].mxu0 %v3089
    %v3404 = vpop.f32.mrb[0].mxu0
    %v3405 = vadd.f32 0.0, %v3404
    %v3406 = vpop.f32.mrb[0].mxu0
    %3407 = vmatprep.mubr.f32.mxu0 0.0
    %3408 = vmatmul.mubr.f32.gmra.mrb[0].mxu0 %v3092
    %v3409 = vpop.f32.mrb[0].mxu0
    %v3410 = vadd.f32 0.0, %v3409
    %v3411 = vpop.f32.mrb[0].mxu0
    %3412 = vmatprep.mubr.f32.mxu0 0.0
    %3413 = vmatmul.mubr.f32.gmra.mrb[0].mxu0 %v3095
    %v3414 = vpop.f32.mrb[0].mxu0
    %v3415 = vadd.f32 0.0, %v3414
    %v3416 = vpop.f32.mrb[0].mxu0
    %3417 = vmatprep.mubr.f32.mxu0 0.0
    %3418 = vmatmul.mubr.f32.gmra.mrb[0].mxu0 %v3098
    %v3419 = vpop.f32.mrb[0].mxu0
    %v3420 = vadd.f32 0.0, %v3419
    %v3421 = vpop.f32.mrb[0].mxu0
    %3422 = vmatprep.mubr.f32.mxu0 0.0
    %3423 = vmatmul.mubr.f32.gmra.mrb[0].mxu0 %v3101
    %v3424 = vpop.f32.mrb[0].mxu0
    %v3425 = vadd.f32 0.0, %v3424
    %v3426 = vpop.f32.mrb[0].mxu0
    %3427 = vmatprep.mubr.f32.mxu0 0.0
    %3428 = vmatmul.mubr.f32.gmra.mrb[0].mxu0 %v3104
    %v3429 = vpop.f32.mrb[0].mxu0
    %v3430 = vadd.f32 0.0, %v3429
    %v3431 = vpop.f32.mrb[0].mxu0
    %3432 = vmatprep.mubr.f32.mxu0 0.0
    %3433 = vmatmul.mubr.f32.gmra.mrb[0].mxu0 %v3107
    %v3434 = vpop.f32.mrb[0].mxu0
    %v3435 = vadd.f32 0.0, %v3434
    %v3436 = vpop.f32.mrb[0].mxu0
    %3437 = vmatprep.mubr.f32.mxu0 0.0
    %3438 = vmatmul.mubr.f32.gmra.mrb[0].mxu0 %v3110
    %v3439 = vpop.f32.mrb[0].mxu0
    %v3440 = vadd.f32 0.0, %v3439
    %v3441 = vpop.f32.mrb[0].mxu0
    %3442 = vmatprep.mubr.f32.mxu0 0.0
    %3443 = vmatmul.mubr.f32.gmra.mrb[0].mxu0 %v3113
    %v3444 = vpop.f32.mrb[0].mxu0
    %v3445 = vadd.f32 0.0, %v3444
    %v3446 = vpop.f32.mrb[0].mxu0
    %3447 = vmatprep.mubr.f32.mxu0 0.0
    %3448 = vmatmul.mubr.f32.gmra.mrb[0].mxu0 %v3116
    %v3449 = vpop.f32.mrb[0].mxu0
    %v3450 = vadd.f32 0.0, %v3449
    %v3451 = vpop.f32.mrb[0].mxu0
    %3452 = vmatprep.mubr.f32.mxu0 0.0
    %3453 = vmatmul.mubr.f32.gmra.mrb[0].mxu0 %v3119
    %v3454 = vpop.f32.mrb[0].mxu0
    %v3455 = vadd.f32 0.0, %v3454
    %v3456 = vpop.f32.mrb[0].mxu0
    %3457 = vmatprep.mubr.f32.mxu0 0.0
    %3458 = vmatmul.mubr.f32.gmra.mrb[0].mxu0 %v3122
    %v3459 = vpop.f32.mrb[0].mxu0
    %v3460 = vadd.f32 0.0, %v3459
    %v3461 = vpop.f32.mrb[0].mxu0
    %3462 = vmatprep.mubr.f32.mxu0 0.0
    %3463 = vmatmul.mubr.f32.gmra.mrb[0].mxu0 %v3125
    %v3464 = vpop.f32.mrb[0].mxu0
    %v3465 = vadd.f32 0.0, %v3464
    %v3466 = vpop.f32.mrb[0].mxu0
    %3467 = vmatprep.mubr.f32.mxu0 0.0
    %3468 = vmatmul.mubr.f32.gmra.mrb[0].mxu0 %v3128
    %v3469 = vpop.f32.mrb[0].mxu0
    %v3470 = vadd.f32 0.0, %v3469
    %v3471 = vpop.f32.mrb[0].mxu0
    %3472 = vmatprep.mubr.f32.mxu0 0.0
    %3473 = vmatmul.mubr.f32.gmra.mrb[0].mxu0 %v3131
    %v3474 = vpop.f32.mrb[0].mxu0
    %v3475 = vadd.f32 0.0, %v3474
    %v3476 = vpop.f32.mrb[0].mxu0
    %3477 = vmatprep.mubr.f32.mxu0 0.0
    %3478 = vmatmul.mubr.f32.gmra.mrb[0].mxu0 %v3134
    %v3479 = vpop.f32.mrb[0].mxu0
    %v3480 = vadd.f32 0.0, %v3479
    %v3481 = vpop.f32.mrb[0].mxu0
    %3482 = vmatprep.mubr.f32.mxu0 0.0
    %3483 = vmatmul.mubr.f32.gmra.mrb[0].mxu0 %v3137
    %v3484 = vpop.f32.mrb[0].mxu0
    %v3485 = vadd.f32 0.0, %v3484
    %v3486 = vpop.f32.mrb[0].mxu0
    %3487 = vmatprep.mubr.f32.mxu0 0.0
    %3488 = vmatmul.mubr.f32.gmra.mrb[0].mxu0 %v3140
    %v3489 = vpop.f32.mrb[0].mxu0
    %v3490 = vadd.f32 0.0, %v3489
    %v3491 = vpop.f32.mrb[0].mxu0
    %3492 = vmatprep.mubr.f32.mxu0 0.0
    %3493 = vmatmul.mubr.f32.gmra.mrb[0].mxu0 %v3143
    %v3494 = vpop.f32.mrb[0].mxu0
    %v3495 = vadd.f32 0.0, %v3494
    %v3496 = vpop.f32.mrb[0].mxu0
    %3497 = vmatprep.mubr.f32.mxu0 0.0
    %3498 = vmatmul.mubr.f32.gmra.mrb[0].mxu0 %v3146
    %v3499 = vpop.f32.mrb[0].mxu0
    %v3500 = vadd.f32 0.0, %v3499
    %v3501 = vpop.f32.mrb[0].mxu0
    %3502 = vmatprep.mubr.f32.mxu0 0.0
    %3503 = vmatmul.mubr.f32.gmra.mrb[0].mxu0 %v3149
    %v3504 = vpop.f32.mrb[0].mxu0
    %v3505 = vadd.f32 0.0, %v3504
    %v3506 = vpop.f32.mrb[0].mxu0
    %3507 = vmatprep.mubr.f32.mxu0 0.0
    %3508 = vmatmul.mubr.f32.gmra.mrb[0].mxu0 %v3152
    %v3509 = vpop.f32.mrb[0].mxu0
    %v3510 = vadd.f32 0.0, %v3509
    %v3511 = vpop.f32.mrb[0].mxu0
    %3512 = vmatprep.mubr.f32.mxu0 0.0
    %3513 = vmatmul.mubr.f32.gmra.mrb[0].mxu0 %v3155
    %v3514 = vpop.f32.mrb[0].mxu0
    %v3515 = vadd.f32 0.0, %v3514
    %v3516 = vpop.f32.mrb[0].mxu0
    %3517 = vmatprep.mubr.f32.mxu0 0.0
    %3518 = vmatmul.mubr.f32.gmra.mrb[0].mxu0 %v3158
    %v3519 = vpop.f32.mrb[0].mxu0
    %v3520 = vadd.f32 0.0, %v3519
    %v3521 = vpop.f32.mrb[0].mxu0
    %3522 = vmatprep.mubr.f32.mxu0 0.0
    %3523 = vmatmul.mubr.f32.gmra.mrb[0].mxu0 %v3161
    %v3524 = vpop.f32.mrb[0].mxu0
    %v3525 = vadd.f32 0.0, %v3524
    %v3526 = vpop.f32.mrb[0].mxu0
    %3527 = vmatprep.mubr.f32.mxu0 0.0
    %3528 = vmatmul.mubr.f32.gmra.mrb[0].mxu0 %v3164
    %v3529 = vpop.f32.mrb[0].mxu0
    %v3530 = vadd.f32 0.0, %v3529
    %v3531 = vpop.f32.mrb[0].mxu0
    %3532 = vmatprep.mubr.f32.mxu0 0.0
    %3533 = vmatmul.mubr.f32.gmra.mrb[0].mxu0 %v3167
    %v3534 = vpop.f32.mrb[0].mxu0
    %v3535 = vadd.f32 0.0, %v3534
    %v3536 = vpop.f32.mrb[0].mxu0
    %3537 = vmatprep.mubr.f32.mxu0 0.0
    %3538 = vmatmul.mubr.f32.gmra.mrb[0].mxu0 %v3170
    %v3539 = vpop.f32.mrb[0].mxu0
    %v3540 = vadd.f32 0.0, %v3539
    %v3541 = vpop.f32.mrb[0].mxu0
    %3542 = vmatprep.mubr.f32.mxu0 0.0
    %3543 = vmatmul.mubr.f32.gmra.mrb[0].mxu0 %v3173
    %v3544 = vpop.f32.mrb[0].mxu0
    %v3545 = vadd.f32 0.0, %v3544
    %v3546 = vpop.f32.mrb[0].mxu0
    %3547 = vmatprep.mubr.f32.mxu0 0.0
    %3548 = vmatmul.mubr.f32.gmra.mrb[0].mxu0 %v3176
    %v3549 = vpop.f32.mrb[0].mxu0
    %v3550 = vadd.f32 0.0, %v3549
    %v3551 = vpop.f32.mrb[0].mxu0
    %3552 = vmatprep.mubr.f32.mxu0 0.0
    %3553 = vmatmul.mubr.f32.gmra.mrb[0].mxu0 %v3179
    %v3554 = vpop.f32.mrb[0].mxu0
    %v3555 = vadd.f32 0.0, %v3554
    %v3556 = vpop.f32.mrb[0].mxu0
    %3557 = vmatprep.mubr.f32.mxu0 0.0
    %3558 = vmatmul.mubr.f32.gmra.mrb[0].mxu0 %v3182
    %v3559 = vpop.f32.mrb[0].mxu0
    %v3560 = vadd.f32 0.0, %v3559
    %v3561 = vpop.f32.mrb[0].mxu0
    %3562 = vmatprep.mubr.f32.mxu0 0.0
    %3563 = vmatmul.mubr.f32.gmra.mrb[0].mxu0 %v3185
    %v3564 = vpop.f32.mrb[0].mxu0
    %v3565 = vadd.f32 0.0, %v3564
    %v3566 = vpop.f32.mrb[0].mxu0
    %3567 = vmatprep.mubr.f32.mxu0 0.0
    %3568 = vmatmul.mubr.f32.gmra.mrb[0].mxu0 %v3188
    %v3569 = vpop.f32.mrb[0].mxu0
    %v3570 = vadd.f32 0.0, %v3569
    %v3571 = vpop.f32.mrb[0].mxu0
    %3572 = vmatprep.mubr.f32.mxu0 0.0
    %3573 = vmatmul.mubr.f32.gmra.mrb[0].mxu0 %v3191
    %v3574 = vpop.f32.mrb[0].mxu0
    %v3575 = vadd.f32 0.0, %v3574
    %v3576 = vpop.f32.mrb[0].mxu0
    %3577 = vdwg.mxu0
    %v3578 = vadd.f32 %v2616, %v3260
    %v3579 = vadd.f32 %v2621, %v3265
    %v3580 = vadd.f32 %v2626, %v3270
    %v3581 = vadd.f32 %v2631, %v3275
    %v3582 = vadd.f32 %v2636, %v3280
    %v3583 = vadd.f32 %v2641, %v3285
    %v3584 = vadd.f32 %v2646, %v3290
    %v3585 = vadd.f32 %v2651, %v3295
    %v3586 = vadd.f32 %v2656, %v3300
    %v3587 = vadd.f32 %v2661, %v3305
    %v3588 = vadd.f32 %v2666, %v3310
    %v3589 = vadd.f32 %v2671, %v3315
    %v3590 = vadd.f32 %v2676, %v3320
    %v3591 = vadd.f32 %v2681, %v3325
    %v3592 = vadd.f32 %v2686, %v3330
    %v3593 = vadd.f32 %v2691, %v3335
    %v3594 = vadd.f32 %v2696, %v3340
    %v3595 = vadd.f32 %v2701, %v3345
    %v3596 = vadd.f32 %v2706, %v3350
    %v3597 = vadd.f32 %v2711, %v3355
    %v3598 = vadd.f32 %v2716, %v3360
    %v3599 = vadd.f32 %v2721, %v3365
    %v3600 = vadd.f32 %v2726, %v3370
    %v3601 = vadd.f32 %v2731, %v3375
    %v3602 = vadd.f32 %v2736, %v3380
    %v3603 = vadd.f32 %v2741, %v3385
    %v3604 = vadd.f32 %v2746, %v3390
    %v3605 = vadd.f32 %v2751, %v3395
    %v3606 = vadd.f32 %v2756, %v3400
    %v3607 = vadd.f32 %v2761, %v3405
    %v3608 = vadd.f32 %v2766, %v3410
    %v3609 = vadd.f32 %v2771, %v3415
    %v3610 = vadd.f32 %v2776, %v3420
    %v3611 = vadd.f32 %v2781, %v3425
    %v3612 = vadd.f32 %v2786, %v3430
    %v3613 = vadd.f32 %v2791, %v3435
    %v3614 = vadd.f32 %v2796, %v3440
    %v3615 = vadd.f32 %v2801, %v3445
    %v3616 = vadd.f32 %v2806, %v3450
    %v3617 = vadd.f32 %v2811, %v3455
    %v3618 = vadd.f32 %v2816, %v3460
    %v3619 = vadd.f32 %v2821, %v3465
    %v3620 = vadd.f32 %v2826, %v3470
    %v3621 = vadd.f32 %v2831, %v3475
    %v3622 = vadd.f32 %v2836, %v3480
    %v3623 = vadd.f32 %v2841, %v3485
    %v3624 = vadd.f32 %v2846, %v3490
    %v3625 = vadd.f32 %v2851, %v3495
    %v3626 = vadd.f32 %v2856, %v3500
    %v3627 = vadd.f32 %v2861, %v3505
    %v3628 = vadd.f32 %v2866, %v3510
    %v3629 = vadd.f32 %v2871, %v3515
    %v3630 = vadd.f32 %v2876, %v3520
    %v3631 = vadd.f32 %v2881, %v3525
    %v3632 = vadd.f32 %v2886, %v3530
    %v3633 = vadd.f32 %v2891, %v3535
    %v3634 = vadd.f32 %v2896, %v3540
    %v3635 = vadd.f32 %v2901, %v3545
    %v3636 = vadd.f32 %v2906, %v3550
    %v3637 = vadd.f32 %v2911, %v3555
    %v3638 = vadd.f32 %v2916, %v3560
    %v3639 = vadd.f32 %v2921, %v3565
    %v3640 = vadd.f32 %v2926, %v3570
    %v3641 = vadd.f32 %v2931, %v3575
    %v3642 = vld [vmem:[%s1582 + $0x7] sm:$0xff]
    %v3643 = vld [vmem:[%s1582 + $0xf] sm:$0xff]
    %v3644 = vld [vmem:[%s1582 + $0x27] sm:$0xff]
    %v3645 = vld [vmem:[%s1582 + $0x2f] sm:$0xff]
    %v3646 = vld [vmem:[%s1582 + $0x47] sm:$0xff]
    %v3647 = vld [vmem:[%s1582 + $0x4f] sm:$0xff]
    %v3648 = vld [vmem:[%s1582 + $0x67] sm:$0xff]
    %v3649 = vld [vmem:[%s1582 + $0x6f] sm:$0xff]
    %v3650 = vld [vmem:[%s1582 + $0x87] sm:$0xff]
    %v3651 = vld [vmem:[%s1582 + $0x8f] sm:$0xff]
    %v3652 = vld [vmem:[%s1582 + $0xa7] sm:$0xff]
    %v3653 = vld [vmem:[%s1582 + $0xaf] sm:$0xff]
    %v3654 = vld [vmem:[%s1582 + $0xc7] sm:$0xff]
    %v3655 = vld [vmem:[%s1582 + $0xcf] sm:$0xff]
    %v3656 = vld [vmem:[%s1582 + $0xe7] sm:$0xff]
    %v3657 = vld [vmem:[%s1582 + $0xef] sm:$0xff]
    %v3658 = vld [vmem:[%s1582 + $0x107] sm:$0xff]
    %v3659 = vld [vmem:[%s1582 + $0x10f] sm:$0xff]
    %v3660 = vld [vmem:[%s1582 + $0x127] sm:$0xff]
    %v3661 = vld [vmem:[%s1582 + $0x12f] sm:$0xff]
    %v3662 = vld [vmem:[%s1582 + $0x147] sm:$0xff]
    %v3663 = vld [vmem:[%s1582 + $0x14f] sm:$0xff]
    %v3664 = vld [vmem:[%s1582 + $0x167] sm:$0xff]
    %v3665 = vld [vmem:[%s1582 + $0x16f] sm:$0xff]
    %v3666 = vld [vmem:[%s1582 + $0x187] sm:$0xff]
    %v3667 = vld [vmem:[%s1582 + $0x18f] sm:$0xff]
    %v3668 = vld [vmem:[%s1582 + $0x1a7] sm:$0xff]
    %v3669 = vld [vmem:[%s1582 + $0x1af] sm:$0xff]
    %v3670 = vld [vmem:[%s1582 + $0x1c7] sm:$0xff]
    %v3671 = vld [vmem:[%s1582 + $0x1cf] sm:$0xff]
    %v3672 = vld [vmem:[%s1582 + $0x1e7] sm:$0xff]
    %v3673 = vld [vmem:[%s1582 + $0x1ef] sm:$0xff]
    %v3674 = vld [vmem:[%s1582 + $0x247] sm:$0xff]
    %v3675 = vld [vmem:[%s1582 + $0x24f] sm:$0xff]
    %v3676 = vld [vmem:[%s1582 + $0x267] sm:$0xff]
    %v3677 = vld [vmem:[%s1582 + $0x26f] sm:$0xff]
    %v3678 = vld [vmem:[%s1582 + $0x287] sm:$0xff]
    %v3679 = vld [vmem:[%s1582 + $0x28f] sm:$0xff]
    %v3680 = vld [vmem:[%s1582 + $0x2a7] sm:$0xff]
    %v3681 = vld [vmem:[%s1582 + $0x2af] sm:$0xff]
    %v3682 = vld [vmem:[%s1582 + $0x2c7] sm:$0xff]
    %v3683 = vld [vmem:[%s1582 + $0x2cf] sm:$0xff]
    %v3684 = vld [vmem:[%s1582 + $0x2e7] sm:$0xff]
    %v3685 = vld [vmem:[%s1582 + $0x2ef] sm:$0xff]
    %v3686 = vld [vmem:[%s1582 + $0x307] sm:$0xff]
    %v3687 = vld [vmem:[%s1582 + $0x30f] sm:$0xff]
    %v3688 = vld [vmem:[%s1582 + $0x327] sm:$0xff]
    %v3689 = vld [vmem:[%s1582 + $0x32f] sm:$0xff]
    %v3690 = vld [vmem:[%s1582 + $0x347] sm:$0xff]
    %v3691 = vld [vmem:[%s1582 + $0x34f] sm:$0xff]
    %v3692 = vld [vmem:[%s1582 + $0x367] sm:$0xff]
    %v3693 = vld [vmem:[%s1582 + $0x36f] sm:$0xff]
    %v3694 = vld [vmem:[%s1582 + $0x387] sm:$0xff]
    %v3695 = vld [vmem:[%s1582 + $0x38f] sm:$0xff]
    %v3696 = vld [vmem:[%s1582 + $0x3a7] sm:$0xff]
    %v3697 = vld [vmem:[%s1582 + $0x3af] sm:$0xff]
    %v3698 = vld [vmem:[%s1582 + $0x3c7] sm:$0xff]
    %v3699 = vld [vmem:[%s1582 + $0x3cf] sm:$0xff]
    %v3700 = vld [vmem:[%s1582 + $0x3e7] sm:$0xff]
    %v3701 = vld [vmem:[%s1582 + $0x3ef] sm:$0xff]
    %v3702 = vld [vmem:[%s1582 + $0x407] sm:$0xff]
    %v3703 = vld [vmem:[%s1582 + $0x40f] sm:$0xff]
    %v3704 = vld [vmem:[%s1582 + $0x427] sm:$0xff]
    %v3705 = vld [vmem:[%s1582 + $0x42f] sm:$0xff]
    %s3706 = scalar_lea.vmem [#allocation6], 48
    %v3707 = vld [vmem:[%s3706] sm:$0xff]
    %v3708 = vld [vmem:[%s3706 + $0x8] sm:$0xff]
    %v3710 = vsel %vm701, %v3642, 0
    %v3713 = vsel %vm701, %v3643, 0
    %v3716 = vsel %vm701, %v3644, 0
    %v3719 = vsel %vm701, %v3645, 0
    %v3722 = vsel %vm701, %v3646, 0
    %v3725 = vsel %vm701, %v3647, 0
    %v3728 = vsel %vm701, %v3648, 0
    %v3731 = vsel %vm701, %v3649, 0
    %v3734 = vsel %vm701, %v3650, 0
    %v3737 = vsel %vm701, %v3651, 0
    %v3740 = vsel %vm701, %v3652, 0
    %v3743 = vsel %vm701, %v3653, 0
    %v3746 = vsel %vm701, %v3654, 0
    %v3749 = vsel %vm701, %v3655, 0
    %v3752 = vsel %vm701, %v3656, 0
    %v3755 = vsel %vm701, %v3657, 0
    %v3758 = vsel %vm701, %v3658, 0
    %v3761 = vsel %vm701, %v3659, 0
    %v3764 = vsel %vm701, %v3660, 0
    %v3767 = vsel %vm701, %v3661, 0
    %v3770 = vsel %vm701, %v3662, 0
    %v3773 = vsel %vm701, %v3663, 0
    %v3776 = vsel %vm701, %v3664, 0
    %v3779 = vsel %vm701, %v3665, 0
    %v3782 = vsel %vm701, %v3666, 0
    %v3785 = vsel %vm701, %v3667, 0
    %v3788 = vsel %vm701, %v3668, 0
    %v3791 = vsel %vm701, %v3669, 0
    %v3794 = vsel %vm701, %v3670, 0
    %v3797 = vsel %vm701, %v3671, 0
    %v3800 = vsel %vm701, %v3672, 0
    %v3803 = vsel %vm701, %v3673, 0
    %v3806 = vsel %vm701, %v3674, 0
    %v3809 = vsel %vm701, %v3675, 0
    %v3812 = vsel %vm701, %v3676, 0
    %v3815 = vsel %vm701, %v3677, 0
    %v3818 = vsel %vm701, %v3678, 0
    %v3821 = vsel %vm701, %v3679, 0
    %v3824 = vsel %vm701, %v3680, 0
    %v3827 = vsel %vm701, %v3681, 0
    %v3830 = vsel %vm701, %v3682, 0
    %v3833 = vsel %vm701, %v3683, 0
    %v3836 = vsel %vm701, %v3684, 0
    %v3839 = vsel %vm701, %v3685, 0
    %v3842 = vsel %vm701, %v3686, 0
    %v3845 = vsel %vm701, %v3687, 0
    %v3848 = vsel %vm701, %v3688, 0
    %v3851 = vsel %vm701, %v3689, 0
    %v3854 = vsel %vm701, %v3690, 0
    %v3857 = vsel %vm701, %v3691, 0
    %v3860 = vsel %vm701, %v3692, 0
    %v3863 = vsel %vm701, %v3693, 0
    %v3866 = vsel %vm701, %v3694, 0
    %v3869 = vsel %vm701, %v3695, 0
    %v3872 = vsel %vm701, %v3696, 0
    %v3875 = vsel %vm701, %v3697, 0
    %v3878 = vsel %vm701, %v3698, 0
    %v3881 = vsel %vm701, %v3699, 0
    %v3884 = vsel %vm701, %v3700, 0
    %v3887 = vsel %vm701, %v3701, 0
    %v3890 = vsel %vm701, %v3702, 0
    %v3893 = vsel %vm701, %v3703, 0
    %v3896 = vsel %vm701, %v3704, 0
    %v3899 = vsel %vm701, %v3705, 0
    %3901 = vmatprep.subr.mxu0 0.0
    %3902 = vmatpush1.msra.mxu0 %v3707
    %3903 = vmatprep.subr.mxu0 0.0
    %3904 = vmatpush1.msra.mxu0 %v3708
    %3905 = vmatprep.subr.mxu0 0.0
    %3906 = vmatpush1.msra.mxu0 0.0
    %3907 = vmatprep.subr.mxu0 0.0
    %3908 = vmatpush1.msra.mxu0 0.0
    %3909 = vmatprep.subr.mxu0 0.0
    %3910 = vmatpush1.msra.mxu0 0.0
    %3911 = vmatprep.subr.mxu0 0.0
    %3912 = vmatpush1.msra.mxu0 0.0
    %3913 = vmatprep.subr.mxu0 0.0
    %3914 = vmatpush1.msra.mxu0 0.0
    %3915 = vmatprep.subr.mxu0 0.0
    %3916 = vmatpush1.msra.mxu0 0.0
    %3917 = vmatprep.subr.mxu0 0.0
    %3918 = vmatpush1.msra.mxu0 0.0
    %3919 = vmatprep.subr.mxu0 0.0
    %3920 = vmatpush1.msra.mxu0 0.0
    %3921 = vmatprep.subr.mxu0 0.0
    %3922 = vmatpush1.msra.mxu0 0.0
    %3923 = vmatprep.subr.mxu0 0.0
    %3924 = vmatpush1.msra.mxu0 0.0
    %3925 = vmatprep.subr.mxu0 0.0
    %3926 = vmatpush1.msra.mxu0 0.0
    %3927 = vmatprep.subr.mxu0 0.0
    %3928 = vmatpush1.msra.mxu0 0.0
    %3929 = vmatprep.subr.mxu0 0.0
    %3930 = vmatpush1.msra.mxu0 0.0
    %3931 = vmatprep.subr.mxu0 0.0
    %3932 = vmatpush1.msra.mxu0 0.0
    %3933 = vmatprep.subr.mxu0 0.0
    %3934 = vmatpush1.msra.mxu0 0.0
    %3935 = vmatprep.subr.mxu0 0.0
    %3936 = vmatpush1.msra.mxu0 0.0
    %3937 = vmatprep.subr.mxu0 0.0
    %3938 = vmatpush1.msra.mxu0 0.0
    %3939 = vmatprep.subr.mxu0 0.0
    %3940 = vmatpush1.msra.mxu0 0.0
    %3941 = vmatprep.subr.mxu0 0.0
    %3942 = vmatpush1.msra.mxu0 0.0
    %3943 = vmatprep.subr.mxu0 0.0
    %3944 = vmatpush1.msra.mxu0 0.0
    %3945 = vmatprep.subr.mxu0 0.0
    %3946 = vmatpush1.msra.mxu0 0.0
    %3947 = vmatprep.subr.mxu0 0.0
    %3948 = vmatpush1.msra.mxu0 0.0
    %3949 = vmatprep.subr.mxu0 0.0
    %3950 = vmatpush1.msra.mxu0 0.0
    %3951 = vmatprep.subr.mxu0 0.0
    %3952 = vmatpush1.msra.mxu0 0.0
    %3953 = vmatprep.subr.mxu0 0.0
    %3954 = vmatpush1.msra.mxu0 0.0
    %3955 = vmatprep.subr.mxu0 0.0
    %3956 = vmatpush1.msra.mxu0 0.0
    %3957 = vmatprep.subr.mxu0 0.0
    %3958 = vmatpush1.msra.mxu0 0.0
    %3959 = vmatprep.subr.mxu0 0.0
    %3960 = vmatpush1.msra.mxu0 0.0
    %3961 = vmatprep.subr.mxu0 0.0
    %3962 = vmatpush1.msra.mxu0 0.0
    %3963 = vmatprep.subr.mxu0 0.0
    %3964 = vmatpush1.msra.mxu0 0.0
    %3965 = vmatprep.mubr.f32.mxu0 0.0
    %3966 = vmatmul.mubr.f32.gmra.mrb[0].mxu0 %v3710
    %v3967 = vpop.f32.mrb[0].mxu0
    %v3968 = vadd.f32 0.0, %v3967
    %v3969 = vpop.f32.mrb[0].mxu0
    %3970 = vmatprep.mubr.f32.mxu0 0.0
    %3971 = vmatmul.mubr.f32.gmra.mrb[0].mxu0 %v3713
    %v3972 = vpop.f32.mrb[0].mxu0
    %v3973 = vadd.f32 0.0, %v3972
    %v3974 = vpop.f32.mrb[0].mxu0
    %3975 = vmatprep.mubr.f32.mxu0 0.0
    %3976 = vmatmul.mubr.f32.gmra.mrb[0].mxu0 %v3716
    %v3977 = vpop.f32.mrb[0].mxu0
    %v3978 = vadd.f32 0.0, %v3977
    %v3979 = vpop.f32.mrb[0].mxu0
    %3980 = vmatprep.mubr.f32.mxu0 0.0
    %3981 = vmatmul.mubr.f32.gmra.mrb[0].mxu0 %v3719
    %v3982 = vpop.f32.mrb[0].mxu0
    %v3983 = vadd.f32 0.0, %v3982
    %v3984 = vpop.f32.mrb[0].mxu0
    %3985 = vmatprep.mubr.f32.mxu0 0.0
    %3986 = vmatmul.mubr.f32.gmra.mrb[0].mxu0 %v3722
    %v3987 = vpop.f32.mrb[0].mxu0
    %v3988 = vadd.f32 0.0, %v3987
    %v3989 = vpop.f32.mrb[0].mxu0
    %3990 = vmatprep.mubr.f32.mxu0 0.0
    %3991 = vmatmul.mubr.f32.gmra.mrb[0].mxu0 %v3725
    %v3992 = vpop.f32.mrb[0].mxu0
    %v3993 = vadd.f32 0.0, %v3992
    %v3994 = vpop.f32.mrb[0].mxu0
    %3995 = vmatprep.mubr.f32.mxu0 0.0
    %3996 = vmatmul.mubr.f32.gmra.mrb[0].mxu0 %v3728
    %v3997 = vpop.f32.mrb[0].mxu0
    %v3998 = vadd.f32 0.0, %v3997
    %v3999 = vpop.f32.mrb[0].mxu0
    %4000 = vmatprep.mubr.f32.mxu0 0.0
    %4001 = vmatmul.mubr.f32.gmra.mrb[0].mxu0 %v3731
    %v4002 = vpop.f32.mrb[0].mxu0
    %v4003 = vadd.f32 0.0, %v4002
    %v4004 = vpop.f32.mrb[0].mxu0
    %4005 = vmatprep.mubr.f32.mxu0 0.0
    %4006 = vmatmul.mubr.f32.gmra.mrb[0].mxu0 %v3734
    %v4007 = vpop.f32.mrb[0].mxu0
    %v4008 = vadd.f32 0.0, %v4007
    %v4009 = vpop.f32.mrb[0].mxu0
    %4010 = vmatprep.mubr.f32.mxu0 0.0
    %4011 = vmatmul.mubr.f32.gmra.mrb[0].mxu0 %v3737
    %v4012 = vpop.f32.mrb[0].mxu0
    %v4013 = vadd.f32 0.0, %v4012
    %v4014 = vpop.f32.mrb[0].mxu0
    %4015 = vmatprep.mubr.f32.mxu0 0.0
    %4016 = vmatmul.mubr.f32.gmra.mrb[0].mxu0 %v3740
    %v4017 = vpop.f32.mrb[0].mxu0
    %v4018 = vadd.f32 0.0, %v4017
    %v4019 = vpop.f32.mrb[0].mxu0
    %4020 = vmatprep.mubr.f32.mxu0 0.0
    %4021 = vmatmul.mubr.f32.gmra.mrb[0].mxu0 %v3743
    %v4022 = vpop.f32.mrb[0].mxu0
    %v4023 = vadd.f32 0.0, %v4022
    %v4024 = vpop.f32.mrb[0].mxu0
    %4025 = vmatprep.mubr.f32.mxu0 0.0
    %4026 = vmatmul.mubr.f32.gmra.mrb[0].mxu0 %v3746
    %v4027 = vpop.f32.mrb[0].mxu0
    %v4028 = vadd.f32 0.0, %v4027
    %v4029 = vpop.f32.mrb[0].mxu0
    %4030 = vmatprep.mubr.f32.mxu0 0.0
    %4031 = vmatmul.mubr.f32.gmra.mrb[0].mxu0 %v3749
    %v4032 = vpop.f32.mrb[0].mxu0
    %v4033 = vadd.f32 0.0, %v4032
    %v4034 = vpop.f32.mrb[0].mxu0
    %4035 = vmatprep.mubr.f32.mxu0 0.0
    %4036 = vmatmul.mubr.f32.gmra.mrb[0].mxu0 %v3752
    %v4037 = vpop.f32.mrb[0].mxu0
    %v4038 = vadd.f32 0.0, %v4037
    %v4039 = vpop.f32.mrb[0].mxu0
    %4040 = vmatprep.mubr.f32.mxu0 0.0
    %4041 = vmatmul.mubr.f32.gmra.mrb[0].mxu0 %v3755
    %v4042 = vpop.f32.mrb[0].mxu0
    %v4043 = vadd.f32 0.0, %v4042
    %v4044 = vpop.f32.mrb[0].mxu0
    %4045 = vmatprep.mubr.f32.mxu0 0.0
    %4046 = vmatmul.mubr.f32.gmra.mrb[0].mxu0 %v3758
    %v4047 = vpop.f32.mrb[0].mxu0
    %v4048 = vadd.f32 0.0, %v4047
    %v4049 = vpop.f32.mrb[0].mxu0
    %4050 = vmatprep.mubr.f32.mxu0 0.0
    %4051 = vmatmul.mubr.f32.gmra.mrb[0].mxu0 %v3761
    %v4052 = vpop.f32.mrb[0].mxu0
    %v4053 = vadd.f32 0.0, %v4052
    %v4054 = vpop.f32.mrb[0].mxu0
    %4055 = vmatprep.mubr.f32.mxu0 0.0
    %4056 = vmatmul.mubr.f32.gmra.mrb[0].mxu0 %v3764
    %v4057 = vpop.f32.mrb[0].mxu0
    %v4058 = vadd.f32 0.0, %v4057
    %v4059 = vpop.f32.mrb[0].mxu0
    %4060 = vmatprep.mubr.f32.mxu0 0.0
    %4061 = vmatmul.mubr.f32.gmra.mrb[0].mxu0 %v3767
    %v4062 = vpop.f32.mrb[0].mxu0
    %v4063 = vadd.f32 0.0, %v4062
    %v4064 = vpop.f32.mrb[0].mxu0
    %4065 = vmatprep.mubr.f32.mxu0 0.0
    %4066 = vmatmul.mubr.f32.gmra.mrb[0].mxu0 %v3770
    %v4067 = vpop.f32.mrb[0].mxu0
    %v4068 = vadd.f32 0.0, %v4067
    %v4069 = vpop.f32.mrb[0].mxu0
    %4070 = vmatprep.mubr.f32.mxu0 0.0
    %4071 = vmatmul.mubr.f32.gmra.mrb[0].mxu0 %v3773
    %v4072 = vpop.f32.mrb[0].mxu0
    %v4073 = vadd.f32 0.0, %v4072
    %v4074 = vpop.f32.mrb[0].mxu0
    %4075 = vmatprep.mubr.f32.mxu0 0.0
    %4076 = vmatmul.mubr.f32.gmra.mrb[0].mxu0 %v3776
    %v4077 = vpop.f32.mrb[0].mxu0
    %v4078 = vadd.f32 0.0, %v4077
    %v4079 = vpop.f32.mrb[0].mxu0
    %4080 = vmatprep.mubr.f32.mxu0 0.0
    %4081 = vmatmul.mubr.f32.gmra.mrb[0].mxu0 %v3779
    %v4082 = vpop.f32.mrb[0].mxu0
    %v4083 = vadd.f32 0.0, %v4082
    %v4084 = vpop.f32.mrb[0].mxu0
    %4085 = vmatprep.mubr.f32.mxu0 0.0
    %4086 = vmatmul.mubr.f32.gmra.mrb[0].mxu0 %v3782
    %v4087 = vpop.f32.mrb[0].mxu0
    %v4088 = vadd.f32 0.0, %v4087
    %v4089 = vpop.f32.mrb[0].mxu0
    %4090 = vmatprep.mubr.f32.mxu0 0.0
    %4091 = vmatmul.mubr.f32.gmra.mrb[0].mxu0 %v3785
    %v4092 = vpop.f32.mrb[0].mxu0
    %v4093 = vadd.f32 0.0, %v4092
    %v4094 = vpop.f32.mrb[0].mxu0
    %4095 = vmatprep.mubr.f32.mxu0 0.0
    %4096 = vmatmul.mubr.f32.gmra.mrb[0].mxu0 %v3788
    %v4097 = vpop.f32.mrb[0].mxu0
    %v4098 = vadd.f32 0.0, %v4097
    %v4099 = vpop.f32.mrb[0].mxu0
    %4100 = vmatprep.mubr.f32.mxu0 0.0
    %4101 = vmatmul.mubr.f32.gmra.mrb[0].mxu0 %v3791
    %v4102 = vpop.f32.mrb[0].mxu0
    %v4103 = vadd.f32 0.0, %v4102
    %v4104 = vpop.f32.mrb[0].mxu0
    %4105 = vmatprep.mubr.f32.mxu0 0.0
    %4106 = vmatmul.mubr.f32.gmra.mrb[0].mxu0 %v3794
    %v4107 = vpop.f32.mrb[0].mxu0
    %v4108 = vadd.f32 0.0, %v4107
    %v4109 = vpop.f32.mrb[0].mxu0
    %4110 = vmatprep.mubr.f32.mxu0 0.0
    %4111 = vmatmul.mubr.f32.gmra.mrb[0].mxu0 %v3797
    %v4112 = vpop.f32.mrb[0].mxu0
    %v4113 = vadd.f32 0.0, %v4112
    %v4114 = vpop.f32.mrb[0].mxu0
    %4115 = vmatprep.mubr.f32.mxu0 0.0
    %4116 = vmatmul.mubr.f32.gmra.mrb[0].mxu0 %v3800
    %v4117 = vpop.f32.mrb[0].mxu0
    %v4118 = vadd.f32 0.0, %v4117
    %v4119 = vpop.f32.mrb[0].mxu0
    %4120 = vmatprep.mubr.f32.mxu0 0.0
    %4121 = vmatmul.mubr.f32.gmra.mrb[0].mxu0 %v3803
    %v4122 = vpop.f32.mrb[0].mxu0
    %v4123 = vadd.f32 0.0, %v4122
    %v4124 = vpop.f32.mrb[0].mxu0
    %4125 = vmatprep.mubr.f32.mxu0 0.0
    %4126 = vmatmul.mubr.f32.gmra.mrb[0].mxu0 %v3806
    %v4127 = vpop.f32.mrb[0].mxu0
    %v4128 = vadd.f32 0.0, %v4127
    %v4129 = vpop.f32.mrb[0].mxu0
    %4130 = vmatprep.mubr.f32.mxu0 0.0
    %4131 = vmatmul.mubr.f32.gmra.mrb[0].mxu0 %v3809
    %v4132 = vpop.f32.mrb[0].mxu0
    %v4133 = vadd.f32 0.0, %v4132
    %v4134 = vpop.f32.mrb[0].mxu0
    %4135 = vmatprep.mubr.f32.mxu0 0.0
    %4136 = vmatmul.mubr.f32.gmra.mrb[0].mxu0 %v3812
    %v4137 = vpop.f32.mrb[0].mxu0
    %v4138 = vadd.f32 0.0, %v4137
    %v4139 = vpop.f32.mrb[0].mxu0
    %4140 = vmatprep.mubr.f32.mxu0 0.0
    %4141 = vmatmul.mubr.f32.gmra.mrb[0].mxu0 %v3815
    %v4142 = vpop.f32.mrb[0].mxu0
    %v4143 = vadd.f32 0.0, %v4142
    %v4144 = vpop.f32.mrb[0].mxu0
    %4145 = vmatprep.mubr.f32.mxu0 0.0
    %4146 = vmatmul.mubr.f32.gmra.mrb[0].mxu0 %v3818
    %v4147 = vpop.f32.mrb[0].mxu0
    %v4148 = vadd.f32 0.0, %v4147
    %v4149 = vpop.f32.mrb[0].mxu0
    %4150 = vmatprep.mubr.f32.mxu0 0.0
    %4151 = vmatmul.mubr.f32.gmra.mrb[0].mxu0 %v3821
    %v4152 = vpop.f32.mrb[0].mxu0
    %v4153 = vadd.f32 0.0, %v4152
    %v4154 = vpop.f32.mrb[0].mxu0
    %4155 = vmatprep.mubr.f32.mxu0 0.0
    %4156 = vmatmul.mubr.f32.gmra.mrb[0].mxu0 %v3824
    %v4157 = vpop.f32.mrb[0].mxu0
    %v4158 = vadd.f32 0.0, %v4157
    %v4159 = vpop.f32.mrb[0].mxu0
    %4160 = vmatprep.mubr.f32.mxu0 0.0
    %4161 = vmatmul.mubr.f32.gmra.mrb[0].mxu0 %v3827
    %v4162 = vpop.f32.mrb[0].mxu0
    %v4163 = vadd.f32 0.0, %v4162
    %v4164 = vpop.f32.mrb[0].mxu0
    %4165 = vmatprep.mubr.f32.mxu0 0.0
    %4166 = vmatmul.mubr.f32.gmra.mrb[0].mxu0 %v3830
    %v4167 = vpop.f32.mrb[0].mxu0
    %v4168 = vadd.f32 0.0, %v4167
    %v4169 = vpop.f32.mrb[0].mxu0
    %4170 = vmatprep.mubr.f32.mxu0 0.0
    %4171 = vmatmul.mubr.f32.gmra.mrb[0].mxu0 %v3833
    %v4172 = vpop.f32.mrb[0].mxu0
    %v4173 = vadd.f32 0.0, %v4172
    %v4174 = vpop.f32.mrb[0].mxu0
    %4175 = vmatprep.mubr.f32.mxu0 0.0
    %4176 = vmatmul.mubr.f32.gmra.mrb[0].mxu0 %v3836
    %v4177 = vpop.f32.mrb[0].mxu0
    %v4178 = vadd.f32 0.0, %v4177
    %v4179 = vpop.f32.mrb[0].mxu0
    %4180 = vmatprep.mubr.f32.mxu0 0.0
    %4181 = vmatmul.mubr.f32.gmra.mrb[0].mxu0 %v3839
    %v4182 = vpop.f32.mrb[0].mxu0
    %v4183 = vadd.f32 0.0, %v4182
    %v4184 = vpop.f32.mrb[0].mxu0
    %4185 = vmatprep.mubr.f32.mxu0 0.0
    %4186 = vmatmul.mubr.f32.gmra.mrb[0].mxu0 %v3842
    %v4187 = vpop.f32.mrb[0].mxu0
    %v4188 = vadd.f32 0.0, %v4187
    %v4189 = vpop.f32.mrb[0].mxu0
    %4190 = vmatprep.mubr.f32.mxu0 0.0
    %4191 = vmatmul.mubr.f32.gmra.mrb[0].mxu0 %v3845
    %v4192 = vpop.f32.mrb[0].mxu0
    %v4193 = vadd.f32 0.0, %v4192
    %v4194 = vpop.f32.mrb[0].mxu0
    %4195 = vmatprep.mubr.f32.mxu0 0.0
    %4196 = vmatmul.mubr.f32.gmra.mrb[0].mxu0 %v3848
    %v4197 = vpop.f32.mrb[0].mxu0
    %v4198 = vadd.f32 0.0, %v4197
    %v4199 = vpop.f32.mrb[0].mxu0
    %4200 = vmatprep.mubr.f32.mxu0 0.0
    %4201 = vmatmul.mubr.f32.gmra.mrb[0].mxu0 %v3851
    %v4202 = vpop.f32.mrb[0].mxu0
    %v4203 = vadd.f32 0.0, %v4202
    %v4204 = vpop.f32.mrb[0].mxu0
    %4205 = vmatprep.mubr.f32.mxu0 0.0
    %4206 = vmatmul.mubr.f32.gmra.mrb[0].mxu0 %v3854
    %v4207 = vpop.f32.mrb[0].mxu0
    %v4208 = vadd.f32 0.0, %v4207
    %v4209 = vpop.f32.mrb[0].mxu0
    %4210 = vmatprep.mubr.f32.mxu0 0.0
    %4211 = vmatmul.mubr.f32.gmra.mrb[0].mxu0 %v3857
    %v4212 = vpop.f32.mrb[0].mxu0
    %v4213 = vadd.f32 0.0, %v4212
    %v4214 = vpop.f32.mrb[0].mxu0
    %4215 = vmatprep.mubr.f32.mxu0 0.0
    %4216 = vmatmul.mubr.f32.gmra.mrb[0].mxu0 %v3860
    %v4217 = vpop.f32.mrb[0].mxu0
    %v4218 = vadd.f32 0.0, %v4217
    %v4219 = vpop.f32.mrb[0].mxu0
    %4220 = vmatprep.mubr.f32.mxu0 0.0
    %4221 = vmatmul.mubr.f32.gmra.mrb[0].mxu0 %v3863
    %v4222 = vpop.f32.mrb[0].mxu0
    %v4223 = vadd.f32 0.0, %v4222
    %v4224 = vpop.f32.mrb[0].mxu0
    %4225 = vmatprep.mubr.f32.mxu0 0.0
    %4226 = vmatmul.mubr.f32.gmra.mrb[0].mxu0 %v3866
    %v4227 = vpop.f32.mrb[0].mxu0
    %v4228 = vadd.f32 0.0, %v4227
    %v4229 = vpop.f32.mrb[0].mxu0
    %4230 = vmatprep.mubr.f32.mxu0 0.0
    %4231 = vmatmul.mubr.f32.gmra.mrb[0].mxu0 %v3869
    %v4232 = vpop.f32.mrb[0].mxu0
    %v4233 = vadd.f32 0.0, %v4232
    %v4234 = vpop.f32.mrb[0].mxu0
    %4235 = vmatprep.mubr.f32.mxu0 0.0
    %4236 = vmatmul.mubr.f32.gmra.mrb[0].mxu0 %v3872
    %v4237 = vpop.f32.mrb[0].mxu0
    %v4238 = vadd.f32 0.0, %v4237
    %v4239 = vpop.f32.mrb[0].mxu0
    %4240 = vmatprep.mubr.f32.mxu0 0.0
    %4241 = vmatmul.mubr.f32.gmra.mrb[0].mxu0 %v3875
    %v4242 = vpop.f32.mrb[0].mxu0
    %v4243 = vadd.f32 0.0, %v4242
    %v4244 = vpop.f32.mrb[0].mxu0
    %4245 = vmatprep.mubr.f32.mxu0 0.0
    %4246 = vmatmul.mubr.f32.gmra.mrb[0].mxu0 %v3878
    %v4247 = vpop.f32.mrb[0].mxu0
    %v4248 = vadd.f32 0.0, %v4247
    %v4249 = vpop.f32.mrb[0].mxu0
    %4250 = vmatprep.mubr.f32.mxu0 0.0
    %4251 = vmatmul.mubr.f32.gmra.mrb[0].mxu0 %v3881
    %v4252 = vpop.f32.mrb[0].mxu0
    %v4253 = vadd.f32 0.0, %v4252
    %v4254 = vpop.f32.mrb[0].mxu0
    %4255 = vmatprep.mubr.f32.mxu0 0.0
    %4256 = vmatmul.mubr.f32.gmra.mrb[0].mxu0 %v3884
    %v4257 = vpop.f32.mrb[0].mxu0
    %v4258 = vadd.f32 0.0, %v4257
    %v4259 = vpop.f32.mrb[0].mxu0
    %4260 = vmatprep.mubr.f32.mxu0 0.0
    %4261 = vmatmul.mubr.f32.gmra.mrb[0].mxu0 %v3887
    %v4262 = vpop.f32.mrb[0].mxu0
    %v4263 = vadd.f32 0.0, %v4262
    %v4264 = vpop.f32.mrb[0].mxu0
    %4265 = vmatprep.mubr.f32.mxu0 0.0
    %4266 = vmatmul.mubr.f32.gmra.mrb[0].mxu0 %v3890
    %v4267 = vpop.f32.mrb[0].mxu0
    %v4268 = vadd.f32 0.0, %v4267
    %v4269 = vpop.f32.mrb[0].mxu0
    %4270 = vmatprep.mubr.f32.mxu0 0.0
    %4271 = vmatmul.mubr.f32.gmra.mrb[0].mxu0 %v3893
    %v4272 = vpop.f32.mrb[0].mxu0
    %v4273 = vadd.f32 0.0, %v4272
    %v4274 = vpop.f32.mrb[0].mxu0
    %4275 = vmatprep.mubr.f32.mxu0 0.0
    %4276 = vmatmul.mubr.f32.gmra.mrb[0].mxu0 %v3896
    %v4277 = vpop.f32.mrb[0].mxu0
    %v4278 = vadd.f32 0.0, %v4277
    %v4279 = vpop.f32.mrb[0].mxu0
    %4280 = vmatprep.mubr.f32.mxu0 0.0
    %4281 = vmatmul.mubr.f32.gmra.mrb[0].mxu0 %v3899
    %v4282 = vpop.f32.mrb[0].mxu0
    %v4283 = vadd.f32 0.0, %v4282
    %v4284 = vpop.f32.mrb[0].mxu0
    %4285 = vdwg.mxu0
    %v4286 = vadd.f32 %v3578, %v3968
    %v4287 = vadd.f32 %v3579, %v3973
    %v4288 = vadd.f32 %v3580, %v3978
    %v4289 = vadd.f32 %v3581, %v3983
    %v4290 = vadd.f32 %v3582, %v3988
    %v4291 = vadd.f32 %v3583, %v3993
    %v4292 = vadd.f32 %v3584, %v3998
    %v4293 = vadd.f32 %v3585, %v4003
    %v4294 = vadd.f32 %v3586, %v4008
    %v4295 = vadd.f32 %v3587, %v4013
    %v4296 = vadd.f32 %v3588, %v4018
    %v4297 = vadd.f32 %v3589, %v4023
    %v4298 = vadd.f32 %v3590, %v4028
    %v4299 = vadd.f32 %v3591, %v4033
    %v4300 = vadd.f32 %v3592, %v4038
    %v4301 = vadd.f32 %v3593, %v4043
    %v4302 = vadd.f32 %v3594, %v4048
    %v4303 = vadd.f32 %v3595, %v4053
    %v4304 = vadd.f32 %v3596, %v4058
    %v4305 = vadd.f32 %v3597, %v4063
    %v4306 = vadd.f32 %v3598, %v4068
    %v4307 = vadd.f32 %v3599, %v4073
    %v4308 = vadd.f32 %v3600, %v4078
    %v4309 = vadd.f32 %v3601, %v4083
    %v4310 = vadd.f32 %v3602, %v4088
    %v4311 = vadd.f32 %v3603, %v4093
    %v4312 = vadd.f32 %v3604, %v4098
    %v4313 = vadd.f32 %v3605, %v4103
    %v4314 = vadd.f32 %v3606, %v4108
    %v4315 = vadd.f32 %v3607, %v4113
    %v4316 = vadd.f32 %v3608, %v4118
    %v4317 = vadd.f32 %v3609, %v4123
    %v4318 = vadd.f32 %v3610, %v4128
    %v4319 = vadd.f32 %v3611, %v4133
    %v4320 = vadd.f32 %v3612, %v4138
    %v4321 = vadd.f32 %v3613, %v4143
    %v4322 = vadd.f32 %v3614, %v4148
    %v4323 = vadd.f32 %v3615, %v4153
    %v4324 = vadd.f32 %v3616, %v4158
    %v4325 = vadd.f32 %v3617, %v4163
    %v4326 = vadd.f32 %v3618, %v4168
    %v4327 = vadd.f32 %v3619, %v4173
    %v4328 = vadd.f32 %v3620, %v4178
    %v4329 = vadd.f32 %v3621, %v4183
    %v4330 = vadd.f32 %v3622, %v4188
    %v4331 = vadd.f32 %v3623, %v4193
    %v4332 = vadd.f32 %v3624, %v4198
    %v4333 = vadd.f32 %v3625, %v4203
    %v4334 = vadd.f32 %v3626, %v4208
    %v4335 = vadd.f32 %v3627, %v4213
    %v4336 = vadd.f32 %v3628, %v4218
    %v4337 = vadd.f32 %v3629, %v4223
    %v4338 = vadd.f32 %v3630, %v4228
    %v4339 = vadd.f32 %v3631, %v4233
    %v4340 = vadd.f32 %v3632, %v4238
    %v4341 = vadd.f32 %v3633, %v4243
    %v4342 = vadd.f32 %v3634, %v4248
    %v4343 = vadd.f32 %v3635, %v4253
    %v4344 = vadd.f32 %v3636, %v4258
    %v4345 = vadd.f32 %v3637, %v4263
    %v4346 = vadd.f32 %v3638, %v4268
    %v4347 = vadd.f32 %v3639, %v4273
    %v4348 = vadd.f32 %v3640, %v4278
    %v4349 = vadd.f32 %v3641, %v4283
    %v4350 = vld [vmem:[%s1582 + $0x8] sm:$0xff]
    %v4351 = vld [vmem:[%s1582 + $0x10] sm:$0xff]
    %v4352 = vld [vmem:[%s1582 + $0x28] sm:$0xff]
    %v4353 = vld [vmem:[%s1582 + $0x30] sm:$0xff]
    %v4354 = vld [vmem:[%s1582 + $0x48] sm:$0xff]
    %v4355 = vld [vmem:[%s1582 + $0x50] sm:$0xff]
    %v4356 = vld [vmem:[%s1582 + $0x68] sm:$0xff]
    %v4357 = vld [vmem:[%s1582 + $0x70] sm:$0xff]
    %v4358 = vld [vmem:[%s1582 + $0x88] sm:$0xff]
    %v4359 = vld [vmem:[%s1582 + $0x90] sm:$0xff]
    %v4360 = vld [vmem:[%s1582 + $0xa8] sm:$0xff]
    %v4361 = vld [vmem:[%s1582 + $0xb0] sm:$0xff]
    %v4362 = vld [vmem:[%s1582 + $0xc8] sm:$0xff]
    %v4363 = vld [vmem:[%s1582 + $0xd0] sm:$0xff]
    %v4364 = vld [vmem:[%s1582 + $0xe8] sm:$0xff]
    %v4365 = vld [vmem:[%s1582 + $0xf0] sm:$0xff]
    %v4366 = vld [vmem:[%s1582 + $0x108] sm:$0xff]
    %v4367 = vld [vmem:[%s1582 + $0x110] sm:$0xff]
    %v4368 = vld [vmem:[%s1582 + $0x128] sm:$0xff]
    %v4369 = vld [vmem:[%s1582 + $0x130] sm:$0xff]
    %v4370 = vld [vmem:[%s1582 + $0x148] sm:$0xff]
    %v4371 = vld [vmem:[%s1582 + $0x150] sm:$0xff]
    %v4372 = vld [vmem:[%s1582 + $0x168] sm:$0xff]
    %v4373 = vld [vmem:[%s1582 + $0x170] sm:$0xff]
    %v4374 = vld [vmem:[%s1582 + $0x188] sm:$0xff]
    %v4375 = vld [vmem:[%s1582 + $0x190] sm:$0xff]
    %v4376 = vld [vmem:[%s1582 + $0x1a8] sm:$0xff]
    %v4377 = vld [vmem:[%s1582 + $0x1b0] sm:$0xff]
    %v4378 = vld [vmem:[%s1582 + $0x1c8] sm:$0xff]
    %v4379 = vld [vmem:[%s1582 + $0x1d0] sm:$0xff]
    %v4380 = vld [vmem:[%s1582 + $0x1e8] sm:$0xff]
    %v4381 = vld [vmem:[%s1582 + $0x1f0] sm:$0xff]
    %v4382 = vld [vmem:[%s1582 + $0x248] sm:$0xff]
    %v4383 = vld [vmem:[%s1582 + $0x250] sm:$0xff]
    %v4384 = vld [vmem:[%s1582 + $0x268] sm:$0xff]
    %v4385 = vld [vmem:[%s1582 + $0x270] sm:$0xff]
    %v4386 = vld [vmem:[%s1582 + $0x288] sm:$0xff]
    %v4387 = vld [vmem:[%s1582 + $0x290] sm:$0xff]
    %v4388 = vld [vmem:[%s1582 + $0x2a8] sm:$0xff]
    %v4389 = vld [vmem:[%s1582 + $0x2b0] sm:$0xff]
    %v4390 = vld [vmem:[%s1582 + $0x2c8] sm:$0xff]
    %v4391 = vld [vmem:[%s1582 + $0x2d0] sm:$0xff]
    %v4392 = vld [vmem:[%s1582 + $0x2e8] sm:$0xff]
    %v4393 = vld [vmem:[%s1582 + $0x2f0] sm:$0xff]
    %v4394 = vld [vmem:[%s1582 + $0x308] sm:$0xff]
    %v4395 = vld [vmem:[%s1582 + $0x310] sm:$0xff]
    %v4396 = vld [vmem:[%s1582 + $0x328] sm:$0xff]
    %v4397 = vld [vmem:[%s1582 + $0x330] sm:$0xff]
    %v4398 = vld [vmem:[%s1582 + $0x348] sm:$0xff]
    %v4399 = vld [vmem:[%s1582 + $0x350] sm:$0xff]
    %v4400 = vld [vmem:[%s1582 + $0x368] sm:$0xff]
    %v4401 = vld [vmem:[%s1582 + $0x370] sm:$0xff]
    %v4402 = vld [vmem:[%s1582 + $0x388] sm:$0xff]
    %v4403 = vld [vmem:[%s1582 + $0x390] sm:$0xff]
    %v4404 = vld [vmem:[%s1582 + $0x3a8] sm:$0xff]
    %v4405 = vld [vmem:[%s1582 + $0x3b0] sm:$0xff]
    %v4406 = vld [vmem:[%s1582 + $0x3c8] sm:$0xff]
    %v4407 = vld [vmem:[%s1582 + $0x3d0] sm:$0xff]
    %v4408 = vld [vmem:[%s1582 + $0x3e8] sm:$0xff]
    %v4409 = vld [vmem:[%s1582 + $0x3f0] sm:$0xff]
    %v4410 = vld [vmem:[%s1582 + $0x408] sm:$0xff]
    %v4411 = vld [vmem:[%s1582 + $0x410] sm:$0xff]
    %v4412 = vld [vmem:[%s1582 + $0x428] sm:$0xff]
    %v4413 = vld [vmem:[%s1582 + $0x430] sm:$0xff]
    %s4414 = scalar_lea.vmem [#allocation6], 64
    %v4415 = vld [vmem:[%s4414] sm:$0xff]
    %v4416 = vld [vmem:[%s4414 + $0x8] sm:$0xff]
    %v4418 = vsel %vm701, %v4350, 0
    %v4421 = vsel %vm701, %v4351, 0
    %v4424 = vsel %vm701, %v4352, 0
    %v4427 = vsel %vm701, %v4353, 0
    %v4430 = vsel %vm701, %v4354, 0
    %v4433 = vsel %vm701, %v4355, 0
    %v4436 = vsel %vm701, %v4356, 0
    %v4439 = vsel %vm701, %v4357, 0
    %v4442 = vsel %vm701, %v4358, 0
    %v4445 = vsel %vm701, %v4359, 0
    %v4448 = vsel %vm701, %v4360, 0
    %v4451 = vsel %vm701, %v4361, 0
    %v4454 = vsel %vm701, %v4362, 0
    %v4457 = vsel %vm701, %v4363, 0
    %v4460 = vsel %vm701, %v4364, 0
    %v4463 = vsel %vm701, %v4365, 0
    %v4466 = vsel %vm701, %v4366, 0
    %v4469 = vsel %vm701, %v4367, 0
    %v4472 = vsel %vm701, %v4368, 0
    %v4475 = vsel %vm701, %v4369, 0
    %v4478 = vsel %vm701, %v4370, 0
    %v4481 = vsel %vm701, %v4371, 0
    %v4484 = vsel %vm701, %v4372, 0
    %v4487 = vsel %vm701, %v4373, 0
    %v4490 = vsel %vm701, %v4374, 0
    %v4493 = vsel %vm701, %v4375, 0
    %v4496 = vsel %vm701, %v4376, 0
    %v4499 = vsel %vm701, %v4377, 0
    %v4502 = vsel %vm701, %v4378, 0
    %v4505 = vsel %vm701, %v4379, 0
    %v4508 = vsel %vm701, %v4380, 0
    %v4511 = vsel %vm701, %v4381, 0
    %v4514 = vsel %vm701, %v4382, 0
    %v4517 = vsel %vm701, %v4383, 0
    %v4520 = vsel %vm701, %v4384, 0
    %v4523 = vsel %vm701, %v4385, 0
    %v4526 = vsel %vm701, %v4386, 0
    %v4529 = vsel %vm701, %v4387, 0
    %v4532 = vsel %vm701, %v4388, 0
    %v4535 = vsel %vm701, %v4389, 0
    %v4538 = vsel %vm701, %v4390, 0
    %v4541 = vsel %vm701, %v4391, 0
    %v4544 = vsel %vm701, %v4392, 0
    %v4547 = vsel %vm701, %v4393, 0
    %v4550 = vsel %vm701, %v4394, 0
    %v4553 = vsel %vm701, %v4395, 0
    %v4556 = vsel %vm701, %v4396, 0
    %v4559 = vsel %vm701, %v4397, 0
    %v4562 = vsel %vm701, %v4398, 0
    %v4565 = vsel %vm701, %v4399, 0
    %v4568 = vsel %vm701, %v4400, 0
    %v4571 = vsel %vm701, %v4401, 0
    %v4574 = vsel %vm701, %v4402, 0
    %v4577 = vsel %vm701, %v4403, 0
    %v4580 = vsel %vm701, %v4404, 0
    %v4583 = vsel %vm701, %v4405, 0
    %v4586 = vsel %vm701, %v4406, 0
    %v4589 = vsel %vm701, %v4407, 0
    %v4592 = vsel %vm701, %v4408, 0
    %v4595 = vsel %vm701, %v4409, 0
    %v4598 = vsel %vm701, %v4410, 0
    %v4601 = vsel %vm701, %v4411, 0
    %v4604 = vsel %vm701, %v4412, 0
    %v4607 = vsel %vm701, %v4413, 0
    %4609 = vmatprep.subr.mxu0 0.0
    %4610 = vmatpush1.msra.mxu0 %v4415
    %4611 = vmatprep.subr.mxu0 0.0
    %4612 = vmatpush1.msra.mxu0 %v4416
    %4613 = vmatprep.subr.mxu0 0.0
    %4614 = vmatpush1.msra.mxu0 0.0
    %4615 = vmatprep.subr.mxu0 0.0
    %4616 = vmatpush1.msra.mxu0 0.0
    %4617 = vmatprep.subr.mxu0 0.0
    %4618 = vmatpush1.msra.mxu0 0.0
    %4619 = vmatprep.subr.mxu0 0.0
    %4620 = vmatpush1.msra.mxu0 0.0
    %4621 = vmatprep.subr.mxu0 0.0
    %4622 = vmatpush1.msra.mxu0 0.0
    %4623 = vmatprep.subr.mxu0 0.0
    %4624 = vmatpush1.msra.mxu0 0.0
    %4625 = vmatprep.subr.mxu0 0.0
    %4626 = vmatpush1.msra.mxu0 0.0
    %4627 = vmatprep.subr.mxu0 0.0
    %4628 = vmatpush1.msra.mxu0 0.0
    %4629 = vmatprep.subr.mxu0 0.0
    %4630 = vmatpush1.msra.mxu0 0.0
    %4631 = vmatprep.subr.mxu0 0.0
    %4632 = vmatpush1.msra.mxu0 0.0
    %4633 = vmatprep.subr.mxu0 0.0
    %4634 = vmatpush1.msra.mxu0 0.0
    %4635 = vmatprep.subr.mxu0 0.0
    %4636 = vmatpush1.msra.mxu0 0.0
    %4637 = vmatprep.subr.mxu0 0.0
    %4638 = vmatpush1.msra.mxu0 0.0
    %4639 = vmatprep.subr.mxu0 0.0
    %4640 = vmatpush1.msra.mxu0 0.0
    %4641 = vmatprep.subr.mxu0 0.0
    %4642 = vmatpush1.msra.mxu0 0.0
    %4643 = vmatprep.subr.mxu0 0.0
    %4644 = vmatpush1.msra.mxu0 0.0
    %4645 = vmatprep.subr.mxu0 0.0
    %4646 = vmatpush1.msra.mxu0 0.0
    %4647 = vmatprep.subr.mxu0 0.0
    %4648 = vmatpush1.msra.mxu0 0.0
    %4649 = vmatprep.subr.mxu0 0.0
    %4650 = vmatpush1.msra.mxu0 0.0
    %4651 = vmatprep.subr.mxu0 0.0
    %4652 = vmatpush1.msra.mxu0 0.0
    %4653 = vmatprep.subr.mxu0 0.0
    %4654 = vmatpush1.msra.mxu0 0.0
    %4655 = vmatprep.subr.mxu0 0.0
    %4656 = vmatpush1.msra.mxu0 0.0
    %4657 = vmatprep.subr.mxu0 0.0
    %4658 = vmatpush1.msra.mxu0 0.0
    %4659 = vmatprep.subr.mxu0 0.0
    %4660 = vmatpush1.msra.mxu0 0.0
    %4661 = vmatprep.subr.mxu0 0.0
    %4662 = vmatpush1.msra.mxu0 0.0
    %4663 = vmatprep.subr.mxu0 0.0
    %4664 = vmatpush1.msra.mxu0 0.0
    %4665 = vmatprep.subr.mxu0 0.0
    %4666 = vmatpush1.msra.mxu0 0.0
    %4667 = vmatprep.subr.mxu0 0.0
    %4668 = vmatpush1.msra.mxu0 0.0
    %4669 = vmatprep.subr.mxu0 0.0
    %4670 = vmatpush1.msra.mxu0 0.0
    %4671 = vmatprep.subr.mxu0 0.0
    %4672 = vmatpush1.msra.mxu0 0.0
    %4673 = vmatprep.mubr.f32.mxu0 0.0
    %4674 = vmatmul.mubr.f32.gmra.mrb[0].mxu0 %v4418
    %v4675 = vpop.f32.mrb[0].mxu0
    %v4676 = vadd.f32 0.0, %v4675
    %v4677 = vpop.f32.mrb[0].mxu0
    %4678 = vmatprep.mubr.f32.mxu0 0.0
    %4679 = vmatmul.mubr.f32.gmra.mrb[0].mxu0 %v4421
    %v4680 = vpop.f32.mrb[0].mxu0
    %v4681 = vadd.f32 0.0, %v4680
    %v4682 = vpop.f32.mrb[0].mxu0
    %4683 = vmatprep.mubr.f32.mxu0 0.0
    %4684 = vmatmul.mubr.f32.gmra.mrb[0].mxu0 %v4424
    %v4685 = vpop.f32.mrb[0].mxu0
    %v4686 = vadd.f32 0.0, %v4685
    %v4687 = vpop.f32.mrb[0].mxu0
    %4688 = vmatprep.mubr.f32.mxu0 0.0
    %4689 = vmatmul.mubr.f32.gmra.mrb[0].mxu0 %v4427
    %v4690 = vpop.f32.mrb[0].mxu0
    %v4691 = vadd.f32 0.0, %v4690
    %v4692 = vpop.f32.mrb[0].mxu0
    %4693 = vmatprep.mubr.f32.mxu0 0.0
    %4694 = vmatmul.mubr.f32.gmra.mrb[0].mxu0 %v4430
    %v4695 = vpop.f32.mrb[0].mxu0
    %v4696 = vadd.f32 0.0, %v4695
    %v4697 = vpop.f32.mrb[0].mxu0
    %4698 = vmatprep.mubr.f32.mxu0 0.0
    %4699 = vmatmul.mubr.f32.gmra.mrb[0].mxu0 %v4433
    %v4700 = vpop.f32.mrb[0].mxu0
    %v4701 = vadd.f32 0.0, %v4700
    %v4702 = vpop.f32.mrb[0].mxu0
    %4703 = vmatprep.mubr.f32.mxu0 0.0
    %4704 = vmatmul.mubr.f32.gmra.mrb[0].mxu0 %v4436
    %v4705 = vpop.f32.mrb[0].mxu0
    %v4706 = vadd.f32 0.0, %v4705
    %v4707 = vpop.f32.mrb[0].mxu0
    %4708 = vmatprep.mubr.f32.mxu0 0.0
    %4709 = vmatmul.mubr.f32.gmra.mrb[0].mxu0 %v4439
    %v4710 = vpop.f32.mrb[0].mxu0
    %v4711 = vadd.f32 0.0, %v4710
    %v4712 = vpop.f32.mrb[0].mxu0
    %4713 = vmatprep.mubr.f32.mxu0 0.0
    %4714 = vmatmul.mubr.f32.gmra.mrb[0].mxu0 %v4442
    %v4715 = vpop.f32.mrb[0].mxu0
    %v4716 = vadd.f32 0.0, %v4715
    %v4717 = vpop.f32.mrb[0].mxu0
    %4718 = vmatprep.mubr.f32.mxu0 0.0
    %4719 = vmatmul.mubr.f32.gmra.mrb[0].mxu0 %v4445
    %v4720 = vpop.f32.mrb[0].mxu0
    %v4721 = vadd.f32 0.0, %v4720
    %v4722 = vpop.f32.mrb[0].mxu0
    %4723 = vmatprep.mubr.f32.mxu0 0.0
    %4724 = vmatmul.mubr.f32.gmra.mrb[0].mxu0 %v4448
    %v4725 = vpop.f32.mrb[0].mxu0
    %v4726 = vadd.f32 0.0, %v4725
    %v4727 = vpop.f32.mrb[0].mxu0
    %4728 = vmatprep.mubr.f32.mxu0 0.0
    %4729 = vmatmul.mubr.f32.gmra.mrb[0].mxu0 %v4451
    %v4730 = vpop.f32.mrb[0].mxu0
    %v4731 = vadd.f32 0.0, %v4730
    %v4732 = vpop.f32.mrb[0].mxu0
    %4733 = vmatprep.mubr.f32.mxu0 0.0
    %4734 = vmatmul.mubr.f32.gmra.mrb[0].mxu0 %v4454
    %v4735 = vpop.f32.mrb[0].mxu0
    %v4736 = vadd.f32 0.0, %v4735
    %v4737 = vpop.f32.mrb[0].mxu0
    %4738 = vmatprep.mubr.f32.mxu0 0.0
    %4739 = vmatmul.mubr.f32.gmra.mrb[0].mxu0 %v4457
    %v4740 = vpop.f32.mrb[0].mxu0
    %v4741 = vadd.f32 0.0, %v4740
    %v4742 = vpop.f32.mrb[0].mxu0
    %4743 = vmatprep.mubr.f32.mxu0 0.0
    %4744 = vmatmul.mubr.f32.gmra.mrb[0].mxu0 %v4460
    %v4745 = vpop.f32.mrb[0].mxu0
    %v4746 = vadd.f32 0.0, %v4745
    %v4747 = vpop.f32.mrb[0].mxu0
    %4748 = vmatprep.mubr.f32.mxu0 0.0
    %4749 = vmatmul.mubr.f32.gmra.mrb[0].mxu0 %v4463
    %v4750 = vpop.f32.mrb[0].mxu0
    %v4751 = vadd.f32 0.0, %v4750
    %v4752 = vpop.f32.mrb[0].mxu0
    %4753 = vmatprep.mubr.f32.mxu0 0.0
    %4754 = vmatmul.mubr.f32.gmra.mrb[0].mxu0 %v4466
    %v4755 = vpop.f32.mrb[0].mxu0
    %v4756 = vadd.f32 0.0, %v4755
    %v4757 = vpop.f32.mrb[0].mxu0
    %4758 = vmatprep.mubr.f32.mxu0 0.0
    %4759 = vmatmul.mubr.f32.gmra.mrb[0].mxu0 %v4469
    %v4760 = vpop.f32.mrb[0].mxu0
    %v4761 = vadd.f32 0.0, %v4760
    %v4762 = vpop.f32.mrb[0].mxu0
    %4763 = vmatprep.mubr.f32.mxu0 0.0
    %4764 = vmatmul.mubr.f32.gmra.mrb[0].mxu0 %v4472
    %v4765 = vpop.f32.mrb[0].mxu0
    %v4766 = vadd.f32 0.0, %v4765
    %v4767 = vpop.f32.mrb[0].mxu0
    %4768 = vmatprep.mubr.f32.mxu0 0.0
    %4769 = vmatmul.mubr.f32.gmra.mrb[0].mxu0 %v4475
    %v4770 = vpop.f32.mrb[0].mxu0
    %v4771 = vadd.f32 0.0, %v4770
    %v4772 = vpop.f32.mrb[0].mxu0
    %4773 = vmatprep.mubr.f32.mxu0 0.0
    %4774 = vmatmul.mubr.f32.gmra.mrb[0].mxu0 %v4478
    %v4775 = vpop.f32.mrb[0].mxu0
    %v4776 = vadd.f32 0.0, %v4775
    %v4777 = vpop.f32.mrb[0].mxu0
    %4778 = vmatprep.mubr.f32.mxu0 0.0
    %4779 = vmatmul.mubr.f32.gmra.mrb[0].mxu0 %v4481
    %v4780 = vpop.f32.mrb[0].mxu0
    %v4781 = vadd.f32 0.0, %v4780
    %v4782 = vpop.f32.mrb[0].mxu0
    %4783 = vmatprep.mubr.f32.mxu0 0.0
    %4784 = vmatmul.mubr.f32.gmra.mrb[0].mxu0 %v4484
    %v4785 = vpop.f32.mrb[0].mxu0
    %v4786 = vadd.f32 0.0, %v4785
    %v4787 = vpop.f32.mrb[0].mxu0
    %4788 = vmatprep.mubr.f32.mxu0 0.0
    %4789 = vmatmul.mubr.f32.gmra.mrb[0].mxu0 %v4487
    %v4790 = vpop.f32.mrb[0].mxu0
    %v4791 = vadd.f32 0.0, %v4790
    %v4792 = vpop.f32.mrb[0].mxu0
    %4793 = vmatprep.mubr.f32.mxu0 0.0
    %4794 = vmatmul.mubr.f32.gmra.mrb[0].mxu0 %v4490
    %v4795 = vpop.f32.mrb[0].mxu0
    %v4796 = vadd.f32 0.0, %v4795
    %v4797 = vpop.f32.mrb[0].mxu0
    %4798 = vmatprep.mubr.f32.mxu0 0.0
    %4799 = vmatmul.mubr.f32.gmra.mrb[0].mxu0 %v4493
    %v4800 = vpop.f32.mrb[0].mxu0
    %v4801 = vadd.f32 0.0, %v4800
    %v4802 = vpop.f32.mrb[0].mxu0
    %4803 = vmatprep.mubr.f32.mxu0 0.0
    %4804 = vmatmul.mubr.f32.gmra.mrb[0].mxu0 %v4496
    %v4805 = vpop.f32.mrb[0].mxu0
    %v4806 = vadd.f32 0.0, %v4805
    %v4807 = vpop.f32.mrb[0].mxu0
    %4808 = vmatprep.mubr.f32.mxu0 0.0
    %4809 = vmatmul.mubr.f32.gmra.mrb[0].mxu0 %v4499
    %v4810 = vpop.f32.mrb[0].mxu0
    %v4811 = vadd.f32 0.0, %v4810
    %v4812 = vpop.f32.mrb[0].mxu0
    %4813 = vmatprep.mubr.f32.mxu0 0.0
    %4814 = vmatmul.mubr.f32.gmra.mrb[0].mxu0 %v4502
    %v4815 = vpop.f32.mrb[0].mxu0
    %v4816 = vadd.f32 0.0, %v4815
    %v4817 = vpop.f32.mrb[0].mxu0
    %4818 = vmatprep.mubr.f32.mxu0 0.0
    %4819 = vmatmul.mubr.f32.gmra.mrb[0].mxu0 %v4505
    %v4820 = vpop.f32.mrb[0].mxu0
    %v4821 = vadd.f32 0.0, %v4820
    %v4822 = vpop.f32.mrb[0].mxu0
    %4823 = vmatprep.mubr.f32.mxu0 0.0
    %4824 = vmatmul.mubr.f32.gmra.mrb[0].mxu0 %v4508
    %v4825 = vpop.f32.mrb[0].mxu0
    %v4826 = vadd.f32 0.0, %v4825
    %v4827 = vpop.f32.mrb[0].mxu0
    %4828 = vmatprep.mubr.f32.mxu0 0.0
    %4829 = vmatmul.mubr.f32.gmra.mrb[0].mxu0 %v4511
    %v4830 = vpop.f32.mrb[0].mxu0
    %v4831 = vadd.f32 0.0, %v4830
    %v4832 = vpop.f32.mrb[0].mxu0
    %4833 = vmatprep.mubr.f32.mxu0 0.0
    %4834 = vmatmul.mubr.f32.gmra.mrb[0].mxu0 %v4514
    %v4835 = vpop.f32.mrb[0].mxu0
    %v4836 = vadd.f32 0.0, %v4835
    %v4837 = vpop.f32.mrb[0].mxu0
    %4838 = vmatprep.mubr.f32.mxu0 0.0
    %4839 = vmatmul.mubr.f32.gmra.mrb[0].mxu0 %v4517
    %v4840 = vpop.f32.mrb[0].mxu0
    %v4841 = vadd.f32 0.0, %v4840
    %v4842 = vpop.f32.mrb[0].mxu0
    %4843 = vmatprep.mubr.f32.mxu0 0.0
    %4844 = vmatmul.mubr.f32.gmra.mrb[0].mxu0 %v4520
    %v4845 = vpop.f32.mrb[0].mxu0
    %v4846 = vadd.f32 0.0, %v4845
    %v4847 = vpop.f32.mrb[0].mxu0
    %4848 = vmatprep.mubr.f32.mxu0 0.0
    %4849 = vmatmul.mubr.f32.gmra.mrb[0].mxu0 %v4523
    %v4850 = vpop.f32.mrb[0].mxu0
    %v4851 = vadd.f32 0.0, %v4850
    %v4852 = vpop.f32.mrb[0].mxu0
    %4853 = vmatprep.mubr.f32.mxu0 0.0
    %4854 = vmatmul.mubr.f32.gmra.mrb[0].mxu0 %v4526
    %v4855 = vpop.f32.mrb[0].mxu0
    %v4856 = vadd.f32 0.0, %v4855
    %v4857 = vpop.f32.mrb[0].mxu0
    %4858 = vmatprep.mubr.f32.mxu0 0.0
    %4859 = vmatmul.mubr.f32.gmra.mrb[0].mxu0 %v4529
    %v4860 = vpop.f32.mrb[0].mxu0
    %v4861 = vadd.f32 0.0, %v4860
    %v4862 = vpop.f32.mrb[0].mxu0
    %4863 = vmatprep.mubr.f32.mxu0 0.0
    %4864 = vmatmul.mubr.f32.gmra.mrb[0].mxu0 %v4532
    %v4865 = vpop.f32.mrb[0].mxu0
    %v4866 = vadd.f32 0.0, %v4865
    %v4867 = vpop.f32.mrb[0].mxu0
    %4868 = vmatprep.mubr.f32.mxu0 0.0
    %4869 = vmatmul.mubr.f32.gmra.mrb[0].mxu0 %v4535
    %v4870 = vpop.f32.mrb[0].mxu0
    %v4871 = vadd.f32 0.0, %v4870
    %v4872 = vpop.f32.mrb[0].mxu0
    %4873 = vmatprep.mubr.f32.mxu0 0.0
    %4874 = vmatmul.mubr.f32.gmra.mrb[0].mxu0 %v4538
    %v4875 = vpop.f32.mrb[0].mxu0
    %v4876 = vadd.f32 0.0, %v4875
    %v4877 = vpop.f32.mrb[0].mxu0
    %4878 = vmatprep.mubr.f32.mxu0 0.0
    %4879 = vmatmul.mubr.f32.gmra.mrb[0].mxu0 %v4541
    %v4880 = vpop.f32.mrb[0].mxu0
    %v4881 = vadd.f32 0.0, %v4880
    %v4882 = vpop.f32.mrb[0].mxu0
    %4883 = vmatprep.mubr.f32.mxu0 0.0
    %4884 = vmatmul.mubr.f32.gmra.mrb[0].mxu0 %v4544
    %v4885 = vpop.f32.mrb[0].mxu0
    %v4886 = vadd.f32 0.0, %v4885
    %v4887 = vpop.f32.mrb[0].mxu0
    %4888 = vmatprep.mubr.f32.mxu0 0.0
    %4889 = vmatmul.mubr.f32.gmra.mrb[0].mxu0 %v4547
    %v4890 = vpop.f32.mrb[0].mxu0
    %v4891 = vadd.f32 0.0, %v4890
    %v4892 = vpop.f32.mrb[0].mxu0
    %4893 = vmatprep.mubr.f32.mxu0 0.0
    %4894 = vmatmul.mubr.f32.gmra.mrb[0].mxu0 %v4550
    %v4895 = vpop.f32.mrb[0].mxu0
    %v4896 = vadd.f32 0.0, %v4895
    %v4897 = vpop.f32.mrb[0].mxu0
    %4898 = vmatprep.mubr.f32.mxu0 0.0
    %4899 = vmatmul.mubr.f32.gmra.mrb[0].mxu0 %v4553
    %v4900 = vpop.f32.mrb[0].mxu0
    %v4901 = vadd.f32 0.0, %v4900
    %v4902 = vpop.f32.mrb[0].mxu0
    %4903 = vmatprep.mubr.f32.mxu0 0.0
    %4904 = vmatmul.mubr.f32.gmra.mrb[0].mxu0 %v4556
    %v4905 = vpop.f32.mrb[0].mxu0
    %v4906 = vadd.f32 0.0, %v4905
    %v4907 = vpop.f32.mrb[0].mxu0
    %4908 = vmatprep.mubr.f32.mxu0 0.0
    %4909 = vmatmul.mubr.f32.gmra.mrb[0].mxu0 %v4559
    %v4910 = vpop.f32.mrb[0].mxu0
    %v4911 = vadd.f32 0.0, %v4910
    %v4912 = vpop.f32.mrb[0].mxu0
    %4913 = vmatprep.mubr.f32.mxu0 0.0
    %4914 = vmatmul.mubr.f32.gmra.mrb[0].mxu0 %v4562
    %v4915 = vpop.f32.mrb[0].mxu0
    %v4916 = vadd.f32 0.0, %v4915
    %v4917 = vpop.f32.mrb[0].mxu0
    %4918 = vmatprep.mubr.f32.mxu0 0.0
    %4919 = vmatmul.mubr.f32.gmra.mrb[0].mxu0 %v4565
    %v4920 = vpop.f32.mrb[0].mxu0
    %v4921 = vadd.f32 0.0, %v4920
    %v4922 = vpop.f32.mrb[0].mxu0
    %4923 = vmatprep.mubr.f32.mxu0 0.0
    %4924 = vmatmul.mubr.f32.gmra.mrb[0].mxu0 %v4568
    %v4925 = vpop.f32.mrb[0].mxu0
    %v4926 = vadd.f32 0.0, %v4925
    %v4927 = vpop.f32.mrb[0].mxu0
    %4928 = vmatprep.mubr.f32.mxu0 0.0
    %4929 = vmatmul.mubr.f32.gmra.mrb[0].mxu0 %v4571
    %v4930 = vpop.f32.mrb[0].mxu0
    %v4931 = vadd.f32 0.0, %v4930
    %v4932 = vpop.f32.mrb[0].mxu0
    %4933 = vmatprep.mubr.f32.mxu0 0.0
    %4934 = vmatmul.mubr.f32.gmra.mrb[0].mxu0 %v4574
    %v4935 = vpop.f32.mrb[0].mxu0
    %v4936 = vadd.f32 0.0, %v4935
    %v4937 = vpop.f32.mrb[0].mxu0
    %4938 = vmatprep.mubr.f32.mxu0 0.0
    %4939 = vmatmul.mubr.f32.gmra.mrb[0].mxu0 %v4577
    %v4940 = vpop.f32.mrb[0].mxu0
    %v4941 = vadd.f32 0.0, %v4940
    %v4942 = vpop.f32.mrb[0].mxu0
    %4943 = vmatprep.mubr.f32.mxu0 0.0
    %4944 = vmatmul.mubr.f32.gmra.mrb[0].mxu0 %v4580
    %v4945 = vpop.f32.mrb[0].mxu0
    %v4946 = vadd.f32 0.0, %v4945
    %v4947 = vpop.f32.mrb[0].mxu0
    %4948 = vmatprep.mubr.f32.mxu0 0.0
    %4949 = vmatmul.mubr.f32.gmra.mrb[0].mxu0 %v4583
    %v4950 = vpop.f32.mrb[0].mxu0
    %v4951 = vadd.f32 0.0, %v4950
    %v4952 = vpop.f32.mrb[0].mxu0
    %4953 = vmatprep.mubr.f32.mxu0 0.0
    %4954 = vmatmul.mubr.f32.gmra.mrb[0].mxu0 %v4586
    %v4955 = vpop.f32.mrb[0].mxu0
    %v4956 = vadd.f32 0.0, %v4955
    %v4957 = vpop.f32.mrb[0].mxu0
    %4958 = vmatprep.mubr.f32.mxu0 0.0
    %4959 = vmatmul.mubr.f32.gmra.mrb[0].mxu0 %v4589
    %v4960 = vpop.f32.mrb[0].mxu0
    %v4961 = vadd.f32 0.0, %v4960
    %v4962 = vpop.f32.mrb[0].mxu0
    %4963 = vmatprep.mubr.f32.mxu0 0.0
    %4964 = vmatmul.mubr.f32.gmra.mrb[0].mxu0 %v4592
    %v4965 = vpop.f32.mrb[0].mxu0
    %v4966 = vadd.f32 0.0, %v4965
    %v4967 = vpop.f32.mrb[0].mxu0
    %4968 = vmatprep.mubr.f32.mxu0 0.0
    %4969 = vmatmul.mubr.f32.gmra.mrb[0].mxu0 %v4595
    %v4970 = vpop.f32.mrb[0].mxu0
    %v4971 = vadd.f32 0.0, %v4970
    %v4972 = vpop.f32.mrb[0].mxu0
    %4973 = vmatprep.mubr.f32.mxu0 0.0
    %4974 = vmatmul.mubr.f32.gmra.mrb[0].mxu0 %v4598
    %v4975 = vpop.f32.mrb[0].mxu0
    %v4976 = vadd.f32 0.0, %v4975
    %v4977 = vpop.f32.mrb[0].mxu0
    %4978 = vmatprep.mubr.f32.mxu0 0.0
    %4979 = vmatmul.mubr.f32.gmra.mrb[0].mxu0 %v4601
    %v4980 = vpop.f32.mrb[0].mxu0
    %v4981 = vadd.f32 0.0, %v4980
    %v4982 = vpop.f32.mrb[0].mxu0
    %4983 = vmatprep.mubr.f32.mxu0 0.0
    %4984 = vmatmul.mubr.f32.gmra.mrb[0].mxu0 %v4604
    %v4985 = vpop.f32.mrb[0].mxu0
    %v4986 = vadd.f32 0.0, %v4985
    %v4987 = vpop.f32.mrb[0].mxu0
    %4988 = vmatprep.mubr.f32.mxu0 0.0
    %4989 = vmatmul.mubr.f32.gmra.mrb[0].mxu0 %v4607
    %v4990 = vpop.f32.mrb[0].mxu0
    %v4991 = vadd.f32 0.0, %v4990
    %v4992 = vpop.f32.mrb[0].mxu0
    %4993 = vdwg.mxu0
    %v4994 = vadd.f32 %v4286, %v4676
    %v4995 = vadd.f32 %v4287, %v4681
    %v4996 = vadd.f32 %v4288, %v4686
    %v4997 = vadd.f32 %v4289, %v4691
    %v4998 = vadd.f32 %v4290, %v4696
    %v4999 = vadd.f32 %v4291, %v4701
    %v5000 = vadd.f32 %v4292, %v4706
    %v5001 = vadd.f32 %v4293, %v4711
    %v5002 = vadd.f32 %v4294, %v4716
    %v5003 = vadd.f32 %v4295, %v4721
    %v5004 = vadd.f32 %v4296, %v4726
    %v5005 = vadd.f32 %v4297, %v4731
    %v5006 = vadd.f32 %v4298, %v4736
    %v5007 = vadd.f32 %v4299, %v4741
    %v5008 = vadd.f32 %v4300, %v4746
    %v5009 = vadd.f32 %v4301, %v4751
    %v5010 = vadd.f32 %v4302, %v4756
    %v5011 = vadd.f32 %v4303, %v4761
    %v5012 = vadd.f32 %v4304, %v4766
    %v5013 = vadd.f32 %v4305, %v4771
    %v5014 = vadd.f32 %v4306, %v4776
    %v5015 = vadd.f32 %v4307, %v4781
    %v5016 = vadd.f32 %v4308, %v4786
    %v5017 = vadd.f32 %v4309, %v4791
    %v5018 = vadd.f32 %v4310, %v4796
    %v5019 = vadd.f32 %v4311, %v4801
    %v5020 = vadd.f32 %v4312, %v4806
    %v5021 = vadd.f32 %v4313, %v4811
    %v5022 = vadd.f32 %v4314, %v4816
    %v5023 = vadd.f32 %v4315, %v4821
    %v5024 = vadd.f32 %v4316, %v4826
    %v5025 = vadd.f32 %v4317, %v4831
    %v5026 = vadd.f32 %v4318, %v4836
    %v5027 = vadd.f32 %v4319, %v4841
    %v5028 = vadd.f32 %v4320, %v4846
    %v5029 = vadd.f32 %v4321, %v4851
    %v5030 = vadd.f32 %v4322, %v4856
    %v5031 = vadd.f32 %v4323, %v4861
    %v5032 = vadd.f32 %v4324, %v4866
    %v5033 = vadd.f32 %v4325, %v4871
    %v5034 = vadd.f32 %v4326, %v4876
    %v5035 = vadd.f32 %v4327, %v4881
    %v5036 = vadd.f32 %v4328, %v4886
    %v5037 = vadd.f32 %v4329, %v4891
    %v5038 = vadd.f32 %v4330, %v4896
    %v5039 = vadd.f32 %v4331, %v4901
    %v5040 = vadd.f32 %v4332, %v4906
    %v5041 = vadd.f32 %v4333, %v4911
    %v5042 = vadd.f32 %v4334, %v4916
    %v5043 = vadd.f32 %v4335, %v4921
    %v5044 = vadd.f32 %v4336, %v4926
    %v5045 = vadd.f32 %v4337, %v4931
    %v5046 = vadd.f32 %v4338, %v4936
    %v5047 = vadd.f32 %v4339, %v4941
    %v5048 = vadd.f32 %v4340, %v4946
    %v5049 = vadd.f32 %v4341, %v4951
    %v5050 = vadd.f32 %v4342, %v4956
    %v5051 = vadd.f32 %v4343, %v4961
    %v5052 = vadd.f32 %v4344, %v4966
    %v5053 = vadd.f32 %v4345, %v4971
    %v5054 = vadd.f32 %v4346, %v4976
    %v5055 = vadd.f32 %v4347, %v4981
    %v5056 = vadd.f32 %v4348, %v4986
    %v5057 = vadd.f32 %v4349, %v4991
    %v5058 = vld [vmem:[%s1582 + $0x9] sm:$0xff]
    %v5059 = vld [vmem:[%s1582 + $0x11] sm:$0xff]
    %v5060 = vld [vmem:[%s1582 + $0x29] sm:$0xff]
    %v5061 = vld [vmem:[%s1582 + $0x31] sm:$0xff]
    %v5062 = vld [vmem:[%s1582 + $0x49] sm:$0xff]
    %v5063 = vld [vmem:[%s1582 + $0x51] sm:$0xff]
    %v5064 = vld [vmem:[%s1582 + $0x69] sm:$0xff]
    %v5065 = vld [vmem:[%s1582 + $0x71] sm:$0xff]
    %v5066 = vld [vmem:[%s1582 + $0x89] sm:$0xff]
    %v5067 = vld [vmem:[%s1582 + $0x91] sm:$0xff]
    %v5068 = vld [vmem:[%s1582 + $0xa9] sm:$0xff]
    %v5069 = vld [vmem:[%s1582 + $0xb1] sm:$0xff]
    %v5070 = vld [vmem:[%s1582 + $0xc9] sm:$0xff]
    %v5071 = vld [vmem:[%s1582 + $0xd1] sm:$0xff]
    %v5072 = vld [vmem:[%s1582 + $0xe9] sm:$0xff]
    %v5073 = vld [vmem:[%s1582 + $0xf1] sm:$0xff]
    %v5074 = vld [vmem:[%s1582 + $0x109] sm:$0xff]
    %v5075 = vld [vmem:[%s1582 + $0x111] sm:$0xff]
    %v5076 = vld [vmem:[%s1582 + $0x129] sm:$0xff]
    %v5077 = vld [vmem:[%s1582 + $0x131] sm:$0xff]
    %v5078 = vld [vmem:[%s1582 + $0x149] sm:$0xff]
    %v5079 = vld [vmem:[%s1582 + $0x151] sm:$0xff]
    %v5080 = vld [vmem:[%s1582 + $0x169] sm:$0xff]
    %v5081 = vld [vmem:[%s1582 + $0x171] sm:$0xff]
    %v5082 = vld [vmem:[%s1582 + $0x189] sm:$0xff]
    %v5083 = vld [vmem:[%s1582 + $0x191] sm:$0xff]
    %v5084 = vld [vmem:[%s1582 + $0x1a9] sm:$0xff]
    %v5085 = vld [vmem:[%s1582 + $0x1b1] sm:$0xff]
    %v5086 = vld [vmem:[%s1582 + $0x1c9] sm:$0xff]
    %v5087 = vld [vmem:[%s1582 + $0x1d1] sm:$0xff]
    %v5088 = vld [vmem:[%s1582 + $0x1e9] sm:$0xff]
    %v5089 = vld [vmem:[%s1582 + $0x1f1] sm:$0xff]
    %v5090 = vld [vmem:[%s1582 + $0x249] sm:$0xff]
    %v5091 = vld [vmem:[%s1582 + $0x251] sm:$0xff]
    %v5092 = vld [vmem:[%s1582 + $0x269] sm:$0xff]
    %v5093 = vld [vmem:[%s1582 + $0x271] sm:$0xff]
    %v5094 = vld [vmem:[%s1582 + $0x289] sm:$0xff]
    %v5095 = vld [vmem:[%s1582 + $0x291] sm:$0xff]
    %v5096 = vld [vmem:[%s1582 + $0x2a9] sm:$0xff]
    %v5097 = vld [vmem:[%s1582 + $0x2b1] sm:$0xff]
    %v5098 = vld [vmem:[%s1582 + $0x2c9] sm:$0xff]
    %v5099 = vld [vmem:[%s1582 + $0x2d1] sm:$0xff]
    %v5100 = vld [vmem:[%s1582 + $0x2e9] sm:$0xff]
    %v5101 = vld [vmem:[%s1582 + $0x2f1] sm:$0xff]
    %v5102 = vld [vmem:[%s1582 + $0x309] sm:$0xff]
    %v5103 = vld [vmem:[%s1582 + $0x311] sm:$0xff]
    %v5104 = vld [vmem:[%s1582 + $0x329] sm:$0xff]
    %v5105 = vld [vmem:[%s1582 + $0x331] sm:$0xff]
    %v5106 = vld [vmem:[%s1582 + $0x349] sm:$0xff]
    %v5107 = vld [vmem:[%s1582 + $0x351] sm:$0xff]
    %v5108 = vld [vmem:[%s1582 + $0x369] sm:$0xff]
    %v5109 = vld [vmem:[%s1582 + $0x371] sm:$0xff]
    %v5110 = vld [vmem:[%s1582 + $0x389] sm:$0xff]
    %v5111 = vld [vmem:[%s1582 + $0x391] sm:$0xff]
    %v5112 = vld [vmem:[%s1582 + $0x3a9] sm:$0xff]
    %v5113 = vld [vmem:[%s1582 + $0x3b1] sm:$0xff]
    %v5114 = vld [vmem:[%s1582 + $0x3c9] sm:$0xff]
    %v5115 = vld [vmem:[%s1582 + $0x3d1] sm:$0xff]
    %v5116 = vld [vmem:[%s1582 + $0x3e9] sm:$0xff]
    %v5117 = vld [vmem:[%s1582 + $0x3f1] sm:$0xff]
    %v5118 = vld [vmem:[%s1582 + $0x409] sm:$0xff]
    %v5119 = vld [vmem:[%s1582 + $0x411] sm:$0xff]
    %v5120 = vld [vmem:[%s1582 + $0x429] sm:$0xff]
    %v5121 = vld [vmem:[%s1582 + $0x431] sm:$0xff]
    %s5122 = scalar_lea.vmem [#allocation6], 80
    %v5123 = vld [vmem:[%s5122] sm:$0xff]
    %v5124 = vld [vmem:[%s5122 + $0x8] sm:$0xff]
    %v5126 = vsel %vm701, %v5058, 0
    %v5129 = vsel %vm701, %v5059, 0
    %v5132 = vsel %vm701, %v5060, 0
    %v5135 = vsel %vm701, %v5061, 0
    %v5138 = vsel %vm701, %v5062, 0
    %v5141 = vsel %vm701, %v5063, 0
    %v5144 = vsel %vm701, %v5064, 0
    %v5147 = vsel %vm701, %v5065, 0
    %v5150 = vsel %vm701, %v5066, 0
    %v5153 = vsel %vm701, %v5067, 0
    %v5156 = vsel %vm701, %v5068, 0
    %v5159 = vsel %vm701, %v5069, 0
    %v5162 = vsel %vm701, %v5070, 0
    %v5165 = vsel %vm701, %v5071, 0
    %v5168 = vsel %vm701, %v5072, 0
    %v5171 = vsel %vm701, %v5073, 0
    %v5174 = vsel %vm701, %v5074, 0
    %v5177 = vsel %vm701, %v5075, 0
    %v5180 = vsel %vm701, %v5076, 0
    %v5183 = vsel %vm701, %v5077, 0
    %v5186 = vsel %vm701, %v5078, 0
    %v5189 = vsel %vm701, %v5079, 0
    %v5192 = vsel %vm701, %v5080, 0
    %v5195 = vsel %vm701, %v5081, 0
    %v5198 = vsel %vm701, %v5082, 0
    %v5201 = vsel %vm701, %v5083, 0
    %v5204 = vsel %vm701, %v5084, 0
    %v5207 = vsel %vm701, %v5085, 0
    %v5210 = vsel %vm701, %v5086, 0
    %v5213 = vsel %vm701, %v5087, 0
    %v5216 = vsel %vm701, %v5088, 0
    %v5219 = vsel %vm701, %v5089, 0
    %v5222 = vsel %vm701, %v5090, 0
    %v5225 = vsel %vm701, %v5091, 0
    %v5228 = vsel %vm701, %v5092, 0
    %v5231 = vsel %vm701, %v5093, 0
    %v5234 = vsel %vm701, %v5094, 0
    %v5237 = vsel %vm701, %v5095, 0
    %v5240 = vsel %vm701, %v5096, 0
    %v5243 = vsel %vm701, %v5097, 0
    %v5246 = vsel %vm701, %v5098, 0
    %v5249 = vsel %vm701, %v5099, 0
    %v5252 = vsel %vm701, %v5100, 0
    %v5255 = vsel %vm701, %v5101, 0
    %v5258 = vsel %vm701, %v5102, 0
    %v5261 = vsel %vm701, %v5103, 0
    %v5264 = vsel %vm701, %v5104, 0
    %v5267 = vsel %vm701, %v5105, 0
    %v5270 = vsel %vm701, %v5106, 0
    %v5273 = vsel %vm701, %v5107, 0
    %v5276 = vsel %vm701, %v5108, 0
    %v5279 = vsel %vm701, %v5109, 0
    %v5282 = vsel %vm701, %v5110, 0
    %v5285 = vsel %vm701, %v5111, 0
    %v5288 = vsel %vm701, %v5112, 0
    %v5291 = vsel %vm701, %v5113, 0
    %v5294 = vsel %vm701, %v5114, 0
    %v5297 = vsel %vm701, %v5115, 0
    %v5300 = vsel %vm701, %v5116, 0
    %v5303 = vsel %vm701, %v5117, 0
    %v5306 = vsel %vm701, %v5118, 0
    %v5309 = vsel %vm701, %v5119, 0
    %v5312 = vsel %vm701, %v5120, 0
    %v5315 = vsel %vm701, %v5121, 0
    %5317 = vmatprep.subr.mxu0 0.0
    %5318 = vmatpush1.msra.mxu0 %v5123
    %5319 = vmatprep.subr.mxu0 0.0
    %5320 = vmatpush1.msra.mxu0 %v5124
    %5321 = vmatprep.subr.mxu0 0.0
    %5322 = vmatpush1.msra.mxu0 0.0
    %5323 = vmatprep.subr.mxu0 0.0
    %5324 = vmatpush1.msra.mxu0 0.0
    %5325 = vmatprep.subr.mxu0 0.0
    %5326 = vmatpush1.msra.mxu0 0.0
    %5327 = vmatprep.subr.mxu0 0.0
    %5328 = vmatpush1.msra.mxu0 0.0
    %5329 = vmatprep.subr.mxu0 0.0
    %5330 = vmatpush1.msra.mxu0 0.0
    %5331 = vmatprep.subr.mxu0 0.0
    %5332 = vmatpush1.msra.mxu0 0.0
    %5333 = vmatprep.subr.mxu0 0.0
    %5334 = vmatpush1.msra.mxu0 0.0
    %5335 = vmatprep.subr.mxu0 0.0
    %5336 = vmatpush1.msra.mxu0 0.0
    %5337 = vmatprep.subr.mxu0 0.0
    %5338 = vmatpush1.msra.mxu0 0.0
    %5339 = vmatprep.subr.mxu0 0.0
    %5340 = vmatpush1.msra.mxu0 0.0
    %5341 = vmatprep.subr.mxu0 0.0
    %5342 = vmatpush1.msra.mxu0 0.0
    %5343 = vmatprep.subr.mxu0 0.0
    %5344 = vmatpush1.msra.mxu0 0.0
    %5345 = vmatprep.subr.mxu0 0.0
    %5346 = vmatpush1.msra.mxu0 0.0
    %5347 = vmatprep.subr.mxu0 0.0
    %5348 = vmatpush1.msra.mxu0 0.0
    %5349 = vmatprep.subr.mxu0 0.0
    %5350 = vmatpush1.msra.mxu0 0.0
    %5351 = vmatprep.subr.mxu0 0.0
    %5352 = vmatpush1.msra.mxu0 0.0
    %5353 = vmatprep.subr.mxu0 0.0
    %5354 = vmatpush1.msra.mxu0 0.0
    %5355 = vmatprep.subr.mxu0 0.0
    %5356 = vmatpush1.msra.mxu0 0.0
    %5357 = vmatprep.subr.mxu0 0.0
    %5358 = vmatpush1.msra.mxu0 0.0
    %5359 = vmatprep.subr.mxu0 0.0
    %5360 = vmatpush1.msra.mxu0 0.0
    %5361 = vmatprep.subr.mxu0 0.0
    %5362 = vmatpush1.msra.mxu0 0.0
    %5363 = vmatprep.subr.mxu0 0.0
    %5364 = vmatpush1.msra.mxu0 0.0
    %5365 = vmatprep.subr.mxu0 0.0
    %5366 = vmatpush1.msra.mxu0 0.0
    %5367 = vmatprep.subr.mxu0 0.0
    %5368 = vmatpush1.msra.mxu0 0.0
    %5369 = vmatprep.subr.mxu0 0.0
    %5370 = vmatpush1.msra.mxu0 0.0
    %5371 = vmatprep.subr.mxu0 0.0
    %5372 = vmatpush1.msra.mxu0 0.0
    %5373 = vmatprep.subr.mxu0 0.0
    %5374 = vmatpush1.msra.mxu0 0.0
    %5375 = vmatprep.subr.mxu0 0.0
    %5376 = vmatpush1.msra.mxu0 0.0
    %5377 = vmatprep.subr.mxu0 0.0
    %5378 = vmatpush1.msra.mxu0 0.0
    %5379 = vmatprep.subr.mxu0 0.0
    %5380 = vmatpush1.msra.mxu0 0.0
    %5381 = vmatprep.mubr.f32.mxu0 0.0
    %5382 = vmatmul.mubr.f32.gmra.mrb[0].mxu0 %v5126
    %v5383 = vpop.f32.mrb[0].mxu0
    %v5384 = vadd.f32 0.0, %v5383
    %v5385 = vpop.f32.mrb[0].mxu0
    %5386 = vmatprep.mubr.f32.mxu0 0.0
    %5387 = vmatmul.mubr.f32.gmra.mrb[0].mxu0 %v5129
    %v5388 = vpop.f32.mrb[0].mxu0
    %v5389 = vadd.f32 0.0, %v5388
    %v5390 = vpop.f32.mrb[0].mxu0
    %5391 = vmatprep.mubr.f32.mxu0 0.0
    %5392 = vmatmul.mubr.f32.gmra.mrb[0].mxu0 %v5132
    %v5393 = vpop.f32.mrb[0].mxu0
    %v5394 = vadd.f32 0.0, %v5393
    %v5395 = vpop.f32.mrb[0].mxu0
    %5396 = vmatprep.mubr.f32.mxu0 0.0
    %5397 = vmatmul.mubr.f32.gmra.mrb[0].mxu0 %v5135
    %v5398 = vpop.f32.mrb[0].mxu0
    %v5399 = vadd.f32 0.0, %v5398
    %v5400 = vpop.f32.mrb[0].mxu0
    %5401 = vmatprep.mubr.f32.mxu0 0.0
    %5402 = vmatmul.mubr.f32.gmra.mrb[0].mxu0 %v5138
    %v5403 = vpop.f32.mrb[0].mxu0
    %v5404 = vadd.f32 0.0, %v5403
    %v5405 = vpop.f32.mrb[0].mxu0
    %5406 = vmatprep.mubr.f32.mxu0 0.0
    %5407 = vmatmul.mubr.f32.gmra.mrb[0].mxu0 %v5141
    %v5408 = vpop.f32.mrb[0].mxu0
    %v5409 = vadd.f32 0.0, %v5408
    %v5410 = vpop.f32.mrb[0].mxu0
    %5411 = vmatprep.mubr.f32.mxu0 0.0
    %5412 = vmatmul.mubr.f32.gmra.mrb[0].mxu0 %v5144
    %v5413 = vpop.f32.mrb[0].mxu0
    %v5414 = vadd.f32 0.0, %v5413
    %v5415 = vpop.f32.mrb[0].mxu0
    %5416 = vmatprep.mubr.f32.mxu0 0.0
    %5417 = vmatmul.mubr.f32.gmra.mrb[0].mxu0 %v5147
    %v5418 = vpop.f32.mrb[0].mxu0
    %v5419 = vadd.f32 0.0, %v5418
    %v5420 = vpop.f32.mrb[0].mxu0
    %5421 = vmatprep.mubr.f32.mxu0 0.0
    %5422 = vmatmul.mubr.f32.gmra.mrb[0].mxu0 %v5150
    %v5423 = vpop.f32.mrb[0].mxu0
    %v5424 = vadd.f32 0.0, %v5423
    %v5425 = vpop.f32.mrb[0].mxu0
    %5426 = vmatprep.mubr.f32.mxu0 0.0
    %5427 = vmatmul.mubr.f32.gmra.mrb[0].mxu0 %v5153
    %v5428 = vpop.f32.mrb[0].mxu0
    %v5429 = vadd.f32 0.0, %v5428
    %v5430 = vpop.f32.mrb[0].mxu0
    %5431 = vmatprep.mubr.f32.mxu0 0.0
    %5432 = vmatmul.mubr.f32.gmra.mrb[0].mxu0 %v5156
    %v5433 = vpop.f32.mrb[0].mxu0
    %v5434 = vadd.f32 0.0, %v5433
    %v5435 = vpop.f32.mrb[0].mxu0
    %5436 = vmatprep.mubr.f32.mxu0 0.0
    %5437 = vmatmul.mubr.f32.gmra.mrb[0].mxu0 %v5159
    %v5438 = vpop.f32.mrb[0].mxu0
    %v5439 = vadd.f32 0.0, %v5438
    %v5440 = vpop.f32.mrb[0].mxu0
    %5441 = vmatprep.mubr.f32.mxu0 0.0
    %5442 = vmatmul.mubr.f32.gmra.mrb[0].mxu0 %v5162
    %v5443 = vpop.f32.mrb[0].mxu0
    %v5444 = vadd.f32 0.0, %v5443
    %v5445 = vpop.f32.mrb[0].mxu0
    %5446 = vmatprep.mubr.f32.mxu0 0.0
    %5447 = vmatmul.mubr.f32.gmra.mrb[0].mxu0 %v5165
    %v5448 = vpop.f32.mrb[0].mxu0
    %v5449 = vadd.f32 0.0, %v5448
    %v5450 = vpop.f32.mrb[0].mxu0
    %5451 = vmatprep.mubr.f32.mxu0 0.0
    %5452 = vmatmul.mubr.f32.gmra.mrb[0].mxu0 %v5168
    %v5453 = vpop.f32.mrb[0].mxu0
    %v5454 = vadd.f32 0.0, %v5453
    %v5455 = vpop.f32.mrb[0].mxu0
    %5456 = vmatprep.mubr.f32.mxu0 0.0
    %5457 = vmatmul.mubr.f32.gmra.mrb[0].mxu0 %v5171
    %v5458 = vpop.f32.mrb[0].mxu0
    %v5459 = vadd.f32 0.0, %v5458
    %v5460 = vpop.f32.mrb[0].mxu0
    %5461 = vmatprep.mubr.f32.mxu0 0.0
    %5462 = vmatmul.mubr.f32.gmra.mrb[0].mxu0 %v5174
    %v5463 = vpop.f32.mrb[0].mxu0
    %v5464 = vadd.f32 0.0, %v5463
    %v5465 = vpop.f32.mrb[0].mxu0
    %5466 = vmatprep.mubr.f32.mxu0 0.0
    %5467 = vmatmul.mubr.f32.gmra.mrb[0].mxu0 %v5177
    %v5468 = vpop.f32.mrb[0].mxu0
    %v5469 = vadd.f32 0.0, %v5468
    %v5470 = vpop.f32.mrb[0].mxu0
    %5471 = vmatprep.mubr.f32.mxu0 0.0
    %5472 = vmatmul.mubr.f32.gmra.mrb[0].mxu0 %v5180
    %v5473 = vpop.f32.mrb[0].mxu0
    %v5474 = vadd.f32 0.0, %v5473
    %v5475 = vpop.f32.mrb[0].mxu0
    %5476 = vmatprep.mubr.f32.mxu0 0.0
    %5477 = vmatmul.mubr.f32.gmra.mrb[0].mxu0 %v5183
    %v5478 = vpop.f32.mrb[0].mxu0
    %v5479 = vadd.f32 0.0, %v5478
    %v5480 = vpop.f32.mrb[0].mxu0
    %5481 = vmatprep.mubr.f32.mxu0 0.0
    %5482 = vmatmul.mubr.f32.gmra.mrb[0].mxu0 %v5186
    %v5483 = vpop.f32.mrb[0].mxu0
    %v5484 = vadd.f32 0.0, %v5483
    %v5485 = vpop.f32.mrb[0].mxu0
    %5486 = vmatprep.mubr.f32.mxu0 0.0
    %5487 = vmatmul.mubr.f32.gmra.mrb[0].mxu0 %v5189
    %v5488 = vpop.f32.mrb[0].mxu0
    %v5489 = vadd.f32 0.0, %v5488
    %v5490 = vpop.f32.mrb[0].mxu0
    %5491 = vmatprep.mubr.f32.mxu0 0.0
    %5492 = vmatmul.mubr.f32.gmra.mrb[0].mxu0 %v5192
    %v5493 = vpop.f32.mrb[0].mxu0
    %v5494 = vadd.f32 0.0, %v5493
    %v5495 = vpop.f32.mrb[0].mxu0
    %5496 = vmatprep.mubr.f32.mxu0 0.0
    %5497 = vmatmul.mubr.f32.gmra.mrb[0].mxu0 %v5195
    %v5498 = vpop.f32.mrb[0].mxu0
    %v5499 = vadd.f32 0.0, %v5498
    %v5500 = vpop.f32.mrb[0].mxu0
    %5501 = vmatprep.mubr.f32.mxu0 0.0
    %5502 = vmatmul.mubr.f32.gmra.mrb[0].mxu0 %v5198
    %v5503 = vpop.f32.mrb[0].mxu0
    %v5504 = vadd.f32 0.0, %v5503
    %v5505 = vpop.f32.mrb[0].mxu0
    %5506 = vmatprep.mubr.f32.mxu0 0.0
    %5507 = vmatmul.mubr.f32.gmra.mrb[0].mxu0 %v5201
    %v5508 = vpop.f32.mrb[0].mxu0
    %v5509 = vadd.f32 0.0, %v5508
    %v5510 = vpop.f32.mrb[0].mxu0
    %5511 = vmatprep.mubr.f32.mxu0 0.0
    %5512 = vmatmul.mubr.f32.gmra.mrb[0].mxu0 %v5204
    %v5513 = vpop.f32.mrb[0].mxu0
    %v5514 = vadd.f32 0.0, %v5513
    %v5515 = vpop.f32.mrb[0].mxu0
    %5516 = vmatprep.mubr.f32.mxu0 0.0
    %5517 = vmatmul.mubr.f32.gmra.mrb[0].mxu0 %v5207
    %v5518 = vpop.f32.mrb[0].mxu0
    %v5519 = vadd.f32 0.0, %v5518
    %v5520 = vpop.f32.mrb[0].mxu0
    %5521 = vmatprep.mubr.f32.mxu0 0.0
    %5522 = vmatmul.mubr.f32.gmra.mrb[0].mxu0 %v5210
    %v5523 = vpop.f32.mrb[0].mxu0
    %v5524 = vadd.f32 0.0, %v5523
    %v5525 = vpop.f32.mrb[0].mxu0
    %5526 = vmatprep.mubr.f32.mxu0 0.0
    %5527 = vmatmul.mubr.f32.gmra.mrb[0].mxu0 %v5213
    %v5528 = vpop.f32.mrb[0].mxu0
    %v5529 = vadd.f32 0.0, %v5528
    %v5530 = vpop.f32.mrb[0].mxu0
    %5531 = vmatprep.mubr.f32.mxu0 0.0
    %5532 = vmatmul.mubr.f32.gmra.mrb[0].mxu0 %v5216
    %v5533 = vpop.f32.mrb[0].mxu0
    %v5534 = vadd.f32 0.0, %v5533
    %v5535 = vpop.f32.mrb[0].mxu0
    %5536 = vmatprep.mubr.f32.mxu0 0.0
    %5537 = vmatmul.mubr.f32.gmra.mrb[0].mxu0 %v5219
    %v5538 = vpop.f32.mrb[0].mxu0
    %v5539 = vadd.f32 0.0, %v5538
    %v5540 = vpop.f32.mrb[0].mxu0
    %5541 = vmatprep.mubr.f32.mxu0 0.0
    %5542 = vmatmul.mubr.f32.gmra.mrb[0].mxu0 %v5222
    %v5543 = vpop.f32.mrb[0].mxu0
    %v5544 = vadd.f32 0.0, %v5543
    %v5545 = vpop.f32.mrb[0].mxu0
    %5546 = vmatprep.mubr.f32.mxu0 0.0
    %5547 = vmatmul.mubr.f32.gmra.mrb[0].mxu0 %v5225
    %v5548 = vpop.f32.mrb[0].mxu0
    %v5549 = vadd.f32 0.0, %v5548
    %v5550 = vpop.f32.mrb[0].mxu0
    %5551 = vmatprep.mubr.f32.mxu0 0.0
    %5552 = vmatmul.mubr.f32.gmra.mrb[0].mxu0 %v5228
    %v5553 = vpop.f32.mrb[0].mxu0
    %v5554 = vadd.f32 0.0, %v5553
    %v5555 = vpop.f32.mrb[0].mxu0
    %5556 = vmatprep.mubr.f32.mxu0 0.0
    %5557 = vmatmul.mubr.f32.gmra.mrb[0].mxu0 %v5231
    %v5558 = vpop.f32.mrb[0].mxu0
    %v5559 = vadd.f32 0.0, %v5558
    %v5560 = vpop.f32.mrb[0].mxu0
    %5561 = vmatprep.mubr.f32.mxu0 0.0
    %5562 = vmatmul.mubr.f32.gmra.mrb[0].mxu0 %v5234
    %v5563 = vpop.f32.mrb[0].mxu0
    %v5564 = vadd.f32 0.0, %v5563
    %v5565 = vpop.f32.mrb[0].mxu0
    %5566 = vmatprep.mubr.f32.mxu0 0.0
    %5567 = vmatmul.mubr.f32.gmra.mrb[0].mxu0 %v5237
    %v5568 = vpop.f32.mrb[0].mxu0
    %v5569 = vadd.f32 0.0, %v5568
    %v5570 = vpop.f32.mrb[0].mxu0
    %5571 = vmatprep.mubr.f32.mxu0 0.0
    %5572 = vmatmul.mubr.f32.gmra.mrb[0].mxu0 %v5240
    %v5573 = vpop.f32.mrb[0].mxu0
    %v5574 = vadd.f32 0.0, %v5573
    %v5575 = vpop.f32.mrb[0].mxu0
    %5576 = vmatprep.mubr.f32.mxu0 0.0
    %5577 = vmatmul.mubr.f32.gmra.mrb[0].mxu0 %v5243
    %v5578 = vpop.f32.mrb[0].mxu0
    %v5579 = vadd.f32 0.0, %v5578
    %v5580 = vpop.f32.mrb[0].mxu0
    %5581 = vmatprep.mubr.f32.mxu0 0.0
    %5582 = vmatmul.mubr.f32.gmra.mrb[0].mxu0 %v5246
    %v5583 = vpop.f32.mrb[0].mxu0
    %v5584 = vadd.f32 0.0, %v5583
    %v5585 = vpop.f32.mrb[0].mxu0
    %5586 = vmatprep.mubr.f32.mxu0 0.0
    %5587 = vmatmul.mubr.f32.gmra.mrb[0].mxu0 %v5249
    %v5588 = vpop.f32.mrb[0].mxu0
    %v5589 = vadd.f32 0.0, %v5588
    %v5590 = vpop.f32.mrb[0].mxu0
    %5591 = vmatprep.mubr.f32.mxu0 0.0
    %5592 = vmatmul.mubr.f32.gmra.mrb[0].mxu0 %v5252
    %v5593 = vpop.f32.mrb[0].mxu0
    %v5594 = vadd.f32 0.0, %v5593
    %v5595 = vpop.f32.mrb[0].mxu0
    %5596 = vmatprep.mubr.f32.mxu0 0.0
    %5597 = vmatmul.mubr.f32.gmra.mrb[0].mxu0 %v5255
    %v5598 = vpop.f32.mrb[0].mxu0
    %v5599 = vadd.f32 0.0, %v5598
    %v5600 = vpop.f32.mrb[0].mxu0
    %5601 = vmatprep.mubr.f32.mxu0 0.0
    %5602 = vmatmul.mubr.f32.gmra.mrb[0].mxu0 %v5258
    %v5603 = vpop.f32.mrb[0].mxu0
    %v5604 = vadd.f32 0.0, %v5603
    %v5605 = vpop.f32.mrb[0].mxu0
    %5606 = vmatprep.mubr.f32.mxu0 0.0
    %5607 = vmatmul.mubr.f32.gmra.mrb[0].mxu0 %v5261
    %v5608 = vpop.f32.mrb[0].mxu0
    %v5609 = vadd.f32 0.0, %v5608
    %v5610 = vpop.f32.mrb[0].mxu0
    %5611 = vmatprep.mubr.f32.mxu0 0.0
    %5612 = vmatmul.mubr.f32.gmra.mrb[0].mxu0 %v5264
    %v5613 = vpop.f32.mrb[0].mxu0
    %v5614 = vadd.f32 0.0, %v5613
    %v5615 = vpop.f32.mrb[0].mxu0
    %5616 = vmatprep.mubr.f32.mxu0 0.0
    %5617 = vmatmul.mubr.f32.gmra.mrb[0].mxu0 %v5267
    %v5618 = vpop.f32.mrb[0].mxu0
    %v5619 = vadd.f32 0.0, %v5618
    %v5620 = vpop.f32.mrb[0].mxu0
    %5621 = vmatprep.mubr.f32.mxu0 0.0
    %5622 = vmatmul.mubr.f32.gmra.mrb[0].mxu0 %v5270
    %v5623 = vpop.f32.mrb[0].mxu0
    %v5624 = vadd.f32 0.0, %v5623
    %v5625 = vpop.f32.mrb[0].mxu0
    %5626 = vmatprep.mubr.f32.mxu0 0.0
    %5627 = vmatmul.mubr.f32.gmra.mrb[0].mxu0 %v5273
    %v5628 = vpop.f32.mrb[0].mxu0
    %v5629 = vadd.f32 0.0, %v5628
    %v5630 = vpop.f32.mrb[0].mxu0
    %5631 = vmatprep.mubr.f32.mxu0 0.0
    %5632 = vmatmul.mubr.f32.gmra.mrb[0].mxu0 %v5276
    %v5633 = vpop.f32.mrb[0].mxu0
    %v5634 = vadd.f32 0.0, %v5633
    %v5635 = vpop.f32.mrb[0].mxu0
    %5636 = vmatprep.mubr.f32.mxu0 0.0
    %5637 = vmatmul.mubr.f32.gmra.mrb[0].mxu0 %v5279
    %v5638 = vpop.f32.mrb[0].mxu0
    %v5639 = vadd.f32 0.0, %v5638
    %v5640 = vpop.f32.mrb[0].mxu0
    %5641 = vmatprep.mubr.f32.mxu0 0.0
    %5642 = vmatmul.mubr.f32.gmra.mrb[0].mxu0 %v5282
    %v5643 = vpop.f32.mrb[0].mxu0
    %v5644 = vadd.f32 0.0, %v5643
    %v5645 = vpop.f32.mrb[0].mxu0
    %5646 = vmatprep.mubr.f32.mxu0 0.0
    %5647 = vmatmul.mubr.f32.gmra.mrb[0].mxu0 %v5285
    %v5648 = vpop.f32.mrb[0].mxu0
    %v5649 = vadd.f32 0.0, %v5648
    %v5650 = vpop.f32.mrb[0].mxu0
    %5651 = vmatprep.mubr.f32.mxu0 0.0
    %5652 = vmatmul.mubr.f32.gmra.mrb[0].mxu0 %v5288
    %v5653 = vpop.f32.mrb[0].mxu0
    %v5654 = vadd.f32 0.0, %v5653
    %v5655 = vpop.f32.mrb[0].mxu0
    %5656 = vmatprep.mubr.f32.mxu0 0.0
    %5657 = vmatmul.mubr.f32.gmra.mrb[0].mxu0 %v5291
    %v5658 = vpop.f32.mrb[0].mxu0
    %v5659 = vadd.f32 0.0, %v5658
    %v5660 = vpop.f32.mrb[0].mxu0
    %5661 = vmatprep.mubr.f32.mxu0 0.0
    %5662 = vmatmul.mubr.f32.gmra.mrb[0].mxu0 %v5294
    %v5663 = vpop.f32.mrb[0].mxu0
    %v5664 = vadd.f32 0.0, %v5663
    %v5665 = vpop.f32.mrb[0].mxu0
    %5666 = vmatprep.mubr.f32.mxu0 0.0
    %5667 = vmatmul.mubr.f32.gmra.mrb[0].mxu0 %v5297
    %v5668 = vpop.f32.mrb[0].mxu0
    %v5669 = vadd.f32 0.0, %v5668
    %v5670 = vpop.f32.mrb[0].mxu0
    %5671 = vmatprep.mubr.f32.mxu0 0.0
    %5672 = vmatmul.mubr.f32.gmra.mrb[0].mxu0 %v5300
    %v5673 = vpop.f32.mrb[0].mxu0
    %v5674 = vadd.f32 0.0, %v5673
    %v5675 = vpop.f32.mrb[0].mxu0
    %5676 = vmatprep.mubr.f32.mxu0 0.0
    %5677 = vmatmul.mubr.f32.gmra.mrb[0].mxu0 %v5303
    %v5678 = vpop.f32.mrb[0].mxu0
    %v5679 = vadd.f32 0.0, %v5678
    %v5680 = vpop.f32.mrb[0].mxu0
    %5681 = vmatprep.mubr.f32.mxu0 0.0
    %5682 = vmatmul.mubr.f32.gmra.mrb[0].mxu0 %v5306
    %v5683 = vpop.f32.mrb[0].mxu0
    %v5684 = vadd.f32 0.0, %v5683
    %v5685 = vpop.f32.mrb[0].mxu0
    %5686 = vmatprep.mubr.f32.mxu0 0.0
    %5687 = vmatmul.mubr.f32.gmra.mrb[0].mxu0 %v5309
    %v5688 = vpop.f32.mrb[0].mxu0
    %v5689 = vadd.f32 0.0, %v5688
    %v5690 = vpop.f32.mrb[0].mxu0
    %5691 = vmatprep.mubr.f32.mxu0 0.0
    %5692 = vmatmul.mubr.f32.gmra.mrb[0].mxu0 %v5312
    %v5693 = vpop.f32.mrb[0].mxu0
    %v5694 = vadd.f32 0.0, %v5693
    %v5695 = vpop.f32.mrb[0].mxu0
    %5696 = vmatprep.mubr.f32.mxu0 0.0
    %5697 = vmatmul.mubr.f32.gmra.mrb[0].mxu0 %v5315
    %v5698 = vpop.f32.mrb[0].mxu0
    %v5699 = vadd.f32 0.0, %v5698
    %v5700 = vpop.f32.mrb[0].mxu0
    %5701 = vdwg.mxu0
    %v5702 = vadd.f32 %v4994, %v5384
    %v5703 = vadd.f32 %v4995, %v5389
    %v5704 = vadd.f32 %v4996, %v5394
    %v5705 = vadd.f32 %v4997, %v5399
    %v5706 = vadd.f32 %v4998, %v5404
    %v5707 = vadd.f32 %v4999, %v5409
    %v5708 = vadd.f32 %v5000, %v5414
    %v5709 = vadd.f32 %v5001, %v5419
    %v5710 = vadd.f32 %v5002, %v5424
    %v5711 = vadd.f32 %v5003, %v5429
    %v5712 = vadd.f32 %v5004, %v5434
    %v5713 = vadd.f32 %v5005, %v5439
    %v5714 = vadd.f32 %v5006, %v5444
    %v5715 = vadd.f32 %v5007, %v5449
    %v5716 = vadd.f32 %v5008, %v5454
    %v5717 = vadd.f32 %v5009, %v5459
    %v5718 = vadd.f32 %v5010, %v5464
    %v5719 = vadd.f32 %v5011, %v5469
    %v5720 = vadd.f32 %v5012, %v5474
    %v5721 = vadd.f32 %v5013, %v5479
    %v5722 = vadd.f32 %v5014, %v5484
    %v5723 = vadd.f32 %v5015, %v5489
    %v5724 = vadd.f32 %v5016, %v5494
    %v5725 = vadd.f32 %v5017, %v5499
    %v5726 = vadd.f32 %v5018, %v5504
    %v5727 = vadd.f32 %v5019, %v5509
    %v5728 = vadd.f32 %v5020, %v5514
    %v5729 = vadd.f32 %v5021, %v5519
    %v5730 = vadd.f32 %v5022, %v5524
    %v5731 = vadd.f32 %v5023, %v5529
    %v5732 = vadd.f32 %v5024, %v5534
    %v5733 = vadd.f32 %v5025, %v5539
    %v5734 = vadd.f32 %v5026, %v5544
    %v5735 = vadd.f32 %v5027, %v5549
    %v5736 = vadd.f32 %v5028, %v5554
    %v5737 = vadd.f32 %v5029, %v5559
    %v5738 = vadd.f32 %v5030, %v5564
    %v5739 = vadd.f32 %v5031, %v5569
    %v5740 = vadd.f32 %v5032, %v5574
    %v5741 = vadd.f32 %v5033, %v5579
    %v5742 = vadd.f32 %v5034, %v5584
    %v5743 = vadd.f32 %v5035, %v5589
    %v5744 = vadd.f32 %v5036, %v5594
    %v5745 = vadd.f32 %v5037, %v5599
    %v5746 = vadd.f32 %v5038, %v5604
    %v5747 = vadd.f32 %v5039, %v5609
    %v5748 = vadd.f32 %v5040, %v5614
    %v5749 = vadd.f32 %v5041, %v5619
    %v5750 = vadd.f32 %v5042, %v5624
    %v5751 = vadd.f32 %v5043, %v5629
    %v5752 = vadd.f32 %v5044, %v5634
    %v5753 = vadd.f32 %v5045, %v5639
    %v5754 = vadd.f32 %v5046, %v5644
    %v5755 = vadd.f32 %v5047, %v5649
    %v5756 = vadd.f32 %v5048, %v5654
    %v5757 = vadd.f32 %v5049, %v5659
    %v5758 = vadd.f32 %v5050, %v5664
    %v5759 = vadd.f32 %v5051, %v5669
    %v5760 = vadd.f32 %v5052, %v5674
    %v5761 = vadd.f32 %v5053, %v5679
    %v5762 = vadd.f32 %v5054, %v5684
    %v5763 = vadd.f32 %v5055, %v5689
    %v5764 = vadd.f32 %v5056, %v5694
    %v5765 = vadd.f32 %v5057, %v5699
    %s5766 = scalar_lea.vmem [#allocation2], 64
    %v5767 = vld [vmem:[%s5766 + $0x7] sm:$0xff]
    %v5768 = vld [vmem:[%s5766 + $0xf] sm:$0xff]
    %v5769 = vld [vmem:[%s5766 + $0x27] sm:$0xff]
    %v5770 = vld [vmem:[%s5766 + $0x2f] sm:$0xff]
    %v5771 = vld [vmem:[%s5766 + $0x47] sm:$0xff]
    %v5772 = vld [vmem:[%s5766 + $0x4f] sm:$0xff]
    %v5773 = vld [vmem:[%s5766 + $0x67] sm:$0xff]
    %v5774 = vld [vmem:[%s5766 + $0x6f] sm:$0xff]
    %v5775 = vld [vmem:[%s5766 + $0x87] sm:$0xff]
    %v5776 = vld [vmem:[%s5766 + $0x8f] sm:$0xff]
    %v5777 = vld [vmem:[%s5766 + $0xa7] sm:$0xff]
    %v5778 = vld [vmem:[%s5766 + $0xaf] sm:$0xff]
    %v5779 = vld [vmem:[%s5766 + $0xc7] sm:$0xff]
    %v5780 = vld [vmem:[%s5766 + $0xcf] sm:$0xff]
    %v5781 = vld [vmem:[%s5766 + $0xe7] sm:$0xff]
    %v5782 = vld [vmem:[%s5766 + $0xef] sm:$0xff]
    %v5783 = vld [vmem:[%s5766 + $0x107] sm:$0xff]
    %v5784 = vld [vmem:[%s5766 + $0x10f] sm:$0xff]
    %v5785 = vld [vmem:[%s5766 + $0x127] sm:$0xff]
    %v5786 = vld [vmem:[%s5766 + $0x12f] sm:$0xff]
    %v5787 = vld [vmem:[%s5766 + $0x147] sm:$0xff]
    %v5788 = vld [vmem:[%s5766 + $0x14f] sm:$0xff]
    %v5789 = vld [vmem:[%s5766 + $0x167] sm:$0xff]
    %v5790 = vld [vmem:[%s5766 + $0x16f] sm:$0xff]
    %v5791 = vld [vmem:[%s5766 + $0x187] sm:$0xff]
    %v5792 = vld [vmem:[%s5766 + $0x18f] sm:$0xff]
    %v5793 = vld [vmem:[%s5766 + $0x1a7] sm:$0xff]
    %v5794 = vld [vmem:[%s5766 + $0x1af] sm:$0xff]
    %v5795 = vld [vmem:[%s5766 + $0x1c7] sm:$0xff]
    %v5796 = vld [vmem:[%s5766 + $0x1cf] sm:$0xff]
    %v5797 = vld [vmem:[%s5766 + $0x1e7] sm:$0xff]
    %v5798 = vld [vmem:[%s5766 + $0x1ef] sm:$0xff]
    %v5799 = vld [vmem:[%s5766 + $0x247] sm:$0xff]
    %v5800 = vld [vmem:[%s5766 + $0x24f] sm:$0xff]
    %v5801 = vld [vmem:[%s5766 + $0x267] sm:$0xff]
    %v5802 = vld [vmem:[%s5766 + $0x26f] sm:$0xff]
    %v5803 = vld [vmem:[%s5766 + $0x287] sm:$0xff]
    %v5804 = vld [vmem:[%s5766 + $0x28f] sm:$0xff]
    %v5805 = vld [vmem:[%s5766 + $0x2a7] sm:$0xff]
    %v5806 = vld [vmem:[%s5766 + $0x2af] sm:$0xff]
    %v5807 = vld [vmem:[%s5766 + $0x2c7] sm:$0xff]
    %v5808 = vld [vmem:[%s5766 + $0x2cf] sm:$0xff]
    %v5809 = vld [vmem:[%s5766 + $0x2e7] sm:$0xff]
    %v5810 = vld [vmem:[%s5766 + $0x2ef] sm:$0xff]
    %v5811 = vld [vmem:[%s5766 + $0x307] sm:$0xff]
    %v5812 = vld [vmem:[%s5766 + $0x30f] sm:$0xff]
    %v5813 = vld [vmem:[%s5766 + $0x327] sm:$0xff]
    %v5814 = vld [vmem:[%s5766 + $0x32f] sm:$0xff]
    %v5815 = vld [vmem:[%s5766 + $0x347] sm:$0xff]
    %v5816 = vld [vmem:[%s5766 + $0x34f] sm:$0xff]
    %v5817 = vld [vmem:[%s5766 + $0x367] sm:$0xff]
    %v5818 = vld [vmem:[%s5766 + $0x36f] sm:$0xff]
    %v5819 = vld [vmem:[%s5766 + $0x387] sm:$0xff]
    %v5820 = vld [vmem:[%s5766 + $0x38f] sm:$0xff]
    %v5821 = vld [vmem:[%s5766 + $0x3a7] sm:$0xff]
    %v5822 = vld [vmem:[%s5766 + $0x3af] sm:$0xff]
    %v5823 = vld [vmem:[%s5766 + $0x3c7] sm:$0xff]
    %v5824 = vld [vmem:[%s5766 + $0x3cf] sm:$0xff]
    %v5825 = vld [vmem:[%s5766 + $0x3e7] sm:$0xff]
    %v5826 = vld [vmem:[%s5766 + $0x3ef] sm:$0xff]
    %v5827 = vld [vmem:[%s5766 + $0x407] sm:$0xff]
    %v5828 = vld [vmem:[%s5766 + $0x40f] sm:$0xff]
    %v5829 = vld [vmem:[%s5766 + $0x427] sm:$0xff]
    %v5830 = vld [vmem:[%s5766 + $0x42f] sm:$0xff]
    %s5831 = scalar_lea.vmem [#allocation6], 96
    %v5832 = vld [vmem:[%s5831] sm:$0xff]
    %v5833 = vld [vmem:[%s5831 + $0x8] sm:$0xff]
    %v5835 = vsel %vm701, %v5767, 0
    %v5838 = vsel %vm701, %v5768, 0
    %v5841 = vsel %vm701, %v5769, 0
    %v5844 = vsel %vm701, %v5770, 0
    %v5847 = vsel %vm701, %v5771, 0
    %v5850 = vsel %vm701, %v5772, 0
    %v5853 = vsel %vm701, %v5773, 0
    %v5856 = vsel %vm701, %v5774, 0
    %v5859 = vsel %vm701, %v5775, 0
    %v5862 = vsel %vm701, %v5776, 0
    %v5865 = vsel %vm701, %v5777, 0
    %v5868 = vsel %vm701, %v5778, 0
    %v5871 = vsel %vm701, %v5779, 0
    %v5874 = vsel %vm701, %v5780, 0
    %v5877 = vsel %vm701, %v5781, 0
    %v5880 = vsel %vm701, %v5782, 0
    %v5883 = vsel %vm701, %v5783, 0
    %v5886 = vsel %vm701, %v5784, 0
    %v5889 = vsel %vm701, %v5785, 0
    %v5892 = vsel %vm701, %v5786, 0
    %v5895 = vsel %vm701, %v5787, 0
    %v5898 = vsel %vm701, %v5788, 0
    %v5901 = vsel %vm701, %v5789, 0
    %v5904 = vsel %vm701, %v5790, 0
    %v5907 = vsel %vm701, %v5791, 0
    %v5910 = vsel %vm701, %v5792, 0
    %v5913 = vsel %vm701, %v5793, 0
    %v5916 = vsel %vm701, %v5794, 0
    %v5919 = vsel %vm701, %v5795, 0
    %v5922 = vsel %vm701, %v5796, 0
    %v5925 = vsel %vm701, %v5797, 0
    %v5928 = vsel %vm701, %v5798, 0
    %v5931 = vsel %vm701, %v5799, 0
    %v5934 = vsel %vm701, %v5800, 0
    %v5937 = vsel %vm701, %v5801, 0
    %v5940 = vsel %vm701, %v5802, 0
    %v5943 = vsel %vm701, %v5803, 0
    %v5946 = vsel %vm701, %v5804, 0
    %v5949 = vsel %vm701, %v5805, 0
    %v5952 = vsel %vm701, %v5806, 0
    %v5955 = vsel %vm701, %v5807, 0
    %v5958 = vsel %vm701, %v5808, 0
    %v5961 = vsel %vm701, %v5809, 0
    %v5964 = vsel %vm701, %v5810, 0
    %v5967 = vsel %vm701, %v5811, 0
    %v5970 = vsel %vm701, %v5812, 0
    %v5973 = vsel %vm701, %v5813, 0
    %v5976 = vsel %vm701, %v5814, 0
    %v5979 = vsel %vm701, %v5815, 0
    %v5982 = vsel %vm701, %v5816, 0
    %v5985 = vsel %vm701, %v5817, 0
    %v5988 = vsel %vm701, %v5818, 0
    %v5991 = vsel %vm701, %v5819, 0
    %v5994 = vsel %vm701, %v5820, 0
    %v5997 = vsel %vm701, %v5821, 0
    %v6000 = vsel %vm701, %v5822, 0
    %v6003 = vsel %vm701, %v5823, 0
    %v6006 = vsel %vm701, %v5824, 0
    %v6009 = vsel %vm701, %v5825, 0
    %v6012 = vsel %vm701, %v5826, 0
    %v6015 = vsel %vm701, %v5827, 0
    %v6018 = vsel %vm701, %v5828, 0
    %v6021 = vsel %vm701, %v5829, 0
    %v6024 = vsel %vm701, %v5830, 0
    %6026 = vmatprep.subr.mxu0 0.0
    %6027 = vmatpush1.msra.mxu0 %v5832
    %6028 = vmatprep.subr.mxu0 0.0
    %6029 = vmatpush1.msra.mxu0 %v5833
    %6030 = vmatprep.subr.mxu0 0.0
    %6031 = vmatpush1.msra.mxu0 0.0
    %6032 = vmatprep.subr.mxu0 0.0
    %6033 = vmatpush1.msra.mxu0 0.0
    %6034 = vmatprep.subr.mxu0 0.0
    %6035 = vmatpush1.msra.mxu0 0.0
    %6036 = vmatprep.subr.mxu0 0.0
    %6037 = vmatpush1.msra.mxu0 0.0
    %6038 = vmatprep.subr.mxu0 0.0
    %6039 = vmatpush1.msra.mxu0 0.0
    %6040 = vmatprep.subr.mxu0 0.0
    %6041 = vmatpush1.msra.mxu0 0.0
    %6042 = vmatprep.subr.mxu0 0.0
    %6043 = vmatpush1.msra.mxu0 0.0
    %6044 = vmatprep.subr.mxu0 0.0
    %6045 = vmatpush1.msra.mxu0 0.0
    %6046 = vmatprep.subr.mxu0 0.0
    %6047 = vmatpush1.msra.mxu0 0.0
    %6048 = vmatprep.subr.mxu0 0.0
    %6049 = vmatpush1.msra.mxu0 0.0
    %6050 = vmatprep.subr.mxu0 0.0
    %6051 = vmatpush1.msra.mxu0 0.0
    %6052 = vmatprep.subr.mxu0 0.0
    %6053 = vmatpush1.msra.mxu0 0.0
    %6054 = vmatprep.subr.mxu0 0.0
    %6055 = vmatpush1.msra.mxu0 0.0
    %6056 = vmatprep.subr.mxu0 0.0
    %6057 = vmatpush1.msra.mxu0 0.0
    %6058 = vmatprep.subr.mxu0 0.0
    %6059 = vmatpush1.msra.mxu0 0.0
    %6060 = vmatprep.subr.mxu0 0.0
    %6061 = vmatpush1.msra.mxu0 0.0
    %6062 = vmatprep.subr.mxu0 0.0
    %6063 = vmatpush1.msra.mxu0 0.0
    %6064 = vmatprep.subr.mxu0 0.0
    %6065 = vmatpush1.msra.mxu0 0.0
    %6066 = vmatprep.subr.mxu0 0.0
    %6067 = vmatpush1.msra.mxu0 0.0
    %6068 = vmatprep.subr.mxu0 0.0
    %6069 = vmatpush1.msra.mxu0 0.0
    %6070 = vmatprep.subr.mxu0 0.0
    %6071 = vmatpush1.msra.mxu0 0.0
    %6072 = vmatprep.subr.mxu0 0.0
    %6073 = vmatpush1.msra.mxu0 0.0
    %6074 = vmatprep.subr.mxu0 0.0
    %6075 = vmatpush1.msra.mxu0 0.0
    %6076 = vmatprep.subr.mxu0 0.0
    %6077 = vmatpush1.msra.mxu0 0.0
    %6078 = vmatprep.subr.mxu0 0.0
    %6079 = vmatpush1.msra.mxu0 0.0
    %6080 = vmatprep.subr.mxu0 0.0
    %6081 = vmatpush1.msra.mxu0 0.0
    %6082 = vmatprep.subr.mxu0 0.0
    %6083 = vmatpush1.msra.mxu0 0.0
    %6084 = vmatprep.subr.mxu0 0.0
    %6085 = vmatpush1.msra.mxu0 0.0
    %6086 = vmatprep.subr.mxu0 0.0
    %6087 = vmatpush1.msra.mxu0 0.0
    %6088 = vmatprep.subr.mxu0 0.0
    %6089 = vmatpush1.msra.mxu0 0.0
    %6090 = vmatprep.mubr.f32.mxu0 0.0
    %6091 = vmatmul.mubr.f32.gmra.mrb[0].mxu0 %v5835
    %v6092 = vpop.f32.mrb[0].mxu0
    %v6093 = vadd.f32 0.0, %v6092
    %v6094 = vpop.f32.mrb[0].mxu0
    %6095 = vmatprep.mubr.f32.mxu0 0.0
    %6096 = vmatmul.mubr.f32.gmra.mrb[0].mxu0 %v5838
    %v6097 = vpop.f32.mrb[0].mxu0
    %v6098 = vadd.f32 0.0, %v6097
    %v6099 = vpop.f32.mrb[0].mxu0
    %6100 = vmatprep.mubr.f32.mxu0 0.0
    %6101 = vmatmul.mubr.f32.gmra.mrb[0].mxu0 %v5841
    %v6102 = vpop.f32.mrb[0].mxu0
    %v6103 = vadd.f32 0.0, %v6102
    %v6104 = vpop.f32.mrb[0].mxu0
    %6105 = vmatprep.mubr.f32.mxu0 0.0
    %6106 = vmatmul.mubr.f32.gmra.mrb[0].mxu0 %v5844
    %v6107 = vpop.f32.mrb[0].mxu0
    %v6108 = vadd.f32 0.0, %v6107
    %v6109 = vpop.f32.mrb[0].mxu0
    %6110 = vmatprep.mubr.f32.mxu0 0.0
    %6111 = vmatmul.mubr.f32.gmra.mrb[0].mxu0 %v5847
    %v6112 = vpop.f32.mrb[0].mxu0
    %v6113 = vadd.f32 0.0, %v6112
    %v6114 = vpop.f32.mrb[0].mxu0
    %6115 = vmatprep.mubr.f32.mxu0 0.0
    %6116 = vmatmul.mubr.f32.gmra.mrb[0].mxu0 %v5850
    %v6117 = vpop.f32.mrb[0].mxu0
    %v6118 = vadd.f32 0.0, %v6117
    %v6119 = vpop.f32.mrb[0].mxu0
    %6120 = vmatprep.mubr.f32.mxu0 0.0
    %6121 = vmatmul.mubr.f32.gmra.mrb[0].mxu0 %v5853
    %v6122 = vpop.f32.mrb[0].mxu0
    %v6123 = vadd.f32 0.0, %v6122
    %v6124 = vpop.f32.mrb[0].mxu0
    %6125 = vmatprep.mubr.f32.mxu0 0.0
    %6126 = vmatmul.mubr.f32.gmra.mrb[0].mxu0 %v5856
    %v6127 = vpop.f32.mrb[0].mxu0
    %v6128 = vadd.f32 0.0, %v6127
    %v6129 = vpop.f32.mrb[0].mxu0
    %6130 = vmatprep.mubr.f32.mxu0 0.0
    %6131 = vmatmul.mubr.f32.gmra.mrb[0].mxu0 %v5859
    %v6132 = vpop.f32.mrb[0].mxu0
    %v6133 = vadd.f32 0.0, %v6132
    %v6134 = vpop.f32.mrb[0].mxu0
    %6135 = vmatprep.mubr.f32.mxu0 0.0
    %6136 = vmatmul.mubr.f32.gmra.mrb[0].mxu0 %v5862
    %v6137 = vpop.f32.mrb[0].mxu0
    %v6138 = vadd.f32 0.0, %v6137
    %v6139 = vpop.f32.mrb[0].mxu0
    %6140 = vmatprep.mubr.f32.mxu0 0.0
    %6141 = vmatmul.mubr.f32.gmra.mrb[0].mxu0 %v5865
    %v6142 = vpop.f32.mrb[0].mxu0
    %v6143 = vadd.f32 0.0, %v6142
    %v6144 = vpop.f32.mrb[0].mxu0
    %6145 = vmatprep.mubr.f32.mxu0 0.0
    %6146 = vmatmul.mubr.f32.gmra.mrb[0].mxu0 %v5868
    %v6147 = vpop.f32.mrb[0].mxu0
    %v6148 = vadd.f32 0.0, %v6147
    %v6149 = vpop.f32.mrb[0].mxu0
    %6150 = vmatprep.mubr.f32.mxu0 0.0
    %6151 = vmatmul.mubr.f32.gmra.mrb[0].mxu0 %v5871
    %v6152 = vpop.f32.mrb[0].mxu0
    %v6153 = vadd.f32 0.0, %v6152
    %v6154 = vpop.f32.mrb[0].mxu0
    %6155 = vmatprep.mubr.f32.mxu0 0.0
    %6156 = vmatmul.mubr.f32.gmra.mrb[0].mxu0 %v5874
    %v6157 = vpop.f32.mrb[0].mxu0
    %v6158 = vadd.f32 0.0, %v6157
    %v6159 = vpop.f32.mrb[0].mxu0
    %6160 = vmatprep.mubr.f32.mxu0 0.0
    %6161 = vmatmul.mubr.f32.gmra.mrb[0].mxu0 %v5877
    %v6162 = vpop.f32.mrb[0].mxu0
    %v6163 = vadd.f32 0.0, %v6162
    %v6164 = vpop.f32.mrb[0].mxu0
    %6165 = vmatprep.mubr.f32.mxu0 0.0
    %6166 = vmatmul.mubr.f32.gmra.mrb[0].mxu0 %v5880
    %v6167 = vpop.f32.mrb[0].mxu0
    %v6168 = vadd.f32 0.0, %v6167
    %v6169 = vpop.f32.mrb[0].mxu0
    %6170 = vmatprep.mubr.f32.mxu0 0.0
    %6171 = vmatmul.mubr.f32.gmra.mrb[0].mxu0 %v5883
    %v6172 = vpop.f32.mrb[0].mxu0
    %v6173 = vadd.f32 0.0, %v6172
    %v6174 = vpop.f32.mrb[0].mxu0
    %6175 = vmatprep.mubr.f32.mxu0 0.0
    %6176 = vmatmul.mubr.f32.gmra.mrb[0].mxu0 %v5886
    %v6177 = vpop.f32.mrb[0].mxu0
    %v6178 = vadd.f32 0.0, %v6177
    %v6179 = vpop.f32.mrb[0].mxu0
    %6180 = vmatprep.mubr.f32.mxu0 0.0
    %6181 = vmatmul.mubr.f32.gmra.mrb[0].mxu0 %v5889
    %v6182 = vpop.f32.mrb[0].mxu0
    %v6183 = vadd.f32 0.0, %v6182
    %v6184 = vpop.f32.mrb[0].mxu0
    %6185 = vmatprep.mubr.f32.mxu0 0.0
    %6186 = vmatmul.mubr.f32.gmra.mrb[0].mxu0 %v5892
    %v6187 = vpop.f32.mrb[0].mxu0
    %v6188 = vadd.f32 0.0, %v6187
    %v6189 = vpop.f32.mrb[0].mxu0
    %6190 = vmatprep.mubr.f32.mxu0 0.0
    %6191 = vmatmul.mubr.f32.gmra.mrb[0].mxu0 %v5895
    %v6192 = vpop.f32.mrb[0].mxu0
    %v6193 = vadd.f32 0.0, %v6192
    %v6194 = vpop.f32.mrb[0].mxu0
    %6195 = vmatprep.mubr.f32.mxu0 0.0
    %6196 = vmatmul.mubr.f32.gmra.mrb[0].mxu0 %v5898
    %v6197 = vpop.f32.mrb[0].mxu0
    %v6198 = vadd.f32 0.0, %v6197
    %v6199 = vpop.f32.mrb[0].mxu0
    %6200 = vmatprep.mubr.f32.mxu0 0.0
    %6201 = vmatmul.mubr.f32.gmra.mrb[0].mxu0 %v5901
    %v6202 = vpop.f32.mrb[0].mxu0
    %v6203 = vadd.f32 0.0, %v6202
    %v6204 = vpop.f32.mrb[0].mxu0
    %6205 = vmatprep.mubr.f32.mxu0 0.0
    %6206 = vmatmul.mubr.f32.gmra.mrb[0].mxu0 %v5904
    %v6207 = vpop.f32.mrb[0].mxu0
    %v6208 = vadd.f32 0.0, %v6207
    %v6209 = vpop.f32.mrb[0].mxu0
    %6210 = vmatprep.mubr.f32.mxu0 0.0
    %6211 = vmatmul.mubr.f32.gmra.mrb[0].mxu0 %v5907
    %v6212 = vpop.f32.mrb[0].mxu0
    %v6213 = vadd.f32 0.0, %v6212
    %v6214 = vpop.f32.mrb[0].mxu0
    %6215 = vmatprep.mubr.f32.mxu0 0.0
    %6216 = vmatmul.mubr.f32.gmra.mrb[0].mxu0 %v5910
    %v6217 = vpop.f32.mrb[0].mxu0
    %v6218 = vadd.f32 0.0, %v6217
    %v6219 = vpop.f32.mrb[0].mxu0
    %6220 = vmatprep.mubr.f32.mxu0 0.0
    %6221 = vmatmul.mubr.f32.gmra.mrb[0].mxu0 %v5913
    %v6222 = vpop.f32.mrb[0].mxu0
    %v6223 = vadd.f32 0.0, %v6222
    %v6224 = vpop.f32.mrb[0].mxu0
    %6225 = vmatprep.mubr.f32.mxu0 0.0
    %6226 = vmatmul.mubr.f32.gmra.mrb[0].mxu0 %v5916
    %v6227 = vpop.f32.mrb[0].mxu0
    %v6228 = vadd.f32 0.0, %v6227
    %v6229 = vpop.f32.mrb[0].mxu0
    %6230 = vmatprep.mubr.f32.mxu0 0.0
    %6231 = vmatmul.mubr.f32.gmra.mrb[0].mxu0 %v5919
    %v6232 = vpop.f32.mrb[0].mxu0
    %v6233 = vadd.f32 0.0, %v6232
    %v6234 = vpop.f32.mrb[0].mxu0
    %6235 = vmatprep.mubr.f32.mxu0 0.0
    %6236 = vmatmul.mubr.f32.gmra.mrb[0].mxu0 %v5922
    %v6237 = vpop.f32.mrb[0].mxu0
    %v6238 = vadd.f32 0.0, %v6237
    %v6239 = vpop.f32.mrb[0].mxu0
    %6240 = vmatprep.mubr.f32.mxu0 0.0
    %6241 = vmatmul.mubr.f32.gmra.mrb[0].mxu0 %v5925
    %v6242 = vpop.f32.mrb[0].mxu0
    %v6243 = vadd.f32 0.0, %v6242
    %v6244 = vpop.f32.mrb[0].mxu0
    %6245 = vmatprep.mubr.f32.mxu0 0.0
    %6246 = vmatmul.mubr.f32.gmra.mrb[0].mxu0 %v5928
    %v6247 = vpop.f32.mrb[0].mxu0
    %v6248 = vadd.f32 0.0, %v6247
    %v6249 = vpop.f32.mrb[0].mxu0
    %6250 = vmatprep.mubr.f32.mxu0 0.0
    %6251 = vmatmul.mubr.f32.gmra.mrb[0].mxu0 %v5931
    %v6252 = vpop.f32.mrb[0].mxu0
    %v6253 = vadd.f32 0.0, %v6252
    %v6254 = vpop.f32.mrb[0].mxu0
    %6255 = vmatprep.mubr.f32.mxu0 0.0
    %6256 = vmatmul.mubr.f32.gmra.mrb[0].mxu0 %v5934
    %v6257 = vpop.f32.mrb[0].mxu0
    %v6258 = vadd.f32 0.0, %v6257
    %v6259 = vpop.f32.mrb[0].mxu0
    %6260 = vmatprep.mubr.f32.mxu0 0.0
    %6261 = vmatmul.mubr.f32.gmra.mrb[0].mxu0 %v5937
    %v6262 = vpop.f32.mrb[0].mxu0
    %v6263 = vadd.f32 0.0, %v6262
    %v6264 = vpop.f32.mrb[0].mxu0
    %6265 = vmatprep.mubr.f32.mxu0 0.0
    %6266 = vmatmul.mubr.f32.gmra.mrb[0].mxu0 %v5940
    %v6267 = vpop.f32.mrb[0].mxu0
    %v6268 = vadd.f32 0.0, %v6267
    %v6269 = vpop.f32.mrb[0].mxu0
    %6270 = vmatprep.mubr.f32.mxu0 0.0
    %6271 = vmatmul.mubr.f32.gmra.mrb[0].mxu0 %v5943
    %v6272 = vpop.f32.mrb[0].mxu0
    %v6273 = vadd.f32 0.0, %v6272
    %v6274 = vpop.f32.mrb[0].mxu0
    %6275 = vmatprep.mubr.f32.mxu0 0.0
    %6276 = vmatmul.mubr.f32.gmra.mrb[0].mxu0 %v5946
    %v6277 = vpop.f32.mrb[0].mxu0
    %v6278 = vadd.f32 0.0, %v6277
    %v6279 = vpop.f32.mrb[0].mxu0
    %6280 = vmatprep.mubr.f32.mxu0 0.0
    %6281 = vmatmul.mubr.f32.gmra.mrb[0].mxu0 %v5949
    %v6282 = vpop.f32.mrb[0].mxu0
    %v6283 = vadd.f32 0.0, %v6282
    %v6284 = vpop.f32.mrb[0].mxu0
    %6285 = vmatprep.mubr.f32.mxu0 0.0
    %6286 = vmatmul.mubr.f32.gmra.mrb[0].mxu0 %v5952
    %v6287 = vpop.f32.mrb[0].mxu0
    %v6288 = vadd.f32 0.0, %v6287
    %v6289 = vpop.f32.mrb[0].mxu0
    %6290 = vmatprep.mubr.f32.mxu0 0.0
    %6291 = vmatmul.mubr.f32.gmra.mrb[0].mxu0 %v5955
    %v6292 = vpop.f32.mrb[0].mxu0
    %v6293 = vadd.f32 0.0, %v6292
    %v6294 = vpop.f32.mrb[0].mxu0
    %6295 = vmatprep.mubr.f32.mxu0 0.0
    %6296 = vmatmul.mubr.f32.gmra.mrb[0].mxu0 %v5958
    %v6297 = vpop.f32.mrb[0].mxu0
    %v6298 = vadd.f32 0.0, %v6297
    %v6299 = vpop.f32.mrb[0].mxu0
    %6300 = vmatprep.mubr.f32.mxu0 0.0
    %6301 = vmatmul.mubr.f32.gmra.mrb[0].mxu0 %v5961
    %v6302 = vpop.f32.mrb[0].mxu0
    %v6303 = vadd.f32 0.0, %v6302
    %v6304 = vpop.f32.mrb[0].mxu0
    %6305 = vmatprep.mubr.f32.mxu0 0.0
    %6306 = vmatmul.mubr.f32.gmra.mrb[0].mxu0 %v5964
    %v6307 = vpop.f32.mrb[0].mxu0
    %v6308 = vadd.f32 0.0, %v6307
    %v6309 = vpop.f32.mrb[0].mxu0
    %6310 = vmatprep.mubr.f32.mxu0 0.0
    %6311 = vmatmul.mubr.f32.gmra.mrb[0].mxu0 %v5967
    %v6312 = vpop.f32.mrb[0].mxu0
    %v6313 = vadd.f32 0.0, %v6312
    %v6314 = vpop.f32.mrb[0].mxu0
    %6315 = vmatprep.mubr.f32.mxu0 0.0
    %6316 = vmatmul.mubr.f32.gmra.mrb[0].mxu0 %v5970
    %v6317 = vpop.f32.mrb[0].mxu0
    %v6318 = vadd.f32 0.0, %v6317
    %v6319 = vpop.f32.mrb[0].mxu0
    %6320 = vmatprep.mubr.f32.mxu0 0.0
    %6321 = vmatmul.mubr.f32.gmra.mrb[0].mxu0 %v5973
    %v6322 = vpop.f32.mrb[0].mxu0
    %v6323 = vadd.f32 0.0, %v6322
    %v6324 = vpop.f32.mrb[0].mxu0
    %6325 = vmatprep.mubr.f32.mxu0 0.0
    %6326 = vmatmul.mubr.f32.gmra.mrb[0].mxu0 %v5976
    %v6327 = vpop.f32.mrb[0].mxu0
    %v6328 = vadd.f32 0.0, %v6327
    %v6329 = vpop.f32.mrb[0].mxu0
    %6330 = vmatprep.mubr.f32.mxu0 0.0
    %6331 = vmatmul.mubr.f32.gmra.mrb[0].mxu0 %v5979
    %v6332 = vpop.f32.mrb[0].mxu0
    %v6333 = vadd.f32 0.0, %v6332
    %v6334 = vpop.f32.mrb[0].mxu0
    %6335 = vmatprep.mubr.f32.mxu0 0.0
    %6336 = vmatmul.mubr.f32.gmra.mrb[0].mxu0 %v5982
    %v6337 = vpop.f32.mrb[0].mxu0
    %v6338 = vadd.f32 0.0, %v6337
    %v6339 = vpop.f32.mrb[0].mxu0
    %6340 = vmatprep.mubr.f32.mxu0 0.0
    %6341 = vmatmul.mubr.f32.gmra.mrb[0].mxu0 %v5985
    %v6342 = vpop.f32.mrb[0].mxu0
    %v6343 = vadd.f32 0.0, %v6342
    %v6344 = vpop.f32.mrb[0].mxu0
    %6345 = vmatprep.mubr.f32.mxu0 0.0
    %6346 = vmatmul.mubr.f32.gmra.mrb[0].mxu0 %v5988
    %v6347 = vpop.f32.mrb[0].mxu0
    %v6348 = vadd.f32 0.0, %v6347
    %v6349 = vpop.f32.mrb[0].mxu0
    %6350 = vmatprep.mubr.f32.mxu0 0.0
    %6351 = vmatmul.mubr.f32.gmra.mrb[0].mxu0 %v5991
    %v6352 = vpop.f32.mrb[0].mxu0
    %v6353 = vadd.f32 0.0, %v6352
    %v6354 = vpop.f32.mrb[0].mxu0
    %6355 = vmatprep.mubr.f32.mxu0 0.0
    %6356 = vmatmul.mubr.f32.gmra.mrb[0].mxu0 %v5994
    %v6357 = vpop.f32.mrb[0].mxu0
    %v6358 = vadd.f32 0.0, %v6357
    %v6359 = vpop.f32.mrb[0].mxu0
    %6360 = vmatprep.mubr.f32.mxu0 0.0
    %6361 = vmatmul.mubr.f32.gmra.mrb[0].mxu0 %v5997
    %v6362 = vpop.f32.mrb[0].mxu0
    %v6363 = vadd.f32 0.0, %v6362
    %v6364 = vpop.f32.mrb[0].mxu0
    %6365 = vmatprep.mubr.f32.mxu0 0.0
    %6366 = vmatmul.mubr.f32.gmra.mrb[0].mxu0 %v6000
    %v6367 = vpop.f32.mrb[0].mxu0
    %v6368 = vadd.f32 0.0, %v6367
    %v6369 = vpop.f32.mrb[0].mxu0
    %6370 = vmatprep.mubr.f32.mxu0 0.0
    %6371 = vmatmul.mubr.f32.gmra.mrb[0].mxu0 %v6003
    %v6372 = vpop.f32.mrb[0].mxu0
    %v6373 = vadd.f32 0.0, %v6372
    %v6374 = vpop.f32.mrb[0].mxu0
    %6375 = vmatprep.mubr.f32.mxu0 0.0
    %6376 = vmatmul.mubr.f32.gmra.mrb[0].mxu0 %v6006
    %v6377 = vpop.f32.mrb[0].mxu0
    %v6378 = vadd.f32 0.0, %v6377
    %v6379 = vpop.f32.mrb[0].mxu0
    %6380 = vmatprep.mubr.f32.mxu0 0.0
    %6381 = vmatmul.mubr.f32.gmra.mrb[0].mxu0 %v6009
    %v6382 = vpop.f32.mrb[0].mxu0
    %v6383 = vadd.f32 0.0, %v6382
    %v6384 = vpop.f32.mrb[0].mxu0
    %6385 = vmatprep.mubr.f32.mxu0 0.0
    %6386 = vmatmul.mubr.f32.gmra.mrb[0].mxu0 %v6012
    %v6387 = vpop.f32.mrb[0].mxu0
    %v6388 = vadd.f32 0.0, %v6387
    %v6389 = vpop.f32.mrb[0].mxu0
    %6390 = vmatprep.mubr.f32.mxu0 0.0
    %6391 = vmatmul.mubr.f32.gmra.mrb[0].mxu0 %v6015
    %v6392 = vpop.f32.mrb[0].mxu0
    %v6393 = vadd.f32 0.0, %v6392
    %v6394 = vpop.f32.mrb[0].mxu0
    %6395 = vmatprep.mubr.f32.mxu0 0.0
    %6396 = vmatmul.mubr.f32.gmra.mrb[0].mxu0 %v6018
    %v6397 = vpop.f32.mrb[0].mxu0
    %v6398 = vadd.f32 0.0, %v6397
    %v6399 = vpop.f32.mrb[0].mxu0
    %6400 = vmatprep.mubr.f32.mxu0 0.0
    %6401 = vmatmul.mubr.f32.gmra.mrb[0].mxu0 %v6021
    %v6402 = vpop.f32.mrb[0].mxu0
    %v6403 = vadd.f32 0.0, %v6402
    %v6404 = vpop.f32.mrb[0].mxu0
    %6405 = vmatprep.mubr.f32.mxu0 0.0
    %6406 = vmatmul.mubr.f32.gmra.mrb[0].mxu0 %v6024
    %v6407 = vpop.f32.mrb[0].mxu0
    %v6408 = vadd.f32 0.0, %v6407
    %v6409 = vpop.f32.mrb[0].mxu0
    %6410 = vdwg.mxu0
    %v6411 = vadd.f32 %v5702, %v6093
    %v6412 = vadd.f32 %v5703, %v6098
    %v6413 = vadd.f32 %v5704, %v6103
    %v6414 = vadd.f32 %v5705, %v6108
    %v6415 = vadd.f32 %v5706, %v6113
    %v6416 = vadd.f32 %v5707, %v6118
    %v6417 = vadd.f32 %v5708, %v6123
    %v6418 = vadd.f32 %v5709, %v6128
    %v6419 = vadd.f32 %v5710, %v6133
    %v6420 = vadd.f32 %v5711, %v6138
    %v6421 = vadd.f32 %v5712, %v6143
    %v6422 = vadd.f32 %v5713, %v6148
    %v6423 = vadd.f32 %v5714, %v6153
    %v6424 = vadd.f32 %v5715, %v6158
    %v6425 = vadd.f32 %v5716, %v6163
    %v6426 = vadd.f32 %v5717, %v6168
    %v6427 = vadd.f32 %v5718, %v6173
    %v6428 = vadd.f32 %v5719, %v6178
    %v6429 = vadd.f32 %v5720, %v6183
    %v6430 = vadd.f32 %v5721, %v6188
    %v6431 = vadd.f32 %v5722, %v6193
    %v6432 = vadd.f32 %v5723, %v6198
    %v6433 = vadd.f32 %v5724, %v6203
    %v6434 = vadd.f32 %v5725, %v6208
    %v6435 = vadd.f32 %v5726, %v6213
    %v6436 = vadd.f32 %v5727, %v6218
    %v6437 = vadd.f32 %v5728, %v6223
    %v6438 = vadd.f32 %v5729, %v6228
    %v6439 = vadd.f32 %v5730, %v6233
    %v6440 = vadd.f32 %v5731, %v6238
    %v6441 = vadd.f32 %v5732, %v6243
    %v6442 = vadd.f32 %v5733, %v6248
    %v6443 = vadd.f32 %v5734, %v6253
    %v6444 = vadd.f32 %v5735, %v6258
    %v6445 = vadd.f32 %v5736, %v6263
    %v6446 = vadd.f32 %v5737, %v6268
    %v6447 = vadd.f32 %v5738, %v6273
    %v6448 = vadd.f32 %v5739, %v6278
    %v6449 = vadd.f32 %v5740, %v6283
    %v6450 = vadd.f32 %v5741, %v6288
    %v6451 = vadd.f32 %v5742, %v6293
    %v6452 = vadd.f32 %v5743, %v6298
    %v6453 = vadd.f32 %v5744, %v6303
    %v6454 = vadd.f32 %v5745, %v6308
    %v6455 = vadd.f32 %v5746, %v6313
    %v6456 = vadd.f32 %v5747, %v6318
    %v6457 = vadd.f32 %v5748, %v6323
    %v6458 = vadd.f32 %v5749, %v6328
    %v6459 = vadd.f32 %v5750, %v6333
    %v6460 = vadd.f32 %v5751, %v6338
    %v6461 = vadd.f32 %v5752, %v6343
    %v6462 = vadd.f32 %v5753, %v6348
    %v6463 = vadd.f32 %v5754, %v6353
    %v6464 = vadd.f32 %v5755, %v6358
    %v6465 = vadd.f32 %v5756, %v6363
    %v6466 = vadd.f32 %v5757, %v6368
    %v6467 = vadd.f32 %v5758, %v6373
    %v6468 = vadd.f32 %v5759, %v6378
    %v6469 = vadd.f32 %v5760, %v6383
    %v6470 = vadd.f32 %v5761, %v6388
    %v6471 = vadd.f32 %v5762, %v6393
    %v6472 = vadd.f32 %v5763, %v6398
    %v6473 = vadd.f32 %v5764, %v6403
    %v6474 = vadd.f32 %v5765, %v6408
    %v6475 = vld [vmem:[%s5766 + $0x8] sm:$0xff]
    %v6476 = vld [vmem:[%s5766 + $0x10] sm:$0xff]
    %v6477 = vld [vmem:[%s5766 + $0x28] sm:$0xff]
    %v6478 = vld [vmem:[%s5766 + $0x30] sm:$0xff]
    %v6479 = vld [vmem:[%s5766 + $0x48] sm:$0xff]
    %v6480 = vld [vmem:[%s5766 + $0x50] sm:$0xff]
    %v6481 = vld [vmem:[%s5766 + $0x68] sm:$0xff]
    %v6482 = vld [vmem:[%s5766 + $0x70] sm:$0xff]
    %v6483 = vld [vmem:[%s5766 + $0x88] sm:$0xff]
    %v6484 = vld [vmem:[%s5766 + $0x90] sm:$0xff]
    %v6485 = vld [vmem:[%s5766 + $0xa8] sm:$0xff]
    %v6486 = vld [vmem:[%s5766 + $0xb0] sm:$0xff]
    %v6487 = vld [vmem:[%s5766 + $0xc8] sm:$0xff]
    %v6488 = vld [vmem:[%s5766 + $0xd0] sm:$0xff]
    %v6489 = vld [vmem:[%s5766 + $0xe8] sm:$0xff]
    %v6490 = vld [vmem:[%s5766 + $0xf0] sm:$0xff]
    %v6491 = vld [vmem:[%s5766 + $0x108] sm:$0xff]
    %v6492 = vld [vmem:[%s5766 + $0x110] sm:$0xff]
    %v6493 = vld [vmem:[%s5766 + $0x128] sm:$0xff]
    %v6494 = vld [vmem:[%s5766 + $0x130] sm:$0xff]
    %v6495 = vld [vmem:[%s5766 + $0x148] sm:$0xff]
    %v6496 = vld [vmem:[%s5766 + $0x150] sm:$0xff]
    %v6497 = vld [vmem:[%s5766 + $0x168] sm:$0xff]
    %v6498 = vld [vmem:[%s5766 + $0x170] sm:$0xff]
    %v6499 = vld [vmem:[%s5766 + $0x188] sm:$0xff]
    %v6500 = vld [vmem:[%s5766 + $0x190] sm:$0xff]
    %v6501 = vld [vmem:[%s5766 + $0x1a8] sm:$0xff]
    %v6502 = vld [vmem:[%s5766 + $0x1b0] sm:$0xff]
    %v6503 = vld [vmem:[%s5766 + $0x1c8] sm:$0xff]
    %v6504 = vld [vmem:[%s5766 + $0x1d0] sm:$0xff]
    %v6505 = vld [vmem:[%s5766 + $0x1e8] sm:$0xff]
    %v6506 = vld [vmem:[%s5766 + $0x1f0] sm:$0xff]
    %v6507 = vld [vmem:[%s5766 + $0x248] sm:$0xff]
    %v6508 = vld [vmem:[%s5766 + $0x250] sm:$0xff]
    %v6509 = vld [vmem:[%s5766 + $0x268] sm:$0xff]
    %v6510 = vld [vmem:[%s5766 + $0x270] sm:$0xff]
    %v6511 = vld [vmem:[%s5766 + $0x288] sm:$0xff]
    %v6512 = vld [vmem:[%s5766 + $0x290] sm:$0xff]
    %v6513 = vld [vmem:[%s5766 + $0x2a8] sm:$0xff]
    %v6514 = vld [vmem:[%s5766 + $0x2b0] sm:$0xff]
    %v6515 = vld [vmem:[%s5766 + $0x2c8] sm:$0xff]
    %v6516 = vld [vmem:[%s5766 + $0x2d0] sm:$0xff]
    %v6517 = vld [vmem:[%s5766 + $0x2e8] sm:$0xff]
    %v6518 = vld [vmem:[%s5766 + $0x2f0] sm:$0xff]
    %v6519 = vld [vmem:[%s5766 + $0x308] sm:$0xff]
    %v6520 = vld [vmem:[%s5766 + $0x310] sm:$0xff]
    %v6521 = vld [vmem:[%s5766 + $0x328] sm:$0xff]
    %v6522 = vld [vmem:[%s5766 + $0x330] sm:$0xff]
    %v6523 = vld [vmem:[%s5766 + $0x348] sm:$0xff]
    %v6524 = vld [vmem:[%s5766 + $0x350] sm:$0xff]
    %v6525 = vld [vmem:[%s5766 + $0x368] sm:$0xff]
    %v6526 = vld [vmem:[%s5766 + $0x370] sm:$0xff]
    %v6527 = vld [vmem:[%s5766 + $0x388] sm:$0xff]
    %v6528 = vld [vmem:[%s5766 + $0x390] sm:$0xff]
    %v6529 = vld [vmem:[%s5766 + $0x3a8] sm:$0xff]
    %v6530 = vld [vmem:[%s5766 + $0x3b0] sm:$0xff]
    %v6531 = vld [vmem:[%s5766 + $0x3c8] sm:$0xff]
    %v6532 = vld [vmem:[%s5766 + $0x3d0] sm:$0xff]
    %v6533 = vld [vmem:[%s5766 + $0x3e8] sm:$0xff]
    %v6534 = vld [vmem:[%s5766 + $0x3f0] sm:$0xff]
    %v6535 = vld [vmem:[%s5766 + $0x408] sm:$0xff]
    %v6536 = vld [vmem:[%s5766 + $0x410] sm:$0xff]
    %v6537 = vld [vmem:[%s5766 + $0x428] sm:$0xff]
    %v6538 = vld [vmem:[%s5766 + $0x430] sm:$0xff]
    %s6539 = scalar_lea.vmem [#allocation6], 112
    %v6540 = vld [vmem:[%s6539] sm:$0xff]
    %v6541 = vld [vmem:[%s6539 + $0x8] sm:$0xff]
    %v6543 = vsel %vm701, %v6475, 0
    %v6546 = vsel %vm701, %v6476, 0
    %v6549 = vsel %vm701, %v6477, 0
    %v6552 = vsel %vm701, %v6478, 0
    %v6555 = vsel %vm701, %v6479, 0
    %v6558 = vsel %vm701, %v6480, 0
    %v6561 = vsel %vm701, %v6481, 0
    %v6564 = vsel %vm701, %v6482, 0
    %v6567 = vsel %vm701, %v6483, 0
    %v6570 = vsel %vm701, %v6484, 0
    %v6573 = vsel %vm701, %v6485, 0
    %v6576 = vsel %vm701, %v6486, 0
    %v6579 = vsel %vm701, %v6487, 0
    %v6582 = vsel %vm701, %v6488, 0
    %v6585 = vsel %vm701, %v6489, 0
    %v6588 = vsel %vm701, %v6490, 0
    %v6591 = vsel %vm701, %v6491, 0
    %v6594 = vsel %vm701, %v6492, 0
    %v6597 = vsel %vm701, %v6493, 0
    %v6600 = vsel %vm701, %v6494, 0
    %v6603 = vsel %vm701, %v6495, 0
    %v6606 = vsel %vm701, %v6496, 0
    %v6609 = vsel %vm701, %v6497, 0
    %v6612 = vsel %vm701, %v6498, 0
    %v6615 = vsel %vm701, %v6499, 0
    %v6618 = vsel %vm701, %v6500, 0
    %v6621 = vsel %vm701, %v6501, 0
    %v6624 = vsel %vm701, %v6502, 0
    %v6627 = vsel %vm701, %v6503, 0
    %v6630 = vsel %vm701, %v6504, 0
    %v6633 = vsel %vm701, %v6505, 0
    %v6636 = vsel %vm701, %v6506, 0
    %v6639 = vsel %vm701, %v6507, 0
    %v6642 = vsel %vm701, %v6508, 0
    %v6645 = vsel %vm701, %v6509, 0
    %v6648 = vsel %vm701, %v6510, 0
    %v6651 = vsel %vm701, %v6511, 0
    %v6654 = vsel %vm701, %v6512, 0
    %v6657 = vsel %vm701, %v6513, 0
    %v6660 = vsel %vm701, %v6514, 0
    %v6663 = vsel %vm701, %v6515, 0
    %v6666 = vsel %vm701, %v6516, 0
    %v6669 = vsel %vm701, %v6517, 0
    %v6672 = vsel %vm701, %v6518, 0
    %v6675 = vsel %vm701, %v6519, 0
    %v6678 = vsel %vm701, %v6520, 0
    %v6681 = vsel %vm701, %v6521, 0
    %v6684 = vsel %vm701, %v6522, 0
    %v6687 = vsel %vm701, %v6523, 0
    %v6690 = vsel %vm701, %v6524, 0
    %v6693 = vsel %vm701, %v6525, 0
    %v6696 = vsel %vm701, %v6526, 0
    %v6699 = vsel %vm701, %v6527, 0
    %v6702 = vsel %vm701, %v6528, 0
    %v6705 = vsel %vm701, %v6529, 0
    %v6708 = vsel %vm701, %v6530, 0
    %v6711 = vsel %vm701, %v6531, 0
    %v6714 = vsel %vm701, %v6532, 0
    %v6717 = vsel %vm701, %v6533, 0
    %v6720 = vsel %vm701, %v6534, 0
    %v6723 = vsel %vm701, %v6535, 0
    %v6726 = vsel %vm701, %v6536, 0
    %v6729 = vsel %vm701, %v6537, 0
    %v6732 = vsel %vm701, %v6538, 0
    %6734 = vmatprep.subr.mxu0 0.0
    %6735 = vmatpush1.msra.mxu0 %v6540
    %6736 = vmatprep.subr.mxu0 0.0
    %6737 = vmatpush1.msra.mxu0 %v6541
    %6738 = vmatprep.subr.mxu0 0.0
    %6739 = vmatpush1.msra.mxu0 0.0
    %6740 = vmatprep.subr.mxu0 0.0
    %6741 = vmatpush1.msra.mxu0 0.0
    %6742 = vmatprep.subr.mxu0 0.0
    %6743 = vmatpush1.msra.mxu0 0.0
    %6744 = vmatprep.subr.mxu0 0.0
    %6745 = vmatpush1.msra.mxu0 0.0
    %6746 = vmatprep.subr.mxu0 0.0
    %6747 = vmatpush1.msra.mxu0 0.0
    %6748 = vmatprep.subr.mxu0 0.0
    %6749 = vmatpush1.msra.mxu0 0.0
    %6750 = vmatprep.subr.mxu0 0.0
    %6751 = vmatpush1.msra.mxu0 0.0
    %6752 = vmatprep.subr.mxu0 0.0
    %6753 = vmatpush1.msra.mxu0 0.0
    %6754 = vmatprep.subr.mxu0 0.0
    %6755 = vmatpush1.msra.mxu0 0.0
    %6756 = vmatprep.subr.mxu0 0.0
    %6757 = vmatpush1.msra.mxu0 0.0
    %6758 = vmatprep.subr.mxu0 0.0
    %6759 = vmatpush1.msra.mxu0 0.0
    %6760 = vmatprep.subr.mxu0 0.0
    %6761 = vmatpush1.msra.mxu0 0.0
    %6762 = vmatprep.subr.mxu0 0.0
    %6763 = vmatpush1.msra.mxu0 0.0
    %6764 = vmatprep.subr.mxu0 0.0
    %6765 = vmatpush1.msra.mxu0 0.0
    %6766 = vmatprep.subr.mxu0 0.0
    %6767 = vmatpush1.msra.mxu0 0.0
    %6768 = vmatprep.subr.mxu0 0.0
    %6769 = vmatpush1.msra.mxu0 0.0
    %6770 = vmatprep.subr.mxu0 0.0
    %6771 = vmatpush1.msra.mxu0 0.0
    %6772 = vmatprep.subr.mxu0 0.0
    %6773 = vmatpush1.msra.mxu0 0.0
    %6774 = vmatprep.subr.mxu0 0.0
    %6775 = vmatpush1.msra.mxu0 0.0
    %6776 = vmatprep.subr.mxu0 0.0
    %6777 = vmatpush1.msra.mxu0 0.0
    %6778 = vmatprep.subr.mxu0 0.0
    %6779 = vmatpush1.msra.mxu0 0.0
    %6780 = vmatprep.subr.mxu0 0.0
    %6781 = vmatpush1.msra.mxu0 0.0
    %6782 = vmatprep.subr.mxu0 0.0
    %6783 = vmatpush1.msra.mxu0 0.0
    %6784 = vmatprep.subr.mxu0 0.0
    %6785 = vmatpush1.msra.mxu0 0.0
    %6786 = vmatprep.subr.mxu0 0.0
    %6787 = vmatpush1.msra.mxu0 0.0
    %6788 = vmatprep.subr.mxu0 0.0
    %6789 = vmatpush1.msra.mxu0 0.0
    %6790 = vmatprep.subr.mxu0 0.0
    %6791 = vmatpush1.msra.mxu0 0.0
    %6792 = vmatprep.subr.mxu0 0.0
    %6793 = vmatpush1.msra.mxu0 0.0
    %6794 = vmatprep.subr.mxu0 0.0
    %6795 = vmatpush1.msra.mxu0 0.0
    %6796 = vmatprep.subr.mxu0 0.0
    %6797 = vmatpush1.msra.mxu0 0.0
    %6798 = vmatprep.mubr.f32.mxu0 0.0
    %6799 = vmatmul.mubr.f32.gmra.mrb[0].mxu0 %v6543
    %v6800 = vpop.f32.mrb[0].mxu0
    %v6801 = vadd.f32 0.0, %v6800
    %v6802 = vpop.f32.mrb[0].mxu0
    %6803 = vmatprep.mubr.f32.mxu0 0.0
    %6804 = vmatmul.mubr.f32.gmra.mrb[0].mxu0 %v6546
    %v6805 = vpop.f32.mrb[0].mxu0
    %v6806 = vadd.f32 0.0, %v6805
    %v6807 = vpop.f32.mrb[0].mxu0
    %6808 = vmatprep.mubr.f32.mxu0 0.0
    %6809 = vmatmul.mubr.f32.gmra.mrb[0].mxu0 %v6549
    %v6810 = vpop.f32.mrb[0].mxu0
    %v6811 = vadd.f32 0.0, %v6810
    %v6812 = vpop.f32.mrb[0].mxu0
    %6813 = vmatprep.mubr.f32.mxu0 0.0
    %6814 = vmatmul.mubr.f32.gmra.mrb[0].mxu0 %v6552
    %v6815 = vpop.f32.mrb[0].mxu0
    %v6816 = vadd.f32 0.0, %v6815
    %v6817 = vpop.f32.mrb[0].mxu0
    %6818 = vmatprep.mubr.f32.mxu0 0.0
    %6819 = vmatmul.mubr.f32.gmra.mrb[0].mxu0 %v6555
    %v6820 = vpop.f32.mrb[0].mxu0
    %v6821 = vadd.f32 0.0, %v6820
    %v6822 = vpop.f32.mrb[0].mxu0
    %6823 = vmatprep.mubr.f32.mxu0 0.0
    %6824 = vmatmul.mubr.f32.gmra.mrb[0].mxu0 %v6558
    %v6825 = vpop.f32.mrb[0].mxu0
    %v6826 = vadd.f32 0.0, %v6825
    %v6827 = vpop.f32.mrb[0].mxu0
    %6828 = vmatprep.mubr.f32.mxu0 0.0
    %6829 = vmatmul.mubr.f32.gmra.mrb[0].mxu0 %v6561
    %v6830 = vpop.f32.mrb[0].mxu0
    %v6831 = vadd.f32 0.0, %v6830
    %v6832 = vpop.f32.mrb[0].mxu0
    %6833 = vmatprep.mubr.f32.mxu0 0.0
    %6834 = vmatmul.mubr.f32.gmra.mrb[0].mxu0 %v6564
    %v6835 = vpop.f32.mrb[0].mxu0
    %v6836 = vadd.f32 0.0, %v6835
    %v6837 = vpop.f32.mrb[0].mxu0
    %6838 = vmatprep.mubr.f32.mxu0 0.0
    %6839 = vmatmul.mubr.f32.gmra.mrb[0].mxu0 %v6567
    %v6840 = vpop.f32.mrb[0].mxu0
    %v6841 = vadd.f32 0.0, %v6840
    %v6842 = vpop.f32.mrb[0].mxu0
    %6843 = vmatprep.mubr.f32.mxu0 0.0
    %6844 = vmatmul.mubr.f32.gmra.mrb[0].mxu0 %v6570
    %v6845 = vpop.f32.mrb[0].mxu0
    %v6846 = vadd.f32 0.0, %v6845
    %v6847 = vpop.f32.mrb[0].mxu0
    %6848 = vmatprep.mubr.f32.mxu0 0.0
    %6849 = vmatmul.mubr.f32.gmra.mrb[0].mxu0 %v6573
    %v6850 = vpop.f32.mrb[0].mxu0
    %v6851 = vadd.f32 0.0, %v6850
    %v6852 = vpop.f32.mrb[0].mxu0
    %6853 = vmatprep.mubr.f32.mxu0 0.0
    %6854 = vmatmul.mubr.f32.gmra.mrb[0].mxu0 %v6576
    %v6855 = vpop.f32.mrb[0].mxu0
    %v6856 = vadd.f32 0.0, %v6855
    %v6857 = vpop.f32.mrb[0].mxu0
    %6858 = vmatprep.mubr.f32.mxu0 0.0
    %6859 = vmatmul.mubr.f32.gmra.mrb[0].mxu0 %v6579
    %v6860 = vpop.f32.mrb[0].mxu0
    %v6861 = vadd.f32 0.0, %v6860
    %v6862 = vpop.f32.mrb[0].mxu0
    %6863 = vmatprep.mubr.f32.mxu0 0.0
    %6864 = vmatmul.mubr.f32.gmra.mrb[0].mxu0 %v6582
    %v6865 = vpop.f32.mrb[0].mxu0
    %v6866 = vadd.f32 0.0, %v6865
    %v6867 = vpop.f32.mrb[0].mxu0
    %6868 = vmatprep.mubr.f32.mxu0 0.0
    %6869 = vmatmul.mubr.f32.gmra.mrb[0].mxu0 %v6585
    %v6870 = vpop.f32.mrb[0].mxu0
    %v6871 = vadd.f32 0.0, %v6870
    %v6872 = vpop.f32.mrb[0].mxu0
    %6873 = vmatprep.mubr.f32.mxu0 0.0
    %6874 = vmatmul.mubr.f32.gmra.mrb[0].mxu0 %v6588
    %v6875 = vpop.f32.mrb[0].mxu0
    %v6876 = vadd.f32 0.0, %v6875
    %v6877 = vpop.f32.mrb[0].mxu0
    %6878 = vmatprep.mubr.f32.mxu0 0.0
    %6879 = vmatmul.mubr.f32.gmra.mrb[0].mxu0 %v6591
    %v6880 = vpop.f32.mrb[0].mxu0
    %v6881 = vadd.f32 0.0, %v6880
    %v6882 = vpop.f32.mrb[0].mxu0
    %6883 = vmatprep.mubr.f32.mxu0 0.0
    %6884 = vmatmul.mubr.f32.gmra.mrb[0].mxu0 %v6594
    %v6885 = vpop.f32.mrb[0].mxu0
    %v6886 = vadd.f32 0.0, %v6885
    %v6887 = vpop.f32.mrb[0].mxu0
    %6888 = vmatprep.mubr.f32.mxu0 0.0
    %6889 = vmatmul.mubr.f32.gmra.mrb[0].mxu0 %v6597
    %v6890 = vpop.f32.mrb[0].mxu0
    %v6891 = vadd.f32 0.0, %v6890
    %v6892 = vpop.f32.mrb[0].mxu0
    %6893 = vmatprep.mubr.f32.mxu0 0.0
    %6894 = vmatmul.mubr.f32.gmra.mrb[0].mxu0 %v6600
    %v6895 = vpop.f32.mrb[0].mxu0
    %v6896 = vadd.f32 0.0, %v6895
    %v6897 = vpop.f32.mrb[0].mxu0
    %6898 = vmatprep.mubr.f32.mxu0 0.0
    %6899 = vmatmul.mubr.f32.gmra.mrb[0].mxu0 %v6603
    %v6900 = vpop.f32.mrb[0].mxu0
    %v6901 = vadd.f32 0.0, %v6900
    %v6902 = vpop.f32.mrb[0].mxu0
    %6903 = vmatprep.mubr.f32.mxu0 0.0
    %6904 = vmatmul.mubr.f32.gmra.mrb[0].mxu0 %v6606
    %v6905 = vpop.f32.mrb[0].mxu0
    %v6906 = vadd.f32 0.0, %v6905
    %v6907 = vpop.f32.mrb[0].mxu0
    %6908 = vmatprep.mubr.f32.mxu0 0.0
    %6909 = vmatmul.mubr.f32.gmra.mrb[0].mxu0 %v6609
    %v6910 = vpop.f32.mrb[0].mxu0
    %v6911 = vadd.f32 0.0, %v6910
    %v6912 = vpop.f32.mrb[0].mxu0
    %6913 = vmatprep.mubr.f32.mxu0 0.0
    %6914 = vmatmul.mubr.f32.gmra.mrb[0].mxu0 %v6612
    %v6915 = vpop.f32.mrb[0].mxu0
    %v6916 = vadd.f32 0.0, %v6915
    %v6917 = vpop.f32.mrb[0].mxu0
    %6918 = vmatprep.mubr.f32.mxu0 0.0
    %6919 = vmatmul.mubr.f32.gmra.mrb[0].mxu0 %v6615
    %v6920 = vpop.f32.mrb[0].mxu0
    %v6921 = vadd.f32 0.0, %v6920
    %v6922 = vpop.f32.mrb[0].mxu0
    %6923 = vmatprep.mubr.f32.mxu0 0.0
    %6924 = vmatmul.mubr.f32.gmra.mrb[0].mxu0 %v6618
    %v6925 = vpop.f32.mrb[0].mxu0
    %v6926 = vadd.f32 0.0, %v6925
    %v6927 = vpop.f32.mrb[0].mxu0
    %6928 = vmatprep.mubr.f32.mxu0 0.0
    %6929 = vmatmul.mubr.f32.gmra.mrb[0].mxu0 %v6621
    %v6930 = vpop.f32.mrb[0].mxu0
    %v6931 = vadd.f32 0.0, %v6930
    %v6932 = vpop.f32.mrb[0].mxu0
    %6933 = vmatprep.mubr.f32.mxu0 0.0
    %6934 = vmatmul.mubr.f32.gmra.mrb[0].mxu0 %v6624
    %v6935 = vpop.f32.mrb[0].mxu0
    %v6936 = vadd.f32 0.0, %v6935
    %v6937 = vpop.f32.mrb[0].mxu0
    %6938 = vmatprep.mubr.f32.mxu0 0.0
    %6939 = vmatmul.mubr.f32.gmra.mrb[0].mxu0 %v6627
    %v6940 = vpop.f32.mrb[0].mxu0
    %v6941 = vadd.f32 0.0, %v6940
    %v6942 = vpop.f32.mrb[0].mxu0
    %6943 = vmatprep.mubr.f32.mxu0 0.0
    %6944 = vmatmul.mubr.f32.gmra.mrb[0].mxu0 %v6630
    %v6945 = vpop.f32.mrb[0].mxu0
    %v6946 = vadd.f32 0.0, %v6945
    %v6947 = vpop.f32.mrb[0].mxu0
    %6948 = vmatprep.mubr.f32.mxu0 0.0
    %6949 = vmatmul.mubr.f32.gmra.mrb[0].mxu0 %v6633
    %v6950 = vpop.f32.mrb[0].mxu0
    %v6951 = vadd.f32 0.0, %v6950
    %v6952 = vpop.f32.mrb[0].mxu0
    %6953 = vmatprep.mubr.f32.mxu0 0.0
    %6954 = vmatmul.mubr.f32.gmra.mrb[0].mxu0 %v6636
    %v6955 = vpop.f32.mrb[0].mxu0
    %v6956 = vadd.f32 0.0, %v6955
    %v6957 = vpop.f32.mrb[0].mxu0
    %6958 = vmatprep.mubr.f32.mxu0 0.0
    %6959 = vmatmul.mubr.f32.gmra.mrb[0].mxu0 %v6639
    %v6960 = vpop.f32.mrb[0].mxu0
    %v6961 = vadd.f32 0.0, %v6960
    %v6962 = vpop.f32.mrb[0].mxu0
    %6963 = vmatprep.mubr.f32.mxu0 0.0
    %6964 = vmatmul.mubr.f32.gmra.mrb[0].mxu0 %v6642
    %v6965 = vpop.f32.mrb[0].mxu0
    %v6966 = vadd.f32 0.0, %v6965
    %v6967 = vpop.f32.mrb[0].mxu0
    %6968 = vmatprep.mubr.f32.mxu0 0.0
    %6969 = vmatmul.mubr.f32.gmra.mrb[0].mxu0 %v6645
    %v6970 = vpop.f32.mrb[0].mxu0
    %v6971 = vadd.f32 0.0, %v6970
    %v6972 = vpop.f32.mrb[0].mxu0
    %6973 = vmatprep.mubr.f32.mxu0 0.0
    %6974 = vmatmul.mubr.f32.gmra.mrb[0].mxu0 %v6648
    %v6975 = vpop.f32.mrb[0].mxu0
    %v6976 = vadd.f32 0.0, %v6975
    %v6977 = vpop.f32.mrb[0].mxu0
    %6978 = vmatprep.mubr.f32.mxu0 0.0
    %6979 = vmatmul.mubr.f32.gmra.mrb[0].mxu0 %v6651
    %v6980 = vpop.f32.mrb[0].mxu0
    %v6981 = vadd.f32 0.0, %v6980
    %v6982 = vpop.f32.mrb[0].mxu0
    %6983 = vmatprep.mubr.f32.mxu0 0.0
    %6984 = vmatmul.mubr.f32.gmra.mrb[0].mxu0 %v6654
    %v6985 = vpop.f32.mrb[0].mxu0
    %v6986 = vadd.f32 0.0, %v6985
    %v6987 = vpop.f32.mrb[0].mxu0
    %6988 = vmatprep.mubr.f32.mxu0 0.0
    %6989 = vmatmul.mubr.f32.gmra.mrb[0].mxu0 %v6657
    %v6990 = vpop.f32.mrb[0].mxu0
    %v6991 = vadd.f32 0.0, %v6990
    %v6992 = vpop.f32.mrb[0].mxu0
    %6993 = vmatprep.mubr.f32.mxu0 0.0
    %6994 = vmatmul.mubr.f32.gmra.mrb[0].mxu0 %v6660
    %v6995 = vpop.f32.mrb[0].mxu0
    %v6996 = vadd.f32 0.0, %v6995
    %v6997 = vpop.f32.mrb[0].mxu0
    %6998 = vmatprep.mubr.f32.mxu0 0.0
    %6999 = vmatmul.mubr.f32.gmra.mrb[0].mxu0 %v6663
    %v7000 = vpop.f32.mrb[0].mxu0
    %v7001 = vadd.f32 0.0, %v7000
    %v7002 = vpop.f32.mrb[0].mxu0
    %7003 = vmatprep.mubr.f32.mxu0 0.0
    %7004 = vmatmul.mubr.f32.gmra.mrb[0].mxu0 %v6666
    %v7005 = vpop.f32.mrb[0].mxu0
    %v7006 = vadd.f32 0.0, %v7005
    %v7007 = vpop.f32.mrb[0].mxu0
    %7008 = vmatprep.mubr.f32.mxu0 0.0
    %7009 = vmatmul.mubr.f32.gmra.mrb[0].mxu0 %v6669
    %v7010 = vpop.f32.mrb[0].mxu0
    %v7011 = vadd.f32 0.0, %v7010
    %v7012 = vpop.f32.mrb[0].mxu0
    %7013 = vmatprep.mubr.f32.mxu0 0.0
    %7014 = vmatmul.mubr.f32.gmra.mrb[0].mxu0 %v6672
    %v7015 = vpop.f32.mrb[0].mxu0
    %v7016 = vadd.f32 0.0, %v7015
    %v7017 = vpop.f32.mrb[0].mxu0
    %7018 = vmatprep.mubr.f32.mxu0 0.0
    %7019 = vmatmul.mubr.f32.gmra.mrb[0].mxu0 %v6675
    %v7020 = vpop.f32.mrb[0].mxu0
    %v7021 = vadd.f32 0.0, %v7020
    %v7022 = vpop.f32.mrb[0].mxu0
    %7023 = vmatprep.mubr.f32.mxu0 0.0
    %7024 = vmatmul.mubr.f32.gmra.mrb[0].mxu0 %v6678
    %v7025 = vpop.f32.mrb[0].mxu0
    %v7026 = vadd.f32 0.0, %v7025
    %v7027 = vpop.f32.mrb[0].mxu0
    %7028 = vmatprep.mubr.f32.mxu0 0.0
    %7029 = vmatmul.mubr.f32.gmra.mrb[0].mxu0 %v6681
    %v7030 = vpop.f32.mrb[0].mxu0
    %v7031 = vadd.f32 0.0, %v7030
    %v7032 = vpop.f32.mrb[0].mxu0
    %7033 = vmatprep.mubr.f32.mxu0 0.0
    %7034 = vmatmul.mubr.f32.gmra.mrb[0].mxu0 %v6684
    %v7035 = vpop.f32.mrb[0].mxu0
    %v7036 = vadd.f32 0.0, %v7035
    %v7037 = vpop.f32.mrb[0].mxu0
    %7038 = vmatprep.mubr.f32.mxu0 0.0
    %7039 = vmatmul.mubr.f32.gmra.mrb[0].mxu0 %v6687
    %v7040 = vpop.f32.mrb[0].mxu0
    %v7041 = vadd.f32 0.0, %v7040
    %v7042 = vpop.f32.mrb[0].mxu0
    %7043 = vmatprep.mubr.f32.mxu0 0.0
    %7044 = vmatmul.mubr.f32.gmra.mrb[0].mxu0 %v6690
    %v7045 = vpop.f32.mrb[0].mxu0
    %v7046 = vadd.f32 0.0, %v7045
    %v7047 = vpop.f32.mrb[0].mxu0
    %7048 = vmatprep.mubr.f32.mxu0 0.0
    %7049 = vmatmul.mubr.f32.gmra.mrb[0].mxu0 %v6693
    %v7050 = vpop.f32.mrb[0].mxu0
    %v7051 = vadd.f32 0.0, %v7050
    %v7052 = vpop.f32.mrb[0].mxu0
    %7053 = vmatprep.mubr.f32.mxu0 0.0
    %7054 = vmatmul.mubr.f32.gmra.mrb[0].mxu0 %v6696
    %v7055 = vpop.f32.mrb[0].mxu0
    %v7056 = vadd.f32 0.0, %v7055
    %v7057 = vpop.f32.mrb[0].mxu0
    %7058 = vmatprep.mubr.f32.mxu0 0.0
    %7059 = vmatmul.mubr.f32.gmra.mrb[0].mxu0 %v6699
    %v7060 = vpop.f32.mrb[0].mxu0
    %v7061 = vadd.f32 0.0, %v7060
    %v7062 = vpop.f32.mrb[0].mxu0
    %7063 = vmatprep.mubr.f32.mxu0 0.0
    %7064 = vmatmul.mubr.f32.gmra.mrb[0].mxu0 %v6702
    %v7065 = vpop.f32.mrb[0].mxu0
    %v7066 = vadd.f32 0.0, %v7065
    %v7067 = vpop.f32.mrb[0].mxu0
    %7068 = vmatprep.mubr.f32.mxu0 0.0
    %7069 = vmatmul.mubr.f32.gmra.mrb[0].mxu0 %v6705
    %v7070 = vpop.f32.mrb[0].mxu0
    %v7071 = vadd.f32 0.0, %v7070
    %v7072 = vpop.f32.mrb[0].mxu0
    %7073 = vmatprep.mubr.f32.mxu0 0.0
    %7074 = vmatmul.mubr.f32.gmra.mrb[0].mxu0 %v6708
    %v7075 = vpop.f32.mrb[0].mxu0
    %v7076 = vadd.f32 0.0, %v7075
    %v7077 = vpop.f32.mrb[0].mxu0
    %7078 = vmatprep.mubr.f32.mxu0 0.0
    %7079 = vmatmul.mubr.f32.gmra.mrb[0].mxu0 %v6711
    %v7080 = vpop.f32.mrb[0].mxu0
    %v7081 = vadd.f32 0.0, %v7080
    %v7082 = vpop.f32.mrb[0].mxu0
    %7083 = vmatprep.mubr.f32.mxu0 0.0
    %7084 = vmatmul.mubr.f32.gmra.mrb[0].mxu0 %v6714
    %v7085 = vpop.f32.mrb[0].mxu0
    %v7086 = vadd.f32 0.0, %v7085
    %v7087 = vpop.f32.mrb[0].mxu0
    %7088 = vmatprep.mubr.f32.mxu0 0.0
    %7089 = vmatmul.mubr.f32.gmra.mrb[0].mxu0 %v6717
    %v7090 = vpop.f32.mrb[0].mxu0
    %v7091 = vadd.f32 0.0, %v7090
    %v7092 = vpop.f32.mrb[0].mxu0
    %7093 = vmatprep.mubr.f32.mxu0 0.0
    %7094 = vmatmul.mubr.f32.gmra.mrb[0].mxu0 %v6720
    %v7095 = vpop.f32.mrb[0].mxu0
    %v7096 = vadd.f32 0.0, %v7095
    %v7097 = vpop.f32.mrb[0].mxu0
    %7098 = vmatprep.mubr.f32.mxu0 0.0
    %7099 = vmatmul.mubr.f32.gmra.mrb[0].mxu0 %v6723
    %v7100 = vpop.f32.mrb[0].mxu0
    %v7101 = vadd.f32 0.0, %v7100
    %v7102 = vpop.f32.mrb[0].mxu0
    %7103 = vmatprep.mubr.f32.mxu0 0.0
    %7104 = vmatmul.mubr.f32.gmra.mrb[0].mxu0 %v6726
    %v7105 = vpop.f32.mrb[0].mxu0
    %v7106 = vadd.f32 0.0, %v7105
    %v7107 = vpop.f32.mrb[0].mxu0
    %7108 = vmatprep.mubr.f32.mxu0 0.0
    %7109 = vmatmul.mubr.f32.gmra.mrb[0].mxu0 %v6729
    %v7110 = vpop.f32.mrb[0].mxu0
    %v7111 = vadd.f32 0.0, %v7110
    %v7112 = vpop.f32.mrb[0].mxu0
    %7113 = vmatprep.mubr.f32.mxu0 0.0
    %7114 = vmatmul.mubr.f32.gmra.mrb[0].mxu0 %v6732
    %v7115 = vpop.f32.mrb[0].mxu0
    %v7116 = vadd.f32 0.0, %v7115
    %v7117 = vpop.f32.mrb[0].mxu0
    %7118 = vdwg.mxu0
    %v7119 = vadd.f32 %v6411, %v6801
    %v7120 = vadd.f32 %v6412, %v6806
    %v7121 = vadd.f32 %v6413, %v6811
    %v7122 = vadd.f32 %v6414, %v6816
    %v7123 = vadd.f32 %v6415, %v6821
    %v7124 = vadd.f32 %v6416, %v6826
    %v7125 = vadd.f32 %v6417, %v6831
    %v7126 = vadd.f32 %v6418, %v6836
    %v7127 = vadd.f32 %v6419, %v6841
    %v7128 = vadd.f32 %v6420, %v6846
    %v7129 = vadd.f32 %v6421, %v6851
    %v7130 = vadd.f32 %v6422, %v6856
    %v7131 = vadd.f32 %v6423, %v6861
    %v7132 = vadd.f32 %v6424, %v6866
    %v7133 = vadd.f32 %v6425, %v6871
    %v7134 = vadd.f32 %v6426, %v6876
    %v7135 = vadd.f32 %v6427, %v6881
    %v7136 = vadd.f32 %v6428, %v6886
    %v7137 = vadd.f32 %v6429, %v6891
    %v7138 = vadd.f32 %v6430, %v6896
    %v7139 = vadd.f32 %v6431, %v6901
    %v7140 = vadd.f32 %v6432, %v6906
    %v7141 = vadd.f32 %v6433, %v6911
    %v7142 = vadd.f32 %v6434, %v6916
    %v7143 = vadd.f32 %v6435, %v6921
    %v7144 = vadd.f32 %v6436, %v6926
    %v7145 = vadd.f32 %v6437, %v6931
    %v7146 = vadd.f32 %v6438, %v6936
    %v7147 = vadd.f32 %v6439, %v6941
    %v7148 = vadd.f32 %v6440, %v6946
    %v7149 = vadd.f32 %v6441, %v6951
    %v7150 = vadd.f32 %v6442, %v6956
    %v7151 = vadd.f32 %v6443, %v6961
    %v7152 = vadd.f32 %v6444, %v6966
    %v7153 = vadd.f32 %v6445, %v6971
    %v7154 = vadd.f32 %v6446, %v6976
    %v7155 = vadd.f32 %v6447, %v6981
    %v7156 = vadd.f32 %v6448, %v6986
    %v7157 = vadd.f32 %v6449, %v6991
    %v7158 = vadd.f32 %v6450, %v6996
    %v7159 = vadd.f32 %v6451, %v7001
    %v7160 = vadd.f32 %v6452, %v7006
    %v7161 = vadd.f32 %v6453, %v7011
    %v7162 = vadd.f32 %v6454, %v7016
    %v7163 = vadd.f32 %v6455, %v7021
    %v7164 = vadd.f32 %v6456, %v7026
    %v7165 = vadd.f32 %v6457, %v7031
    %v7166 = vadd.f32 %v6458, %v7036
    %v7167 = vadd.f32 %v6459, %v7041
    %v7168 = vadd.f32 %v6460, %v7046
    %v7169 = vadd.f32 %v6461, %v7051
    %v7170 = vadd.f32 %v6462, %v7056
    %v7171 = vadd.f32 %v6463, %v7061
    %v7172 = vadd.f32 %v6464, %v7066
    %v7173 = vadd.f32 %v6465, %v7071
    %v7174 = vadd.f32 %v6466, %v7076
    %v7175 = vadd.f32 %v6467, %v7081
    %v7176 = vadd.f32 %v6468, %v7086
    %v7177 = vadd.f32 %v6469, %v7091
    %v7178 = vadd.f32 %v6470, %v7096
    %v7179 = vadd.f32 %v6471, %v7101
    %v7180 = vadd.f32 %v6472, %v7106
    %v7181 = vadd.f32 %v6473, %v7111
    %v7182 = vadd.f32 %v6474, %v7116
    %v7183 = vld [vmem:[%s5766 + $0x9] sm:$0xff]
    %v7184 = vld [vmem:[%s5766 + $0x11] sm:$0xff]
    %v7185 = vld [vmem:[%s5766 + $0x29] sm:$0xff]
    %v7186 = vld [vmem:[%s5766 + $0x31] sm:$0xff]
    %v7187 = vld [vmem:[%s5766 + $0x49] sm:$0xff]
    %v7188 = vld [vmem:[%s5766 + $0x51] sm:$0xff]
    %v7189 = vld [vmem:[%s5766 + $0x69] sm:$0xff]
    %v7190 = vld [vmem:[%s5766 + $0x71] sm:$0xff]
    %v7191 = vld [vmem:[%s5766 + $0x89] sm:$0xff]
    %v7192 = vld [vmem:[%s5766 + $0x91] sm:$0xff]
    %v7193 = vld [vmem:[%s5766 + $0xa9] sm:$0xff]
    %v7194 = vld [vmem:[%s5766 + $0xb1] sm:$0xff]
    %v7195 = vld [vmem:[%s5766 + $0xc9] sm:$0xff]
    %v7196 = vld [vmem:[%s5766 + $0xd1] sm:$0xff]
    %v7197 = vld [vmem:[%s5766 + $0xe9] sm:$0xff]
    %v7198 = vld [vmem:[%s5766 + $0xf1] sm:$0xff]
    %v7199 = vld [vmem:[%s5766 + $0x109] sm:$0xff]
    %v7200 = vld [vmem:[%s5766 + $0x111] sm:$0xff]
    %v7201 = vld [vmem:[%s5766 + $0x129] sm:$0xff]
    %v7202 = vld [vmem:[%s5766 + $0x131] sm:$0xff]
    %v7203 = vld [vmem:[%s5766 + $0x149] sm:$0xff]
    %v7204 = vld [vmem:[%s5766 + $0x151] sm:$0xff]
    %v7205 = vld [vmem:[%s5766 + $0x169] sm:$0xff]
    %v7206 = vld [vmem:[%s5766 + $0x171] sm:$0xff]
    %v7207 = vld [vmem:[%s5766 + $0x189] sm:$0xff]
    %v7208 = vld [vmem:[%s5766 + $0x191] sm:$0xff]
    %v7209 = vld [vmem:[%s5766 + $0x1a9] sm:$0xff]
    %v7210 = vld [vmem:[%s5766 + $0x1b1] sm:$0xff]
    %v7211 = vld [vmem:[%s5766 + $0x1c9] sm:$0xff]
    %v7212 = vld [vmem:[%s5766 + $0x1d1] sm:$0xff]
    %v7213 = vld [vmem:[%s5766 + $0x1e9] sm:$0xff]
    %v7214 = vld [vmem:[%s5766 + $0x1f1] sm:$0xff]
    %v7215 = vld [vmem:[%s5766 + $0x249] sm:$0xff]
    %v7216 = vld [vmem:[%s5766 + $0x251] sm:$0xff]
    %v7217 = vld [vmem:[%s5766 + $0x269] sm:$0xff]
    %v7218 = vld [vmem:[%s5766 + $0x271] sm:$0xff]
    %v7219 = vld [vmem:[%s5766 + $0x289] sm:$0xff]
    %v7220 = vld [vmem:[%s5766 + $0x291] sm:$0xff]
    %v7221 = vld [vmem:[%s5766 + $0x2a9] sm:$0xff]
    %v7222 = vld [vmem:[%s5766 + $0x2b1] sm:$0xff]
    %v7223 = vld [vmem:[%s5766 + $0x2c9] sm:$0xff]
    %v7224 = vld [vmem:[%s5766 + $0x2d1] sm:$0xff]
    %v7225 = vld [vmem:[%s5766 + $0x2e9] sm:$0xff]
    %v7226 = vld [vmem:[%s5766 + $0x2f1] sm:$0xff]
    %v7227 = vld [vmem:[%s5766 + $0x309] sm:$0xff]
    %v7228 = vld [vmem:[%s5766 + $0x311] sm:$0xff]
    %v7229 = vld [vmem:[%s5766 + $0x329] sm:$0xff]
    %v7230 = vld [vmem:[%s5766 + $0x331] sm:$0xff]
    %v7231 = vld [vmem:[%s5766 + $0x349] sm:$0xff]
    %v7232 = vld [vmem:[%s5766 + $0x351] sm:$0xff]
    %v7233 = vld [vmem:[%s5766 + $0x369] sm:$0xff]
    %v7234 = vld [vmem:[%s5766 + $0x371] sm:$0xff]
    %v7235 = vld [vmem:[%s5766 + $0x389] sm:$0xff]
    %v7236 = vld [vmem:[%s5766 + $0x391] sm:$0xff]
    %v7237 = vld [vmem:[%s5766 + $0x3a9] sm:$0xff]
    %v7238 = vld [vmem:[%s5766 + $0x3b1] sm:$0xff]
    %v7239 = vld [vmem:[%s5766 + $0x3c9] sm:$0xff]
    %v7240 = vld [vmem:[%s5766 + $0x3d1] sm:$0xff]
    %v7241 = vld [vmem:[%s5766 + $0x3e9] sm:$0xff]
    %v7242 = vld [vmem:[%s5766 + $0x3f1] sm:$0xff]
    %v7243 = vld [vmem:[%s5766 + $0x409] sm:$0xff]
    %v7244 = vld [vmem:[%s5766 + $0x411] sm:$0xff]
    %v7245 = vld [vmem:[%s5766 + $0x429] sm:$0xff]
    %v7246 = vld [vmem:[%s5766 + $0x431] sm:$0xff]
    %s7247 = scalar_lea.vmem [#allocation6], 128
    %v7248 = vld [vmem:[%s7247] sm:$0xff]
    %v7249 = vld [vmem:[%s7247 + $0x8] sm:$0xff]
    %v7251 = vsel %vm701, %v7183, 0
    %v7254 = vsel %vm701, %v7184, 0
    %v7257 = vsel %vm701, %v7185, 0
    %v7260 = vsel %vm701, %v7186, 0
    %v7263 = vsel %vm701, %v7187, 0
    %v7266 = vsel %vm701, %v7188, 0
    %v7269 = vsel %vm701, %v7189, 0
    %v7272 = vsel %vm701, %v7190, 0
    %v7275 = vsel %vm701, %v7191, 0
    %v7278 = vsel %vm701, %v7192, 0
    %v7281 = vsel %vm701, %v7193, 0
    %v7284 = vsel %vm701, %v7194, 0
    %v7287 = vsel %vm701, %v7195, 0
    %v7290 = vsel %vm701, %v7196, 0
    %v7293 = vsel %vm701, %v7197, 0
    %v7296 = vsel %vm701, %v7198, 0
    %v7299 = vsel %vm701, %v7199, 0
    %v7302 = vsel %vm701, %v7200, 0
    %v7305 = vsel %vm701, %v7201, 0
    %v7308 = vsel %vm701, %v7202, 0
    %v7311 = vsel %vm701, %v7203, 0
    %v7314 = vsel %vm701, %v7204, 0
    %v7317 = vsel %vm701, %v7205, 0
    %v7320 = vsel %vm701, %v7206, 0
    %v7323 = vsel %vm701, %v7207, 0
    %v7326 = vsel %vm701, %v7208, 0
    %v7329 = vsel %vm701, %v7209, 0
    %v7332 = vsel %vm701, %v7210, 0
    %v7335 = vsel %vm701, %v7211, 0
    %v7338 = vsel %vm701, %v7212, 0
    %v7341 = vsel %vm701, %v7213, 0
    %v7344 = vsel %vm701, %v7214, 0
    %v7347 = vsel %vm701, %v7215, 0
    %v7350 = vsel %vm701, %v7216, 0
    %v7353 = vsel %vm701, %v7217, 0
    %v7356 = vsel %vm701, %v7218, 0
    %v7359 = vsel %vm701, %v7219, 0
    %v7362 = vsel %vm701, %v7220, 0
    %v7365 = vsel %vm701, %v7221, 0
    %v7368 = vsel %vm701, %v7222, 0
    %v7371 = vsel %vm701, %v7223, 0
    %v7374 = vsel %vm701, %v7224, 0
    %v7377 = vsel %vm701, %v7225, 0
    %v7380 = vsel %vm701, %v7226, 0
    %v7383 = vsel %vm701, %v7227, 0
    %v7386 = vsel %vm701, %v7228, 0
    %v7389 = vsel %vm701, %v7229, 0
    %v7392 = vsel %vm701, %v7230, 0
    %v7395 = vsel %vm701, %v7231, 0
    %v7398 = vsel %vm701, %v7232, 0
    %v7401 = vsel %vm701, %v7233, 0
    %v7404 = vsel %vm701, %v7234, 0
    %v7407 = vsel %vm701, %v7235, 0
    %v7410 = vsel %vm701, %v7236, 0
    %v7413 = vsel %vm701, %v7237, 0
    %v7416 = vsel %vm701, %v7238, 0
    %v7419 = vsel %vm701, %v7239, 0
    %v7422 = vsel %vm701, %v7240, 0
    %v7425 = vsel %vm701, %v7241, 0
    %v7428 = vsel %vm701, %v7242, 0
    %v7431 = vsel %vm701, %v7243, 0
    %v7434 = vsel %vm701, %v7244, 0
    %v7437 = vsel %vm701, %v7245, 0
    %v7440 = vsel %vm701, %v7246, 0
    %7442 = vmatprep.subr.mxu0 0.0
    %7443 = vmatpush1.msra.mxu0 %v7248
    %7444 = vmatprep.subr.mxu0 0.0
    %7445 = vmatpush1.msra.mxu0 %v7249
    %7446 = vmatprep.subr.mxu0 0.0
    %7447 = vmatpush1.msra.mxu0 0.0
    %7448 = vmatprep.subr.mxu0 0.0
    %7449 = vmatpush1.msra.mxu0 0.0
    %7450 = vmatprep.subr.mxu0 0.0
    %7451 = vmatpush1.msra.mxu0 0.0
    %7452 = vmatprep.subr.mxu0 0.0
    %7453 = vmatpush1.msra.mxu0 0.0
    %7454 = vmatprep.subr.mxu0 0.0
    %7455 = vmatpush1.msra.mxu0 0.0
    %7456 = vmatprep.subr.mxu0 0.0
    %7457 = vmatpush1.msra.mxu0 0.0
    %7458 = vmatprep.subr.mxu0 0.0
    %7459 = vmatpush1.msra.mxu0 0.0
    %7460 = vmatprep.subr.mxu0 0.0
    %7461 = vmatpush1.msra.mxu0 0.0
    %7462 = vmatprep.subr.mxu0 0.0
    %7463 = vmatpush1.msra.mxu0 0.0
    %7464 = vmatprep.subr.mxu0 0.0
    %7465 = vmatpush1.msra.mxu0 0.0
    %7466 = vmatprep.subr.mxu0 0.0
    %7467 = vmatpush1.msra.mxu0 0.0
    %7468 = vmatprep.subr.mxu0 0.0
    %7469 = vmatpush1.msra.mxu0 0.0
    %7470 = vmatprep.subr.mxu0 0.0
    %7471 = vmatpush1.msra.mxu0 0.0
    %7472 = vmatprep.subr.mxu0 0.0
    %7473 = vmatpush1.msra.mxu0 0.0
    %7474 = vmatprep.subr.mxu0 0.0
    %7475 = vmatpush1.msra.mxu0 0.0
    %7476 = vmatprep.subr.mxu0 0.0
    %7477 = vmatpush1.msra.mxu0 0.0
    %7478 = vmatprep.subr.mxu0 0.0
    %7479 = vmatpush1.msra.mxu0 0.0
    %7480 = vmatprep.subr.mxu0 0.0
    %7481 = vmatpush1.msra.mxu0 0.0
    %7482 = vmatprep.subr.mxu0 0.0
    %7483 = vmatpush1.msra.mxu0 0.0
    %7484 = vmatprep.subr.mxu0 0.0
    %7485 = vmatpush1.msra.mxu0 0.0
    %7486 = vmatprep.subr.mxu0 0.0
    %7487 = vmatpush1.msra.mxu0 0.0
    %7488 = vmatprep.subr.mxu0 0.0
    %7489 = vmatpush1.msra.mxu0 0.0
    %7490 = vmatprep.subr.mxu0 0.0
    %7491 = vmatpush1.msra.mxu0 0.0
    %7492 = vmatprep.subr.mxu0 0.0
    %7493 = vmatpush1.msra.mxu0 0.0
    %7494 = vmatprep.subr.mxu0 0.0
    %7495 = vmatpush1.msra.mxu0 0.0
    %7496 = vmatprep.subr.mxu0 0.0
    %7497 = vmatpush1.msra.mxu0 0.0
    %7498 = vmatprep.subr.mxu0 0.0
    %7499 = vmatpush1.msra.mxu0 0.0
    %7500 = vmatprep.subr.mxu0 0.0
    %7501 = vmatpush1.msra.mxu0 0.0
    %7502 = vmatprep.subr.mxu0 0.0
    %7503 = vmatpush1.msra.mxu0 0.0
    %7504 = vmatprep.subr.mxu0 0.0
    %7505 = vmatpush1.msra.mxu0 0.0
    %7506 = vmatprep.mubr.f32.mxu0 0.0
    %7507 = vmatmul.mubr.f32.gmra.mrb[0].mxu0 %v7251
    %v7508 = vpop.f32.mrb[0].mxu0
    %v7509 = vadd.f32 0.0, %v7508
    %v7510 = vpop.f32.mrb[0].mxu0
    %7511 = vmatprep.mubr.f32.mxu0 0.0
    %7512 = vmatmul.mubr.f32.gmra.mrb[0].mxu0 %v7254
    %v7513 = vpop.f32.mrb[0].mxu0
    %v7514 = vadd.f32 0.0, %v7513
    %v7515 = vpop.f32.mrb[0].mxu0
    %7516 = vmatprep.mubr.f32.mxu0 0.0
    %7517 = vmatmul.mubr.f32.gmra.mrb[0].mxu0 %v7257
    %v7518 = vpop.f32.mrb[0].mxu0
    %v7519 = vadd.f32 0.0, %v7518
    %v7520 = vpop.f32.mrb[0].mxu0
    %7521 = vmatprep.mubr.f32.mxu0 0.0
    %7522 = vmatmul.mubr.f32.gmra.mrb[0].mxu0 %v7260
    %v7523 = vpop.f32.mrb[0].mxu0
    %v7524 = vadd.f32 0.0, %v7523
    %v7525 = vpop.f32.mrb[0].mxu0
    %7526 = vmatprep.mubr.f32.mxu0 0.0
    %7527 = vmatmul.mubr.f32.gmra.mrb[0].mxu0 %v7263
    %v7528 = vpop.f32.mrb[0].mxu0
    %v7529 = vadd.f32 0.0, %v7528
    %v7530 = vpop.f32.mrb[0].mxu0
    %7531 = vmatprep.mubr.f32.mxu0 0.0
    %7532 = vmatmul.mubr.f32.gmra.mrb[0].mxu0 %v7266
    %v7533 = vpop.f32.mrb[0].mxu0
    %v7534 = vadd.f32 0.0, %v7533
    %v7535 = vpop.f32.mrb[0].mxu0
    %7536 = vmatprep.mubr.f32.mxu0 0.0
    %7537 = vmatmul.mubr.f32.gmra.mrb[0].mxu0 %v7269
    %v7538 = vpop.f32.mrb[0].mxu0
    %v7539 = vadd.f32 0.0, %v7538
    %v7540 = vpop.f32.mrb[0].mxu0
    %7541 = vmatprep.mubr.f32.mxu0 0.0
    %7542 = vmatmul.mubr.f32.gmra.mrb[0].mxu0 %v7272
    %v7543 = vpop.f32.mrb[0].mxu0
    %v7544 = vadd.f32 0.0, %v7543
    %v7545 = vpop.f32.mrb[0].mxu0
    %7546 = vmatprep.mubr.f32.mxu0 0.0
    %7547 = vmatmul.mubr.f32.gmra.mrb[0].mxu0 %v7275
    %v7548 = vpop.f32.mrb[0].mxu0
    %v7549 = vadd.f32 0.0, %v7548
    %v7550 = vpop.f32.mrb[0].mxu0
    %7551 = vmatprep.mubr.f32.mxu0 0.0
    %7552 = vmatmul.mubr.f32.gmra.mrb[0].mxu0 %v7278
    %v7553 = vpop.f32.mrb[0].mxu0
    %v7554 = vadd.f32 0.0, %v7553
    %v7555 = vpop.f32.mrb[0].mxu0
    %7556 = vmatprep.mubr.f32.mxu0 0.0
    %7557 = vmatmul.mubr.f32.gmra.mrb[0].mxu0 %v7281
    %v7558 = vpop.f32.mrb[0].mxu0
    %v7559 = vadd.f32 0.0, %v7558
    %v7560 = vpop.f32.mrb[0].mxu0
    %7561 = vmatprep.mubr.f32.mxu0 0.0
    %7562 = vmatmul.mubr.f32.gmra.mrb[0].mxu0 %v7284
    %v7563 = vpop.f32.mrb[0].mxu0
    %v7564 = vadd.f32 0.0, %v7563
    %v7565 = vpop.f32.mrb[0].mxu0
    %7566 = vmatprep.mubr.f32.mxu0 0.0
    %7567 = vmatmul.mubr.f32.gmra.mrb[0].mxu0 %v7287
    %v7568 = vpop.f32.mrb[0].mxu0
    %v7569 = vadd.f32 0.0, %v7568
    %v7570 = vpop.f32.mrb[0].mxu0
    %7571 = vmatprep.mubr.f32.mxu0 0.0
    %7572 = vmatmul.mubr.f32.gmra.mrb[0].mxu0 %v7290
    %v7573 = vpop.f32.mrb[0].mxu0
    %v7574 = vadd.f32 0.0, %v7573
    %v7575 = vpop.f32.mrb[0].mxu0
    %7576 = vmatprep.mubr.f32.mxu0 0.0
    %7577 = vmatmul.mubr.f32.gmra.mrb[0].mxu0 %v7293
    %v7578 = vpop.f32.mrb[0].mxu0
    %v7579 = vadd.f32 0.0, %v7578
    %v7580 = vpop.f32.mrb[0].mxu0
    %7581 = vmatprep.mubr.f32.mxu0 0.0
    %7582 = vmatmul.mubr.f32.gmra.mrb[0].mxu0 %v7296
    %v7583 = vpop.f32.mrb[0].mxu0
    %v7584 = vadd.f32 0.0, %v7583
    %v7585 = vpop.f32.mrb[0].mxu0
    %7586 = vmatprep.mubr.f32.mxu0 0.0
    %7587 = vmatmul.mubr.f32.gmra.mrb[0].mxu0 %v7299
    %v7588 = vpop.f32.mrb[0].mxu0
    %v7589 = vadd.f32 0.0, %v7588
    %v7590 = vpop.f32.mrb[0].mxu0
    %7591 = vmatprep.mubr.f32.mxu0 0.0
    %7592 = vmatmul.mubr.f32.gmra.mrb[0].mxu0 %v7302
    %v7593 = vpop.f32.mrb[0].mxu0
    %v7594 = vadd.f32 0.0, %v7593
    %v7595 = vpop.f32.mrb[0].mxu0
    %7596 = vmatprep.mubr.f32.mxu0 0.0
    %7597 = vmatmul.mubr.f32.gmra.mrb[0].mxu0 %v7305
    %v7598 = vpop.f32.mrb[0].mxu0
    %v7599 = vadd.f32 0.0, %v7598
    %v7600 = vpop.f32.mrb[0].mxu0
    %7601 = vmatprep.mubr.f32.mxu0 0.0
    %7602 = vmatmul.mubr.f32.gmra.mrb[0].mxu0 %v7308
    %v7603 = vpop.f32.mrb[0].mxu0
    %v7604 = vadd.f32 0.0, %v7603
    %v7605 = vpop.f32.mrb[0].mxu0
    %7606 = vmatprep.mubr.f32.mxu0 0.0
    %7607 = vmatmul.mubr.f32.gmra.mrb[0].mxu0 %v7311
    %v7608 = vpop.f32.mrb[0].mxu0
    %v7609 = vadd.f32 0.0, %v7608
    %v7610 = vpop.f32.mrb[0].mxu0
    %7611 = vmatprep.mubr.f32.mxu0 0.0
    %7612 = vmatmul.mubr.f32.gmra.mrb[0].mxu0 %v7314
    %v7613 = vpop.f32.mrb[0].mxu0
    %v7614 = vadd.f32 0.0, %v7613
    %v7615 = vpop.f32.mrb[0].mxu0
    %7616 = vmatprep.mubr.f32.mxu0 0.0
    %7617 = vmatmul.mubr.f32.gmra.mrb[0].mxu0 %v7317
    %v7618 = vpop.f32.mrb[0].mxu0
    %v7619 = vadd.f32 0.0, %v7618
    %v7620 = vpop.f32.mrb[0].mxu0
    %7621 = vmatprep.mubr.f32.mxu0 0.0
    %7622 = vmatmul.mubr.f32.gmra.mrb[0].mxu0 %v7320
    %v7623 = vpop.f32.mrb[0].mxu0
    %v7624 = vadd.f32 0.0, %v7623
    %v7625 = vpop.f32.mrb[0].mxu0
    %7626 = vmatprep.mubr.f32.mxu0 0.0
    %7627 = vmatmul.mubr.f32.gmra.mrb[0].mxu0 %v7323
    %v7628 = vpop.f32.mrb[0].mxu0
    %v7629 = vadd.f32 0.0, %v7628
    %v7630 = vpop.f32.mrb[0].mxu0
    %7631 = vmatprep.mubr.f32.mxu0 0.0
    %7632 = vmatmul.mubr.f32.gmra.mrb[0].mxu0 %v7326
    %v7633 = vpop.f32.mrb[0].mxu0
    %v7634 = vadd.f32 0.0, %v7633
    %v7635 = vpop.f32.mrb[0].mxu0
    %7636 = vmatprep.mubr.f32.mxu0 0.0
    %7637 = vmatmul.mubr.f32.gmra.mrb[0].mxu0 %v7329
    %v7638 = vpop.f32.mrb[0].mxu0
    %v7639 = vadd.f32 0.0, %v7638
    %v7640 = vpop.f32.mrb[0].mxu0
    %7641 = vmatprep.mubr.f32.mxu0 0.0
    %7642 = vmatmul.mubr.f32.gmra.mrb[0].mxu0 %v7332
    %v7643 = vpop.f32.mrb[0].mxu0
    %v7644 = vadd.f32 0.0, %v7643
    %v7645 = vpop.f32.mrb[0].mxu0
    %7646 = vmatprep.mubr.f32.mxu0 0.0
    %7647 = vmatmul.mubr.f32.gmra.mrb[0].mxu0 %v7335
    %v7648 = vpop.f32.mrb[0].mxu0
    %v7649 = vadd.f32 0.0, %v7648
    %v7650 = vpop.f32.mrb[0].mxu0
    %7651 = vmatprep.mubr.f32.mxu0 0.0
    %7652 = vmatmul.mubr.f32.gmra.mrb[0].mxu0 %v7338
    %v7653 = vpop.f32.mrb[0].mxu0
    %v7654 = vadd.f32 0.0, %v7653
    %v7655 = vpop.f32.mrb[0].mxu0
    %7656 = vmatprep.mubr.f32.mxu0 0.0
    %7657 = vmatmul.mubr.f32.gmra.mrb[0].mxu0 %v7341
    %v7658 = vpop.f32.mrb[0].mxu0
    %v7659 = vadd.f32 0.0, %v7658
    %v7660 = vpop.f32.mrb[0].mxu0
    %7661 = vmatprep.mubr.f32.mxu0 0.0
    %7662 = vmatmul.mubr.f32.gmra.mrb[0].mxu0 %v7344
    %v7663 = vpop.f32.mrb[0].mxu0
    %v7664 = vadd.f32 0.0, %v7663
    %v7665 = vpop.f32.mrb[0].mxu0
    %7666 = vmatprep.mubr.f32.mxu0 0.0
    %7667 = vmatmul.mubr.f32.gmra.mrb[0].mxu0 %v7347
    %v7668 = vpop.f32.mrb[0].mxu0
    %v7669 = vadd.f32 0.0, %v7668
    %v7670 = vpop.f32.mrb[0].mxu0
    %7671 = vmatprep.mubr.f32.mxu0 0.0
    %7672 = vmatmul.mubr.f32.gmra.mrb[0].mxu0 %v7350
    %v7673 = vpop.f32.mrb[0].mxu0
    %v7674 = vadd.f32 0.0, %v7673
    %v7675 = vpop.f32.mrb[0].mxu0
    %7676 = vmatprep.mubr.f32.mxu0 0.0
    %7677 = vmatmul.mubr.f32.gmra.mrb[0].mxu0 %v7353
    %v7678 = vpop.f32.mrb[0].mxu0
    %v7679 = vadd.f32 0.0, %v7678
    %v7680 = vpop.f32.mrb[0].mxu0
    %7681 = vmatprep.mubr.f32.mxu0 0.0
    %7682 = vmatmul.mubr.f32.gmra.mrb[0].mxu0 %v7356
    %v7683 = vpop.f32.mrb[0].mxu0
    %v7684 = vadd.f32 0.0, %v7683
    %v7685 = vpop.f32.mrb[0].mxu0
    %7686 = vmatprep.mubr.f32.mxu0 0.0
    %7687 = vmatmul.mubr.f32.gmra.mrb[0].mxu0 %v7359
    %v7688 = vpop.f32.mrb[0].mxu0
    %v7689 = vadd.f32 0.0, %v7688
    %v7690 = vpop.f32.mrb[0].mxu0
    %7691 = vmatprep.mubr.f32.mxu0 0.0
    %7692 = vmatmul.mubr.f32.gmra.mrb[0].mxu0 %v7362
    %v7693 = vpop.f32.mrb[0].mxu0
    %v7694 = vadd.f32 0.0, %v7693
    %v7695 = vpop.f32.mrb[0].mxu0
    %7696 = vmatprep.mubr.f32.mxu0 0.0
    %7697 = vmatmul.mubr.f32.gmra.mrb[0].mxu0 %v7365
    %v7698 = vpop.f32.mrb[0].mxu0
    %v7699 = vadd.f32 0.0, %v7698
    %v7700 = vpop.f32.mrb[0].mxu0
    %7701 = vmatprep.mubr.f32.mxu0 0.0
    %7702 = vmatmul.mubr.f32.gmra.mrb[0].mxu0 %v7368
    %v7703 = vpop.f32.mrb[0].mxu0
    %v7704 = vadd.f32 0.0, %v7703
    %v7705 = vpop.f32.mrb[0].mxu0
    %7706 = vmatprep.mubr.f32.mxu0 0.0
    %7707 = vmatmul.mubr.f32.gmra.mrb[0].mxu0 %v7371
    %v7708 = vpop.f32.mrb[0].mxu0
    %v7709 = vadd.f32 0.0, %v7708
    %v7710 = vpop.f32.mrb[0].mxu0
    %7711 = vmatprep.mubr.f32.mxu0 0.0
    %7712 = vmatmul.mubr.f32.gmra.mrb[0].mxu0 %v7374
    %v7713 = vpop.f32.mrb[0].mxu0
    %v7714 = vadd.f32 0.0, %v7713
    %v7715 = vpop.f32.mrb[0].mxu0
    %7716 = vmatprep.mubr.f32.mxu0 0.0
    %7717 = vmatmul.mubr.f32.gmra.mrb[0].mxu0 %v7377
    %v7718 = vpop.f32.mrb[0].mxu0
    %v7719 = vadd.f32 0.0, %v7718
    %v7720 = vpop.f32.mrb[0].mxu0
    %7721 = vmatprep.mubr.f32.mxu0 0.0
    %7722 = vmatmul.mubr.f32.gmra.mrb[0].mxu0 %v7380
    %v7723 = vpop.f32.mrb[0].mxu0
    %v7724 = vadd.f32 0.0, %v7723
    %v7725 = vpop.f32.mrb[0].mxu0
    %7726 = vmatprep.mubr.f32.mxu0 0.0
    %7727 = vmatmul.mubr.f32.gmra.mrb[0].mxu0 %v7383
    %v7728 = vpop.f32.mrb[0].mxu0
    %v7729 = vadd.f32 0.0, %v7728
    %v7730 = vpop.f32.mrb[0].mxu0
    %7731 = vmatprep.mubr.f32.mxu0 0.0
    %7732 = vmatmul.mubr.f32.gmra.mrb[0].mxu0 %v7386
    %v7733 = vpop.f32.mrb[0].mxu0
    %v7734 = vadd.f32 0.0, %v7733
    %v7735 = vpop.f32.mrb[0].mxu0
    %7736 = vmatprep.mubr.f32.mxu0 0.0
    %7737 = vmatmul.mubr.f32.gmra.mrb[0].mxu0 %v7389
    %v7738 = vpop.f32.mrb[0].mxu0
    %v7739 = vadd.f32 0.0, %v7738
    %v7740 = vpop.f32.mrb[0].mxu0
    %7741 = vmatprep.mubr.f32.mxu0 0.0
    %7742 = vmatmul.mubr.f32.gmra.mrb[0].mxu0 %v7392
    %v7743 = vpop.f32.mrb[0].mxu0
    %v7744 = vadd.f32 0.0, %v7743
    %v7745 = vpop.f32.mrb[0].mxu0
    %7746 = vmatprep.mubr.f32.mxu0 0.0
    %7747 = vmatmul.mubr.f32.gmra.mrb[0].mxu0 %v7395
    %v7748 = vpop.f32.mrb[0].mxu0
    %v7749 = vadd.f32 0.0, %v7748
    %v7750 = vpop.f32.mrb[0].mxu0
    %7751 = vmatprep.mubr.f32.mxu0 0.0
    %7752 = vmatmul.mubr.f32.gmra.mrb[0].mxu0 %v7398
    %v7753 = vpop.f32.mrb[0].mxu0
    %v7754 = vadd.f32 0.0, %v7753
    %v7755 = vpop.f32.mrb[0].mxu0
    %7756 = vmatprep.mubr.f32.mxu0 0.0
    %7757 = vmatmul.mubr.f32.gmra.mrb[0].mxu0 %v7401
    %v7758 = vpop.f32.mrb[0].mxu0
    %v7759 = vadd.f32 0.0, %v7758
    %v7760 = vpop.f32.mrb[0].mxu0
    %7761 = vmatprep.mubr.f32.mxu0 0.0
    %7762 = vmatmul.mubr.f32.gmra.mrb[0].mxu0 %v7404
    %v7763 = vpop.f32.mrb[0].mxu0
    %v7764 = vadd.f32 0.0, %v7763
    %v7765 = vpop.f32.mrb[0].mxu0
    %7766 = vmatprep.mubr.f32.mxu0 0.0
    %7767 = vmatmul.mubr.f32.gmra.mrb[0].mxu0 %v7407
    %v7768 = vpop.f32.mrb[0].mxu0
    %v7769 = vadd.f32 0.0, %v7768
    %v7770 = vpop.f32.mrb[0].mxu0
    %7771 = vmatprep.mubr.f32.mxu0 0.0
    %7772 = vmatmul.mubr.f32.gmra.mrb[0].mxu0 %v7410
    %v7773 = vpop.f32.mrb[0].mxu0
    %v7774 = vadd.f32 0.0, %v7773
    %v7775 = vpop.f32.mrb[0].mxu0
    %7776 = vmatprep.mubr.f32.mxu0 0.0
    %7777 = vmatmul.mubr.f32.gmra.mrb[0].mxu0 %v7413
    %v7778 = vpop.f32.mrb[0].mxu0
    %v7779 = vadd.f32 0.0, %v7778
    %v7780 = vpop.f32.mrb[0].mxu0
    %7781 = vmatprep.mubr.f32.mxu0 0.0
    %7782 = vmatmul.mubr.f32.gmra.mrb[0].mxu0 %v7416
    %v7783 = vpop.f32.mrb[0].mxu0
    %v7784 = vadd.f32 0.0, %v7783
    %v7785 = vpop.f32.mrb[0].mxu0
    %7786 = vmatprep.mubr.f32.mxu0 0.0
    %7787 = vmatmul.mubr.f32.gmra.mrb[0].mxu0 %v7419
    %v7788 = vpop.f32.mrb[0].mxu0
    %v7789 = vadd.f32 0.0, %v7788
    %v7790 = vpop.f32.mrb[0].mxu0
    %7791 = vmatprep.mubr.f32.mxu0 0.0
    %7792 = vmatmul.mubr.f32.gmra.mrb[0].mxu0 %v7422
    %v7793 = vpop.f32.mrb[0].mxu0
    %v7794 = vadd.f32 0.0, %v7793
    %v7795 = vpop.f32.mrb[0].mxu0
    %7796 = vmatprep.mubr.f32.mxu0 0.0
    %7797 = vmatmul.mubr.f32.gmra.mrb[0].mxu0 %v7425
    %v7798 = vpop.f32.mrb[0].mxu0
    %v7799 = vadd.f32 0.0, %v7798
    %v7800 = vpop.f32.mrb[0].mxu0
    %7801 = vmatprep.mubr.f32.mxu0 0.0
    %7802 = vmatmul.mubr.f32.gmra.mrb[0].mxu0 %v7428
    %v7803 = vpop.f32.mrb[0].mxu0
    %v7804 = vadd.f32 0.0, %v7803
    %v7805 = vpop.f32.mrb[0].mxu0
    %7806 = vmatprep.mubr.f32.mxu0 0.0
    %7807 = vmatmul.mubr.f32.gmra.mrb[0].mxu0 %v7431
    %v7808 = vpop.f32.mrb[0].mxu0
    %v7809 = vadd.f32 0.0, %v7808
    %v7810 = vpop.f32.mrb[0].mxu0
    %7811 = vmatprep.mubr.f32.mxu0 0.0
    %7812 = vmatmul.mubr.f32.gmra.mrb[0].mxu0 %v7434
    %v7813 = vpop.f32.mrb[0].mxu0
    %v7814 = vadd.f32 0.0, %v7813
    %v7815 = vpop.f32.mrb[0].mxu0
    %7816 = vmatprep.mubr.f32.mxu0 0.0
    %7817 = vmatmul.mubr.f32.gmra.mrb[0].mxu0 %v7437
    %v7818 = vpop.f32.mrb[0].mxu0
    %v7819 = vadd.f32 0.0, %v7818
    %v7820 = vpop.f32.mrb[0].mxu0
    %7821 = vmatprep.mubr.f32.mxu0 0.0
    %7822 = vmatmul.mubr.f32.gmra.mrb[0].mxu0 %v7440
    %v7823 = vpop.f32.mrb[0].mxu0
    %v7824 = vadd.f32 0.0, %v7823
    %v7825 = vpop.f32.mrb[0].mxu0
    %7826 = vdwg.mxu0
    %v7827 = vadd.f32 %v7119, %v7509
    %v7828 = vadd.f32 %v7120, %v7514
    %v7829 = vadd.f32 %v7121, %v7519
    %v7830 = vadd.f32 %v7122, %v7524
    %v7831 = vadd.f32 %v7123, %v7529
    %v7832 = vadd.f32 %v7124, %v7534
    %v7833 = vadd.f32 %v7125, %v7539
    %v7834 = vadd.f32 %v7126, %v7544
    %v7835 = vadd.f32 %v7127, %v7549
    %v7836 = vadd.f32 %v7128, %v7554
    %v7837 = vadd.f32 %v7129, %v7559
    %v7838 = vadd.f32 %v7130, %v7564
    %v7839 = vadd.f32 %v7131, %v7569
    %v7840 = vadd.f32 %v7132, %v7574
    %v7841 = vadd.f32 %v7133, %v7579
    %v7842 = vadd.f32 %v7134, %v7584
    %v7843 = vadd.f32 %v7135, %v7589
    %v7844 = vadd.f32 %v7136, %v7594
    %v7845 = vadd.f32 %v7137, %v7599
    %v7846 = vadd.f32 %v7138, %v7604
    %v7847 = vadd.f32 %v7139, %v7609
    %v7848 = vadd.f32 %v7140, %v7614
    %v7849 = vadd.f32 %v7141, %v7619
    %v7850 = vadd.f32 %v7142, %v7624
    %v7851 = vadd.f32 %v7143, %v7629
    %v7852 = vadd.f32 %v7144, %v7634
    %v7853 = vadd.f32 %v7145, %v7639
    %v7854 = vadd.f32 %v7146, %v7644
    %v7855 = vadd.f32 %v7147, %v7649
    %v7856 = vadd.f32 %v7148, %v7654
    %v7857 = vadd.f32 %v7149, %v7659
    %v7858 = vadd.f32 %v7150, %v7664
    %v7859 = vadd.f32 %v7151, %v7669
    %v7860 = vadd.f32 %v7152, %v7674
    %v7861 = vadd.f32 %v7153, %v7679
    %v7862 = vadd.f32 %v7154, %v7684
    %v7863 = vadd.f32 %v7155, %v7689
    %v7864 = vadd.f32 %v7156, %v7694
    %v7865 = vadd.f32 %v7157, %v7699
    %v7866 = vadd.f32 %v7158, %v7704
    %v7867 = vadd.f32 %v7159, %v7709
    %v7868 = vadd.f32 %v7160, %v7714
    %v7869 = vadd.f32 %v7161, %v7719
    %v7870 = vadd.f32 %v7162, %v7724
    %v7871 = vadd.f32 %v7163, %v7729
    %v7872 = vadd.f32 %v7164, %v7734
    %v7873 = vadd.f32 %v7165, %v7739
    %v7874 = vadd.f32 %v7166, %v7744
    %v7875 = vadd.f32 %v7167, %v7749
    %v7876 = vadd.f32 %v7168, %v7754
    %v7877 = vadd.f32 %v7169, %v7759
    %v7878 = vadd.f32 %v7170, %v7764
    %v7879 = vadd.f32 %v7171, %v7769
    %v7880 = vadd.f32 %v7172, %v7774
    %v7881 = vadd.f32 %v7173, %v7779
    %v7882 = vadd.f32 %v7174, %v7784
    %v7883 = vadd.f32 %v7175, %v7789
    %v7884 = vadd.f32 %v7176, %v7794
    %v7885 = vadd.f32 %v7177, %v7799
    %v7886 = vadd.f32 %v7178, %v7804
    %v7887 = vadd.f32 %v7179, %v7809
    %v7888 = vadd.f32 %v7180, %v7814
    %v7889 = vadd.f32 %v7181, %v7819
    %v7890 = vadd.f32 %v7182, %v7824
    %v7891 = vsel %vm123, %v7827, 0.0
    %v7892 = vsel %vm123, %v7828, 0.0
    %v7893 = vadd.f32 %v7891, %v7892
    %v7894 = vsel %vm123, %v7829, 0.0
    %v7895 = vadd.f32 %v7893, %v7894
    %v7896 = vsel %vm123, %v7830, 0.0
    %v7897 = vadd.f32 %v7895, %v7896
    %v7898 = vsel %vm123, %v7831, 0.0
    %v7899 = vadd.f32 %v7897, %v7898
    %v7900 = vsel %vm123, %v7832, 0.0
    %v7901 = vadd.f32 %v7899, %v7900
    %v7902 = vsel %vm123, %v7833, 0.0
    %v7903 = vadd.f32 %v7901, %v7902
    %v7904 = vsel %vm123, %v7834, 0.0
    %v7905 = vadd.f32 %v7903, %v7904
    %v7906 = vsel %vm123, %v7835, 0.0
    %v7907 = vadd.f32 %v7905, %v7906
    %v7908 = vsel %vm123, %v7836, 0.0
    %v7909 = vadd.f32 %v7907, %v7908
    %v7910 = vsel %vm123, %v7837, 0.0
    %v7911 = vadd.f32 %v7909, %v7910
    %v7912 = vsel %vm123, %v7838, 0.0
    %v7913 = vadd.f32 %v7911, %v7912
    %v7914 = vsel %vm123, %v7839, 0.0
    %v7915 = vadd.f32 %v7913, %v7914
    %v7916 = vsel %vm123, %v7840, 0.0
    %v7917 = vadd.f32 %v7915, %v7916
    %v7918 = vsel %vm123, %v7841, 0.0
    %v7919 = vadd.f32 %v7917, %v7918
    %v7920 = vsel %vm123, %v7842, 0.0
    %v7921 = vadd.f32 %v7919, %v7920
    %v7922 = vsel %vm123, %v7843, 0.0
    %v7923 = vadd.f32 %v7921, %v7922
    %v7924 = vsel %vm123, %v7844, 0.0
    %v7925 = vadd.f32 %v7923, %v7924
    %v7926 = vsel %vm123, %v7845, 0.0
    %v7927 = vadd.f32 %v7925, %v7926
    %v7928 = vsel %vm123, %v7846, 0.0
    %v7929 = vadd.f32 %v7927, %v7928
    %v7930 = vsel %vm123, %v7847, 0.0
    %v7931 = vadd.f32 %v7929, %v7930
    %v7932 = vsel %vm123, %v7848, 0.0
    %v7933 = vadd.f32 %v7931, %v7932
    %v7934 = vsel %vm123, %v7849, 0.0
    %v7935 = vadd.f32 %v7933, %v7934
    %v7936 = vsel %vm123, %v7850, 0.0
    %v7937 = vadd.f32 %v7935, %v7936
    %v7938 = vsel %vm123, %v7851, 0.0
    %v7939 = vadd.f32 %v7937, %v7938
    %v7940 = vsel %vm123, %v7852, 0.0
    %v7941 = vadd.f32 %v7939, %v7940
    %v7942 = vsel %vm123, %v7853, 0.0
    %v7943 = vadd.f32 %v7941, %v7942
    %v7944 = vsel %vm123, %v7854, 0.0
    %v7945 = vadd.f32 %v7943, %v7944
    %v7946 = vsel %vm123, %v7855, 0.0
    %v7947 = vadd.f32 %v7945, %v7946
    %v7948 = vsel %vm123, %v7856, 0.0
    %v7949 = vadd.f32 %v7947, %v7948
    %v7950 = vsel %vm123, %v7857, 0.0
    %v7951 = vadd.f32 %v7949, %v7950
    %v7952 = vsel %vm123, %v7858, 0.0
    %v7953 = vadd.f32 %v7951, %v7952
    %v7954 = vsel %vm123, %v7859, 0.0
    %v7955 = vadd.f32 %v7953, %v7954
    %v7956 = vsel %vm123, %v7860, 0.0
    %v7957 = vadd.f32 %v7955, %v7956
    %v7958 = vsel %vm123, %v7861, 0.0
    %v7959 = vadd.f32 %v7957, %v7958
    %v7960 = vsel %vm123, %v7862, 0.0
    %v7961 = vadd.f32 %v7959, %v7960
    %v7962 = vsel %vm123, %v7863, 0.0
    %v7963 = vadd.f32 %v7961, %v7962
    %v7964 = vsel %vm123, %v7864, 0.0
    %v7965 = vadd.f32 %v7963, %v7964
    %v7966 = vsel %vm123, %v7865, 0.0
    %v7967 = vadd.f32 %v7965, %v7966
    %v7968 = vsel %vm123, %v7866, 0.0
    %v7969 = vadd.f32 %v7967, %v7968
    %v7970 = vsel %vm123, %v7867, 0.0
    %v7971 = vadd.f32 %v7969, %v7970
    %v7972 = vsel %vm123, %v7868, 0.0
    %v7973 = vadd.f32 %v7971, %v7972
    %v7974 = vsel %vm123, %v7869, 0.0
    %v7975 = vadd.f32 %v7973, %v7974
    %v7976 = vsel %vm123, %v7870, 0.0
    %v7977 = vadd.f32 %v7975, %v7976
    %v7978 = vsel %vm123, %v7871, 0.0
    %v7979 = vadd.f32 %v7977, %v7978
    %v7980 = vsel %vm123, %v7872, 0.0
    %v7981 = vadd.f32 %v7979, %v7980
    %v7982 = vsel %vm123, %v7873, 0.0
    %v7983 = vadd.f32 %v7981, %v7982
    %v7984 = vsel %vm123, %v7874, 0.0
    %v7985 = vadd.f32 %v7983, %v7984
    %v7986 = vsel %vm123, %v7875, 0.0
    %v7987 = vadd.f32 %v7985, %v7986
    %v7988 = vsel %vm123, %v7876, 0.0
    %v7989 = vadd.f32 %v7987, %v7988
    %v7990 = vsel %vm123, %v7877, 0.0
    %v7991 = vadd.f32 %v7989, %v7990
    %v7992 = vsel %vm123, %v7878, 0.0
    %v7993 = vadd.f32 %v7991, %v7992
    %v7994 = vsel %vm123, %v7879, 0.0
    %v7995 = vadd.f32 %v7993, %v7994
    %v7996 = vsel %vm123, %v7880, 0.0
    %v7997 = vadd.f32 %v7995, %v7996
    %v7998 = vsel %vm123, %v7881, 0.0
    %v7999 = vadd.f32 %v7997, %v7998
    %v8000 = vsel %vm123, %v7882, 0.0
    %v8001 = vadd.f32 %v7999, %v8000
    %v8002 = vsel %vm123, %v7883, 0.0
    %v8003 = vadd.f32 %v8001, %v8002
    %v8004 = vsel %vm123, %v7884, 0.0
    %v8005 = vadd.f32 %v8003, %v8004
    %v8006 = vsel %vm123, %v7885, 0.0
    %v8007 = vadd.f32 %v8005, %v8006
    %v8008 = vsel %vm123, %v7886, 0.0
    %v8009 = vadd.f32 %v8007, %v8008
    %v8010 = vsel %vm123, %v7887, 0.0
    %v8011 = vadd.f32 %v8009, %v8010
    %v8012 = vsel %vm123, %v7888, 0.0
    %v8013 = vadd.f32 %v8011, %v8012
    %v8014 = vsel %vm123, %v7889, 0.0
    %v8015 = vadd.f32 %v8013, %v8014
    %v8016 = vsel %vm123, %v7890, 0.0
    %v8017 = vadd.f32 %v8015, %v8016
    %v8018 = vrot.slane %v8017, 4
    %v8019 = vadd.f32 %v8017, %v8018
    %v8020 = vrot.slane %v8019, 2
    %v8021 = vadd.f32 %v8019, %v8020
    %v8022 = vrot.slane %v8021, 1
    %v8023 = vadd.f32 %v8021, %v8022
    %v8024 = vmul.f32 %v8023, %v835
    %v8025 = vsub.f32 %v7827, %v8024
    %v8026 = vsub.f32 %v7828, %v8024
    %v8027 = vsub.f32 %v7829, %v8024
    %v8028 = vsub.f32 %v7830, %v8024
    %v8029 = vsub.f32 %v7831, %v8024
    %v8030 = vsub.f32 %v7832, %v8024
    %v8031 = vsub.f32 %v7833, %v8024
    %v8032 = vsub.f32 %v7834, %v8024
    %v8033 = vsub.f32 %v7835, %v8024
    %v8034 = vsub.f32 %v7836, %v8024
    %v8035 = vsub.f32 %v7837, %v8024
    %v8036 = vsub.f32 %v7838, %v8024
    %v8037 = vsub.f32 %v7839, %v8024
    %v8038 = vsub.f32 %v7840, %v8024
    %v8039 = vsub.f32 %v7841, %v8024
    %v8040 = vsub.f32 %v7842, %v8024
    %v8041 = vsub.f32 %v7843, %v8024
    %v8042 = vsub.f32 %v7844, %v8024
    %v8043 = vsub.f32 %v7845, %v8024
    %v8044 = vsub.f32 %v7846, %v8024
    %v8045 = vsub.f32 %v7847, %v8024
    %v8046 = vsub.f32 %v7848, %v8024
    %v8047 = vsub.f32 %v7849, %v8024
    %v8048 = vsub.f32 %v7850, %v8024
    %v8049 = vsub.f32 %v7851, %v8024
    %v8050 = vsub.f32 %v7852, %v8024
    %v8051 = vsub.f32 %v7853, %v8024
    %v8052 = vsub.f32 %v7854, %v8024
    %v8053 = vsub.f32 %v7855, %v8024
    %v8054 = vsub.f32 %v7856, %v8024
    %v8055 = vsub.f32 %v7857, %v8024
    %v8056 = vsub.f32 %v7858, %v8024
    %v8057 = vsub.f32 %v7859, %v8024
    %v8058 = vsub.f32 %v7860, %v8024
    %v8059 = vsub.f32 %v7861, %v8024
    %v8060 = vsub.f32 %v7862, %v8024
    %v8061 = vsub.f32 %v7863, %v8024
    %v8062 = vsub.f32 %v7864, %v8024
    %v8063 = vsub.f32 %v7865, %v8024
    %v8064 = vsub.f32 %v7866, %v8024
    %v8065 = vsub.f32 %v7867, %v8024
    %v8066 = vsub.f32 %v7868, %v8024
    %v8067 = vsub.f32 %v7869, %v8024
    %v8068 = vsub.f32 %v7870, %v8024
    %v8069 = vsub.f32 %v7871, %v8024
    %v8070 = vsub.f32 %v7872, %v8024
    %v8071 = vsub.f32 %v7873, %v8024
    %v8072 = vsub.f32 %v7874, %v8024
    %v8073 = vsub.f32 %v7875, %v8024
    %v8074 = vsub.f32 %v7876, %v8024
    %v8075 = vsub.f32 %v7877, %v8024
    %v8076 = vsub.f32 %v7878, %v8024
    %v8077 = vsub.f32 %v7879, %v8024
    %v8078 = vsub.f32 %v7880, %v8024
    %v8079 = vsub.f32 %v7881, %v8024
    %v8080 = vsub.f32 %v7882, %v8024
    %v8081 = vsub.f32 %v7883, %v8024
    %v8082 = vsub.f32 %v7884, %v8024
    %v8083 = vsub.f32 %v7885, %v8024
    %v8084 = vsub.f32 %v7886, %v8024
    %v8085 = vsub.f32 %v7887, %v8024
    %v8086 = vsub.f32 %v7888, %v8024
    %v8087 = vsub.f32 %v7889, %v8024
    %v8088 = vsub.f32 %v7890, %v8024
    %v8089 = vmul.f32 %v8025, %v8025
    %v8090 = vmul.f32 %v8026, %v8026
    %v8091 = vmul.f32 %v8027, %v8027
    %v8092 = vmul.f32 %v8028, %v8028
    %v8093 = vmul.f32 %v8029, %v8029
    %v8094 = vmul.f32 %v8030, %v8030
    %v8095 = vmul.f32 %v8031, %v8031
    %v8096 = vmul.f32 %v8032, %v8032
    %v8097 = vmul.f32 %v8033, %v8033
    %v8098 = vmul.f32 %v8034, %v8034
    %v8099 = vmul.f32 %v8035, %v8035
    %v8100 = vmul.f32 %v8036, %v8036
    %v8101 = vmul.f32 %v8037, %v8037
    %v8102 = vmul.f32 %v8038, %v8038
    %v8103 = vmul.f32 %v8039, %v8039
    %v8104 = vmul.f32 %v8040, %v8040
    %v8105 = vmul.f32 %v8041, %v8041
    %v8106 = vmul.f32 %v8042, %v8042
    %v8107 = vmul.f32 %v8043, %v8043
    %v8108 = vmul.f32 %v8044, %v8044
    %v8109 = vmul.f32 %v8045, %v8045
    %v8110 = vmul.f32 %v8046, %v8046
    %v8111 = vmul.f32 %v8047, %v8047
    %v8112 = vmul.f32 %v8048, %v8048
    %v8113 = vmul.f32 %v8049, %v8049
    %v8114 = vmul.f32 %v8050, %v8050
    %v8115 = vmul.f32 %v8051, %v8051
    %v8116 = vmul.f32 %v8052, %v8052
    %v8117 = vmul.f32 %v8053, %v8053
    %v8118 = vmul.f32 %v8054, %v8054
    %v8119 = vmul.f32 %v8055, %v8055
    %v8120 = vmul.f32 %v8056, %v8056
    %v8121 = vmul.f32 %v8057, %v8057
    %v8122 = vmul.f32 %v8058, %v8058
    %v8123 = vmul.f32 %v8059, %v8059
    %v8124 = vmul.f32 %v8060, %v8060
    %v8125 = vmul.f32 %v8061, %v8061
    %v8126 = vmul.f32 %v8062, %v8062
    %v8127 = vmul.f32 %v8063, %v8063
    %v8128 = vmul.f32 %v8064, %v8064
    %v8129 = vmul.f32 %v8065, %v8065
    %v8130 = vmul.f32 %v8066, %v8066
    %v8131 = vmul.f32 %v8067, %v8067
    %v8132 = vmul.f32 %v8068, %v8068
    %v8133 = vmul.f32 %v8069, %v8069
    %v8134 = vmul.f32 %v8070, %v8070
    %v8135 = vmul.f32 %v8071, %v8071
    %v8136 = vmul.f32 %v8072, %v8072
    %v8137 = vmul.f32 %v8073, %v8073
    %v8138 = vmul.f32 %v8074, %v8074
    %v8139 = vmul.f32 %v8075, %v8075
    %v8140 = vmul.f32 %v8076, %v8076
    %v8141 = vmul.f32 %v8077, %v8077
    %v8142 = vmul.f32 %v8078, %v8078
    %v8143 = vmul.f32 %v8079, %v8079
    %v8144 = vmul.f32 %v8080, %v8080
    %v8145 = vmul.f32 %v8081, %v8081
    %v8146 = vmul.f32 %v8082, %v8082
    %v8147 = vmul.f32 %v8083, %v8083
    %v8148 = vmul.f32 %v8084, %v8084
    %v8149 = vmul.f32 %v8085, %v8085
    %v8150 = vmul.f32 %v8086, %v8086
    %v8151 = vmul.f32 %v8087, %v8087
    %v8152 = vmul.f32 %v8088, %v8088
    %v8153 = vsel %vm123, %v8089, 0.0
    %v8154 = vsel %vm123, %v8090, 0.0
    %v8155 = vadd.f32 %v8153, %v8154
    %v8156 = vsel %vm123, %v8091, 0.0
    %v8157 = vadd.f32 %v8155, %v8156
    %v8158 = vsel %vm123, %v8092, 0.0
    %v8159 = vadd.f32 %v8157, %v8158
    %v8160 = vsel %vm123, %v8093, 0.0
    %v8161 = vadd.f32 %v8159, %v8160
    %v8162 = vsel %vm123, %v8094, 0.0
    %v8163 = vadd.f32 %v8161, %v8162
    %v8164 = vsel %vm123, %v8095, 0.0
    %v8165 = vadd.f32 %v8163, %v8164
    %v8166 = vsel %vm123, %v8096, 0.0
    %v8167 = vadd.f32 %v8165, %v8166
    %v8168 = vsel %vm123, %v8097, 0.0
    %v8169 = vadd.f32 %v8167, %v8168
    %v8170 = vsel %vm123, %v8098, 0.0
    %v8171 = vadd.f32 %v8169, %v8170
    %v8172 = vsel %vm123, %v8099, 0.0
    %v8173 = vadd.f32 %v8171, %v8172
    %v8174 = vsel %vm123, %v8100, 0.0
    %v8175 = vadd.f32 %v8173, %v8174
    %v8176 = vsel %vm123, %v8101, 0.0
    %v8177 = vadd.f32 %v8175, %v8176
    %v8178 = vsel %vm123, %v8102, 0.0
    %v8179 = vadd.f32 %v8177, %v8178
    %v8180 = vsel %vm123, %v8103, 0.0
    %v8181 = vadd.f32 %v8179, %v8180
    %v8182 = vsel %vm123, %v8104, 0.0
    %v8183 = vadd.f32 %v8181, %v8182
    %v8184 = vsel %vm123, %v8105, 0.0
    %v8185 = vadd.f32 %v8183, %v8184
    %v8186 = vsel %vm123, %v8106, 0.0
    %v8187 = vadd.f32 %v8185, %v8186
    %v8188 = vsel %vm123, %v8107, 0.0
    %v8189 = vadd.f32 %v8187, %v8188
    %v8190 = vsel %vm123, %v8108, 0.0
    %v8191 = vadd.f32 %v8189, %v8190
    %v8192 = vsel %vm123, %v8109, 0.0
    %v8193 = vadd.f32 %v8191, %v8192
    %v8194 = vsel %vm123, %v8110, 0.0
    %v8195 = vadd.f32 %v8193, %v8194
    %v8196 = vsel %vm123, %v8111, 0.0
    %v8197 = vadd.f32 %v8195, %v8196
    %v8198 = vsel %vm123, %v8112, 0.0
    %v8199 = vadd.f32 %v8197, %v8198
    %v8200 = vsel %vm123, %v8113, 0.0
    %v8201 = vadd.f32 %v8199, %v8200
    %v8202 = vsel %vm123, %v8114, 0.0
    %v8203 = vadd.f32 %v8201, %v8202
    %v8204 = vsel %vm123, %v8115, 0.0
    %v8205 = vadd.f32 %v8203, %v8204
    %v8206 = vsel %vm123, %v8116, 0.0
    %v8207 = vadd.f32 %v8205, %v8206
    %v8208 = vsel %vm123, %v8117, 0.0
    %v8209 = vadd.f32 %v8207, %v8208
    %v8210 = vsel %vm123, %v8118, 0.0
    %v8211 = vadd.f32 %v8209, %v8210
    %v8212 = vsel %vm123, %v8119, 0.0
    %v8213 = vadd.f32 %v8211, %v8212
    %v8214 = vsel %vm123, %v8120, 0.0
    %v8215 = vadd.f32 %v8213, %v8214
    %v8216 = vsel %vm123, %v8121, 0.0
    %v8217 = vadd.f32 %v8215, %v8216
    %v8218 = vsel %vm123, %v8122, 0.0
    %v8219 = vadd.f32 %v8217, %v8218
    %v8220 = vsel %vm123, %v8123, 0.0
    %v8221 = vadd.f32 %v8219, %v8220
    %v8222 = vsel %vm123, %v8124, 0.0
    %v8223 = vadd.f32 %v8221, %v8222
    %v8224 = vsel %vm123, %v8125, 0.0
    %v8225 = vadd.f32 %v8223, %v8224
    %v8226 = vsel %vm123, %v8126, 0.0
    %v8227 = vadd.f32 %v8225, %v8226
    %v8228 = vsel %vm123, %v8127, 0.0
    %v8229 = vadd.f32 %v8227, %v8228
    %v8230 = vsel %vm123, %v8128, 0.0
    %v8231 = vadd.f32 %v8229, %v8230
    %v8232 = vsel %vm123, %v8129, 0.0
    %v8233 = vadd.f32 %v8231, %v8232
    %v8234 = vsel %vm123, %v8130, 0.0
    %v8235 = vadd.f32 %v8233, %v8234
    %v8236 = vsel %vm123, %v8131, 0.0
    %v8237 = vadd.f32 %v8235, %v8236
    %v8238 = vsel %vm123, %v8132, 0.0
    %v8239 = vadd.f32 %v8237, %v8238
    %v8240 = vsel %vm123, %v8133, 0.0
    %v8241 = vadd.f32 %v8239, %v8240
    %v8242 = vsel %vm123, %v8134, 0.0
    %v8243 = vadd.f32 %v8241, %v8242
    %v8244 = vsel %vm123, %v8135, 0.0
    %v8245 = vadd.f32 %v8243, %v8244
    %v8246 = vsel %vm123, %v8136, 0.0
    %v8247 = vadd.f32 %v8245, %v8246
    %v8248 = vsel %vm123, %v8137, 0.0
    %v8249 = vadd.f32 %v8247, %v8248
    %v8250 = vsel %vm123, %v8138, 0.0
    %v8251 = vadd.f32 %v8249, %v8250
    %v8252 = vsel %vm123, %v8139, 0.0
    %v8253 = vadd.f32 %v8251, %v8252
    %v8254 = vsel %vm123, %v8140, 0.0
    %v8255 = vadd.f32 %v8253, %v8254
    %v8256 = vsel %vm123, %v8141, 0.0
    %v8257 = vadd.f32 %v8255, %v8256
    %v8258 = vsel %vm123, %v8142, 0.0
    %v8259 = vadd.f32 %v8257, %v8258
    %v8260 = vsel %vm123, %v8143, 0.0
    %v8261 = vadd.f32 %v8259, %v8260
    %v8262 = vsel %vm123, %v8144, 0.0
    %v8263 = vadd.f32 %v8261, %v8262
    %v8264 = vsel %vm123, %v8145, 0.0
    %v8265 = vadd.f32 %v8263, %v8264
    %v8266 = vsel %vm123, %v8146, 0.0
    %v8267 = vadd.f32 %v8265, %v8266
    %v8268 = vsel %vm123, %v8147, 0.0
    %v8269 = vadd.f32 %v8267, %v8268
    %v8270 = vsel %vm123, %v8148, 0.0
    %v8271 = vadd.f32 %v8269, %v8270
    %v8272 = vsel %vm123, %v8149, 0.0
    %v8273 = vadd.f32 %v8271, %v8272
    %v8274 = vsel %vm123, %v8150, 0.0
    %v8275 = vadd.f32 %v8273, %v8274
    %v8276 = vsel %vm123, %v8151, 0.0
    %v8277 = vadd.f32 %v8275, %v8276
    %v8278 = vsel %vm123, %v8152, 0.0
    %v8279 = vadd.f32 %v8277, %v8278
    %v8280 = vrot.slane %v8279, 4
    %v8281 = vadd.f32 %v8279, %v8280
    %v8282 = vrot.slane %v8281, 2
    %v8283 = vadd.f32 %v8281, %v8282
    %v8284 = vrot.slane %v8283, 1
    %v8285 = vadd.f32 %v8283, %v8284
    %v8286 = vmul.f32 %v8285, %v835
    %v8287 = vld [vmem:[%s5] sm:$0x1]
    %v8288 = vadd.f32 %v8286, 1e-05
    %v8289 = vrsqrt.pop %v8288
    %v8290 = vmul.f32 %v8287, %v8289
    %v8291 = vld [vmem:[%s6] sm:$0x1]
    %v8292 = vmul.f32 %v8024, %v8290
    %v8293 = vsub.f32 %v8291, %v8292
    %v8295 = vlaneseq
    %v8296 = vshrl.u32 %v8295, 7
    %v8297 = vsub.s32 0, %v8296
    %v8298 = vrot.slane %v8290, %v8297
    %v8300 = vmul.f32 %v7827, %v8298
    %v8301 = vmul.f32 %v7828, %v8298
    %v8302 = vmul.f32 %v7829, %v8298
    %v8303 = vmul.f32 %v7830, %v8298
    %v8304 = vmul.f32 %v7831, %v8298
    %v8305 = vmul.f32 %v7832, %v8298
    %v8306 = vmul.f32 %v7833, %v8298
    %v8307 = vmul.f32 %v7834, %v8298
    %v8308 = vmul.f32 %v7835, %v8298
    %v8309 = vmul.f32 %v7836, %v8298
    %v8310 = vmul.f32 %v7837, %v8298
    %v8311 = vmul.f32 %v7838, %v8298
    %v8312 = vmul.f32 %v7839, %v8298
    %v8313 = vmul.f32 %v7840, %v8298
    %v8314 = vmul.f32 %v7841, %v8298
    %v8315 = vmul.f32 %v7842, %v8298
    %v8316 = vmul.f32 %v7843, %v8298
    %v8317 = vmul.f32 %v7844, %v8298
    %v8318 = vmul.f32 %v7845, %v8298
    %v8319 = vmul.f32 %v7846, %v8298
    %v8320 = vmul.f32 %v7847, %v8298
    %v8321 = vmul.f32 %v7848, %v8298
    %v8322 = vmul.f32 %v7849, %v8298
    %v8323 = vmul.f32 %v7850, %v8298
    %v8324 = vmul.f32 %v7851, %v8298
    %v8325 = vmul.f32 %v7852, %v8298
    %v8326 = vmul.f32 %v7853, %v8298
    %v8327 = vmul.f32 %v7854, %v8298
    %v8328 = vmul.f32 %v7855, %v8298
    %v8329 = vmul.f32 %v7856, %v8298
    %v8330 = vmul.f32 %v7857, %v8298
    %v8331 = vmul.f32 %v7858, %v8298
    %v8332 = vmul.f32 %v7859, %v8298
    %v8333 = vmul.f32 %v7860, %v8298
    %v8334 = vmul.f32 %v7861, %v8298
    %v8335 = vmul.f32 %v7862, %v8298
    %v8336 = vmul.f32 %v7863, %v8298
    %v8337 = vmul.f32 %v7864, %v8298
    %v8338 = vmul.f32 %v7865, %v8298
    %v8339 = vmul.f32 %v7866, %v8298
    %v8340 = vmul.f32 %v7867, %v8298
    %v8341 = vmul.f32 %v7868, %v8298
    %v8342 = vmul.f32 %v7869, %v8298
    %v8343 = vmul.f32 %v7870, %v8298
    %v8344 = vmul.f32 %v7871, %v8298
    %v8345 = vmul.f32 %v7872, %v8298
    %v8346 = vmul.f32 %v7873, %v8298
    %v8347 = vmul.f32 %v7874, %v8298
    %v8348 = vmul.f32 %v7875, %v8298
    %v8349 = vmul.f32 %v7876, %v8298
    %v8350 = vmul.f32 %v7877, %v8298
    %v8351 = vmul.f32 %v7878, %v8298
    %v8352 = vmul.f32 %v7879, %v8298
    %v8353 = vmul.f32 %v7880, %v8298
    %v8354 = vmul.f32 %v7881, %v8298
    %v8355 = vmul.f32 %v7882, %v8298
    %v8356 = vmul.f32 %v7883, %v8298
    %v8357 = vmul.f32 %v7884, %v8298
    %v8358 = vmul.f32 %v7885, %v8298
    %v8359 = vmul.f32 %v7886, %v8298
    %v8360 = vmul.f32 %v7887, %v8298
    %v8361 = vmul.f32 %v7888, %v8298
    %v8362 = vmul.f32 %v7889, %v8298
    %v8363 = vmul.f32 %v7890, %v8298
    %v8365 = vlaneseq
    %v8366 = vshrl.u32 %v8365, 7
    %v8367 = vsub.s32 0, %v8366
    %v8368 = vrot.slane %v8293, %v8367
    %v8370 = vadd.f32 %v8300, %v8368
    %v8371 = vadd.f32 %v8301, %v8368
    %v8372 = vadd.f32 %v8302, %v8368
    %v8373 = vadd.f32 %v8303, %v8368
    %v8374 = vadd.f32 %v8304, %v8368
    %v8375 = vadd.f32 %v8305, %v8368
    %v8376 = vadd.f32 %v8306, %v8368
    %v8377 = vadd.f32 %v8307, %v8368
    %v8378 = vadd.f32 %v8308, %v8368
    %v8379 = vadd.f32 %v8309, %v8368
    %v8380 = vadd.f32 %v8310, %v8368
    %v8381 = vadd.f32 %v8311, %v8368
    %v8382 = vadd.f32 %v8312, %v8368
    %v8383 = vadd.f32 %v8313, %v8368
    %v8384 = vadd.f32 %v8314, %v8368
    %v8385 = vadd.f32 %v8315, %v8368
    %v8386 = vadd.f32 %v8316, %v8368
    %v8387 = vadd.f32 %v8317, %v8368
    %v8388 = vadd.f32 %v8318, %v8368
    %v8389 = vadd.f32 %v8319, %v8368
    %v8390 = vadd.f32 %v8320, %v8368
    %v8391 = vadd.f32 %v8321, %v8368
    %v8392 = vadd.f32 %v8322, %v8368
    %v8393 = vadd.f32 %v8323, %v8368
    %v8394 = vadd.f32 %v8324, %v8368
    %v8395 = vadd.f32 %v8325, %v8368
    %v8396 = vadd.f32 %v8326, %v8368
    %v8397 = vadd.f32 %v8327, %v8368
    %v8398 = vadd.f32 %v8328, %v8368
    %v8399 = vadd.f32 %v8329, %v8368
    %v8400 = vadd.f32 %v8330, %v8368
    %v8401 = vadd.f32 %v8331, %v8368
    %v8402 = vadd.f32 %v8332, %v8368
    %v8403 = vadd.f32 %v8333, %v8368
    %v8404 = vadd.f32 %v8334, %v8368
    %v8405 = vadd.f32 %v8335, %v8368
    %v8406 = vadd.f32 %v8336, %v8368
    %v8407 = vadd.f32 %v8337, %v8368
    %v8408 = vadd.f32 %v8338, %v8368
    %v8409 = vadd.f32 %v8339, %v8368
    %v8410 = vadd.f32 %v8340, %v8368
    %v8411 = vadd.f32 %v8341, %v8368
    %v8412 = vadd.f32 %v8342, %v8368
    %v8413 = vadd.f32 %v8343, %v8368
    %v8414 = vadd.f32 %v8344, %v8368
    %v8415 = vadd.f32 %v8345, %v8368
    %v8416 = vadd.f32 %v8346, %v8368
    %v8417 = vadd.f32 %v8347, %v8368
    %v8418 = vadd.f32 %v8348, %v8368
    %v8419 = vadd.f32 %v8349, %v8368
    %v8420 = vadd.f32 %v8350, %v8368
    %v8421 = vadd.f32 %v8351, %v8368
    %v8422 = vadd.f32 %v8352, %v8368
    %v8423 = vadd.f32 %v8353, %v8368
    %v8424 = vadd.f32 %v8354, %v8368
    %v8425 = vadd.f32 %v8355, %v8368
    %v8426 = vadd.f32 %v8356, %v8368
    %v8427 = vadd.f32 %v8357, %v8368
    %v8428 = vadd.f32 %v8358, %v8368
    %v8429 = vadd.f32 %v8359, %v8368
    %v8430 = vadd.f32 %v8360, %v8368
    %v8431 = vadd.f32 %v8361, %v8368
    %v8432 = vadd.f32 %v8362, %v8368
    %v8433 = vadd.f32 %v8363, %v8368
    %vm8434 = vcmp.gt.f32.partialorder %v8370, 0.0
    %vm8435 = vcmp.gt.f32.partialorder %v8371, 0.0
    %vm8436 = vcmp.gt.f32.partialorder %v8372, 0.0
    %vm8437 = vcmp.gt.f32.partialorder %v8373, 0.0
    %vm8438 = vcmp.gt.f32.partialorder %v8374, 0.0
    %vm8439 = vcmp.gt.f32.partialorder %v8375, 0.0
    %vm8440 = vcmp.gt.f32.partialorder %v8376, 0.0
    %vm8441 = vcmp.gt.f32.partialorder %v8377, 0.0
    %vm8442 = vcmp.gt.f32.partialorder %v8378, 0.0
    %vm8443 = vcmp.gt.f32.partialorder %v8379, 0.0
    %vm8444 = vcmp.gt.f32.partialorder %v8380, 0.0
    %vm8445 = vcmp.gt.f32.partialorder %v8381, 0.0
    %vm8446 = vcmp.gt.f32.partialorder %v8382, 0.0
    %vm8447 = vcmp.gt.f32.partialorder %v8383, 0.0
    %vm8448 = vcmp.gt.f32.partialorder %v8384, 0.0
    %vm8449 = vcmp.gt.f32.partialorder %v8385, 0.0
    %vm8450 = vcmp.gt.f32.partialorder %v8386, 0.0
    %vm8451 = vcmp.gt.f32.partialorder %v8387, 0.0
    %vm8452 = vcmp.gt.f32.partialorder %v8388, 0.0
    %vm8453 = vcmp.gt.f32.partialorder %v8389, 0.0
    %vm8454 = vcmp.gt.f32.partialorder %v8390, 0.0
    %vm8455 = vcmp.gt.f32.partialorder %v8391, 0.0
    %vm8456 = vcmp.gt.f32.partialorder %v8392, 0.0
    %vm8457 = vcmp.gt.f32.partialorder %v8393, 0.0
    %vm8458 = vcmp.gt.f32.partialorder %v8394, 0.0
    %vm8459 = vcmp.gt.f32.partialorder %v8395, 0.0
    %vm8460 = vcmp.gt.f32.partialorder %v8396, 0.0
    %vm8461 = vcmp.gt.f32.partialorder %v8397, 0.0
    %vm8462 = vcmp.gt.f32.partialorder %v8398, 0.0
    %vm8463 = vcmp.gt.f32.partialorder %v8399, 0.0
    %vm8464 = vcmp.gt.f32.partialorder %v8400, 0.0
    %vm8465 = vcmp.gt.f32.partialorder %v8401, 0.0
    %vm8466 = vcmp.gt.f32.partialorder %v8402, 0.0
    %vm8467 = vcmp.gt.f32.partialorder %v8403, 0.0
    %vm8468 = vcmp.gt.f32.partialorder %v8404, 0.0
    %vm8469 = vcmp.gt.f32.partialorder %v8405, 0.0
    %vm8470 = vcmp.gt.f32.partialorder %v8406, 0.0
    %vm8471 = vcmp.gt.f32.partialorder %v8407, 0.0
    %vm8472 = vcmp.gt.f32.partialorder %v8408, 0.0
    %vm8473 = vcmp.gt.f32.partialorder %v8409, 0.0
    %vm8474 = vcmp.gt.f32.partialorder %v8410, 0.0
    %vm8475 = vcmp.gt.f32.partialorder %v8411, 0.0
    %vm8476 = vcmp.gt.f32.partialorder %v8412, 0.0
    %vm8477 = vcmp.gt.f32.partialorder %v8413, 0.0
    %vm8478 = vcmp.gt.f32.partialorder %v8414, 0.0
    %vm8479 = vcmp.gt.f32.partialorder %v8415, 0.0
    %vm8480 = vcmp.gt.f32.partialorder %v8416, 0.0
    %vm8481 = vcmp.gt.f32.partialorder %v8417, 0.0
    %vm8482 = vcmp.gt.f32.partialorder %v8418, 0.0
    %vm8483 = vcmp.gt.f32.partialorder %v8419, 0.0
    %vm8484 = vcmp.gt.f32.partialorder %v8420, 0.0
    %vm8485 = vcmp.gt.f32.partialorder %v8421, 0.0
    %vm8486 = vcmp.gt.f32.partialorder %v8422, 0.0
    %vm8487 = vcmp.gt.f32.partialorder %v8423, 0.0
    %vm8488 = vcmp.gt.f32.partialorder %v8424, 0.0
    %vm8489 = vcmp.gt.f32.partialorder %v8425, 0.0
    %vm8490 = vcmp.gt.f32.partialorder %v8426, 0.0
    %vm8491 = vcmp.gt.f32.partialorder %v8427, 0.0
    %vm8492 = vcmp.gt.f32.partialorder %v8428, 0.0
    %vm8493 = vcmp.gt.f32.partialorder %v8429, 0.0
    %vm8494 = vcmp.gt.f32.partialorder %v8430, 0.0
    %vm8495 = vcmp.gt.f32.partialorder %v8431, 0.0
    %vm8496 = vcmp.gt.f32.partialorder %v8432, 0.0
    %vm8497 = vcmp.gt.f32.partialorder %v8433, 0.0
    %v8498 = vmul.f32 %v8370, 0.1
    %v8499 = vmul.f32 %v8371, 0.1
    %v8500 = vmul.f32 %v8372, 0.1
    %v8501 = vmul.f32 %v8373, 0.1
    %v8502 = vmul.f32 %v8374, 0.1
    %v8503 = vmul.f32 %v8375, 0.1
    %v8504 = vmul.f32 %v8376, 0.1
    %v8505 = vmul.f32 %v8377, 0.1
    %v8506 = vmul.f32 %v8378, 0.1
    %v8507 = vmul.f32 %v8379, 0.1
    %v8508 = vmul.f32 %v8380, 0.1
    %v8509 = vmul.f32 %v8381, 0.1
    %v8510 = vmul.f32 %v8382, 0.1
    %v8511 = vmul.f32 %v8383, 0.1
    %v8512 = vmul.f32 %v8384, 0.1
    %v8513 = vmul.f32 %v8385, 0.1
    %v8514 = vmul.f32 %v8386, 0.1
    %v8515 = vmul.f32 %v8387, 0.1
    %v8516 = vmul.f32 %v8388, 0.1
    %v8517 = vmul.f32 %v8389, 0.1
    %v8518 = vmul.f32 %v8390, 0.1
    %v8519 = vmul.f32 %v8391, 0.1
    %v8520 = vmul.f32 %v8392, 0.1
    %v8521 = vmul.f32 %v8393, 0.1
    %v8522 = vmul.f32 %v8394, 0.1
    %v8523 = vmul.f32 %v8395, 0.1
    %v8524 = vmul.f32 %v8396, 0.1
    %v8525 = vmul.f32 %v8397, 0.1
    %v8526 = vmul.f32 %v8398, 0.1
    %v8527 = vmul.f32 %v8399, 0.1
    %v8528 = vmul.f32 %v8400, 0.1
    %v8529 = vmul.f32 %v8401, 0.1
    %v8530 = vmul.f32 %v8402, 0.1
    %v8531 = vmul.f32 %v8403, 0.1
    %v8532 = vmul.f32 %v8404, 0.1
    %v8533 = vmul.f32 %v8405, 0.1
    %v8534 = vmul.f32 %v8406, 0.1
    %v8535 = vmul.f32 %v8407, 0.1
    %v8536 = vmul.f32 %v8408, 0.1
    %v8537 = vmul.f32 %v8409, 0.1
    %v8538 = vmul.f32 %v8410, 0.1
    %v8539 = vmul.f32 %v8411, 0.1
    %v8540 = vmul.f32 %v8412, 0.1
    %v8541 = vmul.f32 %v8413, 0.1
    %v8542 = vmul.f32 %v8414, 0.1
    %v8543 = vmul.f32 %v8415, 0.1
    %v8544 = vmul.f32 %v8416, 0.1
    %v8545 = vmul.f32 %v8417, 0.1
    %v8546 = vmul.f32 %v8418, 0.1
    %v8547 = vmul.f32 %v8419, 0.1
    %v8548 = vmul.f32 %v8420, 0.1
    %v8549 = vmul.f32 %v8421, 0.1
    %v8550 = vmul.f32 %v8422, 0.1
    %v8551 = vmul.f32 %v8423, 0.1
    %v8552 = vmul.f32 %v8424, 0.1
    %v8553 = vmul.f32 %v8425, 0.1
    %v8554 = vmul.f32 %v8426, 0.1
    %v8555 = vmul.f32 %v8427, 0.1
    %v8556 = vmul.f32 %v8428, 0.1
    %v8557 = vmul.f32 %v8429, 0.1
    %v8558 = vmul.f32 %v8430, 0.1
    %v8559 = vmul.f32 %v8431, 0.1
    %v8560 = vmul.f32 %v8432, 0.1
    %v8561 = vmul.f32 %v8433, 0.1
    %v8562 = vsel %vm8434, %v8370, %v8498
    %v8563 = vsel %vm8435, %v8371, %v8499
    %v8564 = vsel %vm8436, %v8372, %v8500
    %v8565 = vsel %vm8437, %v8373, %v8501
    %v8566 = vsel %vm8438, %v8374, %v8502
    %v8567 = vsel %vm8439, %v8375, %v8503
    %v8568 = vsel %vm8440, %v8376, %v8504
    %v8569 = vsel %vm8441, %v8377, %v8505
    %v8570 = vsel %vm8442, %v8378, %v8506
    %v8571 = vsel %vm8443, %v8379, %v8507
    %v8572 = vsel %vm8444, %v8380, %v8508
    %v8573 = vsel %vm8445, %v8381, %v8509
    %v8574 = vsel %vm8446, %v8382, %v8510
    %v8575 = vsel %vm8447, %v8383, %v8511
    %v8576 = vsel %vm8448, %v8384, %v8512
    %v8577 = vsel %vm8449, %v8385, %v8513
    %v8578 = vsel %vm8450, %v8386, %v8514
    %v8579 = vsel %vm8451, %v8387, %v8515
    %v8580 = vsel %vm8452, %v8388, %v8516
    %v8581 = vsel %vm8453, %v8389, %v8517
    %v8582 = vsel %vm8454, %v8390, %v8518
    %v8583 = vsel %vm8455, %v8391, %v8519
    %v8584 = vsel %vm8456, %v8392, %v8520
    %v8585 = vsel %vm8457, %v8393, %v8521
    %v8586 = vsel %vm8458, %v8394, %v8522
    %v8587 = vsel %vm8459, %v8395, %v8523
    %v8588 = vsel %vm8460, %v8396, %v8524
    %v8589 = vsel %vm8461, %v8397, %v8525
    %v8590 = vsel %vm8462, %v8398, %v8526
    %v8591 = vsel %vm8463, %v8399, %v8527
    %v8592 = vsel %vm8464, %v8400, %v8528
    %v8593 = vsel %vm8465, %v8401, %v8529
    %v8594 = vsel %vm8466, %v8402, %v8530
    %v8595 = vsel %vm8467, %v8403, %v8531
    %v8596 = vsel %vm8468, %v8404, %v8532
    %v8597 = vsel %vm8469, %v8405, %v8533
    %v8598 = vsel %vm8470, %v8406, %v8534
    %v8599 = vsel %vm8471, %v8407, %v8535
    %v8600 = vsel %vm8472, %v8408, %v8536
    %v8601 = vsel %vm8473, %v8409, %v8537
    %v8602 = vsel %vm8474, %v8410, %v8538
    %v8603 = vsel %vm8475, %v8411, %v8539
    %v8604 = vsel %vm8476, %v8412, %v8540
    %v8605 = vsel %vm8477, %v8413, %v8541
    %v8606 = vsel %vm8478, %v8414, %v8542
    %v8607 = vsel %vm8479, %v8415, %v8543
    %v8608 = vsel %vm8480, %v8416, %v8544
    %v8609 = vsel %vm8481, %v8417, %v8545
    %v8610 = vsel %vm8482, %v8418, %v8546
    %v8611 = vsel %vm8483, %v8419, %v8547
    %v8612 = vsel %vm8484, %v8420, %v8548
    %v8613 = vsel %vm8485, %v8421, %v8549
    %v8614 = vsel %vm8486, %v8422, %v8550
    %v8615 = vsel %vm8487, %v8423, %v8551
    %v8616 = vsel %vm8488, %v8424, %v8552
    %v8617 = vsel %vm8489, %v8425, %v8553
    %v8618 = vsel %vm8490, %v8426, %v8554
    %v8619 = vsel %vm8491, %v8427, %v8555
    %v8620 = vsel %vm8492, %v8428, %v8556
    %v8621 = vsel %vm8493, %v8429, %v8557
    %v8622 = vsel %vm8494, %v8430, %v8558
    %v8623 = vsel %vm8495, %v8431, %v8559
    %v8624 = vsel %vm8496, %v8432, %v8560
    %v8625 = vsel %vm8497, %v8433, %v8561
    %v8626 = vadd.f32 %v8562, %v55
    %v8627 = vadd.f32 %v8563, %v56
    %v8628 = vadd.f32 %v8564, %v57
    %v8629 = vadd.f32 %v8565, %v58
    %v8630 = vadd.f32 %v8566, %v59
    %v8631 = vadd.f32 %v8567, %v60
    %v8632 = vadd.f32 %v8568, %v61
    %v8633 = vadd.f32 %v8569, %v62
    %v8634 = vadd.f32 %v8570, %v63
    %v8635 = vadd.f32 %v8571, %v64
    %v8636 = vadd.f32 %v8572, %v65
    %v8637 = vadd.f32 %v8573, %v66
    %v8638 = vadd.f32 %v8574, %v67
    %v8639 = vadd.f32 %v8575, %v68
    %v8640 = vadd.f32 %v8576, %v69
    %v8641 = vadd.f32 %v8577, %v70
    %v8642 = vadd.f32 %v8578, %v71
    %v8643 = vadd.f32 %v8579, %v72
    %v8644 = vadd.f32 %v8580, %v73
    %v8645 = vadd.f32 %v8581, %v74
    %v8646 = vadd.f32 %v8582, %v75
    %v8647 = vadd.f32 %v8583, %v76
    %v8648 = vadd.f32 %v8584, %v77
    %v8649 = vadd.f32 %v8585, %v78
    %v8650 = vadd.f32 %v8586, %v79
    %v8651 = vadd.f32 %v8587, %v80
    %v8652 = vadd.f32 %v8588, %v81
    %v8653 = vadd.f32 %v8589, %v82
    %v8654 = vadd.f32 %v8590, %v83
    %v8655 = vadd.f32 %v8591, %v84
    %v8656 = vadd.f32 %v8592, %v85
    %v8657 = vadd.f32 %v8593, %v86
    %v8658 = vadd.f32 %v8594, %v87
    %v8659 = vadd.f32 %v8595, %v88
    %v8660 = vadd.f32 %v8596, %v89
    %v8661 = vadd.f32 %v8597, %v90
    %v8662 = vadd.f32 %v8598, %v91
    %v8663 = vadd.f32 %v8599, %v92
    %v8664 = vadd.f32 %v8600, %v93
    %v8665 = vadd.f32 %v8601, %v94
    %v8666 = vadd.f32 %v8602, %v95
    %v8667 = vadd.f32 %v8603, %v96
    %v8668 = vadd.f32 %v8604, %v97
    %v8669 = vadd.f32 %v8605, %v98
    %v8670 = vadd.f32 %v8606, %v99
    %v8671 = vadd.f32 %v8607, %v100
    %v8672 = vadd.f32 %v8608, %v101
    %v8673 = vadd.f32 %v8609, %v102
    %v8674 = vadd.f32 %v8610, %v103
    %v8675 = vadd.f32 %v8611, %v104
    %v8676 = vadd.f32 %v8612, %v105
    %v8677 = vadd.f32 %v8613, %v106
    %v8678 = vadd.f32 %v8614, %v107
    %v8679 = vadd.f32 %v8615, %v108
    %v8680 = vadd.f32 %v8616, %v109
    %v8681 = vadd.f32 %v8617, %v110
    %v8682 = vadd.f32 %v8618, %v111
    %v8683 = vadd.f32 %v8619, %v112
    %v8684 = vadd.f32 %v8620, %v113
    %v8685 = vadd.f32 %v8621, %v114
    %v8686 = vadd.f32 %v8622, %v115
    %v8687 = vadd.f32 %v8623, %v116
    %v8688 = vadd.f32 %v8624, %v117
    %v8689 = vadd.f32 %v8625, %v118
    %8690 = vst.msk [vmem:[#allocation8] sm:$0xff] %vm123, %v8626
    %8691 = vst.msk [vmem:[#allocation8 + $0x8] sm:$0xff] %vm123, %v8627
    %8692 = vst.msk [vmem:[#allocation8 + $0x10] sm:$0xff] %vm123, %v8628
    %8693 = vst.msk [vmem:[#allocation8 + $0x18] sm:$0xff] %vm123, %v8629
    %8694 = vst.msk [vmem:[#allocation8 + $0x20] sm:$0xff] %vm123, %v8630
    %8695 = vst.msk [vmem:[#allocation8 + $0x28] sm:$0xff] %vm123, %v8631
    %8696 = vst.msk [vmem:[#allocation8 + $0x30] sm:$0xff] %vm123, %v8632
    %8697 = vst.msk [vmem:[#allocation8 + $0x38] sm:$0xff] %vm123, %v8633
    %8698 = vst.msk [vmem:[#allocation8 + $0x40] sm:$0xff] %vm123, %v8634
    %8699 = vst.msk [vmem:[#allocation8 + $0x48] sm:$0xff] %vm123, %v8635
    %8700 = vst.msk [vmem:[#allocation8 + $0x50] sm:$0xff] %vm123, %v8636
    %8701 = vst.msk [vmem:[#allocation8 + $0x58] sm:$0xff] %vm123, %v8637
    %8702 = vst.msk [vmem:[#allocation8 + $0x60] sm:$0xff] %vm123, %v8638
    %8703 = vst.msk [vmem:[#allocation8 + $0x68] sm:$0xff] %vm123, %v8639
    %8704 = vst.msk [vmem:[#allocation8 + $0x70] sm:$0xff] %vm123, %v8640
    %8705 = vst.msk [vmem:[#allocation8 + $0x78] sm:$0xff] %vm123, %v8641
    %8706 = vst.msk [vmem:[#allocation8 + $0x80] sm:$0xff] %vm123, %v8642
    %8707 = vst.msk [vmem:[#allocation8 + $0x88] sm:$0xff] %vm123, %v8643
    %8708 = vst.msk [vmem:[#allocation8 + $0x90] sm:$0xff] %vm123, %v8644
    %8709 = vst.msk [vmem:[#allocation8 + $0x98] sm:$0xff] %vm123, %v8645
    %8710 = vst.msk [vmem:[#allocation8 + $0xa0] sm:$0xff] %vm123, %v8646
    %8711 = vst.msk [vmem:[#allocation8 + $0xa8] sm:$0xff] %vm123, %v8647
    %8712 = vst.msk [vmem:[#allocation8 + $0xb0] sm:$0xff] %vm123, %v8648
    %8713 = vst.msk [vmem:[#allocation8 + $0xb8] sm:$0xff] %vm123, %v8649
    %8714 = vst.msk [vmem:[#allocation8 + $0xc0] sm:$0xff] %vm123, %v8650
    %8715 = vst.msk [vmem:[#allocation8 + $0xc8] sm:$0xff] %vm123, %v8651
    %8716 = vst.msk [vmem:[#allocation8 + $0xd0] sm:$0xff] %vm123, %v8652
    %8717 = vst.msk [vmem:[#allocation8 + $0xd8] sm:$0xff] %vm123, %v8653
    %8718 = vst.msk [vmem:[#allocation8 + $0xe0] sm:$0xff] %vm123, %v8654
    %8719 = vst.msk [vmem:[#allocation8 + $0xe8] sm:$0xff] %vm123, %v8655
    %8720 = vst.msk [vmem:[#allocation8 + $0xf0] sm:$0xff] %vm123, %v8656
    %8721 = vst.msk [vmem:[#allocation8 + $0xf8] sm:$0xff] %vm123, %v8657
    %8722 = vst.msk [vmem:[#allocation8 + $0x100] sm:$0xff] %vm123, %v8658
    %8723 = vst.msk [vmem:[#allocation8 + $0x108] sm:$0xff] %vm123, %v8659
    %8724 = vst.msk [vmem:[#allocation8 + $0x110] sm:$0xff] %vm123, %v8660
    %8725 = vst.msk [vmem:[#allocation8 + $0x118] sm:$0xff] %vm123, %v8661
    %8726 = vst.msk [vmem:[#allocation8 + $0x120] sm:$0xff] %vm123, %v8662
    %8727 = vst.msk [vmem:[#allocation8 + $0x128] sm:$0xff] %vm123, %v8663
    %8728 = vst.msk [vmem:[#allocation8 + $0x130] sm:$0xff] %vm123, %v8664
    %8729 = vst.msk [vmem:[#allocation8 + $0x138] sm:$0xff] %vm123, %v8665
    %8730 = vst.msk [vmem:[#allocation8 + $0x140] sm:$0xff] %vm123, %v8666
    %8731 = vst.msk [vmem:[#allocation8 + $0x148] sm:$0xff] %vm123, %v8667
    %8732 = vst.msk [vmem:[#allocation8 + $0x150] sm:$0xff] %vm123, %v8668
    %8733 = vst.msk [vmem:[#allocation8 + $0x158] sm:$0xff] %vm123, %v8669
    %8734 = vst.msk [vmem:[#allocation8 + $0x160] sm:$0xff] %vm123, %v8670
    %8735 = vst.msk [vmem:[#allocation8 + $0x168] sm:$0xff] %vm123, %v8671
    %8736 = vst.msk [vmem:[#allocation8 + $0x170] sm:$0xff] %vm123, %v8672
    %8737 = vst.msk [vmem:[#allocation8 + $0x178] sm:$0xff] %vm123, %v8673
    %8738 = vst.msk [vmem:[#allocation8 + $0x180] sm:$0xff] %vm123, %v8674
    %8739 = vst.msk [vmem:[#allocation8 + $0x188] sm:$0xff] %vm123, %v8675
    %8740 = vst.msk [vmem:[#allocation8 + $0x190] sm:$0xff] %vm123, %v8676
    %8741 = vst.msk [vmem:[#allocation8 + $0x198] sm:$0xff] %vm123, %v8677
    %8742 = vst.msk [vmem:[#allocation8 + $0x1a0] sm:$0xff] %vm123, %v8678
    %8743 = vst.msk [vmem:[#allocation8 + $0x1a8] sm:$0xff] %vm123, %v8679
    %8744 = vst.msk [vmem:[#allocation8 + $0x1b0] sm:$0xff] %vm123, %v8680
    %8745 = vst.msk [vmem:[#allocation8 + $0x1b8] sm:$0xff] %vm123, %v8681
    %8746 = vst.msk [vmem:[#allocation8 + $0x1c0] sm:$0xff] %vm123, %v8682
    %8747 = vst.msk [vmem:[#allocation8 + $0x1c8] sm:$0xff] %vm123, %v8683
    %8748 = vst.msk [vmem:[#allocation8 + $0x1d0] sm:$0xff] %vm123, %v8684
    %8749 = vst.msk [vmem:[#allocation8 + $0x1d8] sm:$0xff] %vm123, %v8685
    %8750 = vst.msk [vmem:[#allocation8 + $0x1e0] sm:$0xff] %vm123, %v8686
    %8751 = vst.msk [vmem:[#allocation8 + $0x1e8] sm:$0xff] %vm123, %v8687
    %8752 = vst.msk [vmem:[#allocation8 + $0x1f0] sm:$0xff] %vm123, %v8688
    %8753 = vst.msk [vmem:[#allocation8 + $0x1f8] sm:$0xff] %vm123, %v8689
    // Predicated region
    $region38: #{residual_block.1} parent=1 // pred_check
      _
    $region39: #{residual_block.1} parent=1 // pred_check_branch
      %8755 = sbr.rel (0) target = $region41
    $region40: #{residual_block.1} parent=1 // pred_region
      %s8757 = ssub.s32 8192, 8192
      %8758 = vsyncadd [#allocation5], %s8757
      %s8759 = sshll.u32 [#allocation8], 4
      %s8760 = int_to_ptr.vmem [resolvable:$true] %s8759
      %8765 = dma.vmem_to_hbm [thread:$0]  %s8760, 8192, %s7, [#allocation5], 128, 128, 8
    $region41: #{residual_block.1} parent=1 // pred_fallthru
      _
    // Predicated region
    $region42: #{residual_block.1} parent=1 // pred_check
      _
    $region43: #{residual_block.1} parent=1 // pred_check_branch
      %8767 = sbr.rel (0) target = $region45
    $region44: #{residual_block.1} parent=1 // pred_region
      %8768 = dma.done [#allocation5], 8192
    $region45: #{residual_block.1} parent=1 // pred_fallthru
      _
    %8769 = vsyncpa [#allocation4], 1
    %8770 = vsyncpa [#allocation7], 1
    %8771 = vsyncpa [#allocation5], 1

</llo_original>
